<compile_context>
chip_gen: v7x
topology: tpu7x:2x2x1
jax: 0.10.0
libtpu: 0.0.40
codegen_flags: <defaults>
</compile_context>

<pallas_src>
import jax
import jax.numpy as jnp
from jax.experimental import pallas as pl
from jax.experimental.pallas import tpu as pltpu

BOARD = 9
PADDED = BOARD + 2                       # ZeroPad2d(1) -> 11x11
NUM_CHANNEL = 11
C_PAD = 16                               # channel dim padded to a sublane-tile multiple
LANES_PER_IMG = 128                      # 121 padded cells + 7 dead lanes per image
NUM_RES = 3
NUM_CONVS = 1 + 2 * NUM_RES              # 7 conv+BN layers in the tower
EPS = 1e-5                               # torch.nn.BatchNorm2d default eps
FC_OUT = 82
FC_OUT_PAD = 128                         # lane-padded policy-head width
FEAT = NUM_CHANNEL * BOARD * BOARD       # 891
FEAT_PAD = 896                           # 7 * 128
NEG_BIG = -1e30                          # bias for padded logits (vanishes in softmax)

# Flat offsets of the 3x3 taps in the padded 11x11 layout, kpos = ky*3 + kx.
SHIFTS = tuple((ky - 1) * PADDED + (kx - 1) for ky in range(3) for kx in range(3))


# --------------------------------------------------------------------------
# Fused Pallas kernel
# --------------------------------------------------------------------------

def _make_fused_kernel(n_batch):
    lane_len = n_batch * LANES_PER_IMG
    inv_cnt = 1.0 / float(n_batch * BOARD * BOARD)   # interior positions per channel

    def conv_bn_relu(a, layer, w_ref, g_ref, b_ref, mask, residual=None):
        # a: (C_PAD, lane_len) f32, zero at border / dead lanes.
        # Tap-accumulated 3x3 conv: for tap offset s, patch[g] = a[g + s]; with jnp.roll
        # semantics (out[g] = in[g - shift]) that is shift = -s.  Wrap-around only ever
        # lands on masked (border / dead) lanes, so it is harmless.
        acc = None
        for kpos, s in enumerate(SHIFTS):
            rolled = a if s == 0 else pltpu.roll(a, (-s) % lane_len, axis=1)
            part = jnp.dot(w_ref[layer, kpos], rolled,
                           preferred_element_type=jnp.float32)
            acc = part if acc is None else acc + part

        # BatchNorm2d training-mode batch stats over the N*9*9 interior lanes, one pass.
        # Conv bias omitted: a pre-BN channel bias is exactly cancelled by mean subtraction.
        am = acc * mask
        s1 = jnp.sum(am, axis=1, keepdims=True)                   # (C_PAD, 1)
        s2 = jnp.sum(am * am, axis=1, keepdims=True)
        mean = s1 * inv_cnt
        var = s2 * inv_cnt - mean * mean
        scale = g_ref[layer] * jax.lax.rsqrt(var + EPS)           # folded BN (gamma=0 on pad rows)
        shift = b_ref[layer] - mean * scale
        y = acc * scale + shift                                   # single FMA pass
        if residual is not None:
            y = y + residual
        return jnp.maximum(y, 0.0) * mask                         # re-zero border + dead lanes

    def kernel(xslab_ref, xflat_ref, mask_ref, w_ref, g_ref, b_ref,
               fcw_ref, fcb_ref, probs_ref, tower_ref):
        # Per-image interior mask, replicated along the lane axis (128-aligned concat).
        m_img = mask_ref[...]                                     # (1, 128)
        if n_batch == 1:
            mask = m_img
        else:
            mask = jnp.concatenate([m_img] * n_batch, axis=1)     # (1, lane_len)

        # Residual tower (computed and returned; the reference discards it).
        out = conv_bn_relu(xslab_ref[...], 0, w_ref, g_ref, b_ref, mask)
        layer = 1
        for _ in range(NUM_RES):
            h = conv_bn_relu(out, layer, w_ref, g_ref, b_ref, mask)
            out = conv_bn_relu(h, layer + 1, w_ref, g_ref, b_ref, mask, residual=out)
            layer += 2
        tower_ref[...] = out

        # Policy head — mirrors the reference bug: applied to relu(x), not the tower.
        h = jnp.maximum(xflat_ref[...], 0.0)                      # (N, 896), relu(x)
        logits = jnp.dot(h, fcw_ref[...],
                         preferred_element_type=jnp.float32) + fcb_ref[...]   # (N, 128)
        z = logits - jnp.max(logits, axis=-1, keepdims=True)      # stable softmax
        e = jnp.exp(z)                                            # padded cols -> exp(-huge)=0
        probs_ref[...] = e / jnp.sum(e, axis=-1, keepdims=True)   # exact divide

    return kernel


# --------------------------------------------------------------------------
# Wrapper / one-time parameter packing
# --------------------------------------------------------------------------

def _full_spec(shape):
    nd = len(shape)
    return pl.BlockSpec(shape, lambda i, _nd=nd: (0,) * _nd)


def pack_params(params):
    """One-time conversion of PyTorch-layout params to kernel-ready (padded) layout."""

    def pack_conv(w):            # (C_out, C_in, 3, 3) -> (9, C_PAD, C_PAD), zero-padded
        co, ci = w.shape[0], w.shape[1]
        wt = jnp.transpose(w, (2, 3, 0, 1)).reshape(9, co, ci)    # [kpos, co, ci]
        return jnp.pad(wt, ((0, 0), (0, C_PAD - co), (0, C_PAD - ci)))

    def pack_vec(v):             # (C,) -> (C_PAD, 1), padded entries = 0
        return jnp.pad(v, (0, C_PAD - v.shape[0])).reshape(C_PAD, 1)

    ws = [params["conv_w"]]
    gs = [params["bn_g"]]
    bs = [params["bn_b"]]
    for blk in params["blocks"]:
        ws += [blk["w1"], blk["w2"]]
        gs += [blk["g1"], blk["g2"]]
        bs += [blk["be1"], blk["be2"]]
    w_all = jnp.stack([pack_conv(w) for w in ws])                 # (7, 9, 16, 16)
    g_all = jnp.stack([pack_vec(g) for g in gs])                  # (7, 16, 1)
    b_all = jnp.stack([pack_vec(b) for b in bs])                  # (7, 16, 1)

    fcw_t = jnp.pad(params["fc_w"].T,
                    ((0, FEAT_PAD - FEAT), (0, FC_OUT_PAD - FC_OUT)))  # (896, 128)
    fcb = jnp.pad(params["fc_b"], (0, FC_OUT_PAD - FC_OUT),
                  constant_values=NEG_BIG).reshape(1, FC_OUT_PAD)      # (1, 128)

    # Per-image interior mask over the 128-lane padded-board layout (baked constant).
    m = jnp.zeros((PADDED, PADDED), jnp.float32).at[1:-1, 1:-1].set(1.0)
    mask_img = jnp.pad(m.reshape(1, -1),
                       ((0, 0), (0, LANES_PER_IMG - PADDED * PADDED)))  # (1, 128)

    return w_all, g_all, b_all, fcw_t, fcb, mask_img


@jax.jit
def policy_network_forward(x, packed):
    """Mirrors PolicyNetwork.forward.  Returns (probs, tower_out)."""
    n, c, hgt, wid = x.shape
    lane_len = n * LANES_PER_IMG

    # Tiny once-per-call input formatting (the only XLA glue left):
    # lane-dense padded slab (C_PAD, N*128) for the tower + flat (N, 896) view for the head.
    xp = jnp.pad(x, ((0, 0), (0, C_PAD - c), (1, 1), (1, 1)))     # (N, 16, 11, 11)
    xp = xp.reshape(n, C_PAD, PADDED * PADDED)
    xp = jnp.pad(xp, ((0, 0), (0, 0), (0, LANES_PER_IMG - PADDED * PADDED)))
    x_slab = xp.transpose(1, 0, 2).reshape(C_PAD, lane_len)       # dead lanes are zero
    x_flat = jnp.pad(x.reshape(n, c * hgt * wid), ((0, 0), (0, FEAT_PAD - FEAT)))

    w_all, g_all, b_all, fcw_t, fcb, mask_img = packed
    operands = (x_slab, x_flat, mask_img, w_all, g_all, b_all, fcw_t, fcb)

    probs_pad, tower_slab = pl.pallas_call(
        _make_fused_kernel(n),
        grid=(1,),
        in_specs=[_full_spec(a.shape) for a in operands],
        out_specs=(_full_spec((n, FC_OUT_PAD)), _full_spec((C_PAD, lane_len))),
        out_shape=(jax.ShapeDtypeStruct((n, FC_OUT_PAD), jnp.float32),
                   jax.ShapeDtypeStruct((C_PAD, lane_len), jnp.float32)),
        compiler_params=pltpu.CompilerParams(dimension_semantics=("arbitrary",)),
    )(*operands)

    probs = probs_pad[:, :FC_OUT]
    t = tower_slab.reshape(C_PAD, n, LANES_PER_IMG)[:c, :, :PADDED * PADDED]
    t = t.reshape(c, n, PADDED, PADDED)[:, :, 1:-1, 1:-1]
    return probs, t.transpose(1, 0, 2, 3)                         # tower back to NCHW


# --------------------------------------------------------------------------
# Deterministic parameter init (synthetic — shapes from the module __init__)
# --------------------------------------------------------------------------

def init_params(key):
    c = NUM_CHANNEL

    def nrm(k, shape, scale=0.05):
        return scale * jax.random.normal(k, shape, jnp.float32)

    keys = iter(jax.random.split(key, 32))
    # Conv2d biases intentionally omitted: a pre-BatchNorm channel bias is exactly cancelled
    # by the BN mean subtraction, so it never affects the forward output.
    params = {
        "conv_w": nrm(next(keys), (c, 11, 3, 3)),
        "bn_g": 1.0 + nrm(next(keys), (c,)),
        "bn_b": nrm(next(keys), (c,)),
        "fc_w": nrm(next(keys), (FC_OUT, c * BOARD * BOARD)),
        "fc_b": nrm(next(keys), (FC_OUT,)),
        "blocks": [],
    }
    for _ in range(NUM_RES):
        params["blocks"].append({
            "w1": nrm(next(keys), (c, c, 3, 3)),
            "g1": 1.0 + nrm(next(keys), (c,)),
            "be1": nrm(next(keys), (c,)),
            "w2": nrm(next(keys), (c, c, 3, 3)),
            "g2": 1.0 + nrm(next(keys), (c,)),
            "be2": nrm(next(keys), (c,)),
        })
    return params


# --------------------------------------------------------------------------
# Pure-JAX (XLA) reference of the PyTorch forward, for validation
# --------------------------------------------------------------------------

def _reference_forward(x, params):
    def conv_bn_relu(h, w, gamma, beta, residual=None):
        hp = jnp.pad(h, ((0, 0), (0, 0), (1, 1), (1, 1)))
        y = jax.lax.conv_general_dilated(
            hp, w, window_strides=(1, 1), padding="VALID",
            dimension_numbers=("NCHW", "OIHW", "NCHW"))
        mean = jnp.mean(y, axis=(0, 2, 3), keepdims=True)
        var = jnp.mean((y - mean) ** 2, axis=(0, 2, 3), keepdims=True)
        y = (y - mean) * jax.lax.rsqrt(var + EPS)
        y = y * gamma.reshape(1, -1, 1, 1) + beta.reshape(1, -1, 1, 1)
        if residual is not None:
            y = y + residual
        return jnp.maximum(y, 0.0)

    out = conv_bn_relu(x, params["conv_w"], params["bn_g"], params["bn_b"])
    for blk in params["blocks"]:
        h1 = conv_bn_relu(out, blk["w1"], blk["g1"], blk["be1"])
        out = conv_bn_relu(h1, blk["w2"], blk["g2"], blk["be2"], residual=out)
    tower = out
    h = jnp.maximum(x, 0.0).reshape(x.shape[0], -1)
    logits = h @ params["fc_w"].T + params["fc_b"]
    z = logits - jnp.max(logits, axis=-1, keepdims=True)
    e = jnp.exp(z)
    return e / jnp.sum(e, axis=-1, keepdims=True), tower


if __name__ == "__main__":
    key = jax.random.PRNGKey(0)
    kx, kp = jax.random.split(key)
    x = jax.random.normal(kx, (2, NUM_CHANNEL, BOARD, BOARD), jnp.float32)  # NCHW
    params = init_params(kp)
    packed = pack_params(params)     # one-time weight packing / padding (hoisted)

    probs, tower = policy_network_forward(x, packed)
    jax.block_until_ready((probs, tower))

    assert probs.shape == (2, FC_OUT)
    assert tower.shape == (2, NUM_CHANNEL, BOARD, BOARD)

    # Exact softmax divide -> rows sum to 1 to f32 accuracy.
    row_sums = jnp.sum(probs, axis=-1)
    assert bool(jnp.all(jnp.abs(row_sums - 1.0) < 1e-3))

    # Numerical check against a pure-JAX reference of the same forward.
    ref_probs, ref_tower = _reference_forward(x, params)
    assert bool(jnp.all(jnp.abs(probs - ref_probs) < 2e-3))
    # Small extra headroom for the tap-accumulated MXU summation order in the tower.
    assert bool(jnp.all(jnp.abs(tower - ref_tower) < 3e-3))

    print("KERNEL_OK")
</pallas_src>

<mosaic_0001>
module attributes {stable_mosaic.version = 11 : i64} {
  func.func @kernel(%arg0: i32, %arg1: memref<16x256xf32, #tpu.memory_space<vmem>>, %arg2: memref<2x896xf32, #tpu.memory_space<vmem>>, %arg3: memref<1x128xf32, #tpu.memory_space<vmem>>, %arg4: memref<7x9x16x16xf32, #tpu.memory_space<vmem>>, %arg5: memref<7x16x1xf32, #tpu.memory_space<vmem>>, %arg6: memref<7x16x1xf32, #tpu.memory_space<vmem>>, %arg7: memref<896x128xf32, #tpu.memory_space<vmem>>, %arg8: memref<1x128xf32, #tpu.memory_space<vmem>>, %arg9: memref<2x128xf32, #tpu.memory_space<vmem>>, %arg10: memref<16x256xf32, #tpu.memory_space<vmem>>) attributes {dimension_semantics = [#tpu.dimension_semantics<arbitrary>], iteration_bounds = array<i64: 1>, scalar_prefetch = 0 : i64, scratch_operands = 0 : i64, tpu.core_type = #tpu.core_type<tc>, window_params = [{pipeline_mode = #tpu.pipeline_mode<synchronous>, transform_indices = @transform_0, window_bounds = array<i64: 16, 256>}, {pipeline_mode = #tpu.pipeline_mode<synchronous>, transform_indices = @transform_1, window_bounds = array<i64: 2, 896>}, {pipeline_mode = #tpu.pipeline_mode<synchronous>, transform_indices = @transform_2, window_bounds = array<i64: 1, 128>}, {pipeline_mode = #tpu.pipeline_mode<synchronous>, transform_indices = @transform_3, window_bounds = array<i64: 7, 9, 16, 16>}, {pipeline_mode = #tpu.pipeline_mode<synchronous>, transform_indices = @transform_4, window_bounds = array<i64: 7, 16, 1>}, {pipeline_mode = #tpu.pipeline_mode<synchronous>, transform_indices = @transform_5, window_bounds = array<i64: 7, 16, 1>}, {pipeline_mode = #tpu.pipeline_mode<synchronous>, transform_indices = @transform_6, window_bounds = array<i64: 896, 128>}, {pipeline_mode = #tpu.pipeline_mode<synchronous>, transform_indices = @transform_7, window_bounds = array<i64: 1, 128>}, {pipeline_mode = #tpu.pipeline_mode<synchronous>, transform_indices = @transform_8, window_bounds = array<i64: 2, 128>}, {pipeline_mode = #tpu.pipeline_mode<synchronous>, transform_indices = @transform_9, window_bounds = array<i64: 16, 256>}]} {
    %c0 = arith.constant 0 : index
    %c0_0 = arith.constant 0 : index
    %0 = vector.load %arg3[%c0, %c0_0] : memref<1x128xf32, #tpu.memory_space<vmem>>, vector<1x128xf32>
    %1 = tpu.concatenate %0, %0 in 1 : vector<1x128xf32>, vector<1x128xf32> -> vector<1x256xf32>
    %c0_1 = arith.constant 0 : index
    %c0_2 = arith.constant 0 : index
    %2 = vector.load %arg1[%c0_1, %c0_2] : memref<16x256xf32, #tpu.memory_space<vmem>>, vector<16x256xf32>
    %c12_i32 = arith.constant 12 : i32
    %3 = tpu.dynamic_rotate %2 by %c12_i32 dim 1 : vector<16x256xf32>, i32 -> vector<16x256xf32>
    %c0_3 = arith.constant 0 : index
    %c0_4 = arith.constant 0 : index
    %c0_5 = arith.constant 0 : index
    %c0_6 = arith.constant 0 : index
    %4 = vector.load %arg4[%c0_3, %c0_4, %c0_5, %c0_6] : memref<7x9x16x16xf32, #tpu.memory_space<vmem>>, vector<1x1x16x16xf32>
    %5 = vector.shape_cast %4 : vector<1x1x16x16xf32> to vector<16x16xf32>
    %cst = arith.constant dense<0.000000e+00> : vector<16x256xf32>
    %6 = tpu.matmul %5, %3, %cst {dimension_numbers = #tpu.dot_dimension_numbers<[1], [0], [0], [1], [0, 0, 1, 1], [], []>} : vector<16x16xf32>, vector<16x256xf32>, vector<16x256xf32> -> vector<16x256xf32>
    %c11_i32 = arith.constant 11 : i32
    %7 = tpu.dynamic_rotate %2 by %c11_i32 dim 1 : vector<16x256xf32>, i32 -> vector<16x256xf32>
    %c0_7 = arith.constant 0 : index
    %c1 = arith.constant 1 : index
    %c0_8 = arith.constant 0 : index
    %c0_9 = arith.constant 0 : index
    %8 = vector.load %arg4[%c0_7, %c1, %c0_8, %c0_9] : memref<7x9x16x16xf32, #tpu.memory_space<vmem>>, vector<1x1x16x16xf32>
    %9 = vector.shape_cast %8 : vector<1x1x16x16xf32> to vector<16x16xf32>
    %cst_10 = arith.constant dense<0.000000e+00> : vector<16x256xf32>
    %10 = tpu.matmul %9, %7, %cst_10 {dimension_numbers = #tpu.dot_dimension_numbers<[1], [0], [0], [1], [0, 0, 1, 1], [], []>} : vector<16x16xf32>, vector<16x256xf32>, vector<16x256xf32> -> vector<16x256xf32>
    %11 = arith.addf %6, %10 : vector<16x256xf32>
    %c10_i32 = arith.constant 10 : i32
    %12 = tpu.dynamic_rotate %2 by %c10_i32 dim 1 : vector<16x256xf32>, i32 -> vector<16x256xf32>
    %c0_11 = arith.constant 0 : index
    %c2 = arith.constant 2 : index
    %c0_12 = arith.constant 0 : index
    %c0_13 = arith.constant 0 : index
    %13 = vector.load %arg4[%c0_11, %c2, %c0_12, %c0_13] : memref<7x9x16x16xf32, #tpu.memory_space<vmem>>, vector<1x1x16x16xf32>
    %14 = vector.shape_cast %13 : vector<1x1x16x16xf32> to vector<16x16xf32>
    %cst_14 = arith.constant dense<0.000000e+00> : vector<16x256xf32>
    %15 = tpu.matmul %14, %12, %cst_14 {dimension_numbers = #tpu.dot_dimension_numbers<[1], [0], [0], [1], [0, 0, 1, 1], [], []>} : vector<16x16xf32>, vector<16x256xf32>, vector<16x256xf32> -> vector<16x256xf32>
    %16 = arith.addf %11, %15 : vector<16x256xf32>
    %c1_i32 = arith.constant 1 : i32
    %17 = tpu.dynamic_rotate %2 by %c1_i32 dim 1 : vector<16x256xf32>, i32 -> vector<16x256xf32>
    %c0_15 = arith.constant 0 : index
    %c3 = arith.constant 3 : index
    %c0_16 = arith.constant 0 : index
    %c0_17 = arith.constant 0 : index
    %18 = vector.load %arg4[%c0_15, %c3, %c0_16, %c0_17] : memref<7x9x16x16xf32, #tpu.memory_space<vmem>>, vector<1x1x16x16xf32>
    %19 = vector.shape_cast %18 : vector<1x1x16x16xf32> to vector<16x16xf32>
    %cst_18 = arith.constant dense<0.000000e+00> : vector<16x256xf32>
    %20 = tpu.matmul %19, %17, %cst_18 {dimension_numbers = #tpu.dot_dimension_numbers<[1], [0], [0], [1], [0, 0, 1, 1], [], []>} : vector<16x16xf32>, vector<16x256xf32>, vector<16x256xf32> -> vector<16x256xf32>
    %21 = arith.addf %16, %20 : vector<16x256xf32>
    %c0_19 = arith.constant 0 : index
    %c4 = arith.constant 4 : index
    %c0_20 = arith.constant 0 : index
    %c0_21 = arith.constant 0 : index
    %22 = vector.load %arg4[%c0_19, %c4, %c0_20, %c0_21] : memref<7x9x16x16xf32, #tpu.memory_space<vmem>>, vector<1x1x16x16xf32>
    %23 = vector.shape_cast %22 : vector<1x1x16x16xf32> to vector<16x16xf32>
    %cst_22 = arith.constant dense<0.000000e+00> : vector<16x256xf32>
    %24 = tpu.matmul %23, %2, %cst_22 {dimension_numbers = #tpu.dot_dimension_numbers<[1], [0], [0], [1], [0, 0, 1, 1], [], []>} : vector<16x16xf32>, vector<16x256xf32>, vector<16x256xf32> -> vector<16x256xf32>
    %25 = arith.addf %21, %24 : vector<16x256xf32>
    %c255_i32 = arith.constant 255 : i32
    %26 = tpu.dynamic_rotate %2 by %c255_i32 dim 1 : vector<16x256xf32>, i32 -> vector<16x256xf32>
    %c0_23 = arith.constant 0 : index
    %c5 = arith.constant 5 : index
    %c0_24 = arith.constant 0 : index
    %c0_25 = arith.constant 0 : index
    %27 = vector.load %arg4[%c0_23, %c5, %c0_24, %c0_25] : memref<7x9x16x16xf32, #tpu.memory_space<vmem>>, vector<1x1x16x16xf32>
    %28 = vector.shape_cast %27 : vector<1x1x16x16xf32> to vector<16x16xf32>
    %cst_26 = arith.constant dense<0.000000e+00> : vector<16x256xf32>
    %29 = tpu.matmul %28, %26, %cst_26 {dimension_numbers = #tpu.dot_dimension_numbers<[1], [0], [0], [1], [0, 0, 1, 1], [], []>} : vector<16x16xf32>, vector<16x256xf32>, vector<16x256xf32> -> vector<16x256xf32>
    %30 = arith.addf %25, %29 : vector<16x256xf32>
    %c246_i32 = arith.constant 246 : i32
    %31 = tpu.dynamic_rotate %2 by %c246_i32 dim 1 : vector<16x256xf32>, i32 -> vector<16x256xf32>
    %c0_27 = arith.constant 0 : index
    %c6 = arith.constant 6 : index
    %c0_28 = arith.constant 0 : index
    %c0_29 = arith.constant 0 : index
    %32 = vector.load %arg4[%c0_27, %c6, %c0_28, %c0_29] : memref<7x9x16x16xf32, #tpu.memory_space<vmem>>, vector<1x1x16x16xf32>
    %33 = vector.shape_cast %32 : vector<1x1x16x16xf32> to vector<16x16xf32>
    %cst_30 = arith.constant dense<0.000000e+00> : vector<16x256xf32>
    %34 = tpu.matmul %33, %31, %cst_30 {dimension_numbers = #tpu.dot_dimension_numbers<[1], [0], [0], [1], [0, 0, 1, 1], [], []>} : vector<16x16xf32>, vector<16x256xf32>, vector<16x256xf32> -> vector<16x256xf32>
    %35 = arith.addf %30, %34 : vector<16x256xf32>
    %c245_i32 = arith.constant 245 : i32
    %36 = tpu.dynamic_rotate %2 by %c245_i32 dim 1 : vector<16x256xf32>, i32 -> vector<16x256xf32>
    %c0_31 = arith.constant 0 : index
    %c7 = arith.constant 7 : index
    %c0_32 = arith.constant 0 : index
    %c0_33 = arith.constant 0 : index
    %37 = vector.load %arg4[%c0_31, %c7, %c0_32, %c0_33] : memref<7x9x16x16xf32, #tpu.memory_space<vmem>>, vector<1x1x16x16xf32>
    %38 = vector.shape_cast %37 : vector<1x1x16x16xf32> to vector<16x16xf32>
    %cst_34 = arith.constant dense<0.000000e+00> : vector<16x256xf32>
    %39 = tpu.matmul %38, %36, %cst_34 {dimension_numbers = #tpu.dot_dimension_numbers<[1], [0], [0], [1], [0, 0, 1, 1], [], []>} : vector<16x16xf32>, vector<16x256xf32>, vector<16x256xf32> -> vector<16x256xf32>
    %40 = arith.addf %35, %39 : vector<16x256xf32>
    %c244_i32 = arith.constant 244 : i32
    %41 = tpu.dynamic_rotate %2 by %c244_i32 dim 1 : vector<16x256xf32>, i32 -> vector<16x256xf32>
    %c0_35 = arith.constant 0 : index
    %c8 = arith.constant 8 : index
    %c0_36 = arith.constant 0 : index
    %c0_37 = arith.constant 0 : index
    %42 = vector.load %arg4[%c0_35, %c8, %c0_36, %c0_37] : memref<7x9x16x16xf32, #tpu.memory_space<vmem>>, vector<1x1x16x16xf32>
    %43 = vector.shape_cast %42 : vector<1x1x16x16xf32> to vector<16x16xf32>
    %cst_38 = arith.constant dense<0.000000e+00> : vector<16x256xf32>
    %44 = tpu.matmul %43, %41, %cst_38 {dimension_numbers = #tpu.dot_dimension_numbers<[1], [0], [0], [1], [0, 0, 1, 1], [], []>} : vector<16x16xf32>, vector<16x256xf32>, vector<16x256xf32> -> vector<16x256xf32>
    %45 = arith.addf %40, %44 : vector<16x256xf32>
    %46 = vector.broadcast %1 : vector<1x256xf32> to vector<16x256xf32>
    %47 = arith.mulf %45, %46 : vector<16x256xf32>
    %cst_39 = arith.constant dense<0.000000e+00> : vector<16xf32>
    %48 = vector.multi_reduction <add>, %47, %cst_39 [1] : vector<16x256xf32> to vector<16xf32>
    %49 = vector.shape_cast %48 : vector<16xf32> to vector<16x1xf32>
    %50 = arith.mulf %47, %47 : vector<16x256xf32>
    %cst_40 = arith.constant dense<0.000000e+00> : vector<16xf32>
    %51 = vector.multi_reduction <add>, %50, %cst_40 [1] : vector<16x256xf32> to vector<16xf32>
    %52 = vector.shape_cast %51 : vector<16xf32> to vector<16x1xf32>
    %cst_41 = arith.constant 0.00617283955 : f32
    %53 = vector.broadcast %cst_41 : f32 to vector<16x1xf32>
    %54 = arith.mulf %49, %53 : vector<16x1xf32>
    %cst_42 = arith.constant 0.00617283955 : f32
    %55 = vector.broadcast %cst_42 : f32 to vector<16x1xf32>
    %56 = arith.mulf %52, %55 : vector<16x1xf32>
    %57 = arith.mulf %54, %54 : vector<16x1xf32>
    %58 = arith.subf %56, %57 : vector<16x1xf32>
    %c0_43 = arith.constant 0 : index
    %c0_44 = arith.constant 0 : index
    %c0_45 = arith.constant 0 : index
    %59 = vector.load %arg5[%c0_43, %c0_44, %c0_45] : memref<7x16x1xf32, #tpu.memory_space<vmem>>, vector<1x16x1xf32>
    %60 = vector.shape_cast %59 : vector<1x16x1xf32> to vector<16x1xf32>
    %cst_46 = arith.constant 9.99999974E-6 : f32
    %61 = vector.broadcast %cst_46 : f32 to vector<16x1xf32>
    %62 = arith.addf %58, %61 : vector<16x1xf32>
    %63 = math.rsqrt %62 : vector<16x1xf32>
    %64 = arith.mulf %60, %63 : vector<16x1xf32>
    %c0_47 = arith.constant 0 : index
    %c0_48 = arith.constant 0 : index
    %c0_49 = arith.constant 0 : index
    %65 = vector.load %arg6[%c0_47, %c0_48, %c0_49] : memref<7x16x1xf32, #tpu.memory_space<vmem>>, vector<1x16x1xf32>
    %66 = vector.shape_cast %65 : vector<1x16x1xf32> to vector<16x1xf32>
    %67 = arith.mulf %54, %64 : vector<16x1xf32>
    %68 = arith.subf %66, %67 : vector<16x1xf32>
    %69 = vector.broadcast %64 : vector<16x1xf32> to vector<16x256xf32>
    %70 = arith.mulf %45, %69 : vector<16x256xf32>
    %71 = vector.broadcast %68 : vector<16x1xf32> to vector<16x256xf32>
    %72 = arith.addf %70, %71 : vector<16x256xf32>
    %cst_50 = arith.constant 0.000000e+00 : f32
    %73 = vector.broadcast %cst_50 : f32 to vector<16x256xf32>
    %74 = arith.maximumf %72, %73 : vector<16x256xf32>
    %75 = vector.broadcast %1 : vector<1x256xf32> to vector<16x256xf32>
    %76 = arith.mulf %74, %75 : vector<16x256xf32>
    %c12_i32_51 = arith.constant 12 : i32
    %77 = tpu.dynamic_rotate %76 by %c12_i32_51 dim 1 : vector<16x256xf32>, i32 -> vector<16x256xf32>
    %c1_52 = arith.constant 1 : index
    %c0_53 = arith.constant 0 : index
    %c0_54 = arith.constant 0 : index
    %c0_55 = arith.constant 0 : index
    %78 = vector.load %arg4[%c1_52, %c0_53, %c0_54, %c0_55] : memref<7x9x16x16xf32, #tpu.memory_space<vmem>>, vector<1x1x16x16xf32>
    %79 = vector.shape_cast %78 : vector<1x1x16x16xf32> to vector<16x16xf32>
    %cst_56 = arith.constant dense<0.000000e+00> : vector<16x256xf32>
    %80 = tpu.matmul %79, %77, %cst_56 {dimension_numbers = #tpu.dot_dimension_numbers<[1], [0], [0], [1], [0, 0, 1, 1], [], []>} : vector<16x16xf32>, vector<16x256xf32>, vector<16x256xf32> -> vector<16x256xf32>
    %c11_i32_57 = arith.constant 11 : i32
    %81 = tpu.dynamic_rotate %76 by %c11_i32_57 dim 1 : vector<16x256xf32>, i32 -> vector<16x256xf32>
    %c1_58 = arith.constant 1 : index
    %c1_59 = arith.constant 1 : index
    %c0_60 = arith.constant 0 : index
    %c0_61 = arith.constant 0 : index
    %82 = vector.load %arg4[%c1_58, %c1_59, %c0_60, %c0_61] : memref<7x9x16x16xf32, #tpu.memory_space<vmem>>, vector<1x1x16x16xf32>
    %83 = vector.shape_cast %82 : vector<1x1x16x16xf32> to vector<16x16xf32>
    %cst_62 = arith.constant dense<0.000000e+00> : vector<16x256xf32>
    %84 = tpu.matmul %83, %81, %cst_62 {dimension_numbers = #tpu.dot_dimension_numbers<[1], [0], [0], [1], [0, 0, 1, 1], [], []>} : vector<16x16xf32>, vector<16x256xf32>, vector<16x256xf32> -> vector<16x256xf32>
    %85 = arith.addf %80, %84 : vector<16x256xf32>
    %c10_i32_63 = arith.constant 10 : i32
    %86 = tpu.dynamic_rotate %76 by %c10_i32_63 dim 1 : vector<16x256xf32>, i32 -> vector<16x256xf32>
    %c1_64 = arith.constant 1 : index
    %c2_65 = arith.constant 2 : index
    %c0_66 = arith.constant 0 : index
    %c0_67 = arith.constant 0 : index
    %87 = vector.load %arg4[%c1_64, %c2_65, %c0_66, %c0_67] : memref<7x9x16x16xf32, #tpu.memory_space<vmem>>, vector<1x1x16x16xf32>
    %88 = vector.shape_cast %87 : vector<1x1x16x16xf32> to vector<16x16xf32>
    %cst_68 = arith.constant dense<0.000000e+00> : vector<16x256xf32>
    %89 = tpu.matmul %88, %86, %cst_68 {dimension_numbers = #tpu.dot_dimension_numbers<[1], [0], [0], [1], [0, 0, 1, 1], [], []>} : vector<16x16xf32>, vector<16x256xf32>, vector<16x256xf32> -> vector<16x256xf32>
    %90 = arith.addf %85, %89 : vector<16x256xf32>
    %c1_i32_69 = arith.constant 1 : i32
    %91 = tpu.dynamic_rotate %76 by %c1_i32_69 dim 1 : vector<16x256xf32>, i32 -> vector<16x256xf32>
    %c1_70 = arith.constant 1 : index
    %c3_71 = arith.constant 3 : index
    %c0_72 = arith.constant 0 : index
    %c0_73 = arith.constant 0 : index
    %92 = vector.load %arg4[%c1_70, %c3_71, %c0_72, %c0_73] : memref<7x9x16x16xf32, #tpu.memory_space<vmem>>, vector<1x1x16x16xf32>
    %93 = vector.shape_cast %92 : vector<1x1x16x16xf32> to vector<16x16xf32>
    %cst_74 = arith.constant dense<0.000000e+00> : vector<16x256xf32>
    %94 = tpu.matmul %93, %91, %cst_74 {dimension_numbers = #tpu.dot_dimension_numbers<[1], [0], [0], [1], [0, 0, 1, 1], [], []>} : vector<16x16xf32>, vector<16x256xf32>, vector<16x256xf32> -> vector<16x256xf32>
    %95 = arith.addf %90, %94 : vector<16x256xf32>
    %c1_75 = arith.constant 1 : index
    %c4_76 = arith.constant 4 : index
    %c0_77 = arith.constant 0 : index
    %c0_78 = arith.constant 0 : index
    %96 = vector.load %arg4[%c1_75, %c4_76, %c0_77, %c0_78] : memref<7x9x16x16xf32, #tpu.memory_space<vmem>>, vector<1x1x16x16xf32>
    %97 = vector.shape_cast %96 : vector<1x1x16x16xf32> to vector<16x16xf32>
    %cst_79 = arith.constant dense<0.000000e+00> : vector<16x256xf32>
    %98 = tpu.matmul %97, %76, %cst_79 {dimension_numbers = #tpu.dot_dimension_numbers<[1], [0], [0], [1], [0, 0, 1, 1], [], []>} : vector<16x16xf32>, vector<16x256xf32>, vector<16x256xf32> -> vector<16x256xf32>
    %99 = arith.addf %95, %98 : vector<16x256xf32>
    %c255_i32_80 = arith.constant 255 : i32
    %100 = tpu.dynamic_rotate %76 by %c255_i32_80 dim 1 : vector<16x256xf32>, i32 -> vector<16x256xf32>
    %c1_81 = arith.constant 1 : index
    %c5_82 = arith.constant 5 : index
    %c0_83 = arith.constant 0 : index
    %c0_84 = arith.constant 0 : index
    %101 = vector.load %arg4[%c1_81, %c5_82, %c0_83, %c0_84] : memref<7x9x16x16xf32, #tpu.memory_space<vmem>>, vector<1x1x16x16xf32>
    %102 = vector.shape_cast %101 : vector<1x1x16x16xf32> to vector<16x16xf32>
    %cst_85 = arith.constant dense<0.000000e+00> : vector<16x256xf32>
    %103 = tpu.matmul %102, %100, %cst_85 {dimension_numbers = #tpu.dot_dimension_numbers<[1], [0], [0], [1], [0, 0, 1, 1], [], []>} : vector<16x16xf32>, vector<16x256xf32>, vector<16x256xf32> -> vector<16x256xf32>
    %104 = arith.addf %99, %103 : vector<16x256xf32>
    %c246_i32_86 = arith.constant 246 : i32
    %105 = tpu.dynamic_rotate %76 by %c246_i32_86 dim 1 : vector<16x256xf32>, i32 -> vector<16x256xf32>
    %c1_87 = arith.constant 1 : index
    %c6_88 = arith.constant 6 : index
    %c0_89 = arith.constant 0 : index
    %c0_90 = arith.constant 0 : index
    %106 = vector.load %arg4[%c1_87, %c6_88, %c0_89, %c0_90] : memref<7x9x16x16xf32, #tpu.memory_space<vmem>>, vector<1x1x16x16xf32>
    %107 = vector.shape_cast %106 : vector<1x1x16x16xf32> to vector<16x16xf32>
    %cst_91 = arith.constant dense<0.000000e+00> : vector<16x256xf32>
    %108 = tpu.matmul %107, %105, %cst_91 {dimension_numbers = #tpu.dot_dimension_numbers<[1], [0], [0], [1], [0, 0, 1, 1], [], []>} : vector<16x16xf32>, vector<16x256xf32>, vector<16x256xf32> -> vector<16x256xf32>
    %109 = arith.addf %104, %108 : vector<16x256xf32>
    %c245_i32_92 = arith.constant 245 : i32
    %110 = tpu.dynamic_rotate %76 by %c245_i32_92 dim 1 : vector<16x256xf32>, i32 -> vector<16x256xf32>
    %c1_93 = arith.constant 1 : index
    %c7_94 = arith.constant 7 : index
    %c0_95 = arith.constant 0 : index
    %c0_96 = arith.constant 0 : index
    %111 = vector.load %arg4[%c1_93, %c7_94, %c0_95, %c0_96] : memref<7x9x16x16xf32, #tpu.memory_space<vmem>>, vector<1x1x16x16xf32>
    %112 = vector.shape_cast %111 : vector<1x1x16x16xf32> to vector<16x16xf32>
    %cst_97 = arith.constant dense<0.000000e+00> : vector<16x256xf32>
    %113 = tpu.matmul %112, %110, %cst_97 {dimension_numbers = #tpu.dot_dimension_numbers<[1], [0], [0], [1], [0, 0, 1, 1], [], []>} : vector<16x16xf32>, vector<16x256xf32>, vector<16x256xf32> -> vector<16x256xf32>
    %114 = arith.addf %109, %113 : vector<16x256xf32>
    %c244_i32_98 = arith.constant 244 : i32
    %115 = tpu.dynamic_rotate %76 by %c244_i32_98 dim 1 : vector<16x256xf32>, i32 -> vector<16x256xf32>
    %c1_99 = arith.constant 1 : index
    %c8_100 = arith.constant 8 : index
    %c0_101 = arith.constant 0 : index
    %c0_102 = arith.constant 0 : index
    %116 = vector.load %arg4[%c1_99, %c8_100, %c0_101, %c0_102] : memref<7x9x16x16xf32, #tpu.memory_space<vmem>>, vector<1x1x16x16xf32>
    %117 = vector.shape_cast %116 : vector<1x1x16x16xf32> to vector<16x16xf32>
    %cst_103 = arith.constant dense<0.000000e+00> : vector<16x256xf32>
    %118 = tpu.matmul %117, %115, %cst_103 {dimension_numbers = #tpu.dot_dimension_numbers<[1], [0], [0], [1], [0, 0, 1, 1], [], []>} : vector<16x16xf32>, vector<16x256xf32>, vector<16x256xf32> -> vector<16x256xf32>
    %119 = arith.addf %114, %118 : vector<16x256xf32>
    %120 = vector.broadcast %1 : vector<1x256xf32> to vector<16x256xf32>
    %121 = arith.mulf %119, %120 : vector<16x256xf32>
    %cst_104 = arith.constant dense<0.000000e+00> : vector<16xf32>
    %122 = vector.multi_reduction <add>, %121, %cst_104 [1] : vector<16x256xf32> to vector<16xf32>
    %123 = vector.shape_cast %122 : vector<16xf32> to vector<16x1xf32>
    %124 = arith.mulf %121, %121 : vector<16x256xf32>
    %cst_105 = arith.constant dense<0.000000e+00> : vector<16xf32>
    %125 = vector.multi_reduction <add>, %124, %cst_105 [1] : vector<16x256xf32> to vector<16xf32>
    %126 = vector.shape_cast %125 : vector<16xf32> to vector<16x1xf32>
    %cst_106 = arith.constant 0.00617283955 : f32
    %127 = vector.broadcast %cst_106 : f32 to vector<16x1xf32>
    %128 = arith.mulf %123, %127 : vector<16x1xf32>
    %cst_107 = arith.constant 0.00617283955 : f32
    %129 = vector.broadcast %cst_107 : f32 to vector<16x1xf32>
    %130 = arith.mulf %126, %129 : vector<16x1xf32>
    %131 = arith.mulf %128, %128 : vector<16x1xf32>
    %132 = arith.subf %130, %131 : vector<16x1xf32>
    %c1_108 = arith.constant 1 : index
    %c0_109 = arith.constant 0 : index
    %c0_110 = arith.constant 0 : index
    %133 = vector.load %arg5[%c1_108, %c0_109, %c0_110] : memref<7x16x1xf32, #tpu.memory_space<vmem>>, vector<1x16x1xf32>
    %134 = vector.shape_cast %133 : vector<1x16x1xf32> to vector<16x1xf32>
    %cst_111 = arith.constant 9.99999974E-6 : f32
    %135 = vector.broadcast %cst_111 : f32 to vector<16x1xf32>
    %136 = arith.addf %132, %135 : vector<16x1xf32>
    %137 = math.rsqrt %136 : vector<16x1xf32>
    %138 = arith.mulf %134, %137 : vector<16x1xf32>
    %c1_112 = arith.constant 1 : index
    %c0_113 = arith.constant 0 : index
    %c0_114 = arith.constant 0 : index
    %139 = vector.load %arg6[%c1_112, %c0_113, %c0_114] : memref<7x16x1xf32, #tpu.memory_space<vmem>>, vector<1x16x1xf32>
    %140 = vector.shape_cast %139 : vector<1x16x1xf32> to vector<16x1xf32>
    %141 = arith.mulf %128, %138 : vector<16x1xf32>
    %142 = arith.subf %140, %141 : vector<16x1xf32>
    %143 = vector.broadcast %138 : vector<16x1xf32> to vector<16x256xf32>
    %144 = arith.mulf %119, %143 : vector<16x256xf32>
    %145 = vector.broadcast %142 : vector<16x1xf32> to vector<16x256xf32>
    %146 = arith.addf %144, %145 : vector<16x256xf32>
    %cst_115 = arith.constant 0.000000e+00 : f32
    %147 = vector.broadcast %cst_115 : f32 to vector<16x256xf32>
    %148 = arith.maximumf %146, %147 : vector<16x256xf32>
    %149 = vector.broadcast %1 : vector<1x256xf32> to vector<16x256xf32>
    %150 = arith.mulf %148, %149 : vector<16x256xf32>
    %c12_i32_116 = arith.constant 12 : i32
    %151 = tpu.dynamic_rotate %150 by %c12_i32_116 dim 1 : vector<16x256xf32>, i32 -> vector<16x256xf32>
    %c2_117 = arith.constant 2 : index
    %c0_118 = arith.constant 0 : index
    %c0_119 = arith.constant 0 : index
    %c0_120 = arith.constant 0 : index
    %152 = vector.load %arg4[%c2_117, %c0_118, %c0_119, %c0_120] : memref<7x9x16x16xf32, #tpu.memory_space<vmem>>, vector<1x1x16x16xf32>
    %153 = vector.shape_cast %152 : vector<1x1x16x16xf32> to vector<16x16xf32>
    %cst_121 = arith.constant dense<0.000000e+00> : vector<16x256xf32>
    %154 = tpu.matmul %153, %151, %cst_121 {dimension_numbers = #tpu.dot_dimension_numbers<[1], [0], [0], [1], [0, 0, 1, 1], [], []>} : vector<16x16xf32>, vector<16x256xf32>, vector<16x256xf32> -> vector<16x256xf32>
    %c11_i32_122 = arith.constant 11 : i32
    %155 = tpu.dynamic_rotate %150 by %c11_i32_122 dim 1 : vector<16x256xf32>, i32 -> vector<16x256xf32>
    %c2_123 = arith.constant 2 : index
    %c1_124 = arith.constant 1 : index
    %c0_125 = arith.constant 0 : index
    %c0_126 = arith.constant 0 : index
    %156 = vector.load %arg4[%c2_123, %c1_124, %c0_125, %c0_126] : memref<7x9x16x16xf32, #tpu.memory_space<vmem>>, vector<1x1x16x16xf32>
    %157 = vector.shape_cast %156 : vector<1x1x16x16xf32> to vector<16x16xf32>
    %cst_127 = arith.constant dense<0.000000e+00> : vector<16x256xf32>
    %158 = tpu.matmul %157, %155, %cst_127 {dimension_numbers = #tpu.dot_dimension_numbers<[1], [0], [0], [1], [0, 0, 1, 1], [], []>} : vector<16x16xf32>, vector<16x256xf32>, vector<16x256xf32> -> vector<16x256xf32>
    %159 = arith.addf %154, %158 : vector<16x256xf32>
    %c10_i32_128 = arith.constant 10 : i32
    %160 = tpu.dynamic_rotate %150 by %c10_i32_128 dim 1 : vector<16x256xf32>, i32 -> vector<16x256xf32>
    %c2_129 = arith.constant 2 : index
    %c2_130 = arith.constant 2 : index
    %c0_131 = arith.constant 0 : index
    %c0_132 = arith.constant 0 : index
    %161 = vector.load %arg4[%c2_129, %c2_130, %c0_131, %c0_132] : memref<7x9x16x16xf32, #tpu.memory_space<vmem>>, vector<1x1x16x16xf32>
    %162 = vector.shape_cast %161 : vector<1x1x16x16xf32> to vector<16x16xf32>
    %cst_133 = arith.constant dense<0.000000e+00> : vector<16x256xf32>
    %163 = tpu.matmul %162, %160, %cst_133 {dimension_numbers = #tpu.dot_dimension_numbers<[1], [0], [0], [1], [0, 0, 1, 1], [], []>} : vector<16x16xf32>, vector<16x256xf32>, vector<16x256xf32> -> vector<16x256xf32>
    %164 = arith.addf %159, %163 : vector<16x256xf32>
    %c1_i32_134 = arith.constant 1 : i32
    %165 = tpu.dynamic_rotate %150 by %c1_i32_134 dim 1 : vector<16x256xf32>, i32 -> vector<16x256xf32>
    %c2_135 = arith.constant 2 : index
    %c3_136 = arith.constant 3 : index
    %c0_137 = arith.constant 0 : index
    %c0_138 = arith.constant 0 : index
    %166 = vector.load %arg4[%c2_135, %c3_136, %c0_137, %c0_138] : memref<7x9x16x16xf32, #tpu.memory_space<vmem>>, vector<1x1x16x16xf32>
    %167 = vector.shape_cast %166 : vector<1x1x16x16xf32> to vector<16x16xf32>
    %cst_139 = arith.constant dense<0.000000e+00> : vector<16x256xf32>
    %168 = tpu.matmul %167, %165, %cst_139 {dimension_numbers = #tpu.dot_dimension_numbers<[1], [0], [0], [1], [0, 0, 1, 1], [], []>} : vector<16x16xf32>, vector<16x256xf32>, vector<16x256xf32> -> vector<16x256xf32>
    %169 = arith.addf %164, %168 : vector<16x256xf32>
    %c2_140 = arith.constant 2 : index
    %c4_141 = arith.constant 4 : index
    %c0_142 = arith.constant 0 : index
    %c0_143 = arith.constant 0 : index
    %170 = vector.load %arg4[%c2_140, %c4_141, %c0_142, %c0_143] : memref<7x9x16x16xf32, #tpu.memory_space<vmem>>, vector<1x1x16x16xf32>
    %171 = vector.shape_cast %170 : vector<1x1x16x16xf32> to vector<16x16xf32>
    %cst_144 = arith.constant dense<0.000000e+00> : vector<16x256xf32>
    %172 = tpu.matmul %171, %150, %cst_144 {dimension_numbers = #tpu.dot_dimension_numbers<[1], [0], [0], [1], [0, 0, 1, 1], [], []>} : vector<16x16xf32>, vector<16x256xf32>, vector<16x256xf32> -> vector<16x256xf32>
    %173 = arith.addf %169, %172 : vector<16x256xf32>
    %c255_i32_145 = arith.constant 255 : i32
    %174 = tpu.dynamic_rotate %150 by %c255_i32_145 dim 1 : vector<16x256xf32>, i32 -> vector<16x256xf32>
    %c2_146 = arith.constant 2 : index
    %c5_147 = arith.constant 5 : index
    %c0_148 = arith.constant 0 : index
    %c0_149 = arith.constant 0 : index
    %175 = vector.load %arg4[%c2_146, %c5_147, %c0_148, %c0_149] : memref<7x9x16x16xf32, #tpu.memory_space<vmem>>, vector<1x1x16x16xf32>
    %176 = vector.shape_cast %175 : vector<1x1x16x16xf32> to vector<16x16xf32>
    %cst_150 = arith.constant dense<0.000000e+00> : vector<16x256xf32>
    %177 = tpu.matmul %176, %174, %cst_150 {dimension_numbers = #tpu.dot_dimension_numbers<[1], [0], [0], [1], [0, 0, 1, 1], [], []>} : vector<16x16xf32>, vector<16x256xf32>, vector<16x256xf32> -> vector<16x256xf32>
    %178 = arith.addf %173, %177 : vector<16x256xf32>
    %c246_i32_151 = arith.constant 246 : i32
    %179 = tpu.dynamic_rotate %150 by %c246_i32_151 dim 1 : vector<16x256xf32>, i32 -> vector<16x256xf32>
    %c2_152 = arith.constant 2 : index
    %c6_153 = arith.constant 6 : index
    %c0_154 = arith.constant 0 : index
    %c0_155 = arith.constant 0 : index
    %180 = vector.load %arg4[%c2_152, %c6_153, %c0_154, %c0_155] : memref<7x9x16x16xf32, #tpu.memory_space<vmem>>, vector<1x1x16x16xf32>
    %181 = vector.shape_cast %180 : vector<1x1x16x16xf32> to vector<16x16xf32>
    %cst_156 = arith.constant dense<0.000000e+00> : vector<16x256xf32>
    %182 = tpu.matmul %181, %179, %cst_156 {dimension_numbers = #tpu.dot_dimension_numbers<[1], [0], [0], [1], [0, 0, 1, 1], [], []>} : vector<16x16xf32>, vector<16x256xf32>, vector<16x256xf32> -> vector<16x256xf32>
    %183 = arith.addf %178, %182 : vector<16x256xf32>
    %c245_i32_157 = arith.constant 245 : i32
    %184 = tpu.dynamic_rotate %150 by %c245_i32_157 dim 1 : vector<16x256xf32>, i32 -> vector<16x256xf32>
    %c2_158 = arith.constant 2 : index
    %c7_159 = arith.constant 7 : index
    %c0_160 = arith.constant 0 : index
    %c0_161 = arith.constant 0 : index
    %185 = vector.load %arg4[%c2_158, %c7_159, %c0_160, %c0_161] : memref<7x9x16x16xf32, #tpu.memory_space<vmem>>, vector<1x1x16x16xf32>
    %186 = vector.shape_cast %185 : vector<1x1x16x16xf32> to vector<16x16xf32>
    %cst_162 = arith.constant dense<0.000000e+00> : vector<16x256xf32>
    %187 = tpu.matmul %186, %184, %cst_162 {dimension_numbers = #tpu.dot_dimension_numbers<[1], [0], [0], [1], [0, 0, 1, 1], [], []>} : vector<16x16xf32>, vector<16x256xf32>, vector<16x256xf32> -> vector<16x256xf32>
    %188 = arith.addf %183, %187 : vector<16x256xf32>
    %c244_i32_163 = arith.constant 244 : i32
    %189 = tpu.dynamic_rotate %150 by %c244_i32_163 dim 1 : vector<16x256xf32>, i32 -> vector<16x256xf32>
    %c2_164 = arith.constant 2 : index
    %c8_165 = arith.constant 8 : index
    %c0_166 = arith.constant 0 : index
    %c0_167 = arith.constant 0 : index
    %190 = vector.load %arg4[%c2_164, %c8_165, %c0_166, %c0_167] : memref<7x9x16x16xf32, #tpu.memory_space<vmem>>, vector<1x1x16x16xf32>
    %191 = vector.shape_cast %190 : vector<1x1x16x16xf32> to vector<16x16xf32>
    %cst_168 = arith.constant dense<0.000000e+00> : vector<16x256xf32>
    %192 = tpu.matmul %191, %189, %cst_168 {dimension_numbers = #tpu.dot_dimension_numbers<[1], [0], [0], [1], [0, 0, 1, 1], [], []>} : vector<16x16xf32>, vector<16x256xf32>, vector<16x256xf32> -> vector<16x256xf32>
    %193 = arith.addf %188, %192 : vector<16x256xf32>
    %194 = vector.broadcast %1 : vector<1x256xf32> to vector<16x256xf32>
    %195 = arith.mulf %193, %194 : vector<16x256xf32>
    %cst_169 = arith.constant dense<0.000000e+00> : vector<16xf32>
    %196 = vector.multi_reduction <add>, %195, %cst_169 [1] : vector<16x256xf32> to vector<16xf32>
    %197 = vector.shape_cast %196 : vector<16xf32> to vector<16x1xf32>
    %198 = arith.mulf %195, %195 : vector<16x256xf32>
    %cst_170 = arith.constant dense<0.000000e+00> : vector<16xf32>
    %199 = vector.multi_reduction <add>, %198, %cst_170 [1] : vector<16x256xf32> to vector<16xf32>
    %200 = vector.shape_cast %199 : vector<16xf32> to vector<16x1xf32>
    %cst_171 = arith.constant 0.00617283955 : f32
    %201 = vector.broadcast %cst_171 : f32 to vector<16x1xf32>
    %202 = arith.mulf %197, %201 : vector<16x1xf32>
    %cst_172 = arith.constant 0.00617283955 : f32
    %203 = vector.broadcast %cst_172 : f32 to vector<16x1xf32>
    %204 = arith.mulf %200, %203 : vector<16x1xf32>
    %205 = arith.mulf %202, %202 : vector<16x1xf32>
    %206 = arith.subf %204, %205 : vector<16x1xf32>
    %c2_173 = arith.constant 2 : index
    %c0_174 = arith.constant 0 : index
    %c0_175 = arith.constant 0 : index
    %207 = vector.load %arg5[%c2_173, %c0_174, %c0_175] : memref<7x16x1xf32, #tpu.memory_space<vmem>>, vector<1x16x1xf32>
    %208 = vector.shape_cast %207 : vector<1x16x1xf32> to vector<16x1xf32>
    %cst_176 = arith.constant 9.99999974E-6 : f32
    %209 = vector.broadcast %cst_176 : f32 to vector<16x1xf32>
    %210 = arith.addf %206, %209 : vector<16x1xf32>
    %211 = math.rsqrt %210 : vector<16x1xf32>
    %212 = arith.mulf %208, %211 : vector<16x1xf32>
    %c2_177 = arith.constant 2 : index
    %c0_178 = arith.constant 0 : index
    %c0_179 = arith.constant 0 : index
    %213 = vector.load %arg6[%c2_177, %c0_178, %c0_179] : memref<7x16x1xf32, #tpu.memory_space<vmem>>, vector<1x16x1xf32>
    %214 = vector.shape_cast %213 : vector<1x16x1xf32> to vector<16x1xf32>
    %215 = arith.mulf %202, %212 : vector<16x1xf32>
    %216 = arith.subf %214, %215 : vector<16x1xf32>
    %217 = vector.broadcast %212 : vector<16x1xf32> to vector<16x256xf32>
    %218 = arith.mulf %193, %217 : vector<16x256xf32>
    %219 = vector.broadcast %216 : vector<16x1xf32> to vector<16x256xf32>
    %220 = arith.addf %218, %219 : vector<16x256xf32>
    %221 = arith.addf %220, %76 : vector<16x256xf32>
    %cst_180 = arith.constant 0.000000e+00 : f32
    %222 = vector.broadcast %cst_180 : f32 to vector<16x256xf32>
    %223 = arith.maximumf %221, %222 : vector<16x256xf32>
    %224 = vector.broadcast %1 : vector<1x256xf32> to vector<16x256xf32>
    %225 = arith.mulf %223, %224 : vector<16x256xf32>
    %c12_i32_181 = arith.constant 12 : i32
    %226 = tpu.dynamic_rotate %225 by %c12_i32_181 dim 1 : vector<16x256xf32>, i32 -> vector<16x256xf32>
    %c3_182 = arith.constant 3 : index
    %c0_183 = arith.constant 0 : index
    %c0_184 = arith.constant 0 : index
    %c0_185 = arith.constant 0 : index
    %227 = vector.load %arg4[%c3_182, %c0_183, %c0_184, %c0_185] : memref<7x9x16x16xf32, #tpu.memory_space<vmem>>, vector<1x1x16x16xf32>
    %228 = vector.shape_cast %227 : vector<1x1x16x16xf32> to vector<16x16xf32>
    %cst_186 = arith.constant dense<0.000000e+00> : vector<16x256xf32>
    %229 = tpu.matmul %228, %226, %cst_186 {dimension_numbers = #tpu.dot_dimension_numbers<[1], [0], [0], [1], [0, 0, 1, 1], [], []>} : vector<16x16xf32>, vector<16x256xf32>, vector<16x256xf32> -> vector<16x256xf32>
    %c11_i32_187 = arith.constant 11 : i32
    %230 = tpu.dynamic_rotate %225 by %c11_i32_187 dim 1 : vector<16x256xf32>, i32 -> vector<16x256xf32>
    %c3_188 = arith.constant 3 : index
    %c1_189 = arith.constant 1 : index
    %c0_190 = arith.constant 0 : index
    %c0_191 = arith.constant 0 : index
    %231 = vector.load %arg4[%c3_188, %c1_189, %c0_190, %c0_191] : memref<7x9x16x16xf32, #tpu.memory_space<vmem>>, vector<1x1x16x16xf32>
    %232 = vector.shape_cast %231 : vector<1x1x16x16xf32> to vector<16x16xf32>
    %cst_192 = arith.constant dense<0.000000e+00> : vector<16x256xf32>
    %233 = tpu.matmul %232, %230, %cst_192 {dimension_numbers = #tpu.dot_dimension_numbers<[1], [0], [0], [1], [0, 0, 1, 1], [], []>} : vector<16x16xf32>, vector<16x256xf32>, vector<16x256xf32> -> vector<16x256xf32>
    %234 = arith.addf %229, %233 : vector<16x256xf32>
    %c10_i32_193 = arith.constant 10 : i32
    %235 = tpu.dynamic_rotate %225 by %c10_i32_193 dim 1 : vector<16x256xf32>, i32 -> vector<16x256xf32>
    %c3_194 = arith.constant 3 : index
    %c2_195 = arith.constant 2 : index
    %c0_196 = arith.constant 0 : index
    %c0_197 = arith.constant 0 : index
    %236 = vector.load %arg4[%c3_194, %c2_195, %c0_196, %c0_197] : memref<7x9x16x16xf32, #tpu.memory_space<vmem>>, vector<1x1x16x16xf32>
    %237 = vector.shape_cast %236 : vector<1x1x16x16xf32> to vector<16x16xf32>
    %cst_198 = arith.constant dense<0.000000e+00> : vector<16x256xf32>
    %238 = tpu.matmul %237, %235, %cst_198 {dimension_numbers = #tpu.dot_dimension_numbers<[1], [0], [0], [1], [0, 0, 1, 1], [], []>} : vector<16x16xf32>, vector<16x256xf32>, vector<16x256xf32> -> vector<16x256xf32>
    %239 = arith.addf %234, %238 : vector<16x256xf32>
    %c1_i32_199 = arith.constant 1 : i32
    %240 = tpu.dynamic_rotate %225 by %c1_i32_199 dim 1 : vector<16x256xf32>, i32 -> vector<16x256xf32>
    %c3_200 = arith.constant 3 : index
    %c3_201 = arith.constant 3 : index
    %c0_202 = arith.constant 0 : index
    %c0_203 = arith.constant 0 : index
    %241 = vector.load %arg4[%c3_200, %c3_201, %c0_202, %c0_203] : memref<7x9x16x16xf32, #tpu.memory_space<vmem>>, vector<1x1x16x16xf32>
    %242 = vector.shape_cast %241 : vector<1x1x16x16xf32> to vector<16x16xf32>
    %cst_204 = arith.constant dense<0.000000e+00> : vector<16x256xf32>
    %243 = tpu.matmul %242, %240, %cst_204 {dimension_numbers = #tpu.dot_dimension_numbers<[1], [0], [0], [1], [0, 0, 1, 1], [], []>} : vector<16x16xf32>, vector<16x256xf32>, vector<16x256xf32> -> vector<16x256xf32>
    %244 = arith.addf %239, %243 : vector<16x256xf32>
    %c3_205 = arith.constant 3 : index
    %c4_206 = arith.constant 4 : index
    %c0_207 = arith.constant 0 : index
    %c0_208 = arith.constant 0 : index
    %245 = vector.load %arg4[%c3_205, %c4_206, %c0_207, %c0_208] : memref<7x9x16x16xf32, #tpu.memory_space<vmem>>, vector<1x1x16x16xf32>
    %246 = vector.shape_cast %245 : vector<1x1x16x16xf32> to vector<16x16xf32>
    %cst_209 = arith.constant dense<0.000000e+00> : vector<16x256xf32>
    %247 = tpu.matmul %246, %225, %cst_209 {dimension_numbers = #tpu.dot_dimension_numbers<[1], [0], [0], [1], [0, 0, 1, 1], [], []>} : vector<16x16xf32>, vector<16x256xf32>, vector<16x256xf32> -> vector<16x256xf32>
    %248 = arith.addf %244, %247 : vector<16x256xf32>
    %c255_i32_210 = arith.constant 255 : i32
    %249 = tpu.dynamic_rotate %225 by %c255_i32_210 dim 1 : vector<16x256xf32>, i32 -> vector<16x256xf32>
    %c3_211 = arith.constant 3 : index
    %c5_212 = arith.constant 5 : index
    %c0_213 = arith.constant 0 : index
    %c0_214 = arith.constant 0 : index
    %250 = vector.load %arg4[%c3_211, %c5_212, %c0_213, %c0_214] : memref<7x9x16x16xf32, #tpu.memory_space<vmem>>, vector<1x1x16x16xf32>
    %251 = vector.shape_cast %250 : vector<1x1x16x16xf32> to vector<16x16xf32>
    %cst_215 = arith.constant dense<0.000000e+00> : vector<16x256xf32>
    %252 = tpu.matmul %251, %249, %cst_215 {dimension_numbers = #tpu.dot_dimension_numbers<[1], [0], [0], [1], [0, 0, 1, 1], [], []>} : vector<16x16xf32>, vector<16x256xf32>, vector<16x256xf32> -> vector<16x256xf32>
    %253 = arith.addf %248, %252 : vector<16x256xf32>
    %c246_i32_216 = arith.constant 246 : i32
    %254 = tpu.dynamic_rotate %225 by %c246_i32_216 dim 1 : vector<16x256xf32>, i32 -> vector<16x256xf32>
    %c3_217 = arith.constant 3 : index
    %c6_218 = arith.constant 6 : index
    %c0_219 = arith.constant 0 : index
    %c0_220 = arith.constant 0 : index
    %255 = vector.load %arg4[%c3_217, %c6_218, %c0_219, %c0_220] : memref<7x9x16x16xf32, #tpu.memory_space<vmem>>, vector<1x1x16x16xf32>
    %256 = vector.shape_cast %255 : vector<1x1x16x16xf32> to vector<16x16xf32>
    %cst_221 = arith.constant dense<0.000000e+00> : vector<16x256xf32>
    %257 = tpu.matmul %256, %254, %cst_221 {dimension_numbers = #tpu.dot_dimension_numbers<[1], [0], [0], [1], [0, 0, 1, 1], [], []>} : vector<16x16xf32>, vector<16x256xf32>, vector<16x256xf32> -> vector<16x256xf32>
    %258 = arith.addf %253, %257 : vector<16x256xf32>
    %c245_i32_222 = arith.constant 245 : i32
    %259 = tpu.dynamic_rotate %225 by %c245_i32_222 dim 1 : vector<16x256xf32>, i32 -> vector<16x256xf32>
    %c3_223 = arith.constant 3 : index
    %c7_224 = arith.constant 7 : index
    %c0_225 = arith.constant 0 : index
    %c0_226 = arith.constant 0 : index
    %260 = vector.load %arg4[%c3_223, %c7_224, %c0_225, %c0_226] : memref<7x9x16x16xf32, #tpu.memory_space<vmem>>, vector<1x1x16x16xf32>
    %261 = vector.shape_cast %260 : vector<1x1x16x16xf32> to vector<16x16xf32>
    %cst_227 = arith.constant dense<0.000000e+00> : vector<16x256xf32>
    %262 = tpu.matmul %261, %259, %cst_227 {dimension_numbers = #tpu.dot_dimension_numbers<[1], [0], [0], [1], [0, 0, 1, 1], [], []>} : vector<16x16xf32>, vector<16x256xf32>, vector<16x256xf32> -> vector<16x256xf32>
    %263 = arith.addf %258, %262 : vector<16x256xf32>
    %c244_i32_228 = arith.constant 244 : i32
    %264 = tpu.dynamic_rotate %225 by %c244_i32_228 dim 1 : vector<16x256xf32>, i32 -> vector<16x256xf32>
    %c3_229 = arith.constant 3 : index
    %c8_230 = arith.constant 8 : index
    %c0_231 = arith.constant 0 : index
    %c0_232 = arith.constant 0 : index
    %265 = vector.load %arg4[%c3_229, %c8_230, %c0_231, %c0_232] : memref<7x9x16x16xf32, #tpu.memory_space<vmem>>, vector<1x1x16x16xf32>
    %266 = vector.shape_cast %265 : vector<1x1x16x16xf32> to vector<16x16xf32>
    %cst_233 = arith.constant dense<0.000000e+00> : vector<16x256xf32>
    %267 = tpu.matmul %266, %264, %cst_233 {dimension_numbers = #tpu.dot_dimension_numbers<[1], [0], [0], [1], [0, 0, 1, 1], [], []>} : vector<16x16xf32>, vector<16x256xf32>, vector<16x256xf32> -> vector<16x256xf32>
    %268 = arith.addf %263, %267 : vector<16x256xf32>
    %269 = vector.broadcast %1 : vector<1x256xf32> to vector<16x256xf32>
    %270 = arith.mulf %268, %269 : vector<16x256xf32>
    %cst_234 = arith.constant dense<0.000000e+00> : vector<16xf32>
    %271 = vector.multi_reduction <add>, %270, %cst_234 [1] : vector<16x256xf32> to vector<16xf32>
    %272 = vector.shape_cast %271 : vector<16xf32> to vector<16x1xf32>
    %273 = arith.mulf %270, %270 : vector<16x256xf32>
    %cst_235 = arith.constant dense<0.000000e+00> : vector<16xf32>
    %274 = vector.multi_reduction <add>, %273, %cst_235 [1] : vector<16x256xf32> to vector<16xf32>
    %275 = vector.shape_cast %274 : vector<16xf32> to vector<16x1xf32>
    %cst_236 = arith.constant 0.00617283955 : f32
    %276 = vector.broadcast %cst_236 : f32 to vector<16x1xf32>
    %277 = arith.mulf %272, %276 : vector<16x1xf32>
    %cst_237 = arith.constant 0.00617283955 : f32
    %278 = vector.broadcast %cst_237 : f32 to vector<16x1xf32>
    %279 = arith.mulf %275, %278 : vector<16x1xf32>
    %280 = arith.mulf %277, %277 : vector<16x1xf32>
    %281 = arith.subf %279, %280 : vector<16x1xf32>
    %c3_238 = arith.constant 3 : index
    %c0_239 = arith.constant 0 : index
    %c0_240 = arith.constant 0 : index
    %282 = vector.load %arg5[%c3_238, %c0_239, %c0_240] : memref<7x16x1xf32, #tpu.memory_space<vmem>>, vector<1x16x1xf32>
    %283 = vector.shape_cast %282 : vector<1x16x1xf32> to vector<16x1xf32>
    %cst_241 = arith.constant 9.99999974E-6 : f32
    %284 = vector.broadcast %cst_241 : f32 to vector<16x1xf32>
    %285 = arith.addf %281, %284 : vector<16x1xf32>
    %286 = math.rsqrt %285 : vector<16x1xf32>
    %287 = arith.mulf %283, %286 : vector<16x1xf32>
    %c3_242 = arith.constant 3 : index
    %c0_243 = arith.constant 0 : index
    %c0_244 = arith.constant 0 : index
    %288 = vector.load %arg6[%c3_242, %c0_243, %c0_244] : memref<7x16x1xf32, #tpu.memory_space<vmem>>, vector<1x16x1xf32>
    %289 = vector.shape_cast %288 : vector<1x16x1xf32> to vector<16x1xf32>
    %290 = arith.mulf %277, %287 : vector<16x1xf32>
    %291 = arith.subf %289, %290 : vector<16x1xf32>
    %292 = vector.broadcast %287 : vector<16x1xf32> to vector<16x256xf32>
    %293 = arith.mulf %268, %292 : vector<16x256xf32>
    %294 = vector.broadcast %291 : vector<16x1xf32> to vector<16x256xf32>
    %295 = arith.addf %293, %294 : vector<16x256xf32>
    %cst_245 = arith.constant 0.000000e+00 : f32
    %296 = vector.broadcast %cst_245 : f32 to vector<16x256xf32>
    %297 = arith.maximumf %295, %296 : vector<16x256xf32>
    %298 = vector.broadcast %1 : vector<1x256xf32> to vector<16x256xf32>
    %299 = arith.mulf %297, %298 : vector<16x256xf32>
    %c12_i32_246 = arith.constant 12 : i32
    %300 = tpu.dynamic_rotate %299 by %c12_i32_246 dim 1 : vector<16x256xf32>, i32 -> vector<16x256xf32>
    %c4_247 = arith.constant 4 : index
    %c0_248 = arith.constant 0 : index
    %c0_249 = arith.constant 0 : index
    %c0_250 = arith.constant 0 : index
    %301 = vector.load %arg4[%c4_247, %c0_248, %c0_249, %c0_250] : memref<7x9x16x16xf32, #tpu.memory_space<vmem>>, vector<1x1x16x16xf32>
    %302 = vector.shape_cast %301 : vector<1x1x16x16xf32> to vector<16x16xf32>
    %cst_251 = arith.constant dense<0.000000e+00> : vector<16x256xf32>
    %303 = tpu.matmul %302, %300, %cst_251 {dimension_numbers = #tpu.dot_dimension_numbers<[1], [0], [0], [1], [0, 0, 1, 1], [], []>} : vector<16x16xf32>, vector<16x256xf32>, vector<16x256xf32> -> vector<16x256xf32>
    %c11_i32_252 = arith.constant 11 : i32
    %304 = tpu.dynamic_rotate %299 by %c11_i32_252 dim 1 : vector<16x256xf32>, i32 -> vector<16x256xf32>
    %c4_253 = arith.constant 4 : index
    %c1_254 = arith.constant 1 : index
    %c0_255 = arith.constant 0 : index
    %c0_256 = arith.constant 0 : index
    %305 = vector.load %arg4[%c4_253, %c1_254, %c0_255, %c0_256] : memref<7x9x16x16xf32, #tpu.memory_space<vmem>>, vector<1x1x16x16xf32>
    %306 = vector.shape_cast %305 : vector<1x1x16x16xf32> to vector<16x16xf32>
    %cst_257 = arith.constant dense<0.000000e+00> : vector<16x256xf32>
    %307 = tpu.matmul %306, %304, %cst_257 {dimension_numbers = #tpu.dot_dimension_numbers<[1], [0], [0], [1], [0, 0, 1, 1], [], []>} : vector<16x16xf32>, vector<16x256xf32>, vector<16x256xf32> -> vector<16x256xf32>
    %308 = arith.addf %303, %307 : vector<16x256xf32>
    %c10_i32_258 = arith.constant 10 : i32
    %309 = tpu.dynamic_rotate %299 by %c10_i32_258 dim 1 : vector<16x256xf32>, i32 -> vector<16x256xf32>
    %c4_259 = arith.constant 4 : index
    %c2_260 = arith.constant 2 : index
    %c0_261 = arith.constant 0 : index
    %c0_262 = arith.constant 0 : index
    %310 = vector.load %arg4[%c4_259, %c2_260, %c0_261, %c0_262] : memref<7x9x16x16xf32, #tpu.memory_space<vmem>>, vector<1x1x16x16xf32>
    %311 = vector.shape_cast %310 : vector<1x1x16x16xf32> to vector<16x16xf32>
    %cst_263 = arith.constant dense<0.000000e+00> : vector<16x256xf32>
    %312 = tpu.matmul %311, %309, %cst_263 {dimension_numbers = #tpu.dot_dimension_numbers<[1], [0], [0], [1], [0, 0, 1, 1], [], []>} : vector<16x16xf32>, vector<16x256xf32>, vector<16x256xf32> -> vector<16x256xf32>
    %313 = arith.addf %308, %312 : vector<16x256xf32>
    %c1_i32_264 = arith.constant 1 : i32
    %314 = tpu.dynamic_rotate %299 by %c1_i32_264 dim 1 : vector<16x256xf32>, i32 -> vector<16x256xf32>
    %c4_265 = arith.constant 4 : index
    %c3_266 = arith.constant 3 : index
    %c0_267 = arith.constant 0 : index
    %c0_268 = arith.constant 0 : index
    %315 = vector.load %arg4[%c4_265, %c3_266, %c0_267, %c0_268] : memref<7x9x16x16xf32, #tpu.memory_space<vmem>>, vector<1x1x16x16xf32>
    %316 = vector.shape_cast %315 : vector<1x1x16x16xf32> to vector<16x16xf32>
    %cst_269 = arith.constant dense<0.000000e+00> : vector<16x256xf32>
    %317 = tpu.matmul %316, %314, %cst_269 {dimension_numbers = #tpu.dot_dimension_numbers<[1], [0], [0], [1], [0, 0, 1, 1], [], []>} : vector<16x16xf32>, vector<16x256xf32>, vector<16x256xf32> -> vector<16x256xf32>
    %318 = arith.addf %313, %317 : vector<16x256xf32>
    %c4_270 = arith.constant 4 : index
    %c4_271 = arith.constant 4 : index
    %c0_272 = arith.constant 0 : index
    %c0_273 = arith.constant 0 : index
    %319 = vector.load %arg4[%c4_270, %c4_271, %c0_272, %c0_273] : memref<7x9x16x16xf32, #tpu.memory_space<vmem>>, vector<1x1x16x16xf32>
    %320 = vector.shape_cast %319 : vector<1x1x16x16xf32> to vector<16x16xf32>
    %cst_274 = arith.constant dense<0.000000e+00> : vector<16x256xf32>
    %321 = tpu.matmul %320, %299, %cst_274 {dimension_numbers = #tpu.dot_dimension_numbers<[1], [0], [0], [1], [0, 0, 1, 1], [], []>} : vector<16x16xf32>, vector<16x256xf32>, vector<16x256xf32> -> vector<16x256xf32>
    %322 = arith.addf %318, %321 : vector<16x256xf32>
    %c255_i32_275 = arith.constant 255 : i32
    %323 = tpu.dynamic_rotate %299 by %c255_i32_275 dim 1 : vector<16x256xf32>, i32 -> vector<16x256xf32>
    %c4_276 = arith.constant 4 : index
    %c5_277 = arith.constant 5 : index
    %c0_278 = arith.constant 0 : index
    %c0_279 = arith.constant 0 : index
    %324 = vector.load %arg4[%c4_276, %c5_277, %c0_278, %c0_279] : memref<7x9x16x16xf32, #tpu.memory_space<vmem>>, vector<1x1x16x16xf32>
    %325 = vector.shape_cast %324 : vector<1x1x16x16xf32> to vector<16x16xf32>
    %cst_280 = arith.constant dense<0.000000e+00> : vector<16x256xf32>
    %326 = tpu.matmul %325, %323, %cst_280 {dimension_numbers = #tpu.dot_dimension_numbers<[1], [0], [0], [1], [0, 0, 1, 1], [], []>} : vector<16x16xf32>, vector<16x256xf32>, vector<16x256xf32> -> vector<16x256xf32>
    %327 = arith.addf %322, %326 : vector<16x256xf32>
    %c246_i32_281 = arith.constant 246 : i32
    %328 = tpu.dynamic_rotate %299 by %c246_i32_281 dim 1 : vector<16x256xf32>, i32 -> vector<16x256xf32>
    %c4_282 = arith.constant 4 : index
    %c6_283 = arith.constant 6 : index
    %c0_284 = arith.constant 0 : index
    %c0_285 = arith.constant 0 : index
    %329 = vector.load %arg4[%c4_282, %c6_283, %c0_284, %c0_285] : memref<7x9x16x16xf32, #tpu.memory_space<vmem>>, vector<1x1x16x16xf32>
    %330 = vector.shape_cast %329 : vector<1x1x16x16xf32> to vector<16x16xf32>
    %cst_286 = arith.constant dense<0.000000e+00> : vector<16x256xf32>
    %331 = tpu.matmul %330, %328, %cst_286 {dimension_numbers = #tpu.dot_dimension_numbers<[1], [0], [0], [1], [0, 0, 1, 1], [], []>} : vector<16x16xf32>, vector<16x256xf32>, vector<16x256xf32> -> vector<16x256xf32>
    %332 = arith.addf %327, %331 : vector<16x256xf32>
    %c245_i32_287 = arith.constant 245 : i32
    %333 = tpu.dynamic_rotate %299 by %c245_i32_287 dim 1 : vector<16x256xf32>, i32 -> vector<16x256xf32>
    %c4_288 = arith.constant 4 : index
    %c7_289 = arith.constant 7 : index
    %c0_290 = arith.constant 0 : index
    %c0_291 = arith.constant 0 : index
    %334 = vector.load %arg4[%c4_288, %c7_289, %c0_290, %c0_291] : memref<7x9x16x16xf32, #tpu.memory_space<vmem>>, vector<1x1x16x16xf32>
    %335 = vector.shape_cast %334 : vector<1x1x16x16xf32> to vector<16x16xf32>
    %cst_292 = arith.constant dense<0.000000e+00> : vector<16x256xf32>
    %336 = tpu.matmul %335, %333, %cst_292 {dimension_numbers = #tpu.dot_dimension_numbers<[1], [0], [0], [1], [0, 0, 1, 1], [], []>} : vector<16x16xf32>, vector<16x256xf32>, vector<16x256xf32> -> vector<16x256xf32>
    %337 = arith.addf %332, %336 : vector<16x256xf32>
    %c244_i32_293 = arith.constant 244 : i32
    %338 = tpu.dynamic_rotate %299 by %c244_i32_293 dim 1 : vector<16x256xf32>, i32 -> vector<16x256xf32>
    %c4_294 = arith.constant 4 : index
    %c8_295 = arith.constant 8 : index
    %c0_296 = arith.constant 0 : index
    %c0_297 = arith.constant 0 : index
    %339 = vector.load %arg4[%c4_294, %c8_295, %c0_296, %c0_297] : memref<7x9x16x16xf32, #tpu.memory_space<vmem>>, vector<1x1x16x16xf32>
    %340 = vector.shape_cast %339 : vector<1x1x16x16xf32> to vector<16x16xf32>
    %cst_298 = arith.constant dense<0.000000e+00> : vector<16x256xf32>
    %341 = tpu.matmul %340, %338, %cst_298 {dimension_numbers = #tpu.dot_dimension_numbers<[1], [0], [0], [1], [0, 0, 1, 1], [], []>} : vector<16x16xf32>, vector<16x256xf32>, vector<16x256xf32> -> vector<16x256xf32>
    %342 = arith.addf %337, %341 : vector<16x256xf32>
    %343 = vector.broadcast %1 : vector<1x256xf32> to vector<16x256xf32>
    %344 = arith.mulf %342, %343 : vector<16x256xf32>
    %cst_299 = arith.constant dense<0.000000e+00> : vector<16xf32>
    %345 = vector.multi_reduction <add>, %344, %cst_299 [1] : vector<16x256xf32> to vector<16xf32>
    %346 = vector.shape_cast %345 : vector<16xf32> to vector<16x1xf32>
    %347 = arith.mulf %344, %344 : vector<16x256xf32>
    %cst_300 = arith.constant dense<0.000000e+00> : vector<16xf32>
    %348 = vector.multi_reduction <add>, %347, %cst_300 [1] : vector<16x256xf32> to vector<16xf32>
    %349 = vector.shape_cast %348 : vector<16xf32> to vector<16x1xf32>
    %cst_301 = arith.constant 0.00617283955 : f32
    %350 = vector.broadcast %cst_301 : f32 to vector<16x1xf32>
    %351 = arith.mulf %346, %350 : vector<16x1xf32>
    %cst_302 = arith.constant 0.00617283955 : f32
    %352 = vector.broadcast %cst_302 : f32 to vector<16x1xf32>
    %353 = arith.mulf %349, %352 : vector<16x1xf32>
    %354 = arith.mulf %351, %351 : vector<16x1xf32>
    %355 = arith.subf %353, %354 : vector<16x1xf32>
    %c4_303 = arith.constant 4 : index
    %c0_304 = arith.constant 0 : index
    %c0_305 = arith.constant 0 : index
    %356 = vector.load %arg5[%c4_303, %c0_304, %c0_305] : memref<7x16x1xf32, #tpu.memory_space<vmem>>, vector<1x16x1xf32>
    %357 = vector.shape_cast %356 : vector<1x16x1xf32> to vector<16x1xf32>
    %cst_306 = arith.constant 9.99999974E-6 : f32
    %358 = vector.broadcast %cst_306 : f32 to vector<16x1xf32>
    %359 = arith.addf %355, %358 : vector<16x1xf32>
    %360 = math.rsqrt %359 : vector<16x1xf32>
    %361 = arith.mulf %357, %360 : vector<16x1xf32>
    %c4_307 = arith.constant 4 : index
    %c0_308 = arith.constant 0 : index
    %c0_309 = arith.constant 0 : index
    %362 = vector.load %arg6[%c4_307, %c0_308, %c0_309] : memref<7x16x1xf32, #tpu.memory_space<vmem>>, vector<1x16x1xf32>
    %363 = vector.shape_cast %362 : vector<1x16x1xf32> to vector<16x1xf32>
    %364 = arith.mulf %351, %361 : vector<16x1xf32>
    %365 = arith.subf %363, %364 : vector<16x1xf32>
    %366 = vector.broadcast %361 : vector<16x1xf32> to vector<16x256xf32>
    %367 = arith.mulf %342, %366 : vector<16x256xf32>
    %368 = vector.broadcast %365 : vector<16x1xf32> to vector<16x256xf32>
    %369 = arith.addf %367, %368 : vector<16x256xf32>
    %370 = arith.addf %369, %225 : vector<16x256xf32>
    %cst_310 = arith.constant 0.000000e+00 : f32
    %371 = vector.broadcast %cst_310 : f32 to vector<16x256xf32>
    %372 = arith.maximumf %370, %371 : vector<16x256xf32>
    %373 = vector.broadcast %1 : vector<1x256xf32> to vector<16x256xf32>
    %374 = arith.mulf %372, %373 : vector<16x256xf32>
    %c12_i32_311 = arith.constant 12 : i32
    %375 = tpu.dynamic_rotate %374 by %c12_i32_311 dim 1 : vector<16x256xf32>, i32 -> vector<16x256xf32>
    %c5_312 = arith.constant 5 : index
    %c0_313 = arith.constant 0 : index
    %c0_314 = arith.constant 0 : index
    %c0_315 = arith.constant 0 : index
    %376 = vector.load %arg4[%c5_312, %c0_313, %c0_314, %c0_315] : memref<7x9x16x16xf32, #tpu.memory_space<vmem>>, vector<1x1x16x16xf32>
    %377 = vector.shape_cast %376 : vector<1x1x16x16xf32> to vector<16x16xf32>
    %cst_316 = arith.constant dense<0.000000e+00> : vector<16x256xf32>
    %378 = tpu.matmul %377, %375, %cst_316 {dimension_numbers = #tpu.dot_dimension_numbers<[1], [0], [0], [1], [0, 0, 1, 1], [], []>} : vector<16x16xf32>, vector<16x256xf32>, vector<16x256xf32> -> vector<16x256xf32>
    %c11_i32_317 = arith.constant 11 : i32
    %379 = tpu.dynamic_rotate %374 by %c11_i32_317 dim 1 : vector<16x256xf32>, i32 -> vector<16x256xf32>
    %c5_318 = arith.constant 5 : index
    %c1_319 = arith.constant 1 : index
    %c0_320 = arith.constant 0 : index
    %c0_321 = arith.constant 0 : index
    %380 = vector.load %arg4[%c5_318, %c1_319, %c0_320, %c0_321] : memref<7x9x16x16xf32, #tpu.memory_space<vmem>>, vector<1x1x16x16xf32>
    %381 = vector.shape_cast %380 : vector<1x1x16x16xf32> to vector<16x16xf32>
    %cst_322 = arith.constant dense<0.000000e+00> : vector<16x256xf32>
    %382 = tpu.matmul %381, %379, %cst_322 {dimension_numbers = #tpu.dot_dimension_numbers<[1], [0], [0], [1], [0, 0, 1, 1], [], []>} : vector<16x16xf32>, vector<16x256xf32>, vector<16x256xf32> -> vector<16x256xf32>
    %383 = arith.addf %378, %382 : vector<16x256xf32>
    %c10_i32_323 = arith.constant 10 : i32
    %384 = tpu.dynamic_rotate %374 by %c10_i32_323 dim 1 : vector<16x256xf32>, i32 -> vector<16x256xf32>
    %c5_324 = arith.constant 5 : index
    %c2_325 = arith.constant 2 : index
    %c0_326 = arith.constant 0 : index
    %c0_327 = arith.constant 0 : index
    %385 = vector.load %arg4[%c5_324, %c2_325, %c0_326, %c0_327] : memref<7x9x16x16xf32, #tpu.memory_space<vmem>>, vector<1x1x16x16xf32>
    %386 = vector.shape_cast %385 : vector<1x1x16x16xf32> to vector<16x16xf32>
    %cst_328 = arith.constant dense<0.000000e+00> : vector<16x256xf32>
    %387 = tpu.matmul %386, %384, %cst_328 {dimension_numbers = #tpu.dot_dimension_numbers<[1], [0], [0], [1], [0, 0, 1, 1], [], []>} : vector<16x16xf32>, vector<16x256xf32>, vector<16x256xf32> -> vector<16x256xf32>
    %388 = arith.addf %383, %387 : vector<16x256xf32>
    %c1_i32_329 = arith.constant 1 : i32
    %389 = tpu.dynamic_rotate %374 by %c1_i32_329 dim 1 : vector<16x256xf32>, i32 -> vector<16x256xf32>
    %c5_330 = arith.constant 5 : index
    %c3_331 = arith.constant 3 : index
    %c0_332 = arith.constant 0 : index
    %c0_333 = arith.constant 0 : index
    %390 = vector.load %arg4[%c5_330, %c3_331, %c0_332, %c0_333] : memref<7x9x16x16xf32, #tpu.memory_space<vmem>>, vector<1x1x16x16xf32>
    %391 = vector.shape_cast %390 : vector<1x1x16x16xf32> to vector<16x16xf32>
    %cst_334 = arith.constant dense<0.000000e+00> : vector<16x256xf32>
    %392 = tpu.matmul %391, %389, %cst_334 {dimension_numbers = #tpu.dot_dimension_numbers<[1], [0], [0], [1], [0, 0, 1, 1], [], []>} : vector<16x16xf32>, vector<16x256xf32>, vector<16x256xf32> -> vector<16x256xf32>
    %393 = arith.addf %388, %392 : vector<16x256xf32>
    %c5_335 = arith.constant 5 : index
    %c4_336 = arith.constant 4 : index
    %c0_337 = arith.constant 0 : index
    %c0_338 = arith.constant 0 : index
    %394 = vector.load %arg4[%c5_335, %c4_336, %c0_337, %c0_338] : memref<7x9x16x16xf32, #tpu.memory_space<vmem>>, vector<1x1x16x16xf32>
    %395 = vector.shape_cast %394 : vector<1x1x16x16xf32> to vector<16x16xf32>
    %cst_339 = arith.constant dense<0.000000e+00> : vector<16x256xf32>
    %396 = tpu.matmul %395, %374, %cst_339 {dimension_numbers = #tpu.dot_dimension_numbers<[1], [0], [0], [1], [0, 0, 1, 1], [], []>} : vector<16x16xf32>, vector<16x256xf32>, vector<16x256xf32> -> vector<16x256xf32>
    %397 = arith.addf %393, %396 : vector<16x256xf32>
    %c255_i32_340 = arith.constant 255 : i32
    %398 = tpu.dynamic_rotate %374 by %c255_i32_340 dim 1 : vector<16x256xf32>, i32 -> vector<16x256xf32>
    %c5_341 = arith.constant 5 : index
    %c5_342 = arith.constant 5 : index
    %c0_343 = arith.constant 0 : index
    %c0_344 = arith.constant 0 : index
    %399 = vector.load %arg4[%c5_341, %c5_342, %c0_343, %c0_344] : memref<7x9x16x16xf32, #tpu.memory_space<vmem>>, vector<1x1x16x16xf32>
    %400 = vector.shape_cast %399 : vector<1x1x16x16xf32> to vector<16x16xf32>
    %cst_345 = arith.constant dense<0.000000e+00> : vector<16x256xf32>
    %401 = tpu.matmul %400, %398, %cst_345 {dimension_numbers = #tpu.dot_dimension_numbers<[1], [0], [0], [1], [0, 0, 1, 1], [], []>} : vector<16x16xf32>, vector<16x256xf32>, vector<16x256xf32> -> vector<16x256xf32>
    %402 = arith.addf %397, %401 : vector<16x256xf32>
    %c246_i32_346 = arith.constant 246 : i32
    %403 = tpu.dynamic_rotate %374 by %c246_i32_346 dim 1 : vector<16x256xf32>, i32 -> vector<16x256xf32>
    %c5_347 = arith.constant 5 : index
    %c6_348 = arith.constant 6 : index
    %c0_349 = arith.constant 0 : index
    %c0_350 = arith.constant 0 : index
    %404 = vector.load %arg4[%c5_347, %c6_348, %c0_349, %c0_350] : memref<7x9x16x16xf32, #tpu.memory_space<vmem>>, vector<1x1x16x16xf32>
    %405 = vector.shape_cast %404 : vector<1x1x16x16xf32> to vector<16x16xf32>
    %cst_351 = arith.constant dense<0.000000e+00> : vector<16x256xf32>
    %406 = tpu.matmul %405, %403, %cst_351 {dimension_numbers = #tpu.dot_dimension_numbers<[1], [0], [0], [1], [0, 0, 1, 1], [], []>} : vector<16x16xf32>, vector<16x256xf32>, vector<16x256xf32> -> vector<16x256xf32>
    %407 = arith.addf %402, %406 : vector<16x256xf32>
    %c245_i32_352 = arith.constant 245 : i32
    %408 = tpu.dynamic_rotate %374 by %c245_i32_352 dim 1 : vector<16x256xf32>, i32 -> vector<16x256xf32>
    %c5_353 = arith.constant 5 : index
    %c7_354 = arith.constant 7 : index
    %c0_355 = arith.constant 0 : index
    %c0_356 = arith.constant 0 : index
    %409 = vector.load %arg4[%c5_353, %c7_354, %c0_355, %c0_356] : memref<7x9x16x16xf32, #tpu.memory_space<vmem>>, vector<1x1x16x16xf32>
    %410 = vector.shape_cast %409 : vector<1x1x16x16xf32> to vector<16x16xf32>
    %cst_357 = arith.constant dense<0.000000e+00> : vector<16x256xf32>
    %411 = tpu.matmul %410, %408, %cst_357 {dimension_numbers = #tpu.dot_dimension_numbers<[1], [0], [0], [1], [0, 0, 1, 1], [], []>} : vector<16x16xf32>, vector<16x256xf32>, vector<16x256xf32> -> vector<16x256xf32>
    %412 = arith.addf %407, %411 : vector<16x256xf32>
    %c244_i32_358 = arith.constant 244 : i32
    %413 = tpu.dynamic_rotate %374 by %c244_i32_358 dim 1 : vector<16x256xf32>, i32 -> vector<16x256xf32>
    %c5_359 = arith.constant 5 : index
    %c8_360 = arith.constant 8 : index
    %c0_361 = arith.constant 0 : index
    %c0_362 = arith.constant 0 : index
    %414 = vector.load %arg4[%c5_359, %c8_360, %c0_361, %c0_362] : memref<7x9x16x16xf32, #tpu.memory_space<vmem>>, vector<1x1x16x16xf32>
    %415 = vector.shape_cast %414 : vector<1x1x16x16xf32> to vector<16x16xf32>
    %cst_363 = arith.constant dense<0.000000e+00> : vector<16x256xf32>
    %416 = tpu.matmul %415, %413, %cst_363 {dimension_numbers = #tpu.dot_dimension_numbers<[1], [0], [0], [1], [0, 0, 1, 1], [], []>} : vector<16x16xf32>, vector<16x256xf32>, vector<16x256xf32> -> vector<16x256xf32>
    %417 = arith.addf %412, %416 : vector<16x256xf32>
    %418 = vector.broadcast %1 : vector<1x256xf32> to vector<16x256xf32>
    %419 = arith.mulf %417, %418 : vector<16x256xf32>
    %cst_364 = arith.constant dense<0.000000e+00> : vector<16xf32>
    %420 = vector.multi_reduction <add>, %419, %cst_364 [1] : vector<16x256xf32> to vector<16xf32>
    %421 = vector.shape_cast %420 : vector<16xf32> to vector<16x1xf32>
    %422 = arith.mulf %419, %419 : vector<16x256xf32>
    %cst_365 = arith.constant dense<0.000000e+00> : vector<16xf32>
    %423 = vector.multi_reduction <add>, %422, %cst_365 [1] : vector<16x256xf32> to vector<16xf32>
    %424 = vector.shape_cast %423 : vector<16xf32> to vector<16x1xf32>
    %cst_366 = arith.constant 0.00617283955 : f32
    %425 = vector.broadcast %cst_366 : f32 to vector<16x1xf32>
    %426 = arith.mulf %421, %425 : vector<16x1xf32>
    %cst_367 = arith.constant 0.00617283955 : f32
    %427 = vector.broadcast %cst_367 : f32 to vector<16x1xf32>
    %428 = arith.mulf %424, %427 : vector<16x1xf32>
    %429 = arith.mulf %426, %426 : vector<16x1xf32>
    %430 = arith.subf %428, %429 : vector<16x1xf32>
    %c5_368 = arith.constant 5 : index
    %c0_369 = arith.constant 0 : index
    %c0_370 = arith.constant 0 : index
    %431 = vector.load %arg5[%c5_368, %c0_369, %c0_370] : memref<7x16x1xf32, #tpu.memory_space<vmem>>, vector<1x16x1xf32>
    %432 = vector.shape_cast %431 : vector<1x16x1xf32> to vector<16x1xf32>
    %cst_371 = arith.constant 9.99999974E-6 : f32
    %433 = vector.broadcast %cst_371 : f32 to vector<16x1xf32>
    %434 = arith.addf %430, %433 : vector<16x1xf32>
    %435 = math.rsqrt %434 : vector<16x1xf32>
    %436 = arith.mulf %432, %435 : vector<16x1xf32>
    %c5_372 = arith.constant 5 : index
    %c0_373 = arith.constant 0 : index
    %c0_374 = arith.constant 0 : index
    %437 = vector.load %arg6[%c5_372, %c0_373, %c0_374] : memref<7x16x1xf32, #tpu.memory_space<vmem>>, vector<1x16x1xf32>
    %438 = vector.shape_cast %437 : vector<1x16x1xf32> to vector<16x1xf32>
    %439 = arith.mulf %426, %436 : vector<16x1xf32>
    %440 = arith.subf %438, %439 : vector<16x1xf32>
    %441 = vector.broadcast %436 : vector<16x1xf32> to vector<16x256xf32>
    %442 = arith.mulf %417, %441 : vector<16x256xf32>
    %443 = vector.broadcast %440 : vector<16x1xf32> to vector<16x256xf32>
    %444 = arith.addf %442, %443 : vector<16x256xf32>
    %cst_375 = arith.constant 0.000000e+00 : f32
    %445 = vector.broadcast %cst_375 : f32 to vector<16x256xf32>
    %446 = arith.maximumf %444, %445 : vector<16x256xf32>
    %447 = vector.broadcast %1 : vector<1x256xf32> to vector<16x256xf32>
    %448 = arith.mulf %446, %447 : vector<16x256xf32>
    %c12_i32_376 = arith.constant 12 : i32
    %449 = tpu.dynamic_rotate %448 by %c12_i32_376 dim 1 : vector<16x256xf32>, i32 -> vector<16x256xf32>
    %c6_377 = arith.constant 6 : index
    %c0_378 = arith.constant 0 : index
    %c0_379 = arith.constant 0 : index
    %c0_380 = arith.constant 0 : index
    %450 = vector.load %arg4[%c6_377, %c0_378, %c0_379, %c0_380] : memref<7x9x16x16xf32, #tpu.memory_space<vmem>>, vector<1x1x16x16xf32>
    %451 = vector.shape_cast %450 : vector<1x1x16x16xf32> to vector<16x16xf32>
    %cst_381 = arith.constant dense<0.000000e+00> : vector<16x256xf32>
    %452 = tpu.matmul %451, %449, %cst_381 {dimension_numbers = #tpu.dot_dimension_numbers<[1], [0], [0], [1], [0, 0, 1, 1], [], []>} : vector<16x16xf32>, vector<16x256xf32>, vector<16x256xf32> -> vector<16x256xf32>
    %c11_i32_382 = arith.constant 11 : i32
    %453 = tpu.dynamic_rotate %448 by %c11_i32_382 dim 1 : vector<16x256xf32>, i32 -> vector<16x256xf32>
    %c6_383 = arith.constant 6 : index
    %c1_384 = arith.constant 1 : index
    %c0_385 = arith.constant 0 : index
    %c0_386 = arith.constant 0 : index
    %454 = vector.load %arg4[%c6_383, %c1_384, %c0_385, %c0_386] : memref<7x9x16x16xf32, #tpu.memory_space<vmem>>, vector<1x1x16x16xf32>
    %455 = vector.shape_cast %454 : vector<1x1x16x16xf32> to vector<16x16xf32>
    %cst_387 = arith.constant dense<0.000000e+00> : vector<16x256xf32>
    %456 = tpu.matmul %455, %453, %cst_387 {dimension_numbers = #tpu.dot_dimension_numbers<[1], [0], [0], [1], [0, 0, 1, 1], [], []>} : vector<16x16xf32>, vector<16x256xf32>, vector<16x256xf32> -> vector<16x256xf32>
    %457 = arith.addf %452, %456 : vector<16x256xf32>
    %c10_i32_388 = arith.constant 10 : i32
    %458 = tpu.dynamic_rotate %448 by %c10_i32_388 dim 1 : vector<16x256xf32>, i32 -> vector<16x256xf32>
    %c6_389 = arith.constant 6 : index
    %c2_390 = arith.constant 2 : index
    %c0_391 = arith.constant 0 : index
    %c0_392 = arith.constant 0 : index
    %459 = vector.load %arg4[%c6_389, %c2_390, %c0_391, %c0_392] : memref<7x9x16x16xf32, #tpu.memory_space<vmem>>, vector<1x1x16x16xf32>
    %460 = vector.shape_cast %459 : vector<1x1x16x16xf32> to vector<16x16xf32>
    %cst_393 = arith.constant dense<0.000000e+00> : vector<16x256xf32>
    %461 = tpu.matmul %460, %458, %cst_393 {dimension_numbers = #tpu.dot_dimension_numbers<[1], [0], [0], [1], [0, 0, 1, 1], [], []>} : vector<16x16xf32>, vector<16x256xf32>, vector<16x256xf32> -> vector<16x256xf32>
    %462 = arith.addf %457, %461 : vector<16x256xf32>
    %c1_i32_394 = arith.constant 1 : i32
    %463 = tpu.dynamic_rotate %448 by %c1_i32_394 dim 1 : vector<16x256xf32>, i32 -> vector<16x256xf32>
    %c6_395 = arith.constant 6 : index
    %c3_396 = arith.constant 3 : index
    %c0_397 = arith.constant 0 : index
    %c0_398 = arith.constant 0 : index
    %464 = vector.load %arg4[%c6_395, %c3_396, %c0_397, %c0_398] : memref<7x9x16x16xf32, #tpu.memory_space<vmem>>, vector<1x1x16x16xf32>
    %465 = vector.shape_cast %464 : vector<1x1x16x16xf32> to vector<16x16xf32>
    %cst_399 = arith.constant dense<0.000000e+00> : vector<16x256xf32>
    %466 = tpu.matmul %465, %463, %cst_399 {dimension_numbers = #tpu.dot_dimension_numbers<[1], [0], [0], [1], [0, 0, 1, 1], [], []>} : vector<16x16xf32>, vector<16x256xf32>, vector<16x256xf32> -> vector<16x256xf32>
    %467 = arith.addf %462, %466 : vector<16x256xf32>
    %c6_400 = arith.constant 6 : index
    %c4_401 = arith.constant 4 : index
    %c0_402 = arith.constant 0 : index
    %c0_403 = arith.constant 0 : index
    %468 = vector.load %arg4[%c6_400, %c4_401, %c0_402, %c0_403] : memref<7x9x16x16xf32, #tpu.memory_space<vmem>>, vector<1x1x16x16xf32>
    %469 = vector.shape_cast %468 : vector<1x1x16x16xf32> to vector<16x16xf32>
    %cst_404 = arith.constant dense<0.000000e+00> : vector<16x256xf32>
    %470 = tpu.matmul %469, %448, %cst_404 {dimension_numbers = #tpu.dot_dimension_numbers<[1], [0], [0], [1], [0, 0, 1, 1], [], []>} : vector<16x16xf32>, vector<16x256xf32>, vector<16x256xf32> -> vector<16x256xf32>
    %471 = arith.addf %467, %470 : vector<16x256xf32>
    %c255_i32_405 = arith.constant 255 : i32
    %472 = tpu.dynamic_rotate %448 by %c255_i32_405 dim 1 : vector<16x256xf32>, i32 -> vector<16x256xf32>
    %c6_406 = arith.constant 6 : index
    %c5_407 = arith.constant 5 : index
    %c0_408 = arith.constant 0 : index
    %c0_409 = arith.constant 0 : index
    %473 = vector.load %arg4[%c6_406, %c5_407, %c0_408, %c0_409] : memref<7x9x16x16xf32, #tpu.memory_space<vmem>>, vector<1x1x16x16xf32>
    %474 = vector.shape_cast %473 : vector<1x1x16x16xf32> to vector<16x16xf32>
    %cst_410 = arith.constant dense<0.000000e+00> : vector<16x256xf32>
    %475 = tpu.matmul %474, %472, %cst_410 {dimension_numbers = #tpu.dot_dimension_numbers<[1], [0], [0], [1], [0, 0, 1, 1], [], []>} : vector<16x16xf32>, vector<16x256xf32>, vector<16x256xf32> -> vector<16x256xf32>
    %476 = arith.addf %471, %475 : vector<16x256xf32>
    %c246_i32_411 = arith.constant 246 : i32
    %477 = tpu.dynamic_rotate %448 by %c246_i32_411 dim 1 : vector<16x256xf32>, i32 -> vector<16x256xf32>
    %c6_412 = arith.constant 6 : index
    %c6_413 = arith.constant 6 : index
    %c0_414 = arith.constant 0 : index
    %c0_415 = arith.constant 0 : index
    %478 = vector.load %arg4[%c6_412, %c6_413, %c0_414, %c0_415] : memref<7x9x16x16xf32, #tpu.memory_space<vmem>>, vector<1x1x16x16xf32>
    %479 = vector.shape_cast %478 : vector<1x1x16x16xf32> to vector<16x16xf32>
    %cst_416 = arith.constant dense<0.000000e+00> : vector<16x256xf32>
    %480 = tpu.matmul %479, %477, %cst_416 {dimension_numbers = #tpu.dot_dimension_numbers<[1], [0], [0], [1], [0, 0, 1, 1], [], []>} : vector<16x16xf32>, vector<16x256xf32>, vector<16x256xf32> -> vector<16x256xf32>
    %481 = arith.addf %476, %480 : vector<16x256xf32>
    %c245_i32_417 = arith.constant 245 : i32
    %482 = tpu.dynamic_rotate %448 by %c245_i32_417 dim 1 : vector<16x256xf32>, i32 -> vector<16x256xf32>
    %c6_418 = arith.constant 6 : index
    %c7_419 = arith.constant 7 : index
    %c0_420 = arith.constant 0 : index
    %c0_421 = arith.constant 0 : index
    %483 = vector.load %arg4[%c6_418, %c7_419, %c0_420, %c0_421] : memref<7x9x16x16xf32, #tpu.memory_space<vmem>>, vector<1x1x16x16xf32>
    %484 = vector.shape_cast %483 : vector<1x1x16x16xf32> to vector<16x16xf32>
    %cst_422 = arith.constant dense<0.000000e+00> : vector<16x256xf32>
    %485 = tpu.matmul %484, %482, %cst_422 {dimension_numbers = #tpu.dot_dimension_numbers<[1], [0], [0], [1], [0, 0, 1, 1], [], []>} : vector<16x16xf32>, vector<16x256xf32>, vector<16x256xf32> -> vector<16x256xf32>
    %486 = arith.addf %481, %485 : vector<16x256xf32>
    %c244_i32_423 = arith.constant 244 : i32
    %487 = tpu.dynamic_rotate %448 by %c244_i32_423 dim 1 : vector<16x256xf32>, i32 -> vector<16x256xf32>
    %c6_424 = arith.constant 6 : index
    %c8_425 = arith.constant 8 : index
    %c0_426 = arith.constant 0 : index
    %c0_427 = arith.constant 0 : index
    %488 = vector.load %arg4[%c6_424, %c8_425, %c0_426, %c0_427] : memref<7x9x16x16xf32, #tpu.memory_space<vmem>>, vector<1x1x16x16xf32>
    %489 = vector.shape_cast %488 : vector<1x1x16x16xf32> to vector<16x16xf32>
    %cst_428 = arith.constant dense<0.000000e+00> : vector<16x256xf32>
    %490 = tpu.matmul %489, %487, %cst_428 {dimension_numbers = #tpu.dot_dimension_numbers<[1], [0], [0], [1], [0, 0, 1, 1], [], []>} : vector<16x16xf32>, vector<16x256xf32>, vector<16x256xf32> -> vector<16x256xf32>
    %491 = arith.addf %486, %490 : vector<16x256xf32>
    %492 = vector.broadcast %1 : vector<1x256xf32> to vector<16x256xf32>
    %493 = arith.mulf %491, %492 : vector<16x256xf32>
    %cst_429 = arith.constant dense<0.000000e+00> : vector<16xf32>
    %494 = vector.multi_reduction <add>, %493, %cst_429 [1] : vector<16x256xf32> to vector<16xf32>
    %495 = vector.shape_cast %494 : vector<16xf32> to vector<16x1xf32>
    %496 = arith.mulf %493, %493 : vector<16x256xf32>
    %cst_430 = arith.constant dense<0.000000e+00> : vector<16xf32>
    %497 = vector.multi_reduction <add>, %496, %cst_430 [1] : vector<16x256xf32> to vector<16xf32>
    %498 = vector.shape_cast %497 : vector<16xf32> to vector<16x1xf32>
    %cst_431 = arith.constant 0.00617283955 : f32
    %499 = vector.broadcast %cst_431 : f32 to vector<16x1xf32>
    %500 = arith.mulf %495, %499 : vector<16x1xf32>
    %cst_432 = arith.constant 0.00617283955 : f32
    %501 = vector.broadcast %cst_432 : f32 to vector<16x1xf32>
    %502 = arith.mulf %498, %501 : vector<16x1xf32>
    %503 = arith.mulf %500, %500 : vector<16x1xf32>
    %504 = arith.subf %502, %503 : vector<16x1xf32>
    %c6_433 = arith.constant 6 : index
    %c0_434 = arith.constant 0 : index
    %c0_435 = arith.constant 0 : index
    %505 = vector.load %arg5[%c6_433, %c0_434, %c0_435] : memref<7x16x1xf32, #tpu.memory_space<vmem>>, vector<1x16x1xf32>
    %506 = vector.shape_cast %505 : vector<1x16x1xf32> to vector<16x1xf32>
    %cst_436 = arith.constant 9.99999974E-6 : f32
    %507 = vector.broadcast %cst_436 : f32 to vector<16x1xf32>
    %508 = arith.addf %504, %507 : vector<16x1xf32>
    %509 = math.rsqrt %508 : vector<16x1xf32>
    %510 = arith.mulf %506, %509 : vector<16x1xf32>
    %c6_437 = arith.constant 6 : index
    %c0_438 = arith.constant 0 : index
    %c0_439 = arith.constant 0 : index
    %511 = vector.load %arg6[%c6_437, %c0_438, %c0_439] : memref<7x16x1xf32, #tpu.memory_space<vmem>>, vector<1x16x1xf32>
    %512 = vector.shape_cast %511 : vector<1x16x1xf32> to vector<16x1xf32>
    %513 = arith.mulf %500, %510 : vector<16x1xf32>
    %514 = arith.subf %512, %513 : vector<16x1xf32>
    %515 = vector.broadcast %510 : vector<16x1xf32> to vector<16x256xf32>
    %516 = arith.mulf %491, %515 : vector<16x256xf32>
    %517 = vector.broadcast %514 : vector<16x1xf32> to vector<16x256xf32>
    %518 = arith.addf %516, %517 : vector<16x256xf32>
    %519 = arith.addf %518, %374 : vector<16x256xf32>
    %cst_440 = arith.constant 0.000000e+00 : f32
    %520 = vector.broadcast %cst_440 : f32 to vector<16x256xf32>
    %521 = arith.maximumf %519, %520 : vector<16x256xf32>
    %522 = vector.broadcast %1 : vector<1x256xf32> to vector<16x256xf32>
    %523 = arith.mulf %521, %522 : vector<16x256xf32>
    %c0_441 = arith.constant 0 : index
    %c0_442 = arith.constant 0 : index
    %524 = vector.load %arg10[%c0_441, %c0_442] : memref<16x256xf32, #tpu.memory_space<vmem>>, vector<16x256xf32>
    tpu.vector_store %arg10[%c0_441, %c0_442], %523 {strides = array<i32>} : memref<16x256xf32, #tpu.memory_space<vmem>>, vector<16x256xf32>,
    %c0_443 = arith.constant 0 : index
    %c0_444 = arith.constant 0 : index
    %525 = vector.load %arg2[%c0_443, %c0_444] : memref<2x896xf32, #tpu.memory_space<vmem>>, vector<2x896xf32>
    %cst_445 = arith.constant 0.000000e+00 : f32
    %526 = vector.broadcast %cst_445 : f32 to vector<2x896xf32>
    %527 = arith.maximumf %525, %526 : vector<2x896xf32>
    %c0_446 = arith.constant 0 : index
    %c0_447 = arith.constant 0 : index
    %528 = vector.load %arg7[%c0_446, %c0_447] : memref<896x128xf32, #tpu.memory_space<vmem>>, vector<896x128xf32>
    %cst_448 = arith.constant dense<0.000000e+00> : vector<2x128xf32>
    %529 = tpu.matmul %527, %528, %cst_448 {dimension_numbers = #tpu.dot_dimension_numbers<[1], [0], [0], [1], [0, 0, 1, 1], [], []>} : vector<2x896xf32>, vector<896x128xf32>, vector<2x128xf32> -> vector<2x128xf32>
    %c0_449 = arith.constant 0 : index
    %c0_450 = arith.constant 0 : index
    %530 = vector.load %arg8[%c0_449, %c0_450] : memref<1x128xf32, #tpu.memory_space<vmem>>, vector<1x128xf32>
    %531 = vector.broadcast %530 : vector<1x128xf32> to vector<2x128xf32>
    %532 = arith.addf %529, %531 : vector<2x128xf32>
    %cst_451 = arith.constant dense<0xFF800000> : vector<2xf32>
    %533 = vector.multi_reduction <maximumf>, %532, %cst_451 [1] : vector<2x128xf32> to vector<2xf32>
    %534 = vector.shape_cast %533 : vector<2xf32> to vector<2x1xf32>
    %535 = vector.broadcast %534 : vector<2x1xf32> to vector<2x128xf32>
    %536 = arith.subf %532, %535 : vector<2x128xf32>
    %537 = math.exp %536 : vector<2x128xf32>
    %cst_452 = arith.constant dense<0.000000e+00> : vector<2xf32>
    %538 = vector.multi_reduction <add>, %537, %cst_452 [1] : vector<2x128xf32> to vector<2xf32>
    %539 = vector.shape_cast %538 : vector<2xf32> to vector<2x1xf32>
    %540 = vector.broadcast %539 : vector<2x1xf32> to vector<2x128xf32>
    %541 = arith.divf %537, %540 : vector<2x128xf32>
    %c0_453 = arith.constant 0 : index
    %c0_454 = arith.constant 0 : index
    %542 = vector.load %arg9[%c0_453, %c0_454] : memref<2x128xf32, #tpu.memory_space<vmem>>, vector<2x128xf32>
    tpu.vector_store %arg9[%c0_453, %c0_454], %541 {strides = array<i32>} : memref<2x128xf32, #tpu.memory_space<vmem>>, vector<2x128xf32>,
    return
  }
  func.func @transform_0(%arg0: i32) -> (i32, i32) {
    %c0_i32 = arith.constant 0 : i32
    %c0_i32_0 = arith.constant 0 : i32
    %c0_i32_1 = arith.constant 0 : i32
    return %c0_i32, %c0_i32_0 : i32, i32
  }
  func.func @transform_1(%arg0: i32) -> (i32, i32) {
    %c0_i32 = arith.constant 0 : i32
    %c0_i32_0 = arith.constant 0 : i32
    %c0_i32_1 = arith.constant 0 : i32
    return %c0_i32, %c0_i32_0 : i32, i32
  }
  func.func @transform_2(%arg0: i32) -> (i32, i32) {
    %c0_i32 = arith.constant 0 : i32
    %c0_i32_0 = arith.constant 0 : i32
    %c0_i32_1 = arith.constant 0 : i32
    return %c0_i32, %c0_i32_0 : i32, i32
  }
  func.func @transform_3(%arg0: i32) -> (i32, i32, i32, i32) {
    %c0_i32 = arith.constant 0 : i32
    %c0_i32_0 = arith.constant 0 : i32
    %c0_i32_1 = arith.constant 0 : i32
    %c0_i32_2 = arith.constant 0 : i32
    %c0_i32_3 = arith.constant 0 : i32
    return %c0_i32, %c0_i32_0, %c0_i32_1, %c0_i32_2 : i32, i32, i32, i32
  }
  func.func @transform_4(%arg0: i32) -> (i32, i32, i32) {
    %c0_i32 = arith.constant 0 : i32
    %c0_i32_0 = arith.constant 0 : i32
    %c0_i32_1 = arith.constant 0 : i32
    %c0_i32_2 = arith.constant 0 : i32
    return %c0_i32, %c0_i32_0, %c0_i32_1 : i32, i32, i32
  }
  func.func @transform_5(%arg0: i32) -> (i32, i32, i32) {
    %c0_i32 = arith.constant 0 : i32
    %c0_i32_0 = arith.constant 0 : i32
    %c0_i32_1 = arith.constant 0 : i32
    %c0_i32_2 = arith.constant 0 : i32
    return %c0_i32, %c0_i32_0, %c0_i32_1 : i32, i32, i32
  }
  func.func @transform_6(%arg0: i32) -> (i32, i32) {
    %c0_i32 = arith.constant 0 : i32
    %c0_i32_0 = arith.constant 0 : i32
    %c0_i32_1 = arith.constant 0 : i32
    return %c0_i32, %c0_i32_0 : i32, i32
  }
  func.func @transform_7(%arg0: i32) -> (i32, i32) {
    %c0_i32 = arith.constant 0 : i32
    %c0_i32_0 = arith.constant 0 : i32
    %c0_i32_1 = arith.constant 0 : i32
    return %c0_i32, %c0_i32_0 : i32, i32
  }
  func.func @transform_8(%arg0: i32) -> (i32, i32) {
    %c0_i32 = arith.constant 0 : i32
    %c0_i32_0 = arith.constant 0 : i32
    %c0_i32_1 = arith.constant 0 : i32
    return %c0_i32, %c0_i32_0 : i32, i32
  }
  func.func @transform_9(%arg0: i32) -> (i32, i32) {
    %c0_i32 = arith.constant 0 : i32
    %c0_i32_0 = arith.constant 0 : i32
    %c0_i32_1 = arith.constant 0 : i32
    return %c0_i32, %c0_i32_0 : i32, i32
  }
}

</mosaic_0001>

<llo_original>
// kernel: policy_network_forward.1
$region0: #{policy_network_forward.1}
  #allocation0 [shape = 'u32[]', space=smem, size = 0x4, offset = 0x4, fixed_abs, tag = 'smem constant byte address 0x4 - core index']
  #allocation1 [shape = 'u32[144,128]{1,0:T(1,128)}', space=vmem, size = 0x12000, scoped, tag = 'internal scratch']
  %s0 = inlined_call_operand.vmem [shape: f32[16,256], index: 0, kind: input, shape index: {}]
  %s1 = inlined_call_operand.vmem [shape: f32[2,896], index: 1, kind: input, shape index: {}]
  %s2 = inlined_call_operand.vmem [shape: f32[1,128], index: 2, kind: input, shape index: {}]
  %s3 = inlined_call_operand.vmem [shape: f32[7,9,16,16], index: 3, kind: input, shape index: {}]
  %s4 = inlined_call_operand.vmem [shape: f32[7,16,1], index: 4, kind: input, shape index: {}]
  %s5 = inlined_call_operand.vmem [shape: f32[7,16,1], index: 5, kind: input, shape index: {}]
  %s6 = inlined_call_operand.vmem [shape: f32[896,128], index: 6, kind: input, shape index: {}]
  %s7 = inlined_call_operand.vmem [shape: f32[1,128], index: 7, kind: input, shape index: {}]
  %s8 = inlined_call_operand.hbm [shape: f32[2,128], index: 8, kind: output, shape index: {0}]
  %s9 = inlined_call_operand.vmem [shape: f32[16,256], index: 9, kind: output, shape index: {1}]
  %10 = xla_tuple %s8, %s9
  %s11 = sld [smem:[#allocation0]]
  $region50: #{policy_network_forward.1} parent=0
    _
  %s13 = ssub.s32 1, %s11
  %s14 = scalar_select 0, %s13, %s11
  $region1: #{policy_network_forward.1} parent=0
    #allocation2 [shape = 'u8[1024]{0}', space=vmem, size = 0x400, scoped, tag = 'output window, operand 0, single buffered']
    #allocation3 [shape = 's32[1]{0}', space=sflag, size = 0x4, scoped, tag = 'scoped memory for policy_network_forward.1']
    %15 = vsyncpa [#allocation3], 0
    // Predicated region
    $region2: #{policy_network_forward.1} parent=1 // pred_check
      _
    $region3: #{policy_network_forward.1} parent=1 // pred_check_branch
      %17 = sbr.rel (0) target = $region5
    $region4: #{policy_network_forward.1} parent=1 // pred_region
      _
    $region5: #{policy_network_forward.1} parent=1 // pred_fallthru
      _
    // Predicated region
    $region6: #{policy_network_forward.1} parent=1 // pred_check
      _
    $region7: #{policy_network_forward.1} parent=1 // pred_check_branch
      %19 = sbr.rel (0) target = $region9
    $region8: #{policy_network_forward.1} parent=1 // pred_region
      _
    $region9: #{policy_network_forward.1} parent=1 // pred_fallthru
      _
    // Predicated region
    $region10: #{policy_network_forward.1} parent=1 // pred_check
      _
    $region11: #{policy_network_forward.1} parent=1 // pred_check_branch
      %21 = sbr.rel (0) target = $region13
    $region12: #{policy_network_forward.1} parent=1 // pred_region
      _
    $region13: #{policy_network_forward.1} parent=1 // pred_fallthru
      _
    // Predicated region
    $region14: #{policy_network_forward.1} parent=1 // pred_check
      _
    $region15: #{policy_network_forward.1} parent=1 // pred_check_branch
      %23 = sbr.rel (0) target = $region17
    $region16: #{policy_network_forward.1} parent=1 // pred_region
      _
    $region17: #{policy_network_forward.1} parent=1 // pred_fallthru
      _
    // Predicated region
    $region18: #{policy_network_forward.1} parent=1 // pred_check
      _
    $region19: #{policy_network_forward.1} parent=1 // pred_check_branch
      %25 = sbr.rel (0) target = $region21
    $region20: #{policy_network_forward.1} parent=1 // pred_region
      _
    $region21: #{policy_network_forward.1} parent=1 // pred_fallthru
      _
    // Predicated region
    $region22: #{policy_network_forward.1} parent=1 // pred_check
      _
    $region23: #{policy_network_forward.1} parent=1 // pred_check_branch
      %27 = sbr.rel (0) target = $region25
    $region24: #{policy_network_forward.1} parent=1 // pred_region
      _
    $region25: #{policy_network_forward.1} parent=1 // pred_fallthru
      _
    // Predicated region
    $region26: #{policy_network_forward.1} parent=1 // pred_check
      _
    $region27: #{policy_network_forward.1} parent=1 // pred_check_branch
      %29 = sbr.rel (0) target = $region29
    $region28: #{policy_network_forward.1} parent=1 // pred_region
      _
    $region29: #{policy_network_forward.1} parent=1 // pred_fallthru
      _
    // Predicated region
    $region30: #{policy_network_forward.1} parent=1 // pred_check
      _
    $region31: #{policy_network_forward.1} parent=1 // pred_check_branch
      %31 = sbr.rel (0) target = $region33
    $region32: #{policy_network_forward.1} parent=1 // pred_region
      _
    $region33: #{policy_network_forward.1} parent=1 // pred_fallthru
      _
    %v32 = vld [vmem:[%s2] sm:$0x1]
    %v33 = vld [vmem:[%s0] sm:$0xff]
    %v34 = vld [vmem:[%s0 + $0x8] sm:$0xff]
    %v35 = vld [vmem:[%s0 + $0x10] sm:$0xff]
    %v36 = vld [vmem:[%s0 + $0x18] sm:$0xff]
    %37 = vrot.lane.b32.xlu0 %v33, 12
    %v38 = vpop.permute.xlu0 %37
    %39 = vrot.lane.b32.xlu0 %v35, 12
    %v40 = vpop.permute.xlu0 %39
    %41 = vrot.lane.b32.xlu0 %v34, 12
    %v42 = vpop.permute.xlu0 %41
    %43 = vrot.lane.b32.xlu0 %v36, 12
    %v44 = vpop.permute.xlu0 %43
    %v45 = vlaneseq
    %v46 = vand.u32 %v45, 127
    %vm47 = vcmp.lt.s32.totalorder %v46, 12
    %v48 = vsel %vm47, %v38, %v42
    %v49 = vsel %vm47, %v40, %v44
    %v50 = vsel %vm47, %v42, %v38
    %v51 = vsel %vm47, %v44, %v40
    %v52 = vld [vmem:[%s3] sm:$0xff]
    %v53 = vld [vmem:[%s3 + $0x8] sm:$0xff]
    %54 = vrot.lane.b32.xlu0 %v33, 11
    %v55 = vpop.permute.xlu0 %54
    %56 = vrot.lane.b32.xlu0 %v35, 11
    %v57 = vpop.permute.xlu0 %56
    %58 = vrot.lane.b32.xlu0 %v34, 11
    %v59 = vpop.permute.xlu0 %58
    %60 = vrot.lane.b32.xlu0 %v36, 11
    %v61 = vpop.permute.xlu0 %60
    %vm62 = vcmp.lt.s32.totalorder %v46, 11
    %v63 = vsel %vm62, %v55, %v59
    %v64 = vsel %vm62, %v57, %v61
    %v65 = vsel %vm62, %v59, %v55
    %v66 = vsel %vm62, %v61, %v57
    %s67 = scalar_lea.vmem %s3, 16
    %v68 = vld [vmem:[%s67] sm:$0xff]
    %v69 = vld [vmem:[%s67 + $0x8] sm:$0xff]
    %vm70 = vcmask 130048
    %v72 = vsel %vm70, %v68, 0
    %v75 = vsel %vm70, %v69, 0
    %77 = vmatprep.subr.mxu0 %v63
    %78 = vmatpush1.msra.mxu0 %v65
    %79 = vmatprep.subr.mxu0 %v64
    %80 = vmatpush1.msra.mxu0 %v66
    %81 = vmatprep.subr.mxu0 0.0
    %82 = vmatpush1.msra.mxu0 0.0
    %83 = vmatprep.subr.mxu0 0.0
    %84 = vmatpush1.msra.mxu0 0.0
    %85 = vmatprep.subr.mxu0 0.0
    %86 = vmatpush1.msra.mxu0 0.0
    %87 = vmatprep.subr.mxu0 0.0
    %88 = vmatpush1.msra.mxu0 0.0
    %89 = vmatprep.subr.mxu0 0.0
    %90 = vmatpush1.msra.mxu0 0.0
    %91 = vmatprep.subr.mxu0 0.0
    %92 = vmatpush1.msra.mxu0 0.0
    %93 = vmatprep.subr.mxu0 0.0
    %94 = vmatpush1.msra.mxu0 0.0
    %95 = vmatprep.subr.mxu0 0.0
    %96 = vmatpush1.msra.mxu0 0.0
    %97 = vmatprep.subr.mxu0 0.0
    %98 = vmatpush1.msra.mxu0 0.0
    %99 = vmatprep.subr.mxu0 0.0
    %100 = vmatpush1.msra.mxu0 0.0
    %101 = vmatprep.subr.mxu0 0.0
    %102 = vmatpush1.msra.mxu0 0.0
    %103 = vmatprep.subr.mxu0 0.0
    %104 = vmatpush1.msra.mxu0 0.0
    %105 = vmatprep.subr.mxu0 0.0
    %106 = vmatpush1.msra.mxu0 0.0
    %107 = vmatprep.subr.mxu0 0.0
    %108 = vmatpush1.msra.mxu0 0.0
    %109 = vmatprep.subr.mxu0 0.0
    %110 = vmatpush1.msra.mxu0 0.0
    %111 = vmatprep.subr.mxu0 0.0
    %112 = vmatpush1.msra.mxu0 0.0
    %113 = vmatprep.subr.mxu0 0.0
    %114 = vmatpush1.msra.mxu0 0.0
    %115 = vmatprep.subr.mxu0 0.0
    %116 = vmatpush1.msra.mxu0 0.0
    %117 = vmatprep.subr.mxu0 0.0
    %118 = vmatpush1.msra.mxu0 0.0
    %119 = vmatprep.subr.mxu0 0.0
    %120 = vmatpush1.msra.mxu0 0.0
    %121 = vmatprep.subr.mxu0 0.0
    %122 = vmatpush1.msra.mxu0 0.0
    %123 = vmatprep.subr.mxu0 0.0
    %124 = vmatpush1.msra.mxu0 0.0
    %125 = vmatprep.subr.mxu0 0.0
    %126 = vmatpush1.msra.mxu0 0.0
    %127 = vmatprep.subr.mxu0 0.0
    %128 = vmatpush1.msra.mxu0 0.0
    %129 = vmatprep.subr.mxu0 0.0
    %130 = vmatpush1.msra.mxu0 0.0
    %131 = vmatprep.subr.mxu0 0.0
    %132 = vmatpush1.msra.mxu0 0.0
    %133 = vmatprep.subr.mxu0 0.0
    %134 = vmatpush1.msra.mxu0 0.0
    %135 = vmatprep.subr.mxu0 0.0
    %136 = vmatpush1.msra.mxu0 0.0
    %137 = vmatprep.subr.mxu0 0.0
    %138 = vmatpush1.msra.mxu0 0.0
    %139 = vmatprep.subr.mxu0 0.0
    %140 = vmatpush1.msra.mxu0 0.0
    %141 = vmatprep.mubr.f32.mxu0 0.0
    %142 = vmatmul.mubr.f32.gmra.mrb[0].mxu0 %v72
    %v143 = vpop.f32.mrb[0].mxu0
    %v144 = vadd.f32 0.0, %v143
    %v145 = vpop.f32.mrb[0].mxu0
    %v146 = vadd.f32 0.0, %v145
    %147 = vmatprep.mubr.f32.mxu0 0.0
    %148 = vmatmul.mubr.f32.gmra.mrb[0].mxu0 %v75
    %v149 = vpop.f32.mrb[0].mxu0
    %v150 = vadd.f32 0.0, %v149
    %v151 = vpop.f32.mrb[0].mxu0
    %v152 = vadd.f32 0.0, %v151
    %153 = vdwg.mxu0
    %v155 = vsel %vm70, %v52, 0
    %v158 = vsel %vm70, %v53, 0
    %160 = vmatprep.subr.mxu0 %v48
    %161 = vmatpush1.msra.mxu0 %v50
    %162 = vmatprep.subr.mxu0 %v49
    %163 = vmatpush1.msra.mxu0 %v51
    %164 = vmatprep.subr.mxu0 0.0
    %165 = vmatpush1.msra.mxu0 0.0
    %166 = vmatprep.subr.mxu0 0.0
    %167 = vmatpush1.msra.mxu0 0.0
    %168 = vmatprep.subr.mxu0 0.0
    %169 = vmatpush1.msra.mxu0 0.0
    %170 = vmatprep.subr.mxu0 0.0
    %171 = vmatpush1.msra.mxu0 0.0
    %172 = vmatprep.subr.mxu0 0.0
    %173 = vmatpush1.msra.mxu0 0.0
    %174 = vmatprep.subr.mxu0 0.0
    %175 = vmatpush1.msra.mxu0 0.0
    %176 = vmatprep.subr.mxu0 0.0
    %177 = vmatpush1.msra.mxu0 0.0
    %178 = vmatprep.subr.mxu0 0.0
    %179 = vmatpush1.msra.mxu0 0.0
    %180 = vmatprep.subr.mxu0 0.0
    %181 = vmatpush1.msra.mxu0 0.0
    %182 = vmatprep.subr.mxu0 0.0
    %183 = vmatpush1.msra.mxu0 0.0
    %184 = vmatprep.subr.mxu0 0.0
    %185 = vmatpush1.msra.mxu0 0.0
    %186 = vmatprep.subr.mxu0 0.0
    %187 = vmatpush1.msra.mxu0 0.0
    %188 = vmatprep.subr.mxu0 0.0
    %189 = vmatpush1.msra.mxu0 0.0
    %190 = vmatprep.subr.mxu0 0.0
    %191 = vmatpush1.msra.mxu0 0.0
    %192 = vmatprep.subr.mxu0 0.0
    %193 = vmatpush1.msra.mxu0 0.0
    %194 = vmatprep.subr.mxu0 0.0
    %195 = vmatpush1.msra.mxu0 0.0
    %196 = vmatprep.subr.mxu0 0.0
    %197 = vmatpush1.msra.mxu0 0.0
    %198 = vmatprep.subr.mxu0 0.0
    %199 = vmatpush1.msra.mxu0 0.0
    %200 = vmatprep.subr.mxu0 0.0
    %201 = vmatpush1.msra.mxu0 0.0
    %202 = vmatprep.subr.mxu0 0.0
    %203 = vmatpush1.msra.mxu0 0.0
    %204 = vmatprep.subr.mxu0 0.0
    %205 = vmatpush1.msra.mxu0 0.0
    %206 = vmatprep.subr.mxu0 0.0
    %207 = vmatpush1.msra.mxu0 0.0
    %208 = vmatprep.subr.mxu0 0.0
    %209 = vmatpush1.msra.mxu0 0.0
    %210 = vmatprep.subr.mxu0 0.0
    %211 = vmatpush1.msra.mxu0 0.0
    %212 = vmatprep.subr.mxu0 0.0
    %213 = vmatpush1.msra.mxu0 0.0
    %214 = vmatprep.subr.mxu0 0.0
    %215 = vmatpush1.msra.mxu0 0.0
    %216 = vmatprep.subr.mxu0 0.0
    %217 = vmatpush1.msra.mxu0 0.0
    %218 = vmatprep.subr.mxu0 0.0
    %219 = vmatpush1.msra.mxu0 0.0
    %220 = vmatprep.subr.mxu0 0.0
    %221 = vmatpush1.msra.mxu0 0.0
    %222 = vmatprep.subr.mxu0 0.0
    %223 = vmatpush1.msra.mxu0 0.0
    %224 = vmatprep.mubr.f32.mxu0 0.0
    %225 = vmatmul.mubr.f32.gmra.mrb[0].mxu0 %v155
    %v226 = vpop.f32.mrb[0].mxu0
    %v227 = vadd.f32 %v144, %v226
    %v228 = vpop.f32.mrb[0].mxu0
    %v229 = vadd.f32 %v146, %v228
    %230 = vmatprep.mubr.f32.mxu0 0.0
    %231 = vmatmul.mubr.f32.gmra.mrb[0].mxu0 %v158
    %v232 = vpop.f32.mrb[0].mxu0
    %v233 = vadd.f32 %v150, %v232
    %v234 = vpop.f32.mrb[0].mxu0
    %v235 = vadd.f32 %v152, %v234
    %236 = vdwg.mxu0
    %237 = vrot.lane.b32.xlu0 %v33, 10
    %v238 = vpop.permute.xlu0 %237
    %239 = vrot.lane.b32.xlu0 %v35, 10
    %v240 = vpop.permute.xlu0 %239
    %241 = vrot.lane.b32.xlu0 %v34, 10
    %v242 = vpop.permute.xlu0 %241
    %243 = vrot.lane.b32.xlu0 %v36, 10
    %v244 = vpop.permute.xlu0 %243
    %vm245 = vcmp.lt.s32.totalorder %v46, 10
    %v246 = vsel %vm245, %v238, %v242
    %v247 = vsel %vm245, %v240, %v244
    %v248 = vsel %vm245, %v242, %v238
    %v249 = vsel %vm245, %v244, %v240
    %s250 = scalar_lea.vmem %s3, 32
    %v251 = vld [vmem:[%s250] sm:$0xff]
    %v252 = vld [vmem:[%s250 + $0x8] sm:$0xff]
    %v254 = vsel %vm70, %v251, 0
    %v257 = vsel %vm70, %v252, 0
    %259 = vmatprep.subr.mxu0 %v246
    %260 = vmatpush1.msra.mxu0 %v248
    %261 = vmatprep.subr.mxu0 %v247
    %262 = vmatpush1.msra.mxu0 %v249
    %263 = vmatprep.subr.mxu0 0.0
    %264 = vmatpush1.msra.mxu0 0.0
    %265 = vmatprep.subr.mxu0 0.0
    %266 = vmatpush1.msra.mxu0 0.0
    %267 = vmatprep.subr.mxu0 0.0
    %268 = vmatpush1.msra.mxu0 0.0
    %269 = vmatprep.subr.mxu0 0.0
    %270 = vmatpush1.msra.mxu0 0.0
    %271 = vmatprep.subr.mxu0 0.0
    %272 = vmatpush1.msra.mxu0 0.0
    %273 = vmatprep.subr.mxu0 0.0
    %274 = vmatpush1.msra.mxu0 0.0
    %275 = vmatprep.subr.mxu0 0.0
    %276 = vmatpush1.msra.mxu0 0.0
    %277 = vmatprep.subr.mxu0 0.0
    %278 = vmatpush1.msra.mxu0 0.0
    %279 = vmatprep.subr.mxu0 0.0
    %280 = vmatpush1.msra.mxu0 0.0
    %281 = vmatprep.subr.mxu0 0.0
    %282 = vmatpush1.msra.mxu0 0.0
    %283 = vmatprep.subr.mxu0 0.0
    %284 = vmatpush1.msra.mxu0 0.0
    %285 = vmatprep.subr.mxu0 0.0
    %286 = vmatpush1.msra.mxu0 0.0
    %287 = vmatprep.subr.mxu0 0.0
    %288 = vmatpush1.msra.mxu0 0.0
    %289 = vmatprep.subr.mxu0 0.0
    %290 = vmatpush1.msra.mxu0 0.0
    %291 = vmatprep.subr.mxu0 0.0
    %292 = vmatpush1.msra.mxu0 0.0
    %293 = vmatprep.subr.mxu0 0.0
    %294 = vmatpush1.msra.mxu0 0.0
    %295 = vmatprep.subr.mxu0 0.0
    %296 = vmatpush1.msra.mxu0 0.0
    %297 = vmatprep.subr.mxu0 0.0
    %298 = vmatpush1.msra.mxu0 0.0
    %299 = vmatprep.subr.mxu0 0.0
    %300 = vmatpush1.msra.mxu0 0.0
    %301 = vmatprep.subr.mxu0 0.0
    %302 = vmatpush1.msra.mxu0 0.0
    %303 = vmatprep.subr.mxu0 0.0
    %304 = vmatpush1.msra.mxu0 0.0
    %305 = vmatprep.subr.mxu0 0.0
    %306 = vmatpush1.msra.mxu0 0.0
    %307 = vmatprep.subr.mxu0 0.0
    %308 = vmatpush1.msra.mxu0 0.0
    %309 = vmatprep.subr.mxu0 0.0
    %310 = vmatpush1.msra.mxu0 0.0
    %311 = vmatprep.subr.mxu0 0.0
    %312 = vmatpush1.msra.mxu0 0.0
    %313 = vmatprep.subr.mxu0 0.0
    %314 = vmatpush1.msra.mxu0 0.0
    %315 = vmatprep.subr.mxu0 0.0
    %316 = vmatpush1.msra.mxu0 0.0
    %317 = vmatprep.subr.mxu0 0.0
    %318 = vmatpush1.msra.mxu0 0.0
    %319 = vmatprep.subr.mxu0 0.0
    %320 = vmatpush1.msra.mxu0 0.0
    %321 = vmatprep.subr.mxu0 0.0
    %322 = vmatpush1.msra.mxu0 0.0
    %323 = vmatprep.mubr.f32.mxu0 0.0
    %324 = vmatmul.mubr.f32.gmra.mrb[0].mxu0 %v254
    %v325 = vpop.f32.mrb[0].mxu0
    %v326 = vadd.f32 0.0, %v325
    %v327 = vpop.f32.mrb[0].mxu0
    %v328 = vadd.f32 0.0, %v327
    %329 = vmatprep.mubr.f32.mxu0 0.0
    %330 = vmatmul.mubr.f32.gmra.mrb[0].mxu0 %v257
    %v331 = vpop.f32.mrb[0].mxu0
    %v332 = vadd.f32 0.0, %v331
    %v333 = vpop.f32.mrb[0].mxu0
    %v334 = vadd.f32 0.0, %v333
    %335 = vdwg.mxu0
    %v336 = vadd.f32 %v227, %v326
    %v337 = vadd.f32 %v229, %v328
    %v338 = vadd.f32 %v233, %v332
    %v339 = vadd.f32 %v235, %v334
    %340 = vrot.lane.b32.xlu0 %v33, 1
    %v341 = vpop.permute.xlu0 %340
    %342 = vrot.lane.b32.xlu0 %v35, 1
    %v343 = vpop.permute.xlu0 %342
    %344 = vrot.lane.b32.xlu0 %v34, 1
    %v345 = vpop.permute.xlu0 %344
    %346 = vrot.lane.b32.xlu0 %v36, 1
    %v347 = vpop.permute.xlu0 %346
    %vm348 = vcmp.lt.s32.totalorder %v46, 1
    %v349 = vsel %vm348, %v341, %v345
    %v350 = vsel %vm348, %v343, %v347
    %v351 = vsel %vm348, %v345, %v341
    %v352 = vsel %vm348, %v347, %v343
    %s353 = scalar_lea.vmem %s3, 48
    %v354 = vld [vmem:[%s353] sm:$0xff]
    %v355 = vld [vmem:[%s353 + $0x8] sm:$0xff]
    %v357 = vsel %vm70, %v354, 0
    %v360 = vsel %vm70, %v355, 0
    %362 = vmatprep.subr.mxu0 %v349
    %363 = vmatpush1.msra.mxu0 %v351
    %364 = vmatprep.subr.mxu0 %v350
    %365 = vmatpush1.msra.mxu0 %v352
    %366 = vmatprep.subr.mxu0 0.0
    %367 = vmatpush1.msra.mxu0 0.0
    %368 = vmatprep.subr.mxu0 0.0
    %369 = vmatpush1.msra.mxu0 0.0
    %370 = vmatprep.subr.mxu0 0.0
    %371 = vmatpush1.msra.mxu0 0.0
    %372 = vmatprep.subr.mxu0 0.0
    %373 = vmatpush1.msra.mxu0 0.0
    %374 = vmatprep.subr.mxu0 0.0
    %375 = vmatpush1.msra.mxu0 0.0
    %376 = vmatprep.subr.mxu0 0.0
    %377 = vmatpush1.msra.mxu0 0.0
    %378 = vmatprep.subr.mxu0 0.0
    %379 = vmatpush1.msra.mxu0 0.0
    %380 = vmatprep.subr.mxu0 0.0
    %381 = vmatpush1.msra.mxu0 0.0
    %382 = vmatprep.subr.mxu0 0.0
    %383 = vmatpush1.msra.mxu0 0.0
    %384 = vmatprep.subr.mxu0 0.0
    %385 = vmatpush1.msra.mxu0 0.0
    %386 = vmatprep.subr.mxu0 0.0
    %387 = vmatpush1.msra.mxu0 0.0
    %388 = vmatprep.subr.mxu0 0.0
    %389 = vmatpush1.msra.mxu0 0.0
    %390 = vmatprep.subr.mxu0 0.0
    %391 = vmatpush1.msra.mxu0 0.0
    %392 = vmatprep.subr.mxu0 0.0
    %393 = vmatpush1.msra.mxu0 0.0
    %394 = vmatprep.subr.mxu0 0.0
    %395 = vmatpush1.msra.mxu0 0.0
    %396 = vmatprep.subr.mxu0 0.0
    %397 = vmatpush1.msra.mxu0 0.0
    %398 = vmatprep.subr.mxu0 0.0
    %399 = vmatpush1.msra.mxu0 0.0
    %400 = vmatprep.subr.mxu0 0.0
    %401 = vmatpush1.msra.mxu0 0.0
    %402 = vmatprep.subr.mxu0 0.0
    %403 = vmatpush1.msra.mxu0 0.0
    %404 = vmatprep.subr.mxu0 0.0
    %405 = vmatpush1.msra.mxu0 0.0
    %406 = vmatprep.subr.mxu0 0.0
    %407 = vmatpush1.msra.mxu0 0.0
    %408 = vmatprep.subr.mxu0 0.0
    %409 = vmatpush1.msra.mxu0 0.0
    %410 = vmatprep.subr.mxu0 0.0
    %411 = vmatpush1.msra.mxu0 0.0
    %412 = vmatprep.subr.mxu0 0.0
    %413 = vmatpush1.msra.mxu0 0.0
    %414 = vmatprep.subr.mxu0 0.0
    %415 = vmatpush1.msra.mxu0 0.0
    %416 = vmatprep.subr.mxu0 0.0
    %417 = vmatpush1.msra.mxu0 0.0
    %418 = vmatprep.subr.mxu0 0.0
    %419 = vmatpush1.msra.mxu0 0.0
    %420 = vmatprep.subr.mxu0 0.0
    %421 = vmatpush1.msra.mxu0 0.0
    %422 = vmatprep.subr.mxu0 0.0
    %423 = vmatpush1.msra.mxu0 0.0
    %424 = vmatprep.subr.mxu0 0.0
    %425 = vmatpush1.msra.mxu0 0.0
    %426 = vmatprep.mubr.f32.mxu0 0.0
    %427 = vmatmul.mubr.f32.gmra.mrb[0].mxu0 %v357
    %v428 = vpop.f32.mrb[0].mxu0
    %v429 = vadd.f32 0.0, %v428
    %v430 = vpop.f32.mrb[0].mxu0
    %v431 = vadd.f32 0.0, %v430
    %432 = vmatprep.mubr.f32.mxu0 0.0
    %433 = vmatmul.mubr.f32.gmra.mrb[0].mxu0 %v360
    %v434 = vpop.f32.mrb[0].mxu0
    %v435 = vadd.f32 0.0, %v434
    %v436 = vpop.f32.mrb[0].mxu0
    %v437 = vadd.f32 0.0, %v436
    %438 = vdwg.mxu0
    %v439 = vadd.f32 %v336, %v429
    %v440 = vadd.f32 %v337, %v431
    %v441 = vadd.f32 %v338, %v435
    %v442 = vadd.f32 %v339, %v437
    %s443 = scalar_lea.vmem %s3, 64
    %v444 = vld [vmem:[%s443] sm:$0xff]
    %v445 = vld [vmem:[%s443 + $0x8] sm:$0xff]
    %v447 = vsel %vm70, %v444, 0
    %v450 = vsel %vm70, %v445, 0
    %452 = vmatprep.subr.mxu0 %v34
    %453 = vmatpush1.msra.mxu0 %v33
    %454 = vmatprep.subr.mxu0 %v36
    %455 = vmatpush1.msra.mxu0 %v35
    %456 = vmatprep.subr.mxu0 0.0
    %457 = vmatpush1.msra.mxu0 0.0
    %458 = vmatprep.subr.mxu0 0.0
    %459 = vmatpush1.msra.mxu0 0.0
    %460 = vmatprep.subr.mxu0 0.0
    %461 = vmatpush1.msra.mxu0 0.0
    %462 = vmatprep.subr.mxu0 0.0
    %463 = vmatpush1.msra.mxu0 0.0
    %464 = vmatprep.subr.mxu0 0.0
    %465 = vmatpush1.msra.mxu0 0.0
    %466 = vmatprep.subr.mxu0 0.0
    %467 = vmatpush1.msra.mxu0 0.0
    %468 = vmatprep.subr.mxu0 0.0
    %469 = vmatpush1.msra.mxu0 0.0
    %470 = vmatprep.subr.mxu0 0.0
    %471 = vmatpush1.msra.mxu0 0.0
    %472 = vmatprep.subr.mxu0 0.0
    %473 = vmatpush1.msra.mxu0 0.0
    %474 = vmatprep.subr.mxu0 0.0
    %475 = vmatpush1.msra.mxu0 0.0
    %476 = vmatprep.subr.mxu0 0.0
    %477 = vmatpush1.msra.mxu0 0.0
    %478 = vmatprep.subr.mxu0 0.0
    %479 = vmatpush1.msra.mxu0 0.0
    %480 = vmatprep.subr.mxu0 0.0
    %481 = vmatpush1.msra.mxu0 0.0
    %482 = vmatprep.subr.mxu0 0.0
    %483 = vmatpush1.msra.mxu0 0.0
    %484 = vmatprep.subr.mxu0 0.0
    %485 = vmatpush1.msra.mxu0 0.0
    %486 = vmatprep.subr.mxu0 0.0
    %487 = vmatpush1.msra.mxu0 0.0
    %488 = vmatprep.subr.mxu0 0.0
    %489 = vmatpush1.msra.mxu0 0.0
    %490 = vmatprep.subr.mxu0 0.0
    %491 = vmatpush1.msra.mxu0 0.0
    %492 = vmatprep.subr.mxu0 0.0
    %493 = vmatpush1.msra.mxu0 0.0
    %494 = vmatprep.subr.mxu0 0.0
    %495 = vmatpush1.msra.mxu0 0.0
    %496 = vmatprep.subr.mxu0 0.0
    %497 = vmatpush1.msra.mxu0 0.0
    %498 = vmatprep.subr.mxu0 0.0
    %499 = vmatpush1.msra.mxu0 0.0
    %500 = vmatprep.subr.mxu0 0.0
    %501 = vmatpush1.msra.mxu0 0.0
    %502 = vmatprep.subr.mxu0 0.0
    %503 = vmatpush1.msra.mxu0 0.0
    %504 = vmatprep.subr.mxu0 0.0
    %505 = vmatpush1.msra.mxu0 0.0
    %506 = vmatprep.subr.mxu0 0.0
    %507 = vmatpush1.msra.mxu0 0.0
    %508 = vmatprep.subr.mxu0 0.0
    %509 = vmatpush1.msra.mxu0 0.0
    %510 = vmatprep.subr.mxu0 0.0
    %511 = vmatpush1.msra.mxu0 0.0
    %512 = vmatprep.subr.mxu0 0.0
    %513 = vmatpush1.msra.mxu0 0.0
    %514 = vmatprep.subr.mxu0 0.0
    %515 = vmatpush1.msra.mxu0 0.0
    %516 = vmatprep.mubr.f32.mxu0 0.0
    %517 = vmatmul.mubr.f32.gmra.mrb[0].mxu0 %v447
    %v518 = vpop.f32.mrb[0].mxu0
    %v519 = vadd.f32 0.0, %v518
    %v520 = vpop.f32.mrb[0].mxu0
    %v521 = vadd.f32 0.0, %v520
    %522 = vmatprep.mubr.f32.mxu0 0.0
    %523 = vmatmul.mubr.f32.gmra.mrb[0].mxu0 %v450
    %v524 = vpop.f32.mrb[0].mxu0
    %v525 = vadd.f32 0.0, %v524
    %v526 = vpop.f32.mrb[0].mxu0
    %v527 = vadd.f32 0.0, %v526
    %528 = vdwg.mxu0
    %v529 = vadd.f32 %v439, %v519
    %v530 = vadd.f32 %v440, %v521
    %v531 = vadd.f32 %v441, %v525
    %v532 = vadd.f32 %v442, %v527
    %533 = vrot.lane.b32.xlu0 %v33, 127
    %v534 = vpop.permute.xlu0 %533
    %535 = vrot.lane.b32.xlu0 %v35, 127
    %v536 = vpop.permute.xlu0 %535
    %537 = vrot.lane.b32.xlu0 %v34, 127
    %v538 = vpop.permute.xlu0 %537
    %539 = vrot.lane.b32.xlu0 %v36, 127
    %v540 = vpop.permute.xlu0 %539
    %vm541 = vcmp.lt.s32.totalorder %v46, 127
    %v542 = vsel %vm541, %v534, %v538
    %v543 = vsel %vm541, %v536, %v540
    %v544 = vsel %vm541, %v538, %v534
    %v545 = vsel %vm541, %v540, %v536
    %s546 = scalar_lea.vmem %s3, 80
    %v547 = vld [vmem:[%s546] sm:$0xff]
    %v548 = vld [vmem:[%s546 + $0x8] sm:$0xff]
    %v550 = vsel %vm70, %v547, 0
    %v553 = vsel %vm70, %v548, 0
    %555 = vmatprep.subr.mxu0 %v544
    %556 = vmatpush1.msra.mxu0 %v542
    %557 = vmatprep.subr.mxu0 %v545
    %558 = vmatpush1.msra.mxu0 %v543
    %559 = vmatprep.subr.mxu0 0.0
    %560 = vmatpush1.msra.mxu0 0.0
    %561 = vmatprep.subr.mxu0 0.0
    %562 = vmatpush1.msra.mxu0 0.0
    %563 = vmatprep.subr.mxu0 0.0
    %564 = vmatpush1.msra.mxu0 0.0
    %565 = vmatprep.subr.mxu0 0.0
    %566 = vmatpush1.msra.mxu0 0.0
    %567 = vmatprep.subr.mxu0 0.0
    %568 = vmatpush1.msra.mxu0 0.0
    %569 = vmatprep.subr.mxu0 0.0
    %570 = vmatpush1.msra.mxu0 0.0
    %571 = vmatprep.subr.mxu0 0.0
    %572 = vmatpush1.msra.mxu0 0.0
    %573 = vmatprep.subr.mxu0 0.0
    %574 = vmatpush1.msra.mxu0 0.0
    %575 = vmatprep.subr.mxu0 0.0
    %576 = vmatpush1.msra.mxu0 0.0
    %577 = vmatprep.subr.mxu0 0.0
    %578 = vmatpush1.msra.mxu0 0.0
    %579 = vmatprep.subr.mxu0 0.0
    %580 = vmatpush1.msra.mxu0 0.0
    %581 = vmatprep.subr.mxu0 0.0
    %582 = vmatpush1.msra.mxu0 0.0
    %583 = vmatprep.subr.mxu0 0.0
    %584 = vmatpush1.msra.mxu0 0.0
    %585 = vmatprep.subr.mxu0 0.0
    %586 = vmatpush1.msra.mxu0 0.0
    %587 = vmatprep.subr.mxu0 0.0
    %588 = vmatpush1.msra.mxu0 0.0
    %589 = vmatprep.subr.mxu0 0.0
    %590 = vmatpush1.msra.mxu0 0.0
    %591 = vmatprep.subr.mxu0 0.0
    %592 = vmatpush1.msra.mxu0 0.0
    %593 = vmatprep.subr.mxu0 0.0
    %594 = vmatpush1.msra.mxu0 0.0
    %595 = vmatprep.subr.mxu0 0.0
    %596 = vmatpush1.msra.mxu0 0.0
    %597 = vmatprep.subr.mxu0 0.0
    %598 = vmatpush1.msra.mxu0 0.0
    %599 = vmatprep.subr.mxu0 0.0
    %600 = vmatpush1.msra.mxu0 0.0
    %601 = vmatprep.subr.mxu0 0.0
    %602 = vmatpush1.msra.mxu0 0.0
    %603 = vmatprep.subr.mxu0 0.0
    %604 = vmatpush1.msra.mxu0 0.0
    %605 = vmatprep.subr.mxu0 0.0
    %606 = vmatpush1.msra.mxu0 0.0
    %607 = vmatprep.subr.mxu0 0.0
    %608 = vmatpush1.msra.mxu0 0.0
    %609 = vmatprep.subr.mxu0 0.0
    %610 = vmatpush1.msra.mxu0 0.0
    %611 = vmatprep.subr.mxu0 0.0
    %612 = vmatpush1.msra.mxu0 0.0
    %613 = vmatprep.subr.mxu0 0.0
    %614 = vmatpush1.msra.mxu0 0.0
    %615 = vmatprep.subr.mxu0 0.0
    %616 = vmatpush1.msra.mxu0 0.0
    %617 = vmatprep.subr.mxu0 0.0
    %618 = vmatpush1.msra.mxu0 0.0
    %619 = vmatprep.mubr.f32.mxu0 0.0
    %620 = vmatmul.mubr.f32.gmra.mrb[0].mxu0 %v550
    %v621 = vpop.f32.mrb[0].mxu0
    %v622 = vadd.f32 0.0, %v621
    %v623 = vpop.f32.mrb[0].mxu0
    %v624 = vadd.f32 0.0, %v623
    %625 = vmatprep.mubr.f32.mxu0 0.0
    %626 = vmatmul.mubr.f32.gmra.mrb[0].mxu0 %v553
    %v627 = vpop.f32.mrb[0].mxu0
    %v628 = vadd.f32 0.0, %v627
    %v629 = vpop.f32.mrb[0].mxu0
    %v630 = vadd.f32 0.0, %v629
    %631 = vdwg.mxu0
    %v632 = vadd.f32 %v529, %v622
    %v633 = vadd.f32 %v530, %v624
    %v634 = vadd.f32 %v531, %v628
    %v635 = vadd.f32 %v532, %v630
    %636 = vrot.lane.b32.xlu0 %v33, 118
    %v637 = vpop.permute.xlu0 %636
    %638 = vrot.lane.b32.xlu0 %v35, 118
    %v639 = vpop.permute.xlu0 %638
    %640 = vrot.lane.b32.xlu0 %v34, 118
    %v641 = vpop.permute.xlu0 %640
    %642 = vrot.lane.b32.xlu0 %v36, 118
    %v643 = vpop.permute.xlu0 %642
    %vm644 = vcmp.lt.s32.totalorder %v46, 118
    %v645 = vsel %vm644, %v637, %v641
    %v646 = vsel %vm644, %v639, %v643
    %v647 = vsel %vm644, %v641, %v637
    %v648 = vsel %vm644, %v643, %v639
    %s649 = scalar_lea.vmem %s3, 96
    %v650 = vld [vmem:[%s649] sm:$0xff]
    %v651 = vld [vmem:[%s649 + $0x8] sm:$0xff]
    %v653 = vsel %vm70, %v650, 0
    %v656 = vsel %vm70, %v651, 0
    %658 = vmatprep.subr.mxu0 %v647
    %659 = vmatpush1.msra.mxu0 %v645
    %660 = vmatprep.subr.mxu0 %v648
    %661 = vmatpush1.msra.mxu0 %v646
    %662 = vmatprep.subr.mxu0 0.0
    %663 = vmatpush1.msra.mxu0 0.0
    %664 = vmatprep.subr.mxu0 0.0
    %665 = vmatpush1.msra.mxu0 0.0
    %666 = vmatprep.subr.mxu0 0.0
    %667 = vmatpush1.msra.mxu0 0.0
    %668 = vmatprep.subr.mxu0 0.0
    %669 = vmatpush1.msra.mxu0 0.0
    %670 = vmatprep.subr.mxu0 0.0
    %671 = vmatpush1.msra.mxu0 0.0
    %672 = vmatprep.subr.mxu0 0.0
    %673 = vmatpush1.msra.mxu0 0.0
    %674 = vmatprep.subr.mxu0 0.0
    %675 = vmatpush1.msra.mxu0 0.0
    %676 = vmatprep.subr.mxu0 0.0
    %677 = vmatpush1.msra.mxu0 0.0
    %678 = vmatprep.subr.mxu0 0.0
    %679 = vmatpush1.msra.mxu0 0.0
    %680 = vmatprep.subr.mxu0 0.0
    %681 = vmatpush1.msra.mxu0 0.0
    %682 = vmatprep.subr.mxu0 0.0
    %683 = vmatpush1.msra.mxu0 0.0
    %684 = vmatprep.subr.mxu0 0.0
    %685 = vmatpush1.msra.mxu0 0.0
    %686 = vmatprep.subr.mxu0 0.0
    %687 = vmatpush1.msra.mxu0 0.0
    %688 = vmatprep.subr.mxu0 0.0
    %689 = vmatpush1.msra.mxu0 0.0
    %690 = vmatprep.subr.mxu0 0.0
    %691 = vmatpush1.msra.mxu0 0.0
    %692 = vmatprep.subr.mxu0 0.0
    %693 = vmatpush1.msra.mxu0 0.0
    %694 = vmatprep.subr.mxu0 0.0
    %695 = vmatpush1.msra.mxu0 0.0
    %696 = vmatprep.subr.mxu0 0.0
    %697 = vmatpush1.msra.mxu0 0.0
    %698 = vmatprep.subr.mxu0 0.0
    %699 = vmatpush1.msra.mxu0 0.0
    %700 = vmatprep.subr.mxu0 0.0
    %701 = vmatpush1.msra.mxu0 0.0
    %702 = vmatprep.subr.mxu0 0.0
    %703 = vmatpush1.msra.mxu0 0.0
    %704 = vmatprep.subr.mxu0 0.0
    %705 = vmatpush1.msra.mxu0 0.0
    %706 = vmatprep.subr.mxu0 0.0
    %707 = vmatpush1.msra.mxu0 0.0
    %708 = vmatprep.subr.mxu0 0.0
    %709 = vmatpush1.msra.mxu0 0.0
    %710 = vmatprep.subr.mxu0 0.0
    %711 = vmatpush1.msra.mxu0 0.0
    %712 = vmatprep.subr.mxu0 0.0
    %713 = vmatpush1.msra.mxu0 0.0
    %714 = vmatprep.subr.mxu0 0.0
    %715 = vmatpush1.msra.mxu0 0.0
    %716 = vmatprep.subr.mxu0 0.0
    %717 = vmatpush1.msra.mxu0 0.0
    %718 = vmatprep.subr.mxu0 0.0
    %719 = vmatpush1.msra.mxu0 0.0
    %720 = vmatprep.subr.mxu0 0.0
    %721 = vmatpush1.msra.mxu0 0.0
    %722 = vmatprep.mubr.f32.mxu0 0.0
    %723 = vmatmul.mubr.f32.gmra.mrb[0].mxu0 %v653
    %v724 = vpop.f32.mrb[0].mxu0
    %v725 = vadd.f32 0.0, %v724
    %v726 = vpop.f32.mrb[0].mxu0
    %v727 = vadd.f32 0.0, %v726
    %728 = vmatprep.mubr.f32.mxu0 0.0
    %729 = vmatmul.mubr.f32.gmra.mrb[0].mxu0 %v656
    %v730 = vpop.f32.mrb[0].mxu0
    %v731 = vadd.f32 0.0, %v730
    %v732 = vpop.f32.mrb[0].mxu0
    %v733 = vadd.f32 0.0, %v732
    %734 = vdwg.mxu0
    %v735 = vadd.f32 %v632, %v725
    %v736 = vadd.f32 %v633, %v727
    %v737 = vadd.f32 %v634, %v731
    %v738 = vadd.f32 %v635, %v733
    %739 = vrot.lane.b32.xlu0 %v33, 117
    %v740 = vpop.permute.xlu0 %739
    %741 = vrot.lane.b32.xlu0 %v35, 117
    %v742 = vpop.permute.xlu0 %741
    %743 = vrot.lane.b32.xlu0 %v34, 117
    %v744 = vpop.permute.xlu0 %743
    %745 = vrot.lane.b32.xlu0 %v36, 117
    %v746 = vpop.permute.xlu0 %745
    %vm747 = vcmp.lt.s32.totalorder %v46, 117
    %v748 = vsel %vm747, %v740, %v744
    %v749 = vsel %vm747, %v742, %v746
    %v750 = vsel %vm747, %v744, %v740
    %v751 = vsel %vm747, %v746, %v742
    %s752 = scalar_lea.vmem %s3, 112
    %v753 = vld [vmem:[%s752] sm:$0xff]
    %v754 = vld [vmem:[%s752 + $0x8] sm:$0xff]
    %v756 = vsel %vm70, %v753, 0
    %v759 = vsel %vm70, %v754, 0
    %761 = vmatprep.subr.mxu0 %v750
    %762 = vmatpush1.msra.mxu0 %v748
    %763 = vmatprep.subr.mxu0 %v751
    %764 = vmatpush1.msra.mxu0 %v749
    %765 = vmatprep.subr.mxu0 0.0
    %766 = vmatpush1.msra.mxu0 0.0
    %767 = vmatprep.subr.mxu0 0.0
    %768 = vmatpush1.msra.mxu0 0.0
    %769 = vmatprep.subr.mxu0 0.0
    %770 = vmatpush1.msra.mxu0 0.0
    %771 = vmatprep.subr.mxu0 0.0
    %772 = vmatpush1.msra.mxu0 0.0
    %773 = vmatprep.subr.mxu0 0.0
    %774 = vmatpush1.msra.mxu0 0.0
    %775 = vmatprep.subr.mxu0 0.0
    %776 = vmatpush1.msra.mxu0 0.0
    %777 = vmatprep.subr.mxu0 0.0
    %778 = vmatpush1.msra.mxu0 0.0
    %779 = vmatprep.subr.mxu0 0.0
    %780 = vmatpush1.msra.mxu0 0.0
    %781 = vmatprep.subr.mxu0 0.0
    %782 = vmatpush1.msra.mxu0 0.0
    %783 = vmatprep.subr.mxu0 0.0
    %784 = vmatpush1.msra.mxu0 0.0
    %785 = vmatprep.subr.mxu0 0.0
    %786 = vmatpush1.msra.mxu0 0.0
    %787 = vmatprep.subr.mxu0 0.0
    %788 = vmatpush1.msra.mxu0 0.0
    %789 = vmatprep.subr.mxu0 0.0
    %790 = vmatpush1.msra.mxu0 0.0
    %791 = vmatprep.subr.mxu0 0.0
    %792 = vmatpush1.msra.mxu0 0.0
    %793 = vmatprep.subr.mxu0 0.0
    %794 = vmatpush1.msra.mxu0 0.0
    %795 = vmatprep.subr.mxu0 0.0
    %796 = vmatpush1.msra.mxu0 0.0
    %797 = vmatprep.subr.mxu0 0.0
    %798 = vmatpush1.msra.mxu0 0.0
    %799 = vmatprep.subr.mxu0 0.0
    %800 = vmatpush1.msra.mxu0 0.0
    %801 = vmatprep.subr.mxu0 0.0
    %802 = vmatpush1.msra.mxu0 0.0
    %803 = vmatprep.subr.mxu0 0.0
    %804 = vmatpush1.msra.mxu0 0.0
    %805 = vmatprep.subr.mxu0 0.0
    %806 = vmatpush1.msra.mxu0 0.0
    %807 = vmatprep.subr.mxu0 0.0
    %808 = vmatpush1.msra.mxu0 0.0
    %809 = vmatprep.subr.mxu0 0.0
    %810 = vmatpush1.msra.mxu0 0.0
    %811 = vmatprep.subr.mxu0 0.0
    %812 = vmatpush1.msra.mxu0 0.0
    %813 = vmatprep.subr.mxu0 0.0
    %814 = vmatpush1.msra.mxu0 0.0
    %815 = vmatprep.subr.mxu0 0.0
    %816 = vmatpush1.msra.mxu0 0.0
    %817 = vmatprep.subr.mxu0 0.0
    %818 = vmatpush1.msra.mxu0 0.0
    %819 = vmatprep.subr.mxu0 0.0
    %820 = vmatpush1.msra.mxu0 0.0
    %821 = vmatprep.subr.mxu0 0.0
    %822 = vmatpush1.msra.mxu0 0.0
    %823 = vmatprep.subr.mxu0 0.0
    %824 = vmatpush1.msra.mxu0 0.0
    %825 = vmatprep.mubr.f32.mxu0 0.0
    %826 = vmatmul.mubr.f32.gmra.mrb[0].mxu0 %v756
    %v827 = vpop.f32.mrb[0].mxu0
    %v828 = vadd.f32 0.0, %v827
    %v829 = vpop.f32.mrb[0].mxu0
    %v830 = vadd.f32 0.0, %v829
    %831 = vmatprep.mubr.f32.mxu0 0.0
    %832 = vmatmul.mubr.f32.gmra.mrb[0].mxu0 %v759
    %v833 = vpop.f32.mrb[0].mxu0
    %v834 = vadd.f32 0.0, %v833
    %v835 = vpop.f32.mrb[0].mxu0
    %v836 = vadd.f32 0.0, %v835
    %837 = vdwg.mxu0
    %v838 = vadd.f32 %v735, %v828
    %v839 = vadd.f32 %v736, %v830
    %v840 = vadd.f32 %v737, %v834
    %v841 = vadd.f32 %v738, %v836
    %842 = vrot.lane.b32.xlu0 %v33, 116
    %v843 = vpop.permute.xlu0 %842
    %844 = vrot.lane.b32.xlu0 %v35, 116
    %v845 = vpop.permute.xlu0 %844
    %846 = vrot.lane.b32.xlu0 %v34, 116
    %v847 = vpop.permute.xlu0 %846
    %848 = vrot.lane.b32.xlu0 %v36, 116
    %v849 = vpop.permute.xlu0 %848
    %vm850 = vcmp.lt.s32.totalorder %v46, 116
    %v851 = vsel %vm850, %v843, %v847
    %v852 = vsel %vm850, %v845, %v849
    %v853 = vsel %vm850, %v847, %v843
    %v854 = vsel %vm850, %v849, %v845
    %s855 = scalar_lea.vmem %s3, 128
    %v856 = vld [vmem:[%s855] sm:$0xff]
    %v857 = vld [vmem:[%s855 + $0x8] sm:$0xff]
    %v859 = vsel %vm70, %v856, 0
    %v862 = vsel %vm70, %v857, 0
    %864 = vmatprep.subr.mxu0 %v853
    %865 = vmatpush1.msra.mxu0 %v851
    %866 = vmatprep.subr.mxu0 %v854
    %867 = vmatpush1.msra.mxu0 %v852
    %868 = vmatprep.subr.mxu0 0.0
    %869 = vmatpush1.msra.mxu0 0.0
    %870 = vmatprep.subr.mxu0 0.0
    %871 = vmatpush1.msra.mxu0 0.0
    %872 = vmatprep.subr.mxu0 0.0
    %873 = vmatpush1.msra.mxu0 0.0
    %874 = vmatprep.subr.mxu0 0.0
    %875 = vmatpush1.msra.mxu0 0.0
    %876 = vmatprep.subr.mxu0 0.0
    %877 = vmatpush1.msra.mxu0 0.0
    %878 = vmatprep.subr.mxu0 0.0
    %879 = vmatpush1.msra.mxu0 0.0
    %880 = vmatprep.subr.mxu0 0.0
    %881 = vmatpush1.msra.mxu0 0.0
    %882 = vmatprep.subr.mxu0 0.0
    %883 = vmatpush1.msra.mxu0 0.0
    %884 = vmatprep.subr.mxu0 0.0
    %885 = vmatpush1.msra.mxu0 0.0
    %886 = vmatprep.subr.mxu0 0.0
    %887 = vmatpush1.msra.mxu0 0.0
    %888 = vmatprep.subr.mxu0 0.0
    %889 = vmatpush1.msra.mxu0 0.0
    %890 = vmatprep.subr.mxu0 0.0
    %891 = vmatpush1.msra.mxu0 0.0
    %892 = vmatprep.subr.mxu0 0.0
    %893 = vmatpush1.msra.mxu0 0.0
    %894 = vmatprep.subr.mxu0 0.0
    %895 = vmatpush1.msra.mxu0 0.0
    %896 = vmatprep.subr.mxu0 0.0
    %897 = vmatpush1.msra.mxu0 0.0
    %898 = vmatprep.subr.mxu0 0.0
    %899 = vmatpush1.msra.mxu0 0.0
    %900 = vmatprep.subr.mxu0 0.0
    %901 = vmatpush1.msra.mxu0 0.0
    %902 = vmatprep.subr.mxu0 0.0
    %903 = vmatpush1.msra.mxu0 0.0
    %904 = vmatprep.subr.mxu0 0.0
    %905 = vmatpush1.msra.mxu0 0.0
    %906 = vmatprep.subr.mxu0 0.0
    %907 = vmatpush1.msra.mxu0 0.0
    %908 = vmatprep.subr.mxu0 0.0
    %909 = vmatpush1.msra.mxu0 0.0
    %910 = vmatprep.subr.mxu0 0.0
    %911 = vmatpush1.msra.mxu0 0.0
    %912 = vmatprep.subr.mxu0 0.0
    %913 = vmatpush1.msra.mxu0 0.0
    %914 = vmatprep.subr.mxu0 0.0
    %915 = vmatpush1.msra.mxu0 0.0
    %916 = vmatprep.subr.mxu0 0.0
    %917 = vmatpush1.msra.mxu0 0.0
    %918 = vmatprep.subr.mxu0 0.0
    %919 = vmatpush1.msra.mxu0 0.0
    %920 = vmatprep.subr.mxu0 0.0
    %921 = vmatpush1.msra.mxu0 0.0
    %922 = vmatprep.subr.mxu0 0.0
    %923 = vmatpush1.msra.mxu0 0.0
    %924 = vmatprep.subr.mxu0 0.0
    %925 = vmatpush1.msra.mxu0 0.0
    %926 = vmatprep.subr.mxu0 0.0
    %927 = vmatpush1.msra.mxu0 0.0
    %928 = vmatprep.mubr.f32.mxu0 0.0
    %929 = vmatmul.mubr.f32.gmra.mrb[0].mxu0 %v859
    %v930 = vpop.f32.mrb[0].mxu0
    %v931 = vadd.f32 0.0, %v930
    %v932 = vpop.f32.mrb[0].mxu0
    %v933 = vadd.f32 0.0, %v932
    %934 = vmatprep.mubr.f32.mxu0 0.0
    %935 = vmatmul.mubr.f32.gmra.mrb[0].mxu0 %v862
    %v936 = vpop.f32.mrb[0].mxu0
    %v937 = vadd.f32 0.0, %v936
    %v938 = vpop.f32.mrb[0].mxu0
    %v939 = vadd.f32 0.0, %v938
    %940 = vdwg.mxu0
    %v941 = vadd.f32 %v838, %v931
    %v942 = vadd.f32 %v839, %v933
    %v943 = vadd.f32 %v840, %v937
    %v944 = vadd.f32 %v841, %v939
    %v945 = vlaneseq
    %v946 = vshrl.u32 %v945, 7
    %v947 = vsub.s32 0, %v946
    %v948 = vrot.slane %v32, %v947
    %v949 = vmul.f32 %v941, %v948
    %v950 = vmul.f32 %v942, %v948
    %v951 = vmul.f32 %v943, %v948
    %v952 = vmul.f32 %v944, %v948
    %v953 = vadd.f32 %v949, %v950
    %954 = vadd.xlane.f32.xlu0 %v953
    %v955 = vpop.xlane.xlu0 %954
    %v956 = vadd.f32 %v951, %v952
    %957 = vadd.xlane.f32.xlu0 %v956
    %v958 = vpop.xlane.xlu0 %957
    %v959 = vmul.f32 %v949, %v949
    %v960 = vmul.f32 %v950, %v950
    %v961 = vmul.f32 %v951, %v951
    %v962 = vmul.f32 %v952, %v952
    %v963 = vadd.f32 %v959, %v960
    %964 = vadd.xlane.f32.xlu0 %v963
    %v965 = vpop.xlane.xlu0 %964
    %v966 = vadd.f32 %v961, %v962
    %967 = vadd.xlane.f32.xlu0 %v966
    %v968 = vpop.xlane.xlu0 %967
    %v969 = vmul.f32 %v955, 0.0061728396
    %v970 = vmul.f32 %v958, 0.0061728396
    %v971 = vmul.f32 %v965, 0.0061728396
    %v972 = vmul.f32 %v968, 0.0061728396
    %v973 = vmul.f32 %v969, %v969
    %v974 = vmul.f32 %v970, %v970
    %v975 = vsub.f32 %v971, %v973
    %v976 = vsub.f32 %v972, %v974
    %v977 = vld [vmem:[%s4] sm:$0xff]
    %v978 = vld [vmem:[%s4 + $0x8] sm:$0xff]
    %v979 = vadd.f32 %v975, 1e-05
    %v980 = vadd.f32 %v976, 1e-05
    %v981 = vrsqrt.pop %v979
    %v982 = vrsqrt.pop %v980
    %v983 = vmul.f32 %v977, %v981
    %v984 = vmul.f32 %v978, %v982
    %v985 = vld [vmem:[%s5] sm:$0xff]
    %v986 = vld [vmem:[%s5 + $0x8] sm:$0xff]
    %v987 = vmul.f32 %v969, %v983
    %v988 = vmul.f32 %v970, %v984
    %v989 = vsub.f32 %v985, %v987
    %v990 = vsub.f32 %v986, %v988
    %992 = vset.pattern.permute.xlu0 0
    %993 = vperm.xlu0 %992, %v983
    %v994 = vpop.permute.xlu0 %993
    %997 = vset.pattern.permute.xlu0 0
    %998 = vperm.xlu0 %997, %v984
    %v999 = vpop.permute.xlu0 %998
    %v1001 = vmul.f32 %v941, %v994
    %v1002 = vmul.f32 %v942, %v994
    %v1003 = vmul.f32 %v943, %v999
    %v1004 = vmul.f32 %v944, %v999
    %1006 = vset.pattern.permute.xlu0 0
    %1007 = vperm.xlu0 %1006, %v989
    %v1008 = vpop.permute.xlu0 %1007
    %1011 = vset.pattern.permute.xlu0 0
    %1012 = vperm.xlu0 %1011, %v990
    %v1013 = vpop.permute.xlu0 %1012
    %v1015 = vadd.f32 %v1001, %v1008
    %v1016 = vadd.f32 %v1002, %v1008
    %v1017 = vadd.f32 %v1003, %v1013
    %v1018 = vadd.f32 %v1004, %v1013
    %v1019 = vmax.f32 %v1015, 0.0
    %v1020 = vmax.f32 %v1016, 0.0
    %v1021 = vmax.f32 %v1017, 0.0
    %v1022 = vmax.f32 %v1018, 0.0
    %v1023 = vmul.f32 %v1019, %v948
    %v1024 = vmul.f32 %v1020, %v948
    %v1025 = vmul.f32 %v1021, %v948
    %v1026 = vmul.f32 %v1022, %v948
    %1027 = vrot.lane.b32.xlu0 %v1023, 12
    %v1028 = vpop.permute.xlu0 %1027
    %1029 = vrot.lane.b32.xlu0 %v1025, 12
    %v1030 = vpop.permute.xlu0 %1029
    %1031 = vrot.lane.b32.xlu0 %v1024, 12
    %v1032 = vpop.permute.xlu0 %1031
    %1033 = vrot.lane.b32.xlu0 %v1026, 12
    %v1034 = vpop.permute.xlu0 %1033
    %v1035 = vsel %vm47, %v1028, %v1032
    %v1036 = vsel %vm47, %v1030, %v1034
    %v1037 = vsel %vm47, %v1032, %v1028
    %v1038 = vsel %vm47, %v1034, %v1030
    %s1039 = scalar_lea.vmem %s3, 144
    %v1040 = vld [vmem:[%s1039] sm:$0xff]
    %v1041 = vld [vmem:[%s1039 + $0x8] sm:$0xff]
    %1042 = vrot.lane.b32.xlu0 %v1023, 11
    %v1043 = vpop.permute.xlu0 %1042
    %1044 = vrot.lane.b32.xlu0 %v1025, 11
    %v1045 = vpop.permute.xlu0 %1044
    %1046 = vrot.lane.b32.xlu0 %v1024, 11
    %v1047 = vpop.permute.xlu0 %1046
    %1048 = vrot.lane.b32.xlu0 %v1026, 11
    %v1049 = vpop.permute.xlu0 %1048
    %v1050 = vsel %vm62, %v1043, %v1047
    %v1051 = vsel %vm62, %v1045, %v1049
    %v1052 = vsel %vm62, %v1047, %v1043
    %v1053 = vsel %vm62, %v1049, %v1045
    %s1054 = scalar_lea.vmem %s3, 160
    %v1055 = vld [vmem:[%s1054] sm:$0xff]
    %v1056 = vld [vmem:[%s1054 + $0x8] sm:$0xff]
    %v1058 = vsel %vm70, %v1055, 0
    %v1061 = vsel %vm70, %v1056, 0
    %1063 = vmatprep.subr.mxu0 %v1050
    %1064 = vmatpush1.msra.mxu0 %v1052
    %1065 = vmatprep.subr.mxu0 %v1051
    %1066 = vmatpush1.msra.mxu0 %v1053
    %1067 = vmatprep.subr.mxu0 0.0
    %1068 = vmatpush1.msra.mxu0 0.0
    %1069 = vmatprep.subr.mxu0 0.0
    %1070 = vmatpush1.msra.mxu0 0.0
    %1071 = vmatprep.subr.mxu0 0.0
    %1072 = vmatpush1.msra.mxu0 0.0
    %1073 = vmatprep.subr.mxu0 0.0
    %1074 = vmatpush1.msra.mxu0 0.0
    %1075 = vmatprep.subr.mxu0 0.0
    %1076 = vmatpush1.msra.mxu0 0.0
    %1077 = vmatprep.subr.mxu0 0.0
    %1078 = vmatpush1.msra.mxu0 0.0
    %1079 = vmatprep.subr.mxu0 0.0
    %1080 = vmatpush1.msra.mxu0 0.0
    %1081 = vmatprep.subr.mxu0 0.0
    %1082 = vmatpush1.msra.mxu0 0.0
    %1083 = vmatprep.subr.mxu0 0.0
    %1084 = vmatpush1.msra.mxu0 0.0
    %1085 = vmatprep.subr.mxu0 0.0
    %1086 = vmatpush1.msra.mxu0 0.0
    %1087 = vmatprep.subr.mxu0 0.0
    %1088 = vmatpush1.msra.mxu0 0.0
    %1089 = vmatprep.subr.mxu0 0.0
    %1090 = vmatpush1.msra.mxu0 0.0
    %1091 = vmatprep.subr.mxu0 0.0
    %1092 = vmatpush1.msra.mxu0 0.0
    %1093 = vmatprep.subr.mxu0 0.0
    %1094 = vmatpush1.msra.mxu0 0.0
    %1095 = vmatprep.subr.mxu0 0.0
    %1096 = vmatpush1.msra.mxu0 0.0
    %1097 = vmatprep.subr.mxu0 0.0
    %1098 = vmatpush1.msra.mxu0 0.0
    %1099 = vmatprep.subr.mxu0 0.0
    %1100 = vmatpush1.msra.mxu0 0.0
    %1101 = vmatprep.subr.mxu0 0.0
    %1102 = vmatpush1.msra.mxu0 0.0
    %1103 = vmatprep.subr.mxu0 0.0
    %1104 = vmatpush1.msra.mxu0 0.0
    %1105 = vmatprep.subr.mxu0 0.0
    %1106 = vmatpush1.msra.mxu0 0.0
    %1107 = vmatprep.subr.mxu0 0.0
    %1108 = vmatpush1.msra.mxu0 0.0
    %1109 = vmatprep.subr.mxu0 0.0
    %1110 = vmatpush1.msra.mxu0 0.0
    %1111 = vmatprep.subr.mxu0 0.0
    %1112 = vmatpush1.msra.mxu0 0.0
    %1113 = vmatprep.subr.mxu0 0.0
    %1114 = vmatpush1.msra.mxu0 0.0
    %1115 = vmatprep.subr.mxu0 0.0
    %1116 = vmatpush1.msra.mxu0 0.0
    %1117 = vmatprep.subr.mxu0 0.0
    %1118 = vmatpush1.msra.mxu0 0.0
    %1119 = vmatprep.subr.mxu0 0.0
    %1120 = vmatpush1.msra.mxu0 0.0
    %1121 = vmatprep.subr.mxu0 0.0
    %1122 = vmatpush1.msra.mxu0 0.0
    %1123 = vmatprep.subr.mxu0 0.0
    %1124 = vmatpush1.msra.mxu0 0.0
    %1125 = vmatprep.subr.mxu0 0.0
    %1126 = vmatpush1.msra.mxu0 0.0
    %1127 = vmatprep.mubr.f32.mxu0 0.0
    %1128 = vmatmul.mubr.f32.gmra.mrb[0].mxu0 %v1058
    %v1129 = vpop.f32.mrb[0].mxu0
    %v1130 = vadd.f32 0.0, %v1129
    %v1131 = vpop.f32.mrb[0].mxu0
    %v1132 = vadd.f32 0.0, %v1131
    %1133 = vmatprep.mubr.f32.mxu0 0.0
    %1134 = vmatmul.mubr.f32.gmra.mrb[0].mxu0 %v1061
    %v1135 = vpop.f32.mrb[0].mxu0
    %v1136 = vadd.f32 0.0, %v1135
    %v1137 = vpop.f32.mrb[0].mxu0
    %v1138 = vadd.f32 0.0, %v1137
    %1139 = vdwg.mxu0
    %v1141 = vsel %vm70, %v1040, 0
    %v1144 = vsel %vm70, %v1041, 0
    %1146 = vmatprep.subr.mxu0 %v1035
    %1147 = vmatpush1.msra.mxu0 %v1037
    %1148 = vmatprep.subr.mxu0 %v1036
    %1149 = vmatpush1.msra.mxu0 %v1038
    %1150 = vmatprep.subr.mxu0 0.0
    %1151 = vmatpush1.msra.mxu0 0.0
    %1152 = vmatprep.subr.mxu0 0.0
    %1153 = vmatpush1.msra.mxu0 0.0
    %1154 = vmatprep.subr.mxu0 0.0
    %1155 = vmatpush1.msra.mxu0 0.0
    %1156 = vmatprep.subr.mxu0 0.0
    %1157 = vmatpush1.msra.mxu0 0.0
    %1158 = vmatprep.subr.mxu0 0.0
    %1159 = vmatpush1.msra.mxu0 0.0
    %1160 = vmatprep.subr.mxu0 0.0
    %1161 = vmatpush1.msra.mxu0 0.0
    %1162 = vmatprep.subr.mxu0 0.0
    %1163 = vmatpush1.msra.mxu0 0.0
    %1164 = vmatprep.subr.mxu0 0.0
    %1165 = vmatpush1.msra.mxu0 0.0
    %1166 = vmatprep.subr.mxu0 0.0
    %1167 = vmatpush1.msra.mxu0 0.0
    %1168 = vmatprep.subr.mxu0 0.0
    %1169 = vmatpush1.msra.mxu0 0.0
    %1170 = vmatprep.subr.mxu0 0.0
    %1171 = vmatpush1.msra.mxu0 0.0
    %1172 = vmatprep.subr.mxu0 0.0
    %1173 = vmatpush1.msra.mxu0 0.0
    %1174 = vmatprep.subr.mxu0 0.0
    %1175 = vmatpush1.msra.mxu0 0.0
    %1176 = vmatprep.subr.mxu0 0.0
    %1177 = vmatpush1.msra.mxu0 0.0
    %1178 = vmatprep.subr.mxu0 0.0
    %1179 = vmatpush1.msra.mxu0 0.0
    %1180 = vmatprep.subr.mxu0 0.0
    %1181 = vmatpush1.msra.mxu0 0.0
    %1182 = vmatprep.subr.mxu0 0.0
    %1183 = vmatpush1.msra.mxu0 0.0
    %1184 = vmatprep.subr.mxu0 0.0
    %1185 = vmatpush1.msra.mxu0 0.0
    %1186 = vmatprep.subr.mxu0 0.0
    %1187 = vmatpush1.msra.mxu0 0.0
    %1188 = vmatprep.subr.mxu0 0.0
    %1189 = vmatpush1.msra.mxu0 0.0
    %1190 = vmatprep.subr.mxu0 0.0
    %1191 = vmatpush1.msra.mxu0 0.0
    %1192 = vmatprep.subr.mxu0 0.0
    %1193 = vmatpush1.msra.mxu0 0.0
    %1194 = vmatprep.subr.mxu0 0.0
    %1195 = vmatpush1.msra.mxu0 0.0
    %1196 = vmatprep.subr.mxu0 0.0
    %1197 = vmatpush1.msra.mxu0 0.0
    %1198 = vmatprep.subr.mxu0 0.0
    %1199 = vmatpush1.msra.mxu0 0.0
    %1200 = vmatprep.subr.mxu0 0.0
    %1201 = vmatpush1.msra.mxu0 0.0
    %1202 = vmatprep.subr.mxu0 0.0
    %1203 = vmatpush1.msra.mxu0 0.0
    %1204 = vmatprep.subr.mxu0 0.0
    %1205 = vmatpush1.msra.mxu0 0.0
    %1206 = vmatprep.subr.mxu0 0.0
    %1207 = vmatpush1.msra.mxu0 0.0
    %1208 = vmatprep.subr.mxu0 0.0
    %1209 = vmatpush1.msra.mxu0 0.0
    %1210 = vmatprep.mubr.f32.mxu0 0.0
    %1211 = vmatmul.mubr.f32.gmra.mrb[0].mxu0 %v1141
    %v1212 = vpop.f32.mrb[0].mxu0
    %v1213 = vadd.f32 %v1130, %v1212
    %v1214 = vpop.f32.mrb[0].mxu0
    %v1215 = vadd.f32 %v1132, %v1214
    %1216 = vmatprep.mubr.f32.mxu0 0.0
    %1217 = vmatmul.mubr.f32.gmra.mrb[0].mxu0 %v1144
    %v1218 = vpop.f32.mrb[0].mxu0
    %v1219 = vadd.f32 %v1136, %v1218
    %v1220 = vpop.f32.mrb[0].mxu0
    %v1221 = vadd.f32 %v1138, %v1220
    %1222 = vdwg.mxu0
    %1223 = vrot.lane.b32.xlu0 %v1023, 10
    %v1224 = vpop.permute.xlu0 %1223
    %1225 = vrot.lane.b32.xlu0 %v1025, 10
    %v1226 = vpop.permute.xlu0 %1225
    %1227 = vrot.lane.b32.xlu0 %v1024, 10
    %v1228 = vpop.permute.xlu0 %1227
    %1229 = vrot.lane.b32.xlu0 %v1026, 10
    %v1230 = vpop.permute.xlu0 %1229
    %v1231 = vsel %vm245, %v1224, %v1228
    %v1232 = vsel %vm245, %v1226, %v1230
    %v1233 = vsel %vm245, %v1228, %v1224
    %v1234 = vsel %vm245, %v1230, %v1226
    %s1235 = scalar_lea.vmem %s3, 176
    %v1236 = vld [vmem:[%s1235] sm:$0xff]
    %v1237 = vld [vmem:[%s1235 + $0x8] sm:$0xff]
    %v1239 = vsel %vm70, %v1236, 0
    %v1242 = vsel %vm70, %v1237, 0
    %1244 = vmatprep.subr.mxu0 %v1231
    %1245 = vmatpush1.msra.mxu0 %v1233
    %1246 = vmatprep.subr.mxu0 %v1232
    %1247 = vmatpush1.msra.mxu0 %v1234
    %1248 = vmatprep.subr.mxu0 0.0
    %1249 = vmatpush1.msra.mxu0 0.0
    %1250 = vmatprep.subr.mxu0 0.0
    %1251 = vmatpush1.msra.mxu0 0.0
    %1252 = vmatprep.subr.mxu0 0.0
    %1253 = vmatpush1.msra.mxu0 0.0
    %1254 = vmatprep.subr.mxu0 0.0
    %1255 = vmatpush1.msra.mxu0 0.0
    %1256 = vmatprep.subr.mxu0 0.0
    %1257 = vmatpush1.msra.mxu0 0.0
    %1258 = vmatprep.subr.mxu0 0.0
    %1259 = vmatpush1.msra.mxu0 0.0
    %1260 = vmatprep.subr.mxu0 0.0
    %1261 = vmatpush1.msra.mxu0 0.0
    %1262 = vmatprep.subr.mxu0 0.0
    %1263 = vmatpush1.msra.mxu0 0.0
    %1264 = vmatprep.subr.mxu0 0.0
    %1265 = vmatpush1.msra.mxu0 0.0
    %1266 = vmatprep.subr.mxu0 0.0
    %1267 = vmatpush1.msra.mxu0 0.0
    %1268 = vmatprep.subr.mxu0 0.0
    %1269 = vmatpush1.msra.mxu0 0.0
    %1270 = vmatprep.subr.mxu0 0.0
    %1271 = vmatpush1.msra.mxu0 0.0
    %1272 = vmatprep.subr.mxu0 0.0
    %1273 = vmatpush1.msra.mxu0 0.0
    %1274 = vmatprep.subr.mxu0 0.0
    %1275 = vmatpush1.msra.mxu0 0.0
    %1276 = vmatprep.subr.mxu0 0.0
    %1277 = vmatpush1.msra.mxu0 0.0
    %1278 = vmatprep.subr.mxu0 0.0
    %1279 = vmatpush1.msra.mxu0 0.0
    %1280 = vmatprep.subr.mxu0 0.0
    %1281 = vmatpush1.msra.mxu0 0.0
    %1282 = vmatprep.subr.mxu0 0.0
    %1283 = vmatpush1.msra.mxu0 0.0
    %1284 = vmatprep.subr.mxu0 0.0
    %1285 = vmatpush1.msra.mxu0 0.0
    %1286 = vmatprep.subr.mxu0 0.0
    %1287 = vmatpush1.msra.mxu0 0.0
    %1288 = vmatprep.subr.mxu0 0.0
    %1289 = vmatpush1.msra.mxu0 0.0
    %1290 = vmatprep.subr.mxu0 0.0
    %1291 = vmatpush1.msra.mxu0 0.0
    %1292 = vmatprep.subr.mxu0 0.0
    %1293 = vmatpush1.msra.mxu0 0.0
    %1294 = vmatprep.subr.mxu0 0.0
    %1295 = vmatpush1.msra.mxu0 0.0
    %1296 = vmatprep.subr.mxu0 0.0
    %1297 = vmatpush1.msra.mxu0 0.0
    %1298 = vmatprep.subr.mxu0 0.0
    %1299 = vmatpush1.msra.mxu0 0.0
    %1300 = vmatprep.subr.mxu0 0.0
    %1301 = vmatpush1.msra.mxu0 0.0
    %1302 = vmatprep.subr.mxu0 0.0
    %1303 = vmatpush1.msra.mxu0 0.0
    %1304 = vmatprep.subr.mxu0 0.0
    %1305 = vmatpush1.msra.mxu0 0.0
    %1306 = vmatprep.subr.mxu0 0.0
    %1307 = vmatpush1.msra.mxu0 0.0
    %1308 = vmatprep.mubr.f32.mxu0 0.0
    %1309 = vmatmul.mubr.f32.gmra.mrb[0].mxu0 %v1239
    %v1310 = vpop.f32.mrb[0].mxu0
    %v1311 = vadd.f32 0.0, %v1310
    %v1312 = vpop.f32.mrb[0].mxu0
    %v1313 = vadd.f32 0.0, %v1312
    %1314 = vmatprep.mubr.f32.mxu0 0.0
    %1315 = vmatmul.mubr.f32.gmra.mrb[0].mxu0 %v1242
    %v1316 = vpop.f32.mrb[0].mxu0
    %v1317 = vadd.f32 0.0, %v1316
    %v1318 = vpop.f32.mrb[0].mxu0
    %v1319 = vadd.f32 0.0, %v1318
    %1320 = vdwg.mxu0
    %v1321 = vadd.f32 %v1213, %v1311
    %v1322 = vadd.f32 %v1215, %v1313
    %v1323 = vadd.f32 %v1219, %v1317
    %v1324 = vadd.f32 %v1221, %v1319
    %1325 = vrot.lane.b32.xlu0 %v1023, 1
    %v1326 = vpop.permute.xlu0 %1325
    %1327 = vrot.lane.b32.xlu0 %v1025, 1
    %v1328 = vpop.permute.xlu0 %1327
    %1329 = vrot.lane.b32.xlu0 %v1024, 1
    %v1330 = vpop.permute.xlu0 %1329
    %1331 = vrot.lane.b32.xlu0 %v1026, 1
    %v1332 = vpop.permute.xlu0 %1331
    %v1333 = vsel %vm348, %v1326, %v1330
    %v1334 = vsel %vm348, %v1328, %v1332
    %v1335 = vsel %vm348, %v1330, %v1326
    %v1336 = vsel %vm348, %v1332, %v1328
    %s1337 = scalar_lea.vmem %s3, 192
    %v1338 = vld [vmem:[%s1337] sm:$0xff]
    %v1339 = vld [vmem:[%s1337 + $0x8] sm:$0xff]
    %v1341 = vsel %vm70, %v1338, 0
    %v1344 = vsel %vm70, %v1339, 0
    %1346 = vmatprep.subr.mxu0 %v1333
    %1347 = vmatpush1.msra.mxu0 %v1335
    %1348 = vmatprep.subr.mxu0 %v1334
    %1349 = vmatpush1.msra.mxu0 %v1336
    %1350 = vmatprep.subr.mxu0 0.0
    %1351 = vmatpush1.msra.mxu0 0.0
    %1352 = vmatprep.subr.mxu0 0.0
    %1353 = vmatpush1.msra.mxu0 0.0
    %1354 = vmatprep.subr.mxu0 0.0
    %1355 = vmatpush1.msra.mxu0 0.0
    %1356 = vmatprep.subr.mxu0 0.0
    %1357 = vmatpush1.msra.mxu0 0.0
    %1358 = vmatprep.subr.mxu0 0.0
    %1359 = vmatpush1.msra.mxu0 0.0
    %1360 = vmatprep.subr.mxu0 0.0
    %1361 = vmatpush1.msra.mxu0 0.0
    %1362 = vmatprep.subr.mxu0 0.0
    %1363 = vmatpush1.msra.mxu0 0.0
    %1364 = vmatprep.subr.mxu0 0.0
    %1365 = vmatpush1.msra.mxu0 0.0
    %1366 = vmatprep.subr.mxu0 0.0
    %1367 = vmatpush1.msra.mxu0 0.0
    %1368 = vmatprep.subr.mxu0 0.0
    %1369 = vmatpush1.msra.mxu0 0.0
    %1370 = vmatprep.subr.mxu0 0.0
    %1371 = vmatpush1.msra.mxu0 0.0
    %1372 = vmatprep.subr.mxu0 0.0
    %1373 = vmatpush1.msra.mxu0 0.0
    %1374 = vmatprep.subr.mxu0 0.0
    %1375 = vmatpush1.msra.mxu0 0.0
    %1376 = vmatprep.subr.mxu0 0.0
    %1377 = vmatpush1.msra.mxu0 0.0
    %1378 = vmatprep.subr.mxu0 0.0
    %1379 = vmatpush1.msra.mxu0 0.0
    %1380 = vmatprep.subr.mxu0 0.0
    %1381 = vmatpush1.msra.mxu0 0.0
    %1382 = vmatprep.subr.mxu0 0.0
    %1383 = vmatpush1.msra.mxu0 0.0
    %1384 = vmatprep.subr.mxu0 0.0
    %1385 = vmatpush1.msra.mxu0 0.0
    %1386 = vmatprep.subr.mxu0 0.0
    %1387 = vmatpush1.msra.mxu0 0.0
    %1388 = vmatprep.subr.mxu0 0.0
    %1389 = vmatpush1.msra.mxu0 0.0
    %1390 = vmatprep.subr.mxu0 0.0
    %1391 = vmatpush1.msra.mxu0 0.0
    %1392 = vmatprep.subr.mxu0 0.0
    %1393 = vmatpush1.msra.mxu0 0.0
    %1394 = vmatprep.subr.mxu0 0.0
    %1395 = vmatpush1.msra.mxu0 0.0
    %1396 = vmatprep.subr.mxu0 0.0
    %1397 = vmatpush1.msra.mxu0 0.0
    %1398 = vmatprep.subr.mxu0 0.0
    %1399 = vmatpush1.msra.mxu0 0.0
    %1400 = vmatprep.subr.mxu0 0.0
    %1401 = vmatpush1.msra.mxu0 0.0
    %1402 = vmatprep.subr.mxu0 0.0
    %1403 = vmatpush1.msra.mxu0 0.0
    %1404 = vmatprep.subr.mxu0 0.0
    %1405 = vmatpush1.msra.mxu0 0.0
    %1406 = vmatprep.subr.mxu0 0.0
    %1407 = vmatpush1.msra.mxu0 0.0
    %1408 = vmatprep.subr.mxu0 0.0
    %1409 = vmatpush1.msra.mxu0 0.0
    %1410 = vmatprep.mubr.f32.mxu0 0.0
    %1411 = vmatmul.mubr.f32.gmra.mrb[0].mxu0 %v1341
    %v1412 = vpop.f32.mrb[0].mxu0
    %v1413 = vadd.f32 0.0, %v1412
    %v1414 = vpop.f32.mrb[0].mxu0
    %v1415 = vadd.f32 0.0, %v1414
    %1416 = vmatprep.mubr.f32.mxu0 0.0
    %1417 = vmatmul.mubr.f32.gmra.mrb[0].mxu0 %v1344
    %v1418 = vpop.f32.mrb[0].mxu0
    %v1419 = vadd.f32 0.0, %v1418
    %v1420 = vpop.f32.mrb[0].mxu0
    %v1421 = vadd.f32 0.0, %v1420
    %1422 = vdwg.mxu0
    %v1423 = vadd.f32 %v1321, %v1413
    %v1424 = vadd.f32 %v1322, %v1415
    %v1425 = vadd.f32 %v1323, %v1419
    %v1426 = vadd.f32 %v1324, %v1421
    %s1427 = scalar_lea.vmem %s3, 208
    %v1428 = vld [vmem:[%s1427] sm:$0xff]
    %v1429 = vld [vmem:[%s1427 + $0x8] sm:$0xff]
    %v1431 = vsel %vm70, %v1428, 0
    %v1434 = vsel %vm70, %v1429, 0
    %1436 = vmatprep.subr.mxu0 %v1024
    %1437 = vmatpush1.msra.mxu0 %v1023
    %1438 = vmatprep.subr.mxu0 %v1026
    %1439 = vmatpush1.msra.mxu0 %v1025
    %1440 = vmatprep.subr.mxu0 0.0
    %1441 = vmatpush1.msra.mxu0 0.0
    %1442 = vmatprep.subr.mxu0 0.0
    %1443 = vmatpush1.msra.mxu0 0.0
    %1444 = vmatprep.subr.mxu0 0.0
    %1445 = vmatpush1.msra.mxu0 0.0
    %1446 = vmatprep.subr.mxu0 0.0
    %1447 = vmatpush1.msra.mxu0 0.0
    %1448 = vmatprep.subr.mxu0 0.0
    %1449 = vmatpush1.msra.mxu0 0.0
    %1450 = vmatprep.subr.mxu0 0.0
    %1451 = vmatpush1.msra.mxu0 0.0
    %1452 = vmatprep.subr.mxu0 0.0
    %1453 = vmatpush1.msra.mxu0 0.0
    %1454 = vmatprep.subr.mxu0 0.0
    %1455 = vmatpush1.msra.mxu0 0.0
    %1456 = vmatprep.subr.mxu0 0.0
    %1457 = vmatpush1.msra.mxu0 0.0
    %1458 = vmatprep.subr.mxu0 0.0
    %1459 = vmatpush1.msra.mxu0 0.0
    %1460 = vmatprep.subr.mxu0 0.0
    %1461 = vmatpush1.msra.mxu0 0.0
    %1462 = vmatprep.subr.mxu0 0.0
    %1463 = vmatpush1.msra.mxu0 0.0
    %1464 = vmatprep.subr.mxu0 0.0
    %1465 = vmatpush1.msra.mxu0 0.0
    %1466 = vmatprep.subr.mxu0 0.0
    %1467 = vmatpush1.msra.mxu0 0.0
    %1468 = vmatprep.subr.mxu0 0.0
    %1469 = vmatpush1.msra.mxu0 0.0
    %1470 = vmatprep.subr.mxu0 0.0
    %1471 = vmatpush1.msra.mxu0 0.0
    %1472 = vmatprep.subr.mxu0 0.0
    %1473 = vmatpush1.msra.mxu0 0.0
    %1474 = vmatprep.subr.mxu0 0.0
    %1475 = vmatpush1.msra.mxu0 0.0
    %1476 = vmatprep.subr.mxu0 0.0
    %1477 = vmatpush1.msra.mxu0 0.0
    %1478 = vmatprep.subr.mxu0 0.0
    %1479 = vmatpush1.msra.mxu0 0.0
    %1480 = vmatprep.subr.mxu0 0.0
    %1481 = vmatpush1.msra.mxu0 0.0
    %1482 = vmatprep.subr.mxu0 0.0
    %1483 = vmatpush1.msra.mxu0 0.0
    %1484 = vmatprep.subr.mxu0 0.0
    %1485 = vmatpush1.msra.mxu0 0.0
    %1486 = vmatprep.subr.mxu0 0.0
    %1487 = vmatpush1.msra.mxu0 0.0
    %1488 = vmatprep.subr.mxu0 0.0
    %1489 = vmatpush1.msra.mxu0 0.0
    %1490 = vmatprep.subr.mxu0 0.0
    %1491 = vmatpush1.msra.mxu0 0.0
    %1492 = vmatprep.subr.mxu0 0.0
    %1493 = vmatpush1.msra.mxu0 0.0
    %1494 = vmatprep.subr.mxu0 0.0
    %1495 = vmatpush1.msra.mxu0 0.0
    %1496 = vmatprep.subr.mxu0 0.0
    %1497 = vmatpush1.msra.mxu0 0.0
    %1498 = vmatprep.subr.mxu0 0.0
    %1499 = vmatpush1.msra.mxu0 0.0
    %1500 = vmatprep.mubr.f32.mxu0 0.0
    %1501 = vmatmul.mubr.f32.gmra.mrb[0].mxu0 %v1431
    %v1502 = vpop.f32.mrb[0].mxu0
    %v1503 = vadd.f32 0.0, %v1502
    %v1504 = vpop.f32.mrb[0].mxu0
    %v1505 = vadd.f32 0.0, %v1504
    %1506 = vmatprep.mubr.f32.mxu0 0.0
    %1507 = vmatmul.mubr.f32.gmra.mrb[0].mxu0 %v1434
    %v1508 = vpop.f32.mrb[0].mxu0
    %v1509 = vadd.f32 0.0, %v1508
    %v1510 = vpop.f32.mrb[0].mxu0
    %v1511 = vadd.f32 0.0, %v1510
    %1512 = vdwg.mxu0
    %v1513 = vadd.f32 %v1423, %v1503
    %v1514 = vadd.f32 %v1424, %v1505
    %v1515 = vadd.f32 %v1425, %v1509
    %v1516 = vadd.f32 %v1426, %v1511
    %1517 = vrot.lane.b32.xlu0 %v1023, 127
    %v1518 = vpop.permute.xlu0 %1517
    %1519 = vrot.lane.b32.xlu0 %v1025, 127
    %v1520 = vpop.permute.xlu0 %1519
    %1521 = vrot.lane.b32.xlu0 %v1024, 127
    %v1522 = vpop.permute.xlu0 %1521
    %1523 = vrot.lane.b32.xlu0 %v1026, 127
    %v1524 = vpop.permute.xlu0 %1523
    %v1525 = vsel %vm541, %v1518, %v1522
    %v1526 = vsel %vm541, %v1520, %v1524
    %v1527 = vsel %vm541, %v1522, %v1518
    %v1528 = vsel %vm541, %v1524, %v1520
    %s1529 = scalar_lea.vmem %s3, 224
    %v1530 = vld [vmem:[%s1529] sm:$0xff]
    %v1531 = vld [vmem:[%s1529 + $0x8] sm:$0xff]
    %v1533 = vsel %vm70, %v1530, 0
    %v1536 = vsel %vm70, %v1531, 0
    %1538 = vmatprep.subr.mxu0 %v1527
    %1539 = vmatpush1.msra.mxu0 %v1525
    %1540 = vmatprep.subr.mxu0 %v1528
    %1541 = vmatpush1.msra.mxu0 %v1526
    %1542 = vmatprep.subr.mxu0 0.0
    %1543 = vmatpush1.msra.mxu0 0.0
    %1544 = vmatprep.subr.mxu0 0.0
    %1545 = vmatpush1.msra.mxu0 0.0
    %1546 = vmatprep.subr.mxu0 0.0
    %1547 = vmatpush1.msra.mxu0 0.0
    %1548 = vmatprep.subr.mxu0 0.0
    %1549 = vmatpush1.msra.mxu0 0.0
    %1550 = vmatprep.subr.mxu0 0.0
    %1551 = vmatpush1.msra.mxu0 0.0
    %1552 = vmatprep.subr.mxu0 0.0
    %1553 = vmatpush1.msra.mxu0 0.0
    %1554 = vmatprep.subr.mxu0 0.0
    %1555 = vmatpush1.msra.mxu0 0.0
    %1556 = vmatprep.subr.mxu0 0.0
    %1557 = vmatpush1.msra.mxu0 0.0
    %1558 = vmatprep.subr.mxu0 0.0
    %1559 = vmatpush1.msra.mxu0 0.0
    %1560 = vmatprep.subr.mxu0 0.0
    %1561 = vmatpush1.msra.mxu0 0.0
    %1562 = vmatprep.subr.mxu0 0.0
    %1563 = vmatpush1.msra.mxu0 0.0
    %1564 = vmatprep.subr.mxu0 0.0
    %1565 = vmatpush1.msra.mxu0 0.0
    %1566 = vmatprep.subr.mxu0 0.0
    %1567 = vmatpush1.msra.mxu0 0.0
    %1568 = vmatprep.subr.mxu0 0.0
    %1569 = vmatpush1.msra.mxu0 0.0
    %1570 = vmatprep.subr.mxu0 0.0
    %1571 = vmatpush1.msra.mxu0 0.0
    %1572 = vmatprep.subr.mxu0 0.0
    %1573 = vmatpush1.msra.mxu0 0.0
    %1574 = vmatprep.subr.mxu0 0.0
    %1575 = vmatpush1.msra.mxu0 0.0
    %1576 = vmatprep.subr.mxu0 0.0
    %1577 = vmatpush1.msra.mxu0 0.0
    %1578 = vmatprep.subr.mxu0 0.0
    %1579 = vmatpush1.msra.mxu0 0.0
    %1580 = vmatprep.subr.mxu0 0.0
    %1581 = vmatpush1.msra.mxu0 0.0
    %1582 = vmatprep.subr.mxu0 0.0
    %1583 = vmatpush1.msra.mxu0 0.0
    %1584 = vmatprep.subr.mxu0 0.0
    %1585 = vmatpush1.msra.mxu0 0.0
    %1586 = vmatprep.subr.mxu0 0.0
    %1587 = vmatpush1.msra.mxu0 0.0
    %1588 = vmatprep.subr.mxu0 0.0
    %1589 = vmatpush1.msra.mxu0 0.0
    %1590 = vmatprep.subr.mxu0 0.0
    %1591 = vmatpush1.msra.mxu0 0.0
    %1592 = vmatprep.subr.mxu0 0.0
    %1593 = vmatpush1.msra.mxu0 0.0
    %1594 = vmatprep.subr.mxu0 0.0
    %1595 = vmatpush1.msra.mxu0 0.0
    %1596 = vmatprep.subr.mxu0 0.0
    %1597 = vmatpush1.msra.mxu0 0.0
    %1598 = vmatprep.subr.mxu0 0.0
    %1599 = vmatpush1.msra.mxu0 0.0
    %1600 = vmatprep.subr.mxu0 0.0
    %1601 = vmatpush1.msra.mxu0 0.0
    %1602 = vmatprep.mubr.f32.mxu0 0.0
    %1603 = vmatmul.mubr.f32.gmra.mrb[0].mxu0 %v1533
    %v1604 = vpop.f32.mrb[0].mxu0
    %v1605 = vadd.f32 0.0, %v1604
    %v1606 = vpop.f32.mrb[0].mxu0
    %v1607 = vadd.f32 0.0, %v1606
    %1608 = vmatprep.mubr.f32.mxu0 0.0
    %1609 = vmatmul.mubr.f32.gmra.mrb[0].mxu0 %v1536
    %v1610 = vpop.f32.mrb[0].mxu0
    %v1611 = vadd.f32 0.0, %v1610
    %v1612 = vpop.f32.mrb[0].mxu0
    %v1613 = vadd.f32 0.0, %v1612
    %1614 = vdwg.mxu0
    %v1615 = vadd.f32 %v1513, %v1605
    %v1616 = vadd.f32 %v1514, %v1607
    %v1617 = vadd.f32 %v1515, %v1611
    %v1618 = vadd.f32 %v1516, %v1613
    %1619 = vrot.lane.b32.xlu0 %v1023, 118
    %v1620 = vpop.permute.xlu0 %1619
    %1621 = vrot.lane.b32.xlu0 %v1025, 118
    %v1622 = vpop.permute.xlu0 %1621
    %1623 = vrot.lane.b32.xlu0 %v1024, 118
    %v1624 = vpop.permute.xlu0 %1623
    %1625 = vrot.lane.b32.xlu0 %v1026, 118
    %v1626 = vpop.permute.xlu0 %1625
    %v1627 = vsel %vm644, %v1620, %v1624
    %v1628 = vsel %vm644, %v1622, %v1626
    %v1629 = vsel %vm644, %v1624, %v1620
    %v1630 = vsel %vm644, %v1626, %v1622
    %s1631 = scalar_lea.vmem %s3, 240
    %v1632 = vld [vmem:[%s1631] sm:$0xff]
    %v1633 = vld [vmem:[%s1631 + $0x8] sm:$0xff]
    %v1635 = vsel %vm70, %v1632, 0
    %v1638 = vsel %vm70, %v1633, 0
    %1640 = vmatprep.subr.mxu0 %v1629
    %1641 = vmatpush1.msra.mxu0 %v1627
    %1642 = vmatprep.subr.mxu0 %v1630
    %1643 = vmatpush1.msra.mxu0 %v1628
    %1644 = vmatprep.subr.mxu0 0.0
    %1645 = vmatpush1.msra.mxu0 0.0
    %1646 = vmatprep.subr.mxu0 0.0
    %1647 = vmatpush1.msra.mxu0 0.0
    %1648 = vmatprep.subr.mxu0 0.0
    %1649 = vmatpush1.msra.mxu0 0.0
    %1650 = vmatprep.subr.mxu0 0.0
    %1651 = vmatpush1.msra.mxu0 0.0
    %1652 = vmatprep.subr.mxu0 0.0
    %1653 = vmatpush1.msra.mxu0 0.0
    %1654 = vmatprep.subr.mxu0 0.0
    %1655 = vmatpush1.msra.mxu0 0.0
    %1656 = vmatprep.subr.mxu0 0.0
    %1657 = vmatpush1.msra.mxu0 0.0
    %1658 = vmatprep.subr.mxu0 0.0
    %1659 = vmatpush1.msra.mxu0 0.0
    %1660 = vmatprep.subr.mxu0 0.0
    %1661 = vmatpush1.msra.mxu0 0.0
    %1662 = vmatprep.subr.mxu0 0.0
    %1663 = vmatpush1.msra.mxu0 0.0
    %1664 = vmatprep.subr.mxu0 0.0
    %1665 = vmatpush1.msra.mxu0 0.0
    %1666 = vmatprep.subr.mxu0 0.0
    %1667 = vmatpush1.msra.mxu0 0.0
    %1668 = vmatprep.subr.mxu0 0.0
    %1669 = vmatpush1.msra.mxu0 0.0
    %1670 = vmatprep.subr.mxu0 0.0
    %1671 = vmatpush1.msra.mxu0 0.0
    %1672 = vmatprep.subr.mxu0 0.0
    %1673 = vmatpush1.msra.mxu0 0.0
    %1674 = vmatprep.subr.mxu0 0.0
    %1675 = vmatpush1.msra.mxu0 0.0
    %1676 = vmatprep.subr.mxu0 0.0
    %1677 = vmatpush1.msra.mxu0 0.0
    %1678 = vmatprep.subr.mxu0 0.0
    %1679 = vmatpush1.msra.mxu0 0.0
    %1680 = vmatprep.subr.mxu0 0.0
    %1681 = vmatpush1.msra.mxu0 0.0
    %1682 = vmatprep.subr.mxu0 0.0
    %1683 = vmatpush1.msra.mxu0 0.0
    %1684 = vmatprep.subr.mxu0 0.0
    %1685 = vmatpush1.msra.mxu0 0.0
    %1686 = vmatprep.subr.mxu0 0.0
    %1687 = vmatpush1.msra.mxu0 0.0
    %1688 = vmatprep.subr.mxu0 0.0
    %1689 = vmatpush1.msra.mxu0 0.0
    %1690 = vmatprep.subr.mxu0 0.0
    %1691 = vmatpush1.msra.mxu0 0.0
    %1692 = vmatprep.subr.mxu0 0.0
    %1693 = vmatpush1.msra.mxu0 0.0
    %1694 = vmatprep.subr.mxu0 0.0
    %1695 = vmatpush1.msra.mxu0 0.0
    %1696 = vmatprep.subr.mxu0 0.0
    %1697 = vmatpush1.msra.mxu0 0.0
    %1698 = vmatprep.subr.mxu0 0.0
    %1699 = vmatpush1.msra.mxu0 0.0
    %1700 = vmatprep.subr.mxu0 0.0
    %1701 = vmatpush1.msra.mxu0 0.0
    %1702 = vmatprep.subr.mxu0 0.0
    %1703 = vmatpush1.msra.mxu0 0.0
    %1704 = vmatprep.mubr.f32.mxu0 0.0
    %1705 = vmatmul.mubr.f32.gmra.mrb[0].mxu0 %v1635
    %v1706 = vpop.f32.mrb[0].mxu0
    %v1707 = vadd.f32 0.0, %v1706
    %v1708 = vpop.f32.mrb[0].mxu0
    %v1709 = vadd.f32 0.0, %v1708
    %1710 = vmatprep.mubr.f32.mxu0 0.0
    %1711 = vmatmul.mubr.f32.gmra.mrb[0].mxu0 %v1638
    %v1712 = vpop.f32.mrb[0].mxu0
    %v1713 = vadd.f32 0.0, %v1712
    %v1714 = vpop.f32.mrb[0].mxu0
    %v1715 = vadd.f32 0.0, %v1714
    %1716 = vdwg.mxu0
    %v1717 = vadd.f32 %v1615, %v1707
    %v1718 = vadd.f32 %v1616, %v1709
    %v1719 = vadd.f32 %v1617, %v1713
    %v1720 = vadd.f32 %v1618, %v1715
    %1721 = vrot.lane.b32.xlu0 %v1023, 117
    %v1722 = vpop.permute.xlu0 %1721
    %1723 = vrot.lane.b32.xlu0 %v1025, 117
    %v1724 = vpop.permute.xlu0 %1723
    %1725 = vrot.lane.b32.xlu0 %v1024, 117
    %v1726 = vpop.permute.xlu0 %1725
    %1727 = vrot.lane.b32.xlu0 %v1026, 117
    %v1728 = vpop.permute.xlu0 %1727
    %v1729 = vsel %vm747, %v1722, %v1726
    %v1730 = vsel %vm747, %v1724, %v1728
    %v1731 = vsel %vm747, %v1726, %v1722
    %v1732 = vsel %vm747, %v1728, %v1724
    %s1733 = scalar_lea.vmem %s3, 256
    %v1734 = vld [vmem:[%s1733] sm:$0xff]
    %v1735 = vld [vmem:[%s1733 + $0x8] sm:$0xff]
    %v1737 = vsel %vm70, %v1734, 0
    %v1740 = vsel %vm70, %v1735, 0
    %1742 = vmatprep.subr.mxu0 %v1731
    %1743 = vmatpush1.msra.mxu0 %v1729
    %1744 = vmatprep.subr.mxu0 %v1732
    %1745 = vmatpush1.msra.mxu0 %v1730
    %1746 = vmatprep.subr.mxu0 0.0
    %1747 = vmatpush1.msra.mxu0 0.0
    %1748 = vmatprep.subr.mxu0 0.0
    %1749 = vmatpush1.msra.mxu0 0.0
    %1750 = vmatprep.subr.mxu0 0.0
    %1751 = vmatpush1.msra.mxu0 0.0
    %1752 = vmatprep.subr.mxu0 0.0
    %1753 = vmatpush1.msra.mxu0 0.0
    %1754 = vmatprep.subr.mxu0 0.0
    %1755 = vmatpush1.msra.mxu0 0.0
    %1756 = vmatprep.subr.mxu0 0.0
    %1757 = vmatpush1.msra.mxu0 0.0
    %1758 = vmatprep.subr.mxu0 0.0
    %1759 = vmatpush1.msra.mxu0 0.0
    %1760 = vmatprep.subr.mxu0 0.0
    %1761 = vmatpush1.msra.mxu0 0.0
    %1762 = vmatprep.subr.mxu0 0.0
    %1763 = vmatpush1.msra.mxu0 0.0
    %1764 = vmatprep.subr.mxu0 0.0
    %1765 = vmatpush1.msra.mxu0 0.0
    %1766 = vmatprep.subr.mxu0 0.0
    %1767 = vmatpush1.msra.mxu0 0.0
    %1768 = vmatprep.subr.mxu0 0.0
    %1769 = vmatpush1.msra.mxu0 0.0
    %1770 = vmatprep.subr.mxu0 0.0
    %1771 = vmatpush1.msra.mxu0 0.0
    %1772 = vmatprep.subr.mxu0 0.0
    %1773 = vmatpush1.msra.mxu0 0.0
    %1774 = vmatprep.subr.mxu0 0.0
    %1775 = vmatpush1.msra.mxu0 0.0
    %1776 = vmatprep.subr.mxu0 0.0
    %1777 = vmatpush1.msra.mxu0 0.0
    %1778 = vmatprep.subr.mxu0 0.0
    %1779 = vmatpush1.msra.mxu0 0.0
    %1780 = vmatprep.subr.mxu0 0.0
    %1781 = vmatpush1.msra.mxu0 0.0
    %1782 = vmatprep.subr.mxu0 0.0
    %1783 = vmatpush1.msra.mxu0 0.0
    %1784 = vmatprep.subr.mxu0 0.0
    %1785 = vmatpush1.msra.mxu0 0.0
    %1786 = vmatprep.subr.mxu0 0.0
    %1787 = vmatpush1.msra.mxu0 0.0
    %1788 = vmatprep.subr.mxu0 0.0
    %1789 = vmatpush1.msra.mxu0 0.0
    %1790 = vmatprep.subr.mxu0 0.0
    %1791 = vmatpush1.msra.mxu0 0.0
    %1792 = vmatprep.subr.mxu0 0.0
    %1793 = vmatpush1.msra.mxu0 0.0
    %1794 = vmatprep.subr.mxu0 0.0
    %1795 = vmatpush1.msra.mxu0 0.0
    %1796 = vmatprep.subr.mxu0 0.0
    %1797 = vmatpush1.msra.mxu0 0.0
    %1798 = vmatprep.subr.mxu0 0.0
    %1799 = vmatpush1.msra.mxu0 0.0
    %1800 = vmatprep.subr.mxu0 0.0
    %1801 = vmatpush1.msra.mxu0 0.0
    %1802 = vmatprep.subr.mxu0 0.0
    %1803 = vmatpush1.msra.mxu0 0.0
    %1804 = vmatprep.subr.mxu0 0.0
    %1805 = vmatpush1.msra.mxu0 0.0
    %1806 = vmatprep.mubr.f32.mxu0 0.0
    %1807 = vmatmul.mubr.f32.gmra.mrb[0].mxu0 %v1737
    %v1808 = vpop.f32.mrb[0].mxu0
    %v1809 = vadd.f32 0.0, %v1808
    %v1810 = vpop.f32.mrb[0].mxu0
    %v1811 = vadd.f32 0.0, %v1810
    %1812 = vmatprep.mubr.f32.mxu0 0.0
    %1813 = vmatmul.mubr.f32.gmra.mrb[0].mxu0 %v1740
    %v1814 = vpop.f32.mrb[0].mxu0
    %v1815 = vadd.f32 0.0, %v1814
    %v1816 = vpop.f32.mrb[0].mxu0
    %v1817 = vadd.f32 0.0, %v1816
    %1818 = vdwg.mxu0
    %v1819 = vadd.f32 %v1717, %v1809
    %v1820 = vadd.f32 %v1718, %v1811
    %v1821 = vadd.f32 %v1719, %v1815
    %v1822 = vadd.f32 %v1720, %v1817
    %1823 = vrot.lane.b32.xlu0 %v1023, 116
    %v1824 = vpop.permute.xlu0 %1823
    %1825 = vrot.lane.b32.xlu0 %v1025, 116
    %v1826 = vpop.permute.xlu0 %1825
    %1827 = vrot.lane.b32.xlu0 %v1024, 116
    %v1828 = vpop.permute.xlu0 %1827
    %1829 = vrot.lane.b32.xlu0 %v1026, 116
    %v1830 = vpop.permute.xlu0 %1829
    %v1831 = vsel %vm850, %v1824, %v1828
    %v1832 = vsel %vm850, %v1826, %v1830
    %v1833 = vsel %vm850, %v1828, %v1824
    %v1834 = vsel %vm850, %v1830, %v1826
    %s1835 = scalar_lea.vmem %s3, 272
    %v1836 = vld [vmem:[%s1835] sm:$0xff]
    %v1837 = vld [vmem:[%s1835 + $0x8] sm:$0xff]
    %v1839 = vsel %vm70, %v1836, 0
    %v1842 = vsel %vm70, %v1837, 0
    %1844 = vmatprep.subr.mxu0 %v1833
    %1845 = vmatpush1.msra.mxu0 %v1831
    %1846 = vmatprep.subr.mxu0 %v1834
    %1847 = vmatpush1.msra.mxu0 %v1832
    %1848 = vmatprep.subr.mxu0 0.0
    %1849 = vmatpush1.msra.mxu0 0.0
    %1850 = vmatprep.subr.mxu0 0.0
    %1851 = vmatpush1.msra.mxu0 0.0
    %1852 = vmatprep.subr.mxu0 0.0
    %1853 = vmatpush1.msra.mxu0 0.0
    %1854 = vmatprep.subr.mxu0 0.0
    %1855 = vmatpush1.msra.mxu0 0.0
    %1856 = vmatprep.subr.mxu0 0.0
    %1857 = vmatpush1.msra.mxu0 0.0
    %1858 = vmatprep.subr.mxu0 0.0
    %1859 = vmatpush1.msra.mxu0 0.0
    %1860 = vmatprep.subr.mxu0 0.0
    %1861 = vmatpush1.msra.mxu0 0.0
    %1862 = vmatprep.subr.mxu0 0.0
    %1863 = vmatpush1.msra.mxu0 0.0
    %1864 = vmatprep.subr.mxu0 0.0
    %1865 = vmatpush1.msra.mxu0 0.0
    %1866 = vmatprep.subr.mxu0 0.0
    %1867 = vmatpush1.msra.mxu0 0.0
    %1868 = vmatprep.subr.mxu0 0.0
    %1869 = vmatpush1.msra.mxu0 0.0
    %1870 = vmatprep.subr.mxu0 0.0
    %1871 = vmatpush1.msra.mxu0 0.0
    %1872 = vmatprep.subr.mxu0 0.0
    %1873 = vmatpush1.msra.mxu0 0.0
    %1874 = vmatprep.subr.mxu0 0.0
    %1875 = vmatpush1.msra.mxu0 0.0
    %1876 = vmatprep.subr.mxu0 0.0
    %1877 = vmatpush1.msra.mxu0 0.0
    %1878 = vmatprep.subr.mxu0 0.0
    %1879 = vmatpush1.msra.mxu0 0.0
    %1880 = vmatprep.subr.mxu0 0.0
    %1881 = vmatpush1.msra.mxu0 0.0
    %1882 = vmatprep.subr.mxu0 0.0
    %1883 = vmatpush1.msra.mxu0 0.0
    %1884 = vmatprep.subr.mxu0 0.0
    %1885 = vmatpush1.msra.mxu0 0.0
    %1886 = vmatprep.subr.mxu0 0.0
    %1887 = vmatpush1.msra.mxu0 0.0
    %1888 = vmatprep.subr.mxu0 0.0
    %1889 = vmatpush1.msra.mxu0 0.0
    %1890 = vmatprep.subr.mxu0 0.0
    %1891 = vmatpush1.msra.mxu0 0.0
    %1892 = vmatprep.subr.mxu0 0.0
    %1893 = vmatpush1.msra.mxu0 0.0
    %1894 = vmatprep.subr.mxu0 0.0
    %1895 = vmatpush1.msra.mxu0 0.0
    %1896 = vmatprep.subr.mxu0 0.0
    %1897 = vmatpush1.msra.mxu0 0.0
    %1898 = vmatprep.subr.mxu0 0.0
    %1899 = vmatpush1.msra.mxu0 0.0
    %1900 = vmatprep.subr.mxu0 0.0
    %1901 = vmatpush1.msra.mxu0 0.0
    %1902 = vmatprep.subr.mxu0 0.0
    %1903 = vmatpush1.msra.mxu0 0.0
    %1904 = vmatprep.subr.mxu0 0.0
    %1905 = vmatpush1.msra.mxu0 0.0
    %1906 = vmatprep.subr.mxu0 0.0
    %1907 = vmatpush1.msra.mxu0 0.0
    %1908 = vmatprep.mubr.f32.mxu0 0.0
    %1909 = vmatmul.mubr.f32.gmra.mrb[0].mxu0 %v1839
    %v1910 = vpop.f32.mrb[0].mxu0
    %v1911 = vadd.f32 0.0, %v1910
    %v1912 = vpop.f32.mrb[0].mxu0
    %v1913 = vadd.f32 0.0, %v1912
    %1914 = vmatprep.mubr.f32.mxu0 0.0
    %1915 = vmatmul.mubr.f32.gmra.mrb[0].mxu0 %v1842
    %v1916 = vpop.f32.mrb[0].mxu0
    %v1917 = vadd.f32 0.0, %v1916
    %v1918 = vpop.f32.mrb[0].mxu0
    %v1919 = vadd.f32 0.0, %v1918
    %1920 = vdwg.mxu0
    %v1921 = vadd.f32 %v1819, %v1911
    %v1922 = vadd.f32 %v1820, %v1913
    %v1923 = vadd.f32 %v1821, %v1917
    %v1924 = vadd.f32 %v1822, %v1919
    %v1925 = vmul.f32 %v1921, %v948
    %v1926 = vmul.f32 %v1922, %v948
    %v1927 = vmul.f32 %v1923, %v948
    %v1928 = vmul.f32 %v1924, %v948
    %v1929 = vadd.f32 %v1925, %v1926
    %1930 = vadd.xlane.f32.xlu0 %v1929
    %v1931 = vpop.xlane.xlu0 %1930
    %v1932 = vadd.f32 %v1927, %v1928
    %1933 = vadd.xlane.f32.xlu0 %v1932
    %v1934 = vpop.xlane.xlu0 %1933
    %v1935 = vmul.f32 %v1925, %v1925
    %v1936 = vmul.f32 %v1926, %v1926
    %v1937 = vmul.f32 %v1927, %v1927
    %v1938 = vmul.f32 %v1928, %v1928
    %v1939 = vadd.f32 %v1935, %v1936
    %1940 = vadd.xlane.f32.xlu0 %v1939
    %v1941 = vpop.xlane.xlu0 %1940
    %v1942 = vadd.f32 %v1937, %v1938
    %1943 = vadd.xlane.f32.xlu0 %v1942
    %v1944 = vpop.xlane.xlu0 %1943
    %v1945 = vmul.f32 %v1931, 0.0061728396
    %v1946 = vmul.f32 %v1934, 0.0061728396
    %v1947 = vmul.f32 %v1941, 0.0061728396
    %v1948 = vmul.f32 %v1944, 0.0061728396
    %v1949 = vmul.f32 %v1945, %v1945
    %v1950 = vmul.f32 %v1946, %v1946
    %v1951 = vsub.f32 %v1947, %v1949
    %v1952 = vsub.f32 %v1948, %v1950
    %s1953 = scalar_lea.vmem %s4, 16
    %v1954 = vld [vmem:[%s1953] sm:$0xff]
    %v1955 = vld [vmem:[%s1953 + $0x8] sm:$0xff]
    %v1956 = vadd.f32 %v1951, 1e-05
    %v1957 = vadd.f32 %v1952, 1e-05
    %v1958 = vrsqrt.pop %v1956
    %v1959 = vrsqrt.pop %v1957
    %v1960 = vmul.f32 %v1954, %v1958
    %v1961 = vmul.f32 %v1955, %v1959
    %s1962 = scalar_lea.vmem %s5, 16
    %v1963 = vld [vmem:[%s1962] sm:$0xff]
    %v1964 = vld [vmem:[%s1962 + $0x8] sm:$0xff]
    %v1965 = vmul.f32 %v1945, %v1960
    %v1966 = vmul.f32 %v1946, %v1961
    %v1967 = vsub.f32 %v1963, %v1965
    %v1968 = vsub.f32 %v1964, %v1966
    %1970 = vset.pattern.permute.xlu0 0
    %1971 = vperm.xlu0 %1970, %v1960
    %v1972 = vpop.permute.xlu0 %1971
    %1975 = vset.pattern.permute.xlu0 0
    %1976 = vperm.xlu0 %1975, %v1961
    %v1977 = vpop.permute.xlu0 %1976
    %v1979 = vmul.f32 %v1921, %v1972
    %v1980 = vmul.f32 %v1922, %v1972
    %v1981 = vmul.f32 %v1923, %v1977
    %v1982 = vmul.f32 %v1924, %v1977
    %1984 = vset.pattern.permute.xlu0 0
    %1985 = vperm.xlu0 %1984, %v1967
    %v1986 = vpop.permute.xlu0 %1985
    %1989 = vset.pattern.permute.xlu0 0
    %1990 = vperm.xlu0 %1989, %v1968
    %v1991 = vpop.permute.xlu0 %1990
    %v1993 = vadd.f32 %v1979, %v1986
    %v1994 = vadd.f32 %v1980, %v1986
    %v1995 = vadd.f32 %v1981, %v1991
    %v1996 = vadd.f32 %v1982, %v1991
    %v1997 = vmax.f32 %v1993, 0.0
    %v1998 = vmax.f32 %v1994, 0.0
    %v1999 = vmax.f32 %v1995, 0.0
    %v2000 = vmax.f32 %v1996, 0.0
    %v2001 = vmul.f32 %v1997, %v948
    %v2002 = vmul.f32 %v1998, %v948
    %v2003 = vmul.f32 %v1999, %v948
    %v2004 = vmul.f32 %v2000, %v948
    %2005 = vrot.lane.b32.xlu0 %v2001, 12
    %v2006 = vpop.permute.xlu0 %2005
    %2007 = vrot.lane.b32.xlu0 %v2003, 12
    %v2008 = vpop.permute.xlu0 %2007
    %2009 = vrot.lane.b32.xlu0 %v2002, 12
    %v2010 = vpop.permute.xlu0 %2009
    %2011 = vrot.lane.b32.xlu0 %v2004, 12
    %v2012 = vpop.permute.xlu0 %2011
    %v2013 = vsel %vm47, %v2006, %v2010
    %v2014 = vsel %vm47, %v2008, %v2012
    %v2015 = vsel %vm47, %v2010, %v2006
    %v2016 = vsel %vm47, %v2012, %v2008
    %s2017 = scalar_lea.vmem %s3, 288
    %v2018 = vld [vmem:[%s2017] sm:$0xff]
    %v2019 = vld [vmem:[%s2017 + $0x8] sm:$0xff]
    %2020 = vrot.lane.b32.xlu0 %v2001, 11
    %v2021 = vpop.permute.xlu0 %2020
    %2022 = vrot.lane.b32.xlu0 %v2003, 11
    %v2023 = vpop.permute.xlu0 %2022
    %2024 = vrot.lane.b32.xlu0 %v2002, 11
    %v2025 = vpop.permute.xlu0 %2024
    %2026 = vrot.lane.b32.xlu0 %v2004, 11
    %v2027 = vpop.permute.xlu0 %2026
    %v2028 = vsel %vm62, %v2021, %v2025
    %v2029 = vsel %vm62, %v2023, %v2027
    %v2030 = vsel %vm62, %v2025, %v2021
    %v2031 = vsel %vm62, %v2027, %v2023
    %s2032 = scalar_lea.vmem %s3, 304
    %v2033 = vld [vmem:[%s2032] sm:$0xff]
    %v2034 = vld [vmem:[%s2032 + $0x8] sm:$0xff]
    %v2036 = vsel %vm70, %v2033, 0
    %v2039 = vsel %vm70, %v2034, 0
    %2041 = vmatprep.subr.mxu0 %v2028
    %2042 = vmatpush1.msra.mxu0 %v2030
    %2043 = vmatprep.subr.mxu0 %v2029
    %2044 = vmatpush1.msra.mxu0 %v2031
    %2045 = vmatprep.subr.mxu0 0.0
    %2046 = vmatpush1.msra.mxu0 0.0
    %2047 = vmatprep.subr.mxu0 0.0
    %2048 = vmatpush1.msra.mxu0 0.0
    %2049 = vmatprep.subr.mxu0 0.0
    %2050 = vmatpush1.msra.mxu0 0.0
    %2051 = vmatprep.subr.mxu0 0.0
    %2052 = vmatpush1.msra.mxu0 0.0
    %2053 = vmatprep.subr.mxu0 0.0
    %2054 = vmatpush1.msra.mxu0 0.0
    %2055 = vmatprep.subr.mxu0 0.0
    %2056 = vmatpush1.msra.mxu0 0.0
    %2057 = vmatprep.subr.mxu0 0.0
    %2058 = vmatpush1.msra.mxu0 0.0
    %2059 = vmatprep.subr.mxu0 0.0
    %2060 = vmatpush1.msra.mxu0 0.0
    %2061 = vmatprep.subr.mxu0 0.0
    %2062 = vmatpush1.msra.mxu0 0.0
    %2063 = vmatprep.subr.mxu0 0.0
    %2064 = vmatpush1.msra.mxu0 0.0
    %2065 = vmatprep.subr.mxu0 0.0
    %2066 = vmatpush1.msra.mxu0 0.0
    %2067 = vmatprep.subr.mxu0 0.0
    %2068 = vmatpush1.msra.mxu0 0.0
    %2069 = vmatprep.subr.mxu0 0.0
    %2070 = vmatpush1.msra.mxu0 0.0
    %2071 = vmatprep.subr.mxu0 0.0
    %2072 = vmatpush1.msra.mxu0 0.0
    %2073 = vmatprep.subr.mxu0 0.0
    %2074 = vmatpush1.msra.mxu0 0.0
    %2075 = vmatprep.subr.mxu0 0.0
    %2076 = vmatpush1.msra.mxu0 0.0
    %2077 = vmatprep.subr.mxu0 0.0
    %2078 = vmatpush1.msra.mxu0 0.0
    %2079 = vmatprep.subr.mxu0 0.0
    %2080 = vmatpush1.msra.mxu0 0.0
    %2081 = vmatprep.subr.mxu0 0.0
    %2082 = vmatpush1.msra.mxu0 0.0
    %2083 = vmatprep.subr.mxu0 0.0
    %2084 = vmatpush1.msra.mxu0 0.0
    %2085 = vmatprep.subr.mxu0 0.0
    %2086 = vmatpush1.msra.mxu0 0.0
    %2087 = vmatprep.subr.mxu0 0.0
    %2088 = vmatpush1.msra.mxu0 0.0
    %2089 = vmatprep.subr.mxu0 0.0
    %2090 = vmatpush1.msra.mxu0 0.0
    %2091 = vmatprep.subr.mxu0 0.0
    %2092 = vmatpush1.msra.mxu0 0.0
    %2093 = vmatprep.subr.mxu0 0.0
    %2094 = vmatpush1.msra.mxu0 0.0
    %2095 = vmatprep.subr.mxu0 0.0
    %2096 = vmatpush1.msra.mxu0 0.0
    %2097 = vmatprep.subr.mxu0 0.0
    %2098 = vmatpush1.msra.mxu0 0.0
    %2099 = vmatprep.subr.mxu0 0.0
    %2100 = vmatpush1.msra.mxu0 0.0
    %2101 = vmatprep.subr.mxu0 0.0
    %2102 = vmatpush1.msra.mxu0 0.0
    %2103 = vmatprep.subr.mxu0 0.0
    %2104 = vmatpush1.msra.mxu0 0.0
    %2105 = vmatprep.mubr.f32.mxu0 0.0
    %2106 = vmatmul.mubr.f32.gmra.mrb[0].mxu0 %v2036
    %v2107 = vpop.f32.mrb[0].mxu0
    %v2108 = vadd.f32 0.0, %v2107
    %v2109 = vpop.f32.mrb[0].mxu0
    %v2110 = vadd.f32 0.0, %v2109
    %2111 = vmatprep.mubr.f32.mxu0 0.0
    %2112 = vmatmul.mubr.f32.gmra.mrb[0].mxu0 %v2039
    %v2113 = vpop.f32.mrb[0].mxu0
    %v2114 = vadd.f32 0.0, %v2113
    %v2115 = vpop.f32.mrb[0].mxu0
    %v2116 = vadd.f32 0.0, %v2115
    %2117 = vdwg.mxu0
    %v2119 = vsel %vm70, %v2018, 0
    %v2122 = vsel %vm70, %v2019, 0
    %2124 = vmatprep.subr.mxu0 %v2013
    %2125 = vmatpush1.msra.mxu0 %v2015
    %2126 = vmatprep.subr.mxu0 %v2014
    %2127 = vmatpush1.msra.mxu0 %v2016
    %2128 = vmatprep.subr.mxu0 0.0
    %2129 = vmatpush1.msra.mxu0 0.0
    %2130 = vmatprep.subr.mxu0 0.0
    %2131 = vmatpush1.msra.mxu0 0.0
    %2132 = vmatprep.subr.mxu0 0.0
    %2133 = vmatpush1.msra.mxu0 0.0
    %2134 = vmatprep.subr.mxu0 0.0
    %2135 = vmatpush1.msra.mxu0 0.0
    %2136 = vmatprep.subr.mxu0 0.0
    %2137 = vmatpush1.msra.mxu0 0.0
    %2138 = vmatprep.subr.mxu0 0.0
    %2139 = vmatpush1.msra.mxu0 0.0
    %2140 = vmatprep.subr.mxu0 0.0
    %2141 = vmatpush1.msra.mxu0 0.0
    %2142 = vmatprep.subr.mxu0 0.0
    %2143 = vmatpush1.msra.mxu0 0.0
    %2144 = vmatprep.subr.mxu0 0.0
    %2145 = vmatpush1.msra.mxu0 0.0
    %2146 = vmatprep.subr.mxu0 0.0
    %2147 = vmatpush1.msra.mxu0 0.0
    %2148 = vmatprep.subr.mxu0 0.0
    %2149 = vmatpush1.msra.mxu0 0.0
    %2150 = vmatprep.subr.mxu0 0.0
    %2151 = vmatpush1.msra.mxu0 0.0
    %2152 = vmatprep.subr.mxu0 0.0
    %2153 = vmatpush1.msra.mxu0 0.0
    %2154 = vmatprep.subr.mxu0 0.0
    %2155 = vmatpush1.msra.mxu0 0.0
    %2156 = vmatprep.subr.mxu0 0.0
    %2157 = vmatpush1.msra.mxu0 0.0
    %2158 = vmatprep.subr.mxu0 0.0
    %2159 = vmatpush1.msra.mxu0 0.0
    %2160 = vmatprep.subr.mxu0 0.0
    %2161 = vmatpush1.msra.mxu0 0.0
    %2162 = vmatprep.subr.mxu0 0.0
    %2163 = vmatpush1.msra.mxu0 0.0
    %2164 = vmatprep.subr.mxu0 0.0
    %2165 = vmatpush1.msra.mxu0 0.0
    %2166 = vmatprep.subr.mxu0 0.0
    %2167 = vmatpush1.msra.mxu0 0.0
    %2168 = vmatprep.subr.mxu0 0.0
    %2169 = vmatpush1.msra.mxu0 0.0
    %2170 = vmatprep.subr.mxu0 0.0
    %2171 = vmatpush1.msra.mxu0 0.0
    %2172 = vmatprep.subr.mxu0 0.0
    %2173 = vmatpush1.msra.mxu0 0.0
    %2174 = vmatprep.subr.mxu0 0.0
    %2175 = vmatpush1.msra.mxu0 0.0
    %2176 = vmatprep.subr.mxu0 0.0
    %2177 = vmatpush1.msra.mxu0 0.0
    %2178 = vmatprep.subr.mxu0 0.0
    %2179 = vmatpush1.msra.mxu0 0.0
    %2180 = vmatprep.subr.mxu0 0.0
    %2181 = vmatpush1.msra.mxu0 0.0
    %2182 = vmatprep.subr.mxu0 0.0
    %2183 = vmatpush1.msra.mxu0 0.0
    %2184 = vmatprep.subr.mxu0 0.0
    %2185 = vmatpush1.msra.mxu0 0.0
    %2186 = vmatprep.subr.mxu0 0.0
    %2187 = vmatpush1.msra.mxu0 0.0
    %2188 = vmatprep.mubr.f32.mxu0 0.0
    %2189 = vmatmul.mubr.f32.gmra.mrb[0].mxu0 %v2119
    %v2190 = vpop.f32.mrb[0].mxu0
    %v2191 = vadd.f32 %v2108, %v2190
    %v2192 = vpop.f32.mrb[0].mxu0
    %v2193 = vadd.f32 %v2110, %v2192
    %2194 = vmatprep.mubr.f32.mxu0 0.0
    %2195 = vmatmul.mubr.f32.gmra.mrb[0].mxu0 %v2122
    %v2196 = vpop.f32.mrb[0].mxu0
    %v2197 = vadd.f32 %v2114, %v2196
    %v2198 = vpop.f32.mrb[0].mxu0
    %v2199 = vadd.f32 %v2116, %v2198
    %2200 = vdwg.mxu0
    %2201 = vrot.lane.b32.xlu0 %v2001, 10
    %v2202 = vpop.permute.xlu0 %2201
    %2203 = vrot.lane.b32.xlu0 %v2003, 10
    %v2204 = vpop.permute.xlu0 %2203
    %2205 = vrot.lane.b32.xlu0 %v2002, 10
    %v2206 = vpop.permute.xlu0 %2205
    %2207 = vrot.lane.b32.xlu0 %v2004, 10
    %v2208 = vpop.permute.xlu0 %2207
    %v2209 = vsel %vm245, %v2202, %v2206
    %v2210 = vsel %vm245, %v2204, %v2208
    %v2211 = vsel %vm245, %v2206, %v2202
    %v2212 = vsel %vm245, %v2208, %v2204
    %s2213 = scalar_lea.vmem %s3, 320
    %v2214 = vld [vmem:[%s2213] sm:$0xff]
    %v2215 = vld [vmem:[%s2213 + $0x8] sm:$0xff]
    %v2217 = vsel %vm70, %v2214, 0
    %v2220 = vsel %vm70, %v2215, 0
    %2222 = vmatprep.subr.mxu0 %v2209
    %2223 = vmatpush1.msra.mxu0 %v2211
    %2224 = vmatprep.subr.mxu0 %v2210
    %2225 = vmatpush1.msra.mxu0 %v2212
    %2226 = vmatprep.subr.mxu0 0.0
    %2227 = vmatpush1.msra.mxu0 0.0
    %2228 = vmatprep.subr.mxu0 0.0
    %2229 = vmatpush1.msra.mxu0 0.0
    %2230 = vmatprep.subr.mxu0 0.0
    %2231 = vmatpush1.msra.mxu0 0.0
    %2232 = vmatprep.subr.mxu0 0.0
    %2233 = vmatpush1.msra.mxu0 0.0
    %2234 = vmatprep.subr.mxu0 0.0
    %2235 = vmatpush1.msra.mxu0 0.0
    %2236 = vmatprep.subr.mxu0 0.0
    %2237 = vmatpush1.msra.mxu0 0.0
    %2238 = vmatprep.subr.mxu0 0.0
    %2239 = vmatpush1.msra.mxu0 0.0
    %2240 = vmatprep.subr.mxu0 0.0
    %2241 = vmatpush1.msra.mxu0 0.0
    %2242 = vmatprep.subr.mxu0 0.0
    %2243 = vmatpush1.msra.mxu0 0.0
    %2244 = vmatprep.subr.mxu0 0.0
    %2245 = vmatpush1.msra.mxu0 0.0
    %2246 = vmatprep.subr.mxu0 0.0
    %2247 = vmatpush1.msra.mxu0 0.0
    %2248 = vmatprep.subr.mxu0 0.0
    %2249 = vmatpush1.msra.mxu0 0.0
    %2250 = vmatprep.subr.mxu0 0.0
    %2251 = vmatpush1.msra.mxu0 0.0
    %2252 = vmatprep.subr.mxu0 0.0
    %2253 = vmatpush1.msra.mxu0 0.0
    %2254 = vmatprep.subr.mxu0 0.0
    %2255 = vmatpush1.msra.mxu0 0.0
    %2256 = vmatprep.subr.mxu0 0.0
    %2257 = vmatpush1.msra.mxu0 0.0
    %2258 = vmatprep.subr.mxu0 0.0
    %2259 = vmatpush1.msra.mxu0 0.0
    %2260 = vmatprep.subr.mxu0 0.0
    %2261 = vmatpush1.msra.mxu0 0.0
    %2262 = vmatprep.subr.mxu0 0.0
    %2263 = vmatpush1.msra.mxu0 0.0
    %2264 = vmatprep.subr.mxu0 0.0
    %2265 = vmatpush1.msra.mxu0 0.0
    %2266 = vmatprep.subr.mxu0 0.0
    %2267 = vmatpush1.msra.mxu0 0.0
    %2268 = vmatprep.subr.mxu0 0.0
    %2269 = vmatpush1.msra.mxu0 0.0
    %2270 = vmatprep.subr.mxu0 0.0
    %2271 = vmatpush1.msra.mxu0 0.0
    %2272 = vmatprep.subr.mxu0 0.0
    %2273 = vmatpush1.msra.mxu0 0.0
    %2274 = vmatprep.subr.mxu0 0.0
    %2275 = vmatpush1.msra.mxu0 0.0
    %2276 = vmatprep.subr.mxu0 0.0
    %2277 = vmatpush1.msra.mxu0 0.0
    %2278 = vmatprep.subr.mxu0 0.0
    %2279 = vmatpush1.msra.mxu0 0.0
    %2280 = vmatprep.subr.mxu0 0.0
    %2281 = vmatpush1.msra.mxu0 0.0
    %2282 = vmatprep.subr.mxu0 0.0
    %2283 = vmatpush1.msra.mxu0 0.0
    %2284 = vmatprep.subr.mxu0 0.0
    %2285 = vmatpush1.msra.mxu0 0.0
    %2286 = vmatprep.mubr.f32.mxu0 0.0
    %2287 = vmatmul.mubr.f32.gmra.mrb[0].mxu0 %v2217
    %v2288 = vpop.f32.mrb[0].mxu0
    %v2289 = vadd.f32 0.0, %v2288
    %v2290 = vpop.f32.mrb[0].mxu0
    %v2291 = vadd.f32 0.0, %v2290
    %2292 = vmatprep.mubr.f32.mxu0 0.0
    %2293 = vmatmul.mubr.f32.gmra.mrb[0].mxu0 %v2220
    %v2294 = vpop.f32.mrb[0].mxu0
    %v2295 = vadd.f32 0.0, %v2294
    %v2296 = vpop.f32.mrb[0].mxu0
    %v2297 = vadd.f32 0.0, %v2296
    %2298 = vdwg.mxu0
    %v2299 = vadd.f32 %v2191, %v2289
    %v2300 = vadd.f32 %v2193, %v2291
    %v2301 = vadd.f32 %v2197, %v2295
    %v2302 = vadd.f32 %v2199, %v2297
    %2303 = vrot.lane.b32.xlu0 %v2001, 1
    %v2304 = vpop.permute.xlu0 %2303
    %2305 = vrot.lane.b32.xlu0 %v2003, 1
    %v2306 = vpop.permute.xlu0 %2305
    %2307 = vrot.lane.b32.xlu0 %v2002, 1
    %v2308 = vpop.permute.xlu0 %2307
    %2309 = vrot.lane.b32.xlu0 %v2004, 1
    %v2310 = vpop.permute.xlu0 %2309
    %v2311 = vsel %vm348, %v2304, %v2308
    %v2312 = vsel %vm348, %v2306, %v2310
    %v2313 = vsel %vm348, %v2308, %v2304
    %v2314 = vsel %vm348, %v2310, %v2306
    %s2315 = scalar_lea.vmem %s3, 336
    %v2316 = vld [vmem:[%s2315] sm:$0xff]
    %v2317 = vld [vmem:[%s2315 + $0x8] sm:$0xff]
    %v2319 = vsel %vm70, %v2316, 0
    %v2322 = vsel %vm70, %v2317, 0
    %2324 = vmatprep.subr.mxu0 %v2311
    %2325 = vmatpush1.msra.mxu0 %v2313
    %2326 = vmatprep.subr.mxu0 %v2312
    %2327 = vmatpush1.msra.mxu0 %v2314
    %2328 = vmatprep.subr.mxu0 0.0
    %2329 = vmatpush1.msra.mxu0 0.0
    %2330 = vmatprep.subr.mxu0 0.0
    %2331 = vmatpush1.msra.mxu0 0.0
    %2332 = vmatprep.subr.mxu0 0.0
    %2333 = vmatpush1.msra.mxu0 0.0
    %2334 = vmatprep.subr.mxu0 0.0
    %2335 = vmatpush1.msra.mxu0 0.0
    %2336 = vmatprep.subr.mxu0 0.0
    %2337 = vmatpush1.msra.mxu0 0.0
    %2338 = vmatprep.subr.mxu0 0.0
    %2339 = vmatpush1.msra.mxu0 0.0
    %2340 = vmatprep.subr.mxu0 0.0
    %2341 = vmatpush1.msra.mxu0 0.0
    %2342 = vmatprep.subr.mxu0 0.0
    %2343 = vmatpush1.msra.mxu0 0.0
    %2344 = vmatprep.subr.mxu0 0.0
    %2345 = vmatpush1.msra.mxu0 0.0
    %2346 = vmatprep.subr.mxu0 0.0
    %2347 = vmatpush1.msra.mxu0 0.0
    %2348 = vmatprep.subr.mxu0 0.0
    %2349 = vmatpush1.msra.mxu0 0.0
    %2350 = vmatprep.subr.mxu0 0.0
    %2351 = vmatpush1.msra.mxu0 0.0
    %2352 = vmatprep.subr.mxu0 0.0
    %2353 = vmatpush1.msra.mxu0 0.0
    %2354 = vmatprep.subr.mxu0 0.0
    %2355 = vmatpush1.msra.mxu0 0.0
    %2356 = vmatprep.subr.mxu0 0.0
    %2357 = vmatpush1.msra.mxu0 0.0
    %2358 = vmatprep.subr.mxu0 0.0
    %2359 = vmatpush1.msra.mxu0 0.0
    %2360 = vmatprep.subr.mxu0 0.0
    %2361 = vmatpush1.msra.mxu0 0.0
    %2362 = vmatprep.subr.mxu0 0.0
    %2363 = vmatpush1.msra.mxu0 0.0
    %2364 = vmatprep.subr.mxu0 0.0
    %2365 = vmatpush1.msra.mxu0 0.0
    %2366 = vmatprep.subr.mxu0 0.0
    %2367 = vmatpush1.msra.mxu0 0.0
    %2368 = vmatprep.subr.mxu0 0.0
    %2369 = vmatpush1.msra.mxu0 0.0
    %2370 = vmatprep.subr.mxu0 0.0
    %2371 = vmatpush1.msra.mxu0 0.0
    %2372 = vmatprep.subr.mxu0 0.0
    %2373 = vmatpush1.msra.mxu0 0.0
    %2374 = vmatprep.subr.mxu0 0.0
    %2375 = vmatpush1.msra.mxu0 0.0
    %2376 = vmatprep.subr.mxu0 0.0
    %2377 = vmatpush1.msra.mxu0 0.0
    %2378 = vmatprep.subr.mxu0 0.0
    %2379 = vmatpush1.msra.mxu0 0.0
    %2380 = vmatprep.subr.mxu0 0.0
    %2381 = vmatpush1.msra.mxu0 0.0
    %2382 = vmatprep.subr.mxu0 0.0
    %2383 = vmatpush1.msra.mxu0 0.0
    %2384 = vmatprep.subr.mxu0 0.0
    %2385 = vmatpush1.msra.mxu0 0.0
    %2386 = vmatprep.subr.mxu0 0.0
    %2387 = vmatpush1.msra.mxu0 0.0
    %2388 = vmatprep.mubr.f32.mxu0 0.0
    %2389 = vmatmul.mubr.f32.gmra.mrb[0].mxu0 %v2319
    %v2390 = vpop.f32.mrb[0].mxu0
    %v2391 = vadd.f32 0.0, %v2390
    %v2392 = vpop.f32.mrb[0].mxu0
    %v2393 = vadd.f32 0.0, %v2392
    %2394 = vmatprep.mubr.f32.mxu0 0.0
    %2395 = vmatmul.mubr.f32.gmra.mrb[0].mxu0 %v2322
    %v2396 = vpop.f32.mrb[0].mxu0
    %v2397 = vadd.f32 0.0, %v2396
    %v2398 = vpop.f32.mrb[0].mxu0
    %v2399 = vadd.f32 0.0, %v2398
    %2400 = vdwg.mxu0
    %v2401 = vadd.f32 %v2299, %v2391
    %v2402 = vadd.f32 %v2300, %v2393
    %v2403 = vadd.f32 %v2301, %v2397
    %v2404 = vadd.f32 %v2302, %v2399
    %s2405 = scalar_lea.vmem %s3, 352
    %v2406 = vld [vmem:[%s2405] sm:$0xff]
    %v2407 = vld [vmem:[%s2405 + $0x8] sm:$0xff]
    %v2409 = vsel %vm70, %v2406, 0
    %v2412 = vsel %vm70, %v2407, 0
    %2414 = vmatprep.subr.mxu0 %v2002
    %2415 = vmatpush1.msra.mxu0 %v2001
    %2416 = vmatprep.subr.mxu0 %v2004
    %2417 = vmatpush1.msra.mxu0 %v2003
    %2418 = vmatprep.subr.mxu0 0.0
    %2419 = vmatpush1.msra.mxu0 0.0
    %2420 = vmatprep.subr.mxu0 0.0
    %2421 = vmatpush1.msra.mxu0 0.0
    %2422 = vmatprep.subr.mxu0 0.0
    %2423 = vmatpush1.msra.mxu0 0.0
    %2424 = vmatprep.subr.mxu0 0.0
    %2425 = vmatpush1.msra.mxu0 0.0
    %2426 = vmatprep.subr.mxu0 0.0
    %2427 = vmatpush1.msra.mxu0 0.0
    %2428 = vmatprep.subr.mxu0 0.0
    %2429 = vmatpush1.msra.mxu0 0.0
    %2430 = vmatprep.subr.mxu0 0.0
    %2431 = vmatpush1.msra.mxu0 0.0
    %2432 = vmatprep.subr.mxu0 0.0
    %2433 = vmatpush1.msra.mxu0 0.0
    %2434 = vmatprep.subr.mxu0 0.0
    %2435 = vmatpush1.msra.mxu0 0.0
    %2436 = vmatprep.subr.mxu0 0.0
    %2437 = vmatpush1.msra.mxu0 0.0
    %2438 = vmatprep.subr.mxu0 0.0
    %2439 = vmatpush1.msra.mxu0 0.0
    %2440 = vmatprep.subr.mxu0 0.0
    %2441 = vmatpush1.msra.mxu0 0.0
    %2442 = vmatprep.subr.mxu0 0.0
    %2443 = vmatpush1.msra.mxu0 0.0
    %2444 = vmatprep.subr.mxu0 0.0
    %2445 = vmatpush1.msra.mxu0 0.0
    %2446 = vmatprep.subr.mxu0 0.0
    %2447 = vmatpush1.msra.mxu0 0.0
    %2448 = vmatprep.subr.mxu0 0.0
    %2449 = vmatpush1.msra.mxu0 0.0
    %2450 = vmatprep.subr.mxu0 0.0
    %2451 = vmatpush1.msra.mxu0 0.0
    %2452 = vmatprep.subr.mxu0 0.0
    %2453 = vmatpush1.msra.mxu0 0.0
    %2454 = vmatprep.subr.mxu0 0.0
    %2455 = vmatpush1.msra.mxu0 0.0
    %2456 = vmatprep.subr.mxu0 0.0
    %2457 = vmatpush1.msra.mxu0 0.0
    %2458 = vmatprep.subr.mxu0 0.0
    %2459 = vmatpush1.msra.mxu0 0.0
    %2460 = vmatprep.subr.mxu0 0.0
    %2461 = vmatpush1.msra.mxu0 0.0
    %2462 = vmatprep.subr.mxu0 0.0
    %2463 = vmatpush1.msra.mxu0 0.0
    %2464 = vmatprep.subr.mxu0 0.0
    %2465 = vmatpush1.msra.mxu0 0.0
    %2466 = vmatprep.subr.mxu0 0.0
    %2467 = vmatpush1.msra.mxu0 0.0
    %2468 = vmatprep.subr.mxu0 0.0
    %2469 = vmatpush1.msra.mxu0 0.0
    %2470 = vmatprep.subr.mxu0 0.0
    %2471 = vmatpush1.msra.mxu0 0.0
    %2472 = vmatprep.subr.mxu0 0.0
    %2473 = vmatpush1.msra.mxu0 0.0
    %2474 = vmatprep.subr.mxu0 0.0
    %2475 = vmatpush1.msra.mxu0 0.0
    %2476 = vmatprep.subr.mxu0 0.0
    %2477 = vmatpush1.msra.mxu0 0.0
    %2478 = vmatprep.mubr.f32.mxu0 0.0
    %2479 = vmatmul.mubr.f32.gmra.mrb[0].mxu0 %v2409
    %v2480 = vpop.f32.mrb[0].mxu0
    %v2481 = vadd.f32 0.0, %v2480
    %v2482 = vpop.f32.mrb[0].mxu0
    %v2483 = vadd.f32 0.0, %v2482
    %2484 = vmatprep.mubr.f32.mxu0 0.0
    %2485 = vmatmul.mubr.f32.gmra.mrb[0].mxu0 %v2412
    %v2486 = vpop.f32.mrb[0].mxu0
    %v2487 = vadd.f32 0.0, %v2486
    %v2488 = vpop.f32.mrb[0].mxu0
    %v2489 = vadd.f32 0.0, %v2488
    %2490 = vdwg.mxu0
    %v2491 = vadd.f32 %v2401, %v2481
    %v2492 = vadd.f32 %v2402, %v2483
    %v2493 = vadd.f32 %v2403, %v2487
    %v2494 = vadd.f32 %v2404, %v2489
    %2495 = vrot.lane.b32.xlu0 %v2001, 127
    %v2496 = vpop.permute.xlu0 %2495
    %2497 = vrot.lane.b32.xlu0 %v2003, 127
    %v2498 = vpop.permute.xlu0 %2497
    %2499 = vrot.lane.b32.xlu0 %v2002, 127
    %v2500 = vpop.permute.xlu0 %2499
    %2501 = vrot.lane.b32.xlu0 %v2004, 127
    %v2502 = vpop.permute.xlu0 %2501
    %v2503 = vsel %vm541, %v2496, %v2500
    %v2504 = vsel %vm541, %v2498, %v2502
    %v2505 = vsel %vm541, %v2500, %v2496
    %v2506 = vsel %vm541, %v2502, %v2498
    %s2507 = scalar_lea.vmem %s3, 368
    %v2508 = vld [vmem:[%s2507] sm:$0xff]
    %v2509 = vld [vmem:[%s2507 + $0x8] sm:$0xff]
    %v2511 = vsel %vm70, %v2508, 0
    %v2514 = vsel %vm70, %v2509, 0
    %2516 = vmatprep.subr.mxu0 %v2505
    %2517 = vmatpush1.msra.mxu0 %v2503
    %2518 = vmatprep.subr.mxu0 %v2506
    %2519 = vmatpush1.msra.mxu0 %v2504
    %2520 = vmatprep.subr.mxu0 0.0
    %2521 = vmatpush1.msra.mxu0 0.0
    %2522 = vmatprep.subr.mxu0 0.0
    %2523 = vmatpush1.msra.mxu0 0.0
    %2524 = vmatprep.subr.mxu0 0.0
    %2525 = vmatpush1.msra.mxu0 0.0
    %2526 = vmatprep.subr.mxu0 0.0
    %2527 = vmatpush1.msra.mxu0 0.0
    %2528 = vmatprep.subr.mxu0 0.0
    %2529 = vmatpush1.msra.mxu0 0.0
    %2530 = vmatprep.subr.mxu0 0.0
    %2531 = vmatpush1.msra.mxu0 0.0
    %2532 = vmatprep.subr.mxu0 0.0
    %2533 = vmatpush1.msra.mxu0 0.0
    %2534 = vmatprep.subr.mxu0 0.0
    %2535 = vmatpush1.msra.mxu0 0.0
    %2536 = vmatprep.subr.mxu0 0.0
    %2537 = vmatpush1.msra.mxu0 0.0
    %2538 = vmatprep.subr.mxu0 0.0
    %2539 = vmatpush1.msra.mxu0 0.0
    %2540 = vmatprep.subr.mxu0 0.0
    %2541 = vmatpush1.msra.mxu0 0.0
    %2542 = vmatprep.subr.mxu0 0.0
    %2543 = vmatpush1.msra.mxu0 0.0
    %2544 = vmatprep.subr.mxu0 0.0
    %2545 = vmatpush1.msra.mxu0 0.0
    %2546 = vmatprep.subr.mxu0 0.0
    %2547 = vmatpush1.msra.mxu0 0.0
    %2548 = vmatprep.subr.mxu0 0.0
    %2549 = vmatpush1.msra.mxu0 0.0
    %2550 = vmatprep.subr.mxu0 0.0
    %2551 = vmatpush1.msra.mxu0 0.0
    %2552 = vmatprep.subr.mxu0 0.0
    %2553 = vmatpush1.msra.mxu0 0.0
    %2554 = vmatprep.subr.mxu0 0.0
    %2555 = vmatpush1.msra.mxu0 0.0
    %2556 = vmatprep.subr.mxu0 0.0
    %2557 = vmatpush1.msra.mxu0 0.0
    %2558 = vmatprep.subr.mxu0 0.0
    %2559 = vmatpush1.msra.mxu0 0.0
    %2560 = vmatprep.subr.mxu0 0.0
    %2561 = vmatpush1.msra.mxu0 0.0
    %2562 = vmatprep.subr.mxu0 0.0
    %2563 = vmatpush1.msra.mxu0 0.0
    %2564 = vmatprep.subr.mxu0 0.0
    %2565 = vmatpush1.msra.mxu0 0.0
    %2566 = vmatprep.subr.mxu0 0.0
    %2567 = vmatpush1.msra.mxu0 0.0
    %2568 = vmatprep.subr.mxu0 0.0
    %2569 = vmatpush1.msra.mxu0 0.0
    %2570 = vmatprep.subr.mxu0 0.0
    %2571 = vmatpush1.msra.mxu0 0.0
    %2572 = vmatprep.subr.mxu0 0.0
    %2573 = vmatpush1.msra.mxu0 0.0
    %2574 = vmatprep.subr.mxu0 0.0
    %2575 = vmatpush1.msra.mxu0 0.0
    %2576 = vmatprep.subr.mxu0 0.0
    %2577 = vmatpush1.msra.mxu0 0.0
    %2578 = vmatprep.subr.mxu0 0.0
    %2579 = vmatpush1.msra.mxu0 0.0
    %2580 = vmatprep.mubr.f32.mxu0 0.0
    %2581 = vmatmul.mubr.f32.gmra.mrb[0].mxu0 %v2511
    %v2582 = vpop.f32.mrb[0].mxu0
    %v2583 = vadd.f32 0.0, %v2582
    %v2584 = vpop.f32.mrb[0].mxu0
    %v2585 = vadd.f32 0.0, %v2584
    %2586 = vmatprep.mubr.f32.mxu0 0.0
    %2587 = vmatmul.mubr.f32.gmra.mrb[0].mxu0 %v2514
    %v2588 = vpop.f32.mrb[0].mxu0
    %v2589 = vadd.f32 0.0, %v2588
    %v2590 = vpop.f32.mrb[0].mxu0
    %v2591 = vadd.f32 0.0, %v2590
    %2592 = vdwg.mxu0
    %v2593 = vadd.f32 %v2491, %v2583
    %v2594 = vadd.f32 %v2492, %v2585
    %v2595 = vadd.f32 %v2493, %v2589
    %v2596 = vadd.f32 %v2494, %v2591
    %2597 = vrot.lane.b32.xlu0 %v2001, 118
    %v2598 = vpop.permute.xlu0 %2597
    %2599 = vrot.lane.b32.xlu0 %v2003, 118
    %v2600 = vpop.permute.xlu0 %2599
    %2601 = vrot.lane.b32.xlu0 %v2002, 118
    %v2602 = vpop.permute.xlu0 %2601
    %2603 = vrot.lane.b32.xlu0 %v2004, 118
    %v2604 = vpop.permute.xlu0 %2603
    %v2605 = vsel %vm644, %v2598, %v2602
    %v2606 = vsel %vm644, %v2600, %v2604
    %v2607 = vsel %vm644, %v2602, %v2598
    %v2608 = vsel %vm644, %v2604, %v2600
    %s2609 = scalar_lea.vmem %s3, 384
    %v2610 = vld [vmem:[%s2609] sm:$0xff]
    %v2611 = vld [vmem:[%s2609 + $0x8] sm:$0xff]
    %v2613 = vsel %vm70, %v2610, 0
    %v2616 = vsel %vm70, %v2611, 0
    %2618 = vmatprep.subr.mxu0 %v2607
    %2619 = vmatpush1.msra.mxu0 %v2605
    %2620 = vmatprep.subr.mxu0 %v2608
    %2621 = vmatpush1.msra.mxu0 %v2606
    %2622 = vmatprep.subr.mxu0 0.0
    %2623 = vmatpush1.msra.mxu0 0.0
    %2624 = vmatprep.subr.mxu0 0.0
    %2625 = vmatpush1.msra.mxu0 0.0
    %2626 = vmatprep.subr.mxu0 0.0
    %2627 = vmatpush1.msra.mxu0 0.0
    %2628 = vmatprep.subr.mxu0 0.0
    %2629 = vmatpush1.msra.mxu0 0.0
    %2630 = vmatprep.subr.mxu0 0.0
    %2631 = vmatpush1.msra.mxu0 0.0
    %2632 = vmatprep.subr.mxu0 0.0
    %2633 = vmatpush1.msra.mxu0 0.0
    %2634 = vmatprep.subr.mxu0 0.0
    %2635 = vmatpush1.msra.mxu0 0.0
    %2636 = vmatprep.subr.mxu0 0.0
    %2637 = vmatpush1.msra.mxu0 0.0
    %2638 = vmatprep.subr.mxu0 0.0
    %2639 = vmatpush1.msra.mxu0 0.0
    %2640 = vmatprep.subr.mxu0 0.0
    %2641 = vmatpush1.msra.mxu0 0.0
    %2642 = vmatprep.subr.mxu0 0.0
    %2643 = vmatpush1.msra.mxu0 0.0
    %2644 = vmatprep.subr.mxu0 0.0
    %2645 = vmatpush1.msra.mxu0 0.0
    %2646 = vmatprep.subr.mxu0 0.0
    %2647 = vmatpush1.msra.mxu0 0.0
    %2648 = vmatprep.subr.mxu0 0.0
    %2649 = vmatpush1.msra.mxu0 0.0
    %2650 = vmatprep.subr.mxu0 0.0
    %2651 = vmatpush1.msra.mxu0 0.0
    %2652 = vmatprep.subr.mxu0 0.0
    %2653 = vmatpush1.msra.mxu0 0.0
    %2654 = vmatprep.subr.mxu0 0.0
    %2655 = vmatpush1.msra.mxu0 0.0
    %2656 = vmatprep.subr.mxu0 0.0
    %2657 = vmatpush1.msra.mxu0 0.0
    %2658 = vmatprep.subr.mxu0 0.0
    %2659 = vmatpush1.msra.mxu0 0.0
    %2660 = vmatprep.subr.mxu0 0.0
    %2661 = vmatpush1.msra.mxu0 0.0
    %2662 = vmatprep.subr.mxu0 0.0
    %2663 = vmatpush1.msra.mxu0 0.0
    %2664 = vmatprep.subr.mxu0 0.0
    %2665 = vmatpush1.msra.mxu0 0.0
    %2666 = vmatprep.subr.mxu0 0.0
    %2667 = vmatpush1.msra.mxu0 0.0
    %2668 = vmatprep.subr.mxu0 0.0
    %2669 = vmatpush1.msra.mxu0 0.0
    %2670 = vmatprep.subr.mxu0 0.0
    %2671 = vmatpush1.msra.mxu0 0.0
    %2672 = vmatprep.subr.mxu0 0.0
    %2673 = vmatpush1.msra.mxu0 0.0
    %2674 = vmatprep.subr.mxu0 0.0
    %2675 = vmatpush1.msra.mxu0 0.0
    %2676 = vmatprep.subr.mxu0 0.0
    %2677 = vmatpush1.msra.mxu0 0.0
    %2678 = vmatprep.subr.mxu0 0.0
    %2679 = vmatpush1.msra.mxu0 0.0
    %2680 = vmatprep.subr.mxu0 0.0
    %2681 = vmatpush1.msra.mxu0 0.0
    %2682 = vmatprep.mubr.f32.mxu0 0.0
    %2683 = vmatmul.mubr.f32.gmra.mrb[0].mxu0 %v2613
    %v2684 = vpop.f32.mrb[0].mxu0
    %v2685 = vadd.f32 0.0, %v2684
    %v2686 = vpop.f32.mrb[0].mxu0
    %v2687 = vadd.f32 0.0, %v2686
    %2688 = vmatprep.mubr.f32.mxu0 0.0
    %2689 = vmatmul.mubr.f32.gmra.mrb[0].mxu0 %v2616
    %v2690 = vpop.f32.mrb[0].mxu0
    %v2691 = vadd.f32 0.0, %v2690
    %v2692 = vpop.f32.mrb[0].mxu0
    %v2693 = vadd.f32 0.0, %v2692
    %2694 = vdwg.mxu0
    %v2695 = vadd.f32 %v2593, %v2685
    %v2696 = vadd.f32 %v2594, %v2687
    %v2697 = vadd.f32 %v2595, %v2691
    %v2698 = vadd.f32 %v2596, %v2693
    %2699 = vrot.lane.b32.xlu0 %v2001, 117
    %v2700 = vpop.permute.xlu0 %2699
    %2701 = vrot.lane.b32.xlu0 %v2003, 117
    %v2702 = vpop.permute.xlu0 %2701
    %2703 = vrot.lane.b32.xlu0 %v2002, 117
    %v2704 = vpop.permute.xlu0 %2703
    %2705 = vrot.lane.b32.xlu0 %v2004, 117
    %v2706 = vpop.permute.xlu0 %2705
    %v2707 = vsel %vm747, %v2700, %v2704
    %v2708 = vsel %vm747, %v2702, %v2706
    %v2709 = vsel %vm747, %v2704, %v2700
    %v2710 = vsel %vm747, %v2706, %v2702
    %s2711 = scalar_lea.vmem %s3, 400
    %v2712 = vld [vmem:[%s2711] sm:$0xff]
    %v2713 = vld [vmem:[%s2711 + $0x8] sm:$0xff]
    %v2715 = vsel %vm70, %v2712, 0
    %v2718 = vsel %vm70, %v2713, 0
    %2720 = vmatprep.subr.mxu0 %v2709
    %2721 = vmatpush1.msra.mxu0 %v2707
    %2722 = vmatprep.subr.mxu0 %v2710
    %2723 = vmatpush1.msra.mxu0 %v2708
    %2724 = vmatprep.subr.mxu0 0.0
    %2725 = vmatpush1.msra.mxu0 0.0
    %2726 = vmatprep.subr.mxu0 0.0
    %2727 = vmatpush1.msra.mxu0 0.0
    %2728 = vmatprep.subr.mxu0 0.0
    %2729 = vmatpush1.msra.mxu0 0.0
    %2730 = vmatprep.subr.mxu0 0.0
    %2731 = vmatpush1.msra.mxu0 0.0
    %2732 = vmatprep.subr.mxu0 0.0
    %2733 = vmatpush1.msra.mxu0 0.0
    %2734 = vmatprep.subr.mxu0 0.0
    %2735 = vmatpush1.msra.mxu0 0.0
    %2736 = vmatprep.subr.mxu0 0.0
    %2737 = vmatpush1.msra.mxu0 0.0
    %2738 = vmatprep.subr.mxu0 0.0
    %2739 = vmatpush1.msra.mxu0 0.0
    %2740 = vmatprep.subr.mxu0 0.0
    %2741 = vmatpush1.msra.mxu0 0.0
    %2742 = vmatprep.subr.mxu0 0.0
    %2743 = vmatpush1.msra.mxu0 0.0
    %2744 = vmatprep.subr.mxu0 0.0
    %2745 = vmatpush1.msra.mxu0 0.0
    %2746 = vmatprep.subr.mxu0 0.0
    %2747 = vmatpush1.msra.mxu0 0.0
    %2748 = vmatprep.subr.mxu0 0.0
    %2749 = vmatpush1.msra.mxu0 0.0
    %2750 = vmatprep.subr.mxu0 0.0
    %2751 = vmatpush1.msra.mxu0 0.0
    %2752 = vmatprep.subr.mxu0 0.0
    %2753 = vmatpush1.msra.mxu0 0.0
    %2754 = vmatprep.subr.mxu0 0.0
    %2755 = vmatpush1.msra.mxu0 0.0
    %2756 = vmatprep.subr.mxu0 0.0
    %2757 = vmatpush1.msra.mxu0 0.0
    %2758 = vmatprep.subr.mxu0 0.0
    %2759 = vmatpush1.msra.mxu0 0.0
    %2760 = vmatprep.subr.mxu0 0.0
    %2761 = vmatpush1.msra.mxu0 0.0
    %2762 = vmatprep.subr.mxu0 0.0
    %2763 = vmatpush1.msra.mxu0 0.0
    %2764 = vmatprep.subr.mxu0 0.0
    %2765 = vmatpush1.msra.mxu0 0.0
    %2766 = vmatprep.subr.mxu0 0.0
    %2767 = vmatpush1.msra.mxu0 0.0
    %2768 = vmatprep.subr.mxu0 0.0
    %2769 = vmatpush1.msra.mxu0 0.0
    %2770 = vmatprep.subr.mxu0 0.0
    %2771 = vmatpush1.msra.mxu0 0.0
    %2772 = vmatprep.subr.mxu0 0.0
    %2773 = vmatpush1.msra.mxu0 0.0
    %2774 = vmatprep.subr.mxu0 0.0
    %2775 = vmatpush1.msra.mxu0 0.0
    %2776 = vmatprep.subr.mxu0 0.0
    %2777 = vmatpush1.msra.mxu0 0.0
    %2778 = vmatprep.subr.mxu0 0.0
    %2779 = vmatpush1.msra.mxu0 0.0
    %2780 = vmatprep.subr.mxu0 0.0
    %2781 = vmatpush1.msra.mxu0 0.0
    %2782 = vmatprep.subr.mxu0 0.0
    %2783 = vmatpush1.msra.mxu0 0.0
    %2784 = vmatprep.mubr.f32.mxu0 0.0
    %2785 = vmatmul.mubr.f32.gmra.mrb[0].mxu0 %v2715
    %v2786 = vpop.f32.mrb[0].mxu0
    %v2787 = vadd.f32 0.0, %v2786
    %v2788 = vpop.f32.mrb[0].mxu0
    %v2789 = vadd.f32 0.0, %v2788
    %2790 = vmatprep.mubr.f32.mxu0 0.0
    %2791 = vmatmul.mubr.f32.gmra.mrb[0].mxu0 %v2718
    %v2792 = vpop.f32.mrb[0].mxu0
    %v2793 = vadd.f32 0.0, %v2792
    %v2794 = vpop.f32.mrb[0].mxu0
    %v2795 = vadd.f32 0.0, %v2794
    %2796 = vdwg.mxu0
    %v2797 = vadd.f32 %v2695, %v2787
    %v2798 = vadd.f32 %v2696, %v2789
    %v2799 = vadd.f32 %v2697, %v2793
    %v2800 = vadd.f32 %v2698, %v2795
    %2801 = vrot.lane.b32.xlu0 %v2001, 116
    %v2802 = vpop.permute.xlu0 %2801
    %2803 = vrot.lane.b32.xlu0 %v2003, 116
    %v2804 = vpop.permute.xlu0 %2803
    %2805 = vrot.lane.b32.xlu0 %v2002, 116
    %v2806 = vpop.permute.xlu0 %2805
    %2807 = vrot.lane.b32.xlu0 %v2004, 116
    %v2808 = vpop.permute.xlu0 %2807
    %v2809 = vsel %vm850, %v2802, %v2806
    %v2810 = vsel %vm850, %v2804, %v2808
    %v2811 = vsel %vm850, %v2806, %v2802
    %v2812 = vsel %vm850, %v2808, %v2804
    %s2813 = scalar_lea.vmem %s3, 416
    %v2814 = vld [vmem:[%s2813] sm:$0xff]
    %v2815 = vld [vmem:[%s2813 + $0x8] sm:$0xff]
    %v2817 = vsel %vm70, %v2814, 0
    %v2820 = vsel %vm70, %v2815, 0
    %2822 = vmatprep.subr.mxu0 %v2811
    %2823 = vmatpush1.msra.mxu0 %v2809
    %2824 = vmatprep.subr.mxu0 %v2812
    %2825 = vmatpush1.msra.mxu0 %v2810
    %2826 = vmatprep.subr.mxu0 0.0
    %2827 = vmatpush1.msra.mxu0 0.0
    %2828 = vmatprep.subr.mxu0 0.0
    %2829 = vmatpush1.msra.mxu0 0.0
    %2830 = vmatprep.subr.mxu0 0.0
    %2831 = vmatpush1.msra.mxu0 0.0
    %2832 = vmatprep.subr.mxu0 0.0
    %2833 = vmatpush1.msra.mxu0 0.0
    %2834 = vmatprep.subr.mxu0 0.0
    %2835 = vmatpush1.msra.mxu0 0.0
    %2836 = vmatprep.subr.mxu0 0.0
    %2837 = vmatpush1.msra.mxu0 0.0
    %2838 = vmatprep.subr.mxu0 0.0
    %2839 = vmatpush1.msra.mxu0 0.0
    %2840 = vmatprep.subr.mxu0 0.0
    %2841 = vmatpush1.msra.mxu0 0.0
    %2842 = vmatprep.subr.mxu0 0.0
    %2843 = vmatpush1.msra.mxu0 0.0
    %2844 = vmatprep.subr.mxu0 0.0
    %2845 = vmatpush1.msra.mxu0 0.0
    %2846 = vmatprep.subr.mxu0 0.0
    %2847 = vmatpush1.msra.mxu0 0.0
    %2848 = vmatprep.subr.mxu0 0.0
    %2849 = vmatpush1.msra.mxu0 0.0
    %2850 = vmatprep.subr.mxu0 0.0
    %2851 = vmatpush1.msra.mxu0 0.0
    %2852 = vmatprep.subr.mxu0 0.0
    %2853 = vmatpush1.msra.mxu0 0.0
    %2854 = vmatprep.subr.mxu0 0.0
    %2855 = vmatpush1.msra.mxu0 0.0
    %2856 = vmatprep.subr.mxu0 0.0
    %2857 = vmatpush1.msra.mxu0 0.0
    %2858 = vmatprep.subr.mxu0 0.0
    %2859 = vmatpush1.msra.mxu0 0.0
    %2860 = vmatprep.subr.mxu0 0.0
    %2861 = vmatpush1.msra.mxu0 0.0
    %2862 = vmatprep.subr.mxu0 0.0
    %2863 = vmatpush1.msra.mxu0 0.0
    %2864 = vmatprep.subr.mxu0 0.0
    %2865 = vmatpush1.msra.mxu0 0.0
    %2866 = vmatprep.subr.mxu0 0.0
    %2867 = vmatpush1.msra.mxu0 0.0
    %2868 = vmatprep.subr.mxu0 0.0
    %2869 = vmatpush1.msra.mxu0 0.0
    %2870 = vmatprep.subr.mxu0 0.0
    %2871 = vmatpush1.msra.mxu0 0.0
    %2872 = vmatprep.subr.mxu0 0.0
    %2873 = vmatpush1.msra.mxu0 0.0
    %2874 = vmatprep.subr.mxu0 0.0
    %2875 = vmatpush1.msra.mxu0 0.0
    %2876 = vmatprep.subr.mxu0 0.0
    %2877 = vmatpush1.msra.mxu0 0.0
    %2878 = vmatprep.subr.mxu0 0.0
    %2879 = vmatpush1.msra.mxu0 0.0
    %2880 = vmatprep.subr.mxu0 0.0
    %2881 = vmatpush1.msra.mxu0 0.0
    %2882 = vmatprep.subr.mxu0 0.0
    %2883 = vmatpush1.msra.mxu0 0.0
    %2884 = vmatprep.subr.mxu0 0.0
    %2885 = vmatpush1.msra.mxu0 0.0
    %2886 = vmatprep.mubr.f32.mxu0 0.0
    %2887 = vmatmul.mubr.f32.gmra.mrb[0].mxu0 %v2817
    %v2888 = vpop.f32.mrb[0].mxu0
    %v2889 = vadd.f32 0.0, %v2888
    %v2890 = vpop.f32.mrb[0].mxu0
    %v2891 = vadd.f32 0.0, %v2890
    %2892 = vmatprep.mubr.f32.mxu0 0.0
    %2893 = vmatmul.mubr.f32.gmra.mrb[0].mxu0 %v2820
    %v2894 = vpop.f32.mrb[0].mxu0
    %v2895 = vadd.f32 0.0, %v2894
    %v2896 = vpop.f32.mrb[0].mxu0
    %v2897 = vadd.f32 0.0, %v2896
    %2898 = vdwg.mxu0
    %v2899 = vadd.f32 %v2797, %v2889
    %v2900 = vadd.f32 %v2798, %v2891
    %v2901 = vadd.f32 %v2799, %v2895
    %v2902 = vadd.f32 %v2800, %v2897
    %v2903 = vmul.f32 %v2899, %v948
    %v2904 = vmul.f32 %v2900, %v948
    %v2905 = vmul.f32 %v2901, %v948
    %v2906 = vmul.f32 %v2902, %v948
    %v2907 = vadd.f32 %v2903, %v2904
    %2908 = vadd.xlane.f32.xlu0 %v2907
    %v2909 = vpop.xlane.xlu0 %2908
    %v2910 = vadd.f32 %v2905, %v2906
    %2911 = vadd.xlane.f32.xlu0 %v2910
    %v2912 = vpop.xlane.xlu0 %2911
    %v2913 = vmul.f32 %v2903, %v2903
    %v2914 = vmul.f32 %v2904, %v2904
    %v2915 = vmul.f32 %v2905, %v2905
    %v2916 = vmul.f32 %v2906, %v2906
    %v2917 = vadd.f32 %v2913, %v2914
    %2918 = vadd.xlane.f32.xlu0 %v2917
    %v2919 = vpop.xlane.xlu0 %2918
    %v2920 = vadd.f32 %v2915, %v2916
    %2921 = vadd.xlane.f32.xlu0 %v2920
    %v2922 = vpop.xlane.xlu0 %2921
    %v2923 = vmul.f32 %v2909, 0.0061728396
    %v2924 = vmul.f32 %v2912, 0.0061728396
    %v2925 = vmul.f32 %v2919, 0.0061728396
    %v2926 = vmul.f32 %v2922, 0.0061728396
    %v2927 = vmul.f32 %v2923, %v2923
    %v2928 = vmul.f32 %v2924, %v2924
    %v2929 = vsub.f32 %v2925, %v2927
    %v2930 = vsub.f32 %v2926, %v2928
    %s2931 = scalar_lea.vmem %s4, 32
    %v2932 = vld [vmem:[%s2931] sm:$0xff]
    %v2933 = vld [vmem:[%s2931 + $0x8] sm:$0xff]
    %v2934 = vadd.f32 %v2929, 1e-05
    %v2935 = vadd.f32 %v2930, 1e-05
    %v2936 = vrsqrt.pop %v2934
    %v2937 = vrsqrt.pop %v2935
    %v2938 = vmul.f32 %v2932, %v2936
    %v2939 = vmul.f32 %v2933, %v2937
    %s2940 = scalar_lea.vmem %s5, 32
    %v2941 = vld [vmem:[%s2940] sm:$0xff]
    %v2942 = vld [vmem:[%s2940 + $0x8] sm:$0xff]
    %v2943 = vmul.f32 %v2923, %v2938
    %v2944 = vmul.f32 %v2924, %v2939
    %v2945 = vsub.f32 %v2941, %v2943
    %v2946 = vsub.f32 %v2942, %v2944
    %2948 = vset.pattern.permute.xlu0 0
    %2949 = vperm.xlu0 %2948, %v2938
    %v2950 = vpop.permute.xlu0 %2949
    %2953 = vset.pattern.permute.xlu0 0
    %2954 = vperm.xlu0 %2953, %v2939
    %v2955 = vpop.permute.xlu0 %2954
    %v2957 = vmul.f32 %v2899, %v2950
    %v2958 = vmul.f32 %v2900, %v2950
    %v2959 = vmul.f32 %v2901, %v2955
    %v2960 = vmul.f32 %v2902, %v2955
    %2962 = vset.pattern.permute.xlu0 0
    %2963 = vperm.xlu0 %2962, %v2945
    %v2964 = vpop.permute.xlu0 %2963
    %2967 = vset.pattern.permute.xlu0 0
    %2968 = vperm.xlu0 %2967, %v2946
    %v2969 = vpop.permute.xlu0 %2968
    %v2971 = vadd.f32 %v2957, %v2964
    %v2972 = vadd.f32 %v2958, %v2964
    %v2973 = vadd.f32 %v2959, %v2969
    %v2974 = vadd.f32 %v2960, %v2969
    %v2975 = vadd.f32 %v2971, %v1023
    %v2976 = vadd.f32 %v2972, %v1024
    %v2977 = vadd.f32 %v2973, %v1025
    %v2978 = vadd.f32 %v2974, %v1026
    %v2979 = vmax.f32 %v2975, 0.0
    %v2980 = vmax.f32 %v2976, 0.0
    %v2981 = vmax.f32 %v2977, 0.0
    %v2982 = vmax.f32 %v2978, 0.0
    %v2983 = vmul.f32 %v2979, %v948
    %v2984 = vmul.f32 %v2980, %v948
    %v2985 = vmul.f32 %v2981, %v948
    %v2986 = vmul.f32 %v2982, %v948
    %2987 = vrot.lane.b32.xlu0 %v2983, 12
    %v2988 = vpop.permute.xlu0 %2987
    %2989 = vrot.lane.b32.xlu0 %v2985, 12
    %v2990 = vpop.permute.xlu0 %2989
    %2991 = vrot.lane.b32.xlu0 %v2984, 12
    %v2992 = vpop.permute.xlu0 %2991
    %2993 = vrot.lane.b32.xlu0 %v2986, 12
    %v2994 = vpop.permute.xlu0 %2993
    %v2995 = vsel %vm47, %v2988, %v2992
    %v2996 = vsel %vm47, %v2990, %v2994
    %v2997 = vsel %vm47, %v2992, %v2988
    %v2998 = vsel %vm47, %v2994, %v2990
    %s2999 = scalar_lea.vmem %s3, 432
    %v3000 = vld [vmem:[%s2999] sm:$0xff]
    %v3001 = vld [vmem:[%s2999 + $0x8] sm:$0xff]
    %3002 = vrot.lane.b32.xlu0 %v2983, 11
    %v3003 = vpop.permute.xlu0 %3002
    %3004 = vrot.lane.b32.xlu0 %v2985, 11
    %v3005 = vpop.permute.xlu0 %3004
    %3006 = vrot.lane.b32.xlu0 %v2984, 11
    %v3007 = vpop.permute.xlu0 %3006
    %3008 = vrot.lane.b32.xlu0 %v2986, 11
    %v3009 = vpop.permute.xlu0 %3008
    %v3010 = vsel %vm62, %v3003, %v3007
    %v3011 = vsel %vm62, %v3005, %v3009
    %v3012 = vsel %vm62, %v3007, %v3003
    %v3013 = vsel %vm62, %v3009, %v3005
    %s3014 = scalar_lea.vmem %s3, 448
    %v3015 = vld [vmem:[%s3014] sm:$0xff]
    %v3016 = vld [vmem:[%s3014 + $0x8] sm:$0xff]
    %v3018 = vsel %vm70, %v3015, 0
    %v3021 = vsel %vm70, %v3016, 0
    %3023 = vmatprep.subr.mxu0 %v3010
    %3024 = vmatpush1.msra.mxu0 %v3012
    %3025 = vmatprep.subr.mxu0 %v3011
    %3026 = vmatpush1.msra.mxu0 %v3013
    %3027 = vmatprep.subr.mxu0 0.0
    %3028 = vmatpush1.msra.mxu0 0.0
    %3029 = vmatprep.subr.mxu0 0.0
    %3030 = vmatpush1.msra.mxu0 0.0
    %3031 = vmatprep.subr.mxu0 0.0
    %3032 = vmatpush1.msra.mxu0 0.0
    %3033 = vmatprep.subr.mxu0 0.0
    %3034 = vmatpush1.msra.mxu0 0.0
    %3035 = vmatprep.subr.mxu0 0.0
    %3036 = vmatpush1.msra.mxu0 0.0
    %3037 = vmatprep.subr.mxu0 0.0
    %3038 = vmatpush1.msra.mxu0 0.0
    %3039 = vmatprep.subr.mxu0 0.0
    %3040 = vmatpush1.msra.mxu0 0.0
    %3041 = vmatprep.subr.mxu0 0.0
    %3042 = vmatpush1.msra.mxu0 0.0
    %3043 = vmatprep.subr.mxu0 0.0
    %3044 = vmatpush1.msra.mxu0 0.0
    %3045 = vmatprep.subr.mxu0 0.0
    %3046 = vmatpush1.msra.mxu0 0.0
    %3047 = vmatprep.subr.mxu0 0.0
    %3048 = vmatpush1.msra.mxu0 0.0
    %3049 = vmatprep.subr.mxu0 0.0
    %3050 = vmatpush1.msra.mxu0 0.0
    %3051 = vmatprep.subr.mxu0 0.0
    %3052 = vmatpush1.msra.mxu0 0.0
    %3053 = vmatprep.subr.mxu0 0.0
    %3054 = vmatpush1.msra.mxu0 0.0
    %3055 = vmatprep.subr.mxu0 0.0
    %3056 = vmatpush1.msra.mxu0 0.0
    %3057 = vmatprep.subr.mxu0 0.0
    %3058 = vmatpush1.msra.mxu0 0.0
    %3059 = vmatprep.subr.mxu0 0.0
    %3060 = vmatpush1.msra.mxu0 0.0
    %3061 = vmatprep.subr.mxu0 0.0
    %3062 = vmatpush1.msra.mxu0 0.0
    %3063 = vmatprep.subr.mxu0 0.0
    %3064 = vmatpush1.msra.mxu0 0.0
    %3065 = vmatprep.subr.mxu0 0.0
    %3066 = vmatpush1.msra.mxu0 0.0
    %3067 = vmatprep.subr.mxu0 0.0
    %3068 = vmatpush1.msra.mxu0 0.0
    %3069 = vmatprep.subr.mxu0 0.0
    %3070 = vmatpush1.msra.mxu0 0.0
    %3071 = vmatprep.subr.mxu0 0.0
    %3072 = vmatpush1.msra.mxu0 0.0
    %3073 = vmatprep.subr.mxu0 0.0
    %3074 = vmatpush1.msra.mxu0 0.0
    %3075 = vmatprep.subr.mxu0 0.0
    %3076 = vmatpush1.msra.mxu0 0.0
    %3077 = vmatprep.subr.mxu0 0.0
    %3078 = vmatpush1.msra.mxu0 0.0
    %3079 = vmatprep.subr.mxu0 0.0
    %3080 = vmatpush1.msra.mxu0 0.0
    %3081 = vmatprep.subr.mxu0 0.0
    %3082 = vmatpush1.msra.mxu0 0.0
    %3083 = vmatprep.subr.mxu0 0.0
    %3084 = vmatpush1.msra.mxu0 0.0
    %3085 = vmatprep.subr.mxu0 0.0
    %3086 = vmatpush1.msra.mxu0 0.0
    %3087 = vmatprep.mubr.f32.mxu0 0.0
    %3088 = vmatmul.mubr.f32.gmra.mrb[0].mxu0 %v3018
    %v3089 = vpop.f32.mrb[0].mxu0
    %v3090 = vadd.f32 0.0, %v3089
    %v3091 = vpop.f32.mrb[0].mxu0
    %v3092 = vadd.f32 0.0, %v3091
    %3093 = vmatprep.mubr.f32.mxu0 0.0
    %3094 = vmatmul.mubr.f32.gmra.mrb[0].mxu0 %v3021
    %v3095 = vpop.f32.mrb[0].mxu0
    %v3096 = vadd.f32 0.0, %v3095
    %v3097 = vpop.f32.mrb[0].mxu0
    %v3098 = vadd.f32 0.0, %v3097
    %3099 = vdwg.mxu0
    %v3101 = vsel %vm70, %v3000, 0
    %v3104 = vsel %vm70, %v3001, 0
    %3106 = vmatprep.subr.mxu0 %v2995
    %3107 = vmatpush1.msra.mxu0 %v2997
    %3108 = vmatprep.subr.mxu0 %v2996
    %3109 = vmatpush1.msra.mxu0 %v2998
    %3110 = vmatprep.subr.mxu0 0.0
    %3111 = vmatpush1.msra.mxu0 0.0
    %3112 = vmatprep.subr.mxu0 0.0
    %3113 = vmatpush1.msra.mxu0 0.0
    %3114 = vmatprep.subr.mxu0 0.0
    %3115 = vmatpush1.msra.mxu0 0.0
    %3116 = vmatprep.subr.mxu0 0.0
    %3117 = vmatpush1.msra.mxu0 0.0
    %3118 = vmatprep.subr.mxu0 0.0
    %3119 = vmatpush1.msra.mxu0 0.0
    %3120 = vmatprep.subr.mxu0 0.0
    %3121 = vmatpush1.msra.mxu0 0.0
    %3122 = vmatprep.subr.mxu0 0.0
    %3123 = vmatpush1.msra.mxu0 0.0
    %3124 = vmatprep.subr.mxu0 0.0
    %3125 = vmatpush1.msra.mxu0 0.0
    %3126 = vmatprep.subr.mxu0 0.0
    %3127 = vmatpush1.msra.mxu0 0.0
    %3128 = vmatprep.subr.mxu0 0.0
    %3129 = vmatpush1.msra.mxu0 0.0
    %3130 = vmatprep.subr.mxu0 0.0
    %3131 = vmatpush1.msra.mxu0 0.0
    %3132 = vmatprep.subr.mxu0 0.0
    %3133 = vmatpush1.msra.mxu0 0.0
    %3134 = vmatprep.subr.mxu0 0.0
    %3135 = vmatpush1.msra.mxu0 0.0
    %3136 = vmatprep.subr.mxu0 0.0
    %3137 = vmatpush1.msra.mxu0 0.0
    %3138 = vmatprep.subr.mxu0 0.0
    %3139 = vmatpush1.msra.mxu0 0.0
    %3140 = vmatprep.subr.mxu0 0.0
    %3141 = vmatpush1.msra.mxu0 0.0
    %3142 = vmatprep.subr.mxu0 0.0
    %3143 = vmatpush1.msra.mxu0 0.0
    %3144 = vmatprep.subr.mxu0 0.0
    %3145 = vmatpush1.msra.mxu0 0.0
    %3146 = vmatprep.subr.mxu0 0.0
    %3147 = vmatpush1.msra.mxu0 0.0
    %3148 = vmatprep.subr.mxu0 0.0
    %3149 = vmatpush1.msra.mxu0 0.0
    %3150 = vmatprep.subr.mxu0 0.0
    %3151 = vmatpush1.msra.mxu0 0.0
    %3152 = vmatprep.subr.mxu0 0.0
    %3153 = vmatpush1.msra.mxu0 0.0
    %3154 = vmatprep.subr.mxu0 0.0
    %3155 = vmatpush1.msra.mxu0 0.0
    %3156 = vmatprep.subr.mxu0 0.0
    %3157 = vmatpush1.msra.mxu0 0.0
    %3158 = vmatprep.subr.mxu0 0.0
    %3159 = vmatpush1.msra.mxu0 0.0
    %3160 = vmatprep.subr.mxu0 0.0
    %3161 = vmatpush1.msra.mxu0 0.0
    %3162 = vmatprep.subr.mxu0 0.0
    %3163 = vmatpush1.msra.mxu0 0.0
    %3164 = vmatprep.subr.mxu0 0.0
    %3165 = vmatpush1.msra.mxu0 0.0
    %3166 = vmatprep.subr.mxu0 0.0
    %3167 = vmatpush1.msra.mxu0 0.0
    %3168 = vmatprep.subr.mxu0 0.0
    %3169 = vmatpush1.msra.mxu0 0.0
    %3170 = vmatprep.mubr.f32.mxu0 0.0
    %3171 = vmatmul.mubr.f32.gmra.mrb[0].mxu0 %v3101
    %v3172 = vpop.f32.mrb[0].mxu0
    %v3173 = vadd.f32 %v3090, %v3172
    %v3174 = vpop.f32.mrb[0].mxu0
    %v3175 = vadd.f32 %v3092, %v3174
    %3176 = vmatprep.mubr.f32.mxu0 0.0
    %3177 = vmatmul.mubr.f32.gmra.mrb[0].mxu0 %v3104
    %v3178 = vpop.f32.mrb[0].mxu0
    %v3179 = vadd.f32 %v3096, %v3178
    %v3180 = vpop.f32.mrb[0].mxu0
    %v3181 = vadd.f32 %v3098, %v3180
    %3182 = vdwg.mxu0
    %3183 = vrot.lane.b32.xlu0 %v2983, 10
    %v3184 = vpop.permute.xlu0 %3183
    %3185 = vrot.lane.b32.xlu0 %v2985, 10
    %v3186 = vpop.permute.xlu0 %3185
    %3187 = vrot.lane.b32.xlu0 %v2984, 10
    %v3188 = vpop.permute.xlu0 %3187
    %3189 = vrot.lane.b32.xlu0 %v2986, 10
    %v3190 = vpop.permute.xlu0 %3189
    %v3191 = vsel %vm245, %v3184, %v3188
    %v3192 = vsel %vm245, %v3186, %v3190
    %v3193 = vsel %vm245, %v3188, %v3184
    %v3194 = vsel %vm245, %v3190, %v3186
    %s3195 = scalar_lea.vmem %s3, 464
    %v3196 = vld [vmem:[%s3195] sm:$0xff]
    %v3197 = vld [vmem:[%s3195 + $0x8] sm:$0xff]
    %v3199 = vsel %vm70, %v3196, 0
    %v3202 = vsel %vm70, %v3197, 0
    %3204 = vmatprep.subr.mxu0 %v3191
    %3205 = vmatpush1.msra.mxu0 %v3193
    %3206 = vmatprep.subr.mxu0 %v3192
    %3207 = vmatpush1.msra.mxu0 %v3194
    %3208 = vmatprep.subr.mxu0 0.0
    %3209 = vmatpush1.msra.mxu0 0.0
    %3210 = vmatprep.subr.mxu0 0.0
    %3211 = vmatpush1.msra.mxu0 0.0
    %3212 = vmatprep.subr.mxu0 0.0
    %3213 = vmatpush1.msra.mxu0 0.0
    %3214 = vmatprep.subr.mxu0 0.0
    %3215 = vmatpush1.msra.mxu0 0.0
    %3216 = vmatprep.subr.mxu0 0.0
    %3217 = vmatpush1.msra.mxu0 0.0
    %3218 = vmatprep.subr.mxu0 0.0
    %3219 = vmatpush1.msra.mxu0 0.0
    %3220 = vmatprep.subr.mxu0 0.0
    %3221 = vmatpush1.msra.mxu0 0.0
    %3222 = vmatprep.subr.mxu0 0.0
    %3223 = vmatpush1.msra.mxu0 0.0
    %3224 = vmatprep.subr.mxu0 0.0
    %3225 = vmatpush1.msra.mxu0 0.0
    %3226 = vmatprep.subr.mxu0 0.0
    %3227 = vmatpush1.msra.mxu0 0.0
    %3228 = vmatprep.subr.mxu0 0.0
    %3229 = vmatpush1.msra.mxu0 0.0
    %3230 = vmatprep.subr.mxu0 0.0
    %3231 = vmatpush1.msra.mxu0 0.0
    %3232 = vmatprep.subr.mxu0 0.0
    %3233 = vmatpush1.msra.mxu0 0.0
    %3234 = vmatprep.subr.mxu0 0.0
    %3235 = vmatpush1.msra.mxu0 0.0
    %3236 = vmatprep.subr.mxu0 0.0
    %3237 = vmatpush1.msra.mxu0 0.0
    %3238 = vmatprep.subr.mxu0 0.0
    %3239 = vmatpush1.msra.mxu0 0.0
    %3240 = vmatprep.subr.mxu0 0.0
    %3241 = vmatpush1.msra.mxu0 0.0
    %3242 = vmatprep.subr.mxu0 0.0
    %3243 = vmatpush1.msra.mxu0 0.0
    %3244 = vmatprep.subr.mxu0 0.0
    %3245 = vmatpush1.msra.mxu0 0.0
    %3246 = vmatprep.subr.mxu0 0.0
    %3247 = vmatpush1.msra.mxu0 0.0
    %3248 = vmatprep.subr.mxu0 0.0
    %3249 = vmatpush1.msra.mxu0 0.0
    %3250 = vmatprep.subr.mxu0 0.0
    %3251 = vmatpush1.msra.mxu0 0.0
    %3252 = vmatprep.subr.mxu0 0.0
    %3253 = vmatpush1.msra.mxu0 0.0
    %3254 = vmatprep.subr.mxu0 0.0
    %3255 = vmatpush1.msra.mxu0 0.0
    %3256 = vmatprep.subr.mxu0 0.0
    %3257 = vmatpush1.msra.mxu0 0.0
    %3258 = vmatprep.subr.mxu0 0.0
    %3259 = vmatpush1.msra.mxu0 0.0
    %3260 = vmatprep.subr.mxu0 0.0
    %3261 = vmatpush1.msra.mxu0 0.0
    %3262 = vmatprep.subr.mxu0 0.0
    %3263 = vmatpush1.msra.mxu0 0.0
    %3264 = vmatprep.subr.mxu0 0.0
    %3265 = vmatpush1.msra.mxu0 0.0
    %3266 = vmatprep.subr.mxu0 0.0
    %3267 = vmatpush1.msra.mxu0 0.0
    %3268 = vmatprep.mubr.f32.mxu0 0.0
    %3269 = vmatmul.mubr.f32.gmra.mrb[0].mxu0 %v3199
    %v3270 = vpop.f32.mrb[0].mxu0
    %v3271 = vadd.f32 0.0, %v3270
    %v3272 = vpop.f32.mrb[0].mxu0
    %v3273 = vadd.f32 0.0, %v3272
    %3274 = vmatprep.mubr.f32.mxu0 0.0
    %3275 = vmatmul.mubr.f32.gmra.mrb[0].mxu0 %v3202
    %v3276 = vpop.f32.mrb[0].mxu0
    %v3277 = vadd.f32 0.0, %v3276
    %v3278 = vpop.f32.mrb[0].mxu0
    %v3279 = vadd.f32 0.0, %v3278
    %3280 = vdwg.mxu0
    %v3281 = vadd.f32 %v3173, %v3271
    %v3282 = vadd.f32 %v3175, %v3273
    %v3283 = vadd.f32 %v3179, %v3277
    %v3284 = vadd.f32 %v3181, %v3279
    %3285 = vrot.lane.b32.xlu0 %v2983, 1
    %v3286 = vpop.permute.xlu0 %3285
    %3287 = vrot.lane.b32.xlu0 %v2985, 1
    %v3288 = vpop.permute.xlu0 %3287
    %3289 = vrot.lane.b32.xlu0 %v2984, 1
    %v3290 = vpop.permute.xlu0 %3289
    %3291 = vrot.lane.b32.xlu0 %v2986, 1
    %v3292 = vpop.permute.xlu0 %3291
    %v3293 = vsel %vm348, %v3286, %v3290
    %v3294 = vsel %vm348, %v3288, %v3292
    %v3295 = vsel %vm348, %v3290, %v3286
    %v3296 = vsel %vm348, %v3292, %v3288
    %s3297 = scalar_lea.vmem %s3, 480
    %v3298 = vld [vmem:[%s3297] sm:$0xff]
    %v3299 = vld [vmem:[%s3297 + $0x8] sm:$0xff]
    %v3301 = vsel %vm70, %v3298, 0
    %v3304 = vsel %vm70, %v3299, 0
    %3306 = vmatprep.subr.mxu0 %v3293
    %3307 = vmatpush1.msra.mxu0 %v3295
    %3308 = vmatprep.subr.mxu0 %v3294
    %3309 = vmatpush1.msra.mxu0 %v3296
    %3310 = vmatprep.subr.mxu0 0.0
    %3311 = vmatpush1.msra.mxu0 0.0
    %3312 = vmatprep.subr.mxu0 0.0
    %3313 = vmatpush1.msra.mxu0 0.0
    %3314 = vmatprep.subr.mxu0 0.0
    %3315 = vmatpush1.msra.mxu0 0.0
    %3316 = vmatprep.subr.mxu0 0.0
    %3317 = vmatpush1.msra.mxu0 0.0
    %3318 = vmatprep.subr.mxu0 0.0
    %3319 = vmatpush1.msra.mxu0 0.0
    %3320 = vmatprep.subr.mxu0 0.0
    %3321 = vmatpush1.msra.mxu0 0.0
    %3322 = vmatprep.subr.mxu0 0.0
    %3323 = vmatpush1.msra.mxu0 0.0
    %3324 = vmatprep.subr.mxu0 0.0
    %3325 = vmatpush1.msra.mxu0 0.0
    %3326 = vmatprep.subr.mxu0 0.0
    %3327 = vmatpush1.msra.mxu0 0.0
    %3328 = vmatprep.subr.mxu0 0.0
    %3329 = vmatpush1.msra.mxu0 0.0
    %3330 = vmatprep.subr.mxu0 0.0
    %3331 = vmatpush1.msra.mxu0 0.0
    %3332 = vmatprep.subr.mxu0 0.0
    %3333 = vmatpush1.msra.mxu0 0.0
    %3334 = vmatprep.subr.mxu0 0.0
    %3335 = vmatpush1.msra.mxu0 0.0
    %3336 = vmatprep.subr.mxu0 0.0
    %3337 = vmatpush1.msra.mxu0 0.0
    %3338 = vmatprep.subr.mxu0 0.0
    %3339 = vmatpush1.msra.mxu0 0.0
    %3340 = vmatprep.subr.mxu0 0.0
    %3341 = vmatpush1.msra.mxu0 0.0
    %3342 = vmatprep.subr.mxu0 0.0
    %3343 = vmatpush1.msra.mxu0 0.0
    %3344 = vmatprep.subr.mxu0 0.0
    %3345 = vmatpush1.msra.mxu0 0.0
    %3346 = vmatprep.subr.mxu0 0.0
    %3347 = vmatpush1.msra.mxu0 0.0
    %3348 = vmatprep.subr.mxu0 0.0
    %3349 = vmatpush1.msra.mxu0 0.0
    %3350 = vmatprep.subr.mxu0 0.0
    %3351 = vmatpush1.msra.mxu0 0.0
    %3352 = vmatprep.subr.mxu0 0.0
    %3353 = vmatpush1.msra.mxu0 0.0
    %3354 = vmatprep.subr.mxu0 0.0
    %3355 = vmatpush1.msra.mxu0 0.0
    %3356 = vmatprep.subr.mxu0 0.0
    %3357 = vmatpush1.msra.mxu0 0.0
    %3358 = vmatprep.subr.mxu0 0.0
    %3359 = vmatpush1.msra.mxu0 0.0
    %3360 = vmatprep.subr.mxu0 0.0
    %3361 = vmatpush1.msra.mxu0 0.0
    %3362 = vmatprep.subr.mxu0 0.0
    %3363 = vmatpush1.msra.mxu0 0.0
    %3364 = vmatprep.subr.mxu0 0.0
    %3365 = vmatpush1.msra.mxu0 0.0
    %3366 = vmatprep.subr.mxu0 0.0
    %3367 = vmatpush1.msra.mxu0 0.0
    %3368 = vmatprep.subr.mxu0 0.0
    %3369 = vmatpush1.msra.mxu0 0.0
    %3370 = vmatprep.mubr.f32.mxu0 0.0
    %3371 = vmatmul.mubr.f32.gmra.mrb[0].mxu0 %v3301
    %v3372 = vpop.f32.mrb[0].mxu0
    %v3373 = vadd.f32 0.0, %v3372
    %v3374 = vpop.f32.mrb[0].mxu0
    %v3375 = vadd.f32 0.0, %v3374
    %3376 = vmatprep.mubr.f32.mxu0 0.0
    %3377 = vmatmul.mubr.f32.gmra.mrb[0].mxu0 %v3304
    %v3378 = vpop.f32.mrb[0].mxu0
    %v3379 = vadd.f32 0.0, %v3378
    %v3380 = vpop.f32.mrb[0].mxu0
    %v3381 = vadd.f32 0.0, %v3380
    %3382 = vdwg.mxu0
    %v3383 = vadd.f32 %v3281, %v3373
    %v3384 = vadd.f32 %v3282, %v3375
    %v3385 = vadd.f32 %v3283, %v3379
    %v3386 = vadd.f32 %v3284, %v3381
    %s3387 = scalar_lea.vmem %s3, 496
    %v3388 = vld [vmem:[%s3387] sm:$0xff]
    %v3389 = vld [vmem:[%s3387 + $0x8] sm:$0xff]
    %v3391 = vsel %vm70, %v3388, 0
    %v3394 = vsel %vm70, %v3389, 0
    %3396 = vmatprep.subr.mxu0 %v2984
    %3397 = vmatpush1.msra.mxu0 %v2983
    %3398 = vmatprep.subr.mxu0 %v2986
    %3399 = vmatpush1.msra.mxu0 %v2985
    %3400 = vmatprep.subr.mxu0 0.0
    %3401 = vmatpush1.msra.mxu0 0.0
    %3402 = vmatprep.subr.mxu0 0.0
    %3403 = vmatpush1.msra.mxu0 0.0
    %3404 = vmatprep.subr.mxu0 0.0
    %3405 = vmatpush1.msra.mxu0 0.0
    %3406 = vmatprep.subr.mxu0 0.0
    %3407 = vmatpush1.msra.mxu0 0.0
    %3408 = vmatprep.subr.mxu0 0.0
    %3409 = vmatpush1.msra.mxu0 0.0
    %3410 = vmatprep.subr.mxu0 0.0
    %3411 = vmatpush1.msra.mxu0 0.0
    %3412 = vmatprep.subr.mxu0 0.0
    %3413 = vmatpush1.msra.mxu0 0.0
    %3414 = vmatprep.subr.mxu0 0.0
    %3415 = vmatpush1.msra.mxu0 0.0
    %3416 = vmatprep.subr.mxu0 0.0
    %3417 = vmatpush1.msra.mxu0 0.0
    %3418 = vmatprep.subr.mxu0 0.0
    %3419 = vmatpush1.msra.mxu0 0.0
    %3420 = vmatprep.subr.mxu0 0.0
    %3421 = vmatpush1.msra.mxu0 0.0
    %3422 = vmatprep.subr.mxu0 0.0
    %3423 = vmatpush1.msra.mxu0 0.0
    %3424 = vmatprep.subr.mxu0 0.0
    %3425 = vmatpush1.msra.mxu0 0.0
    %3426 = vmatprep.subr.mxu0 0.0
    %3427 = vmatpush1.msra.mxu0 0.0
    %3428 = vmatprep.subr.mxu0 0.0
    %3429 = vmatpush1.msra.mxu0 0.0
    %3430 = vmatprep.subr.mxu0 0.0
    %3431 = vmatpush1.msra.mxu0 0.0
    %3432 = vmatprep.subr.mxu0 0.0
    %3433 = vmatpush1.msra.mxu0 0.0
    %3434 = vmatprep.subr.mxu0 0.0
    %3435 = vmatpush1.msra.mxu0 0.0
    %3436 = vmatprep.subr.mxu0 0.0
    %3437 = vmatpush1.msra.mxu0 0.0
    %3438 = vmatprep.subr.mxu0 0.0
    %3439 = vmatpush1.msra.mxu0 0.0
    %3440 = vmatprep.subr.mxu0 0.0
    %3441 = vmatpush1.msra.mxu0 0.0
    %3442 = vmatprep.subr.mxu0 0.0
    %3443 = vmatpush1.msra.mxu0 0.0
    %3444 = vmatprep.subr.mxu0 0.0
    %3445 = vmatpush1.msra.mxu0 0.0
    %3446 = vmatprep.subr.mxu0 0.0
    %3447 = vmatpush1.msra.mxu0 0.0
    %3448 = vmatprep.subr.mxu0 0.0
    %3449 = vmatpush1.msra.mxu0 0.0
    %3450 = vmatprep.subr.mxu0 0.0
    %3451 = vmatpush1.msra.mxu0 0.0
    %3452 = vmatprep.subr.mxu0 0.0
    %3453 = vmatpush1.msra.mxu0 0.0
    %3454 = vmatprep.subr.mxu0 0.0
    %3455 = vmatpush1.msra.mxu0 0.0
    %3456 = vmatprep.subr.mxu0 0.0
    %3457 = vmatpush1.msra.mxu0 0.0
    %3458 = vmatprep.subr.mxu0 0.0
    %3459 = vmatpush1.msra.mxu0 0.0
    %3460 = vmatprep.mubr.f32.mxu0 0.0
    %3461 = vmatmul.mubr.f32.gmra.mrb[0].mxu0 %v3391
    %v3462 = vpop.f32.mrb[0].mxu0
    %v3463 = vadd.f32 0.0, %v3462
    %v3464 = vpop.f32.mrb[0].mxu0
    %v3465 = vadd.f32 0.0, %v3464
    %3466 = vmatprep.mubr.f32.mxu0 0.0
    %3467 = vmatmul.mubr.f32.gmra.mrb[0].mxu0 %v3394
    %v3468 = vpop.f32.mrb[0].mxu0
    %v3469 = vadd.f32 0.0, %v3468
    %v3470 = vpop.f32.mrb[0].mxu0
    %v3471 = vadd.f32 0.0, %v3470
    %3472 = vdwg.mxu0
    %v3473 = vadd.f32 %v3383, %v3463
    %v3474 = vadd.f32 %v3384, %v3465
    %v3475 = vadd.f32 %v3385, %v3469
    %v3476 = vadd.f32 %v3386, %v3471
    %3477 = vrot.lane.b32.xlu0 %v2983, 127
    %v3478 = vpop.permute.xlu0 %3477
    %3479 = vrot.lane.b32.xlu0 %v2985, 127
    %v3480 = vpop.permute.xlu0 %3479
    %3481 = vrot.lane.b32.xlu0 %v2984, 127
    %v3482 = vpop.permute.xlu0 %3481
    %3483 = vrot.lane.b32.xlu0 %v2986, 127
    %v3484 = vpop.permute.xlu0 %3483
    %v3485 = vsel %vm541, %v3478, %v3482
    %v3486 = vsel %vm541, %v3480, %v3484
    %v3487 = vsel %vm541, %v3482, %v3478
    %v3488 = vsel %vm541, %v3484, %v3480
    %s3489 = scalar_lea.vmem %s3, 512
    %v3490 = vld [vmem:[%s3489] sm:$0xff]
    %v3491 = vld [vmem:[%s3489 + $0x8] sm:$0xff]
    %v3493 = vsel %vm70, %v3490, 0
    %v3496 = vsel %vm70, %v3491, 0
    %3498 = vmatprep.subr.mxu0 %v3487
    %3499 = vmatpush1.msra.mxu0 %v3485
    %3500 = vmatprep.subr.mxu0 %v3488
    %3501 = vmatpush1.msra.mxu0 %v3486
    %3502 = vmatprep.subr.mxu0 0.0
    %3503 = vmatpush1.msra.mxu0 0.0
    %3504 = vmatprep.subr.mxu0 0.0
    %3505 = vmatpush1.msra.mxu0 0.0
    %3506 = vmatprep.subr.mxu0 0.0
    %3507 = vmatpush1.msra.mxu0 0.0
    %3508 = vmatprep.subr.mxu0 0.0
    %3509 = vmatpush1.msra.mxu0 0.0
    %3510 = vmatprep.subr.mxu0 0.0
    %3511 = vmatpush1.msra.mxu0 0.0
    %3512 = vmatprep.subr.mxu0 0.0
    %3513 = vmatpush1.msra.mxu0 0.0
    %3514 = vmatprep.subr.mxu0 0.0
    %3515 = vmatpush1.msra.mxu0 0.0
    %3516 = vmatprep.subr.mxu0 0.0
    %3517 = vmatpush1.msra.mxu0 0.0
    %3518 = vmatprep.subr.mxu0 0.0
    %3519 = vmatpush1.msra.mxu0 0.0
    %3520 = vmatprep.subr.mxu0 0.0
    %3521 = vmatpush1.msra.mxu0 0.0
    %3522 = vmatprep.subr.mxu0 0.0
    %3523 = vmatpush1.msra.mxu0 0.0
    %3524 = vmatprep.subr.mxu0 0.0
    %3525 = vmatpush1.msra.mxu0 0.0
    %3526 = vmatprep.subr.mxu0 0.0
    %3527 = vmatpush1.msra.mxu0 0.0
    %3528 = vmatprep.subr.mxu0 0.0
    %3529 = vmatpush1.msra.mxu0 0.0
    %3530 = vmatprep.subr.mxu0 0.0
    %3531 = vmatpush1.msra.mxu0 0.0
    %3532 = vmatprep.subr.mxu0 0.0
    %3533 = vmatpush1.msra.mxu0 0.0
    %3534 = vmatprep.subr.mxu0 0.0
    %3535 = vmatpush1.msra.mxu0 0.0
    %3536 = vmatprep.subr.mxu0 0.0
    %3537 = vmatpush1.msra.mxu0 0.0
    %3538 = vmatprep.subr.mxu0 0.0
    %3539 = vmatpush1.msra.mxu0 0.0
    %3540 = vmatprep.subr.mxu0 0.0
    %3541 = vmatpush1.msra.mxu0 0.0
    %3542 = vmatprep.subr.mxu0 0.0
    %3543 = vmatpush1.msra.mxu0 0.0
    %3544 = vmatprep.subr.mxu0 0.0
    %3545 = vmatpush1.msra.mxu0 0.0
    %3546 = vmatprep.subr.mxu0 0.0
    %3547 = vmatpush1.msra.mxu0 0.0
    %3548 = vmatprep.subr.mxu0 0.0
    %3549 = vmatpush1.msra.mxu0 0.0
    %3550 = vmatprep.subr.mxu0 0.0
    %3551 = vmatpush1.msra.mxu0 0.0
    %3552 = vmatprep.subr.mxu0 0.0
    %3553 = vmatpush1.msra.mxu0 0.0
    %3554 = vmatprep.subr.mxu0 0.0
    %3555 = vmatpush1.msra.mxu0 0.0
    %3556 = vmatprep.subr.mxu0 0.0
    %3557 = vmatpush1.msra.mxu0 0.0
    %3558 = vmatprep.subr.mxu0 0.0
    %3559 = vmatpush1.msra.mxu0 0.0
    %3560 = vmatprep.subr.mxu0 0.0
    %3561 = vmatpush1.msra.mxu0 0.0
    %3562 = vmatprep.mubr.f32.mxu0 0.0
    %3563 = vmatmul.mubr.f32.gmra.mrb[0].mxu0 %v3493
    %v3564 = vpop.f32.mrb[0].mxu0
    %v3565 = vadd.f32 0.0, %v3564
    %v3566 = vpop.f32.mrb[0].mxu0
    %v3567 = vadd.f32 0.0, %v3566
    %3568 = vmatprep.mubr.f32.mxu0 0.0
    %3569 = vmatmul.mubr.f32.gmra.mrb[0].mxu0 %v3496
    %v3570 = vpop.f32.mrb[0].mxu0
    %v3571 = vadd.f32 0.0, %v3570
    %v3572 = vpop.f32.mrb[0].mxu0
    %v3573 = vadd.f32 0.0, %v3572
    %3574 = vdwg.mxu0
    %v3575 = vadd.f32 %v3473, %v3565
    %v3576 = vadd.f32 %v3474, %v3567
    %v3577 = vadd.f32 %v3475, %v3571
    %v3578 = vadd.f32 %v3476, %v3573
    %3579 = vrot.lane.b32.xlu0 %v2983, 118
    %v3580 = vpop.permute.xlu0 %3579
    %3581 = vrot.lane.b32.xlu0 %v2985, 118
    %v3582 = vpop.permute.xlu0 %3581
    %3583 = vrot.lane.b32.xlu0 %v2984, 118
    %v3584 = vpop.permute.xlu0 %3583
    %3585 = vrot.lane.b32.xlu0 %v2986, 118
    %v3586 = vpop.permute.xlu0 %3585
    %v3587 = vsel %vm644, %v3580, %v3584
    %v3588 = vsel %vm644, %v3582, %v3586
    %v3589 = vsel %vm644, %v3584, %v3580
    %v3590 = vsel %vm644, %v3586, %v3582
    %s3591 = scalar_lea.vmem %s3, 528
    %v3592 = vld [vmem:[%s3591] sm:$0xff]
    %v3593 = vld [vmem:[%s3591 + $0x8] sm:$0xff]
    %v3595 = vsel %vm70, %v3592, 0
    %v3598 = vsel %vm70, %v3593, 0
    %3600 = vmatprep.subr.mxu0 %v3589
    %3601 = vmatpush1.msra.mxu0 %v3587
    %3602 = vmatprep.subr.mxu0 %v3590
    %3603 = vmatpush1.msra.mxu0 %v3588
    %3604 = vmatprep.subr.mxu0 0.0
    %3605 = vmatpush1.msra.mxu0 0.0
    %3606 = vmatprep.subr.mxu0 0.0
    %3607 = vmatpush1.msra.mxu0 0.0
    %3608 = vmatprep.subr.mxu0 0.0
    %3609 = vmatpush1.msra.mxu0 0.0
    %3610 = vmatprep.subr.mxu0 0.0
    %3611 = vmatpush1.msra.mxu0 0.0
    %3612 = vmatprep.subr.mxu0 0.0
    %3613 = vmatpush1.msra.mxu0 0.0
    %3614 = vmatprep.subr.mxu0 0.0
    %3615 = vmatpush1.msra.mxu0 0.0
    %3616 = vmatprep.subr.mxu0 0.0
    %3617 = vmatpush1.msra.mxu0 0.0
    %3618 = vmatprep.subr.mxu0 0.0
    %3619 = vmatpush1.msra.mxu0 0.0
    %3620 = vmatprep.subr.mxu0 0.0
    %3621 = vmatpush1.msra.mxu0 0.0
    %3622 = vmatprep.subr.mxu0 0.0
    %3623 = vmatpush1.msra.mxu0 0.0
    %3624 = vmatprep.subr.mxu0 0.0
    %3625 = vmatpush1.msra.mxu0 0.0
    %3626 = vmatprep.subr.mxu0 0.0
    %3627 = vmatpush1.msra.mxu0 0.0
    %3628 = vmatprep.subr.mxu0 0.0
    %3629 = vmatpush1.msra.mxu0 0.0
    %3630 = vmatprep.subr.mxu0 0.0
    %3631 = vmatpush1.msra.mxu0 0.0
    %3632 = vmatprep.subr.mxu0 0.0
    %3633 = vmatpush1.msra.mxu0 0.0
    %3634 = vmatprep.subr.mxu0 0.0
    %3635 = vmatpush1.msra.mxu0 0.0
    %3636 = vmatprep.subr.mxu0 0.0
    %3637 = vmatpush1.msra.mxu0 0.0
    %3638 = vmatprep.subr.mxu0 0.0
    %3639 = vmatpush1.msra.mxu0 0.0
    %3640 = vmatprep.subr.mxu0 0.0
    %3641 = vmatpush1.msra.mxu0 0.0
    %3642 = vmatprep.subr.mxu0 0.0
    %3643 = vmatpush1.msra.mxu0 0.0
    %3644 = vmatprep.subr.mxu0 0.0
    %3645 = vmatpush1.msra.mxu0 0.0
    %3646 = vmatprep.subr.mxu0 0.0
    %3647 = vmatpush1.msra.mxu0 0.0
    %3648 = vmatprep.subr.mxu0 0.0
    %3649 = vmatpush1.msra.mxu0 0.0
    %3650 = vmatprep.subr.mxu0 0.0
    %3651 = vmatpush1.msra.mxu0 0.0
    %3652 = vmatprep.subr.mxu0 0.0
    %3653 = vmatpush1.msra.mxu0 0.0
    %3654 = vmatprep.subr.mxu0 0.0
    %3655 = vmatpush1.msra.mxu0 0.0
    %3656 = vmatprep.subr.mxu0 0.0
    %3657 = vmatpush1.msra.mxu0 0.0
    %3658 = vmatprep.subr.mxu0 0.0
    %3659 = vmatpush1.msra.mxu0 0.0
    %3660 = vmatprep.subr.mxu0 0.0
    %3661 = vmatpush1.msra.mxu0 0.0
    %3662 = vmatprep.subr.mxu0 0.0
    %3663 = vmatpush1.msra.mxu0 0.0
    %3664 = vmatprep.mubr.f32.mxu0 0.0
    %3665 = vmatmul.mubr.f32.gmra.mrb[0].mxu0 %v3595
    %v3666 = vpop.f32.mrb[0].mxu0
    %v3667 = vadd.f32 0.0, %v3666
    %v3668 = vpop.f32.mrb[0].mxu0
    %v3669 = vadd.f32 0.0, %v3668
    %3670 = vmatprep.mubr.f32.mxu0 0.0
    %3671 = vmatmul.mubr.f32.gmra.mrb[0].mxu0 %v3598
    %v3672 = vpop.f32.mrb[0].mxu0
    %v3673 = vadd.f32 0.0, %v3672
    %v3674 = vpop.f32.mrb[0].mxu0
    %v3675 = vadd.f32 0.0, %v3674
    %3676 = vdwg.mxu0
    %v3677 = vadd.f32 %v3575, %v3667
    %v3678 = vadd.f32 %v3576, %v3669
    %v3679 = vadd.f32 %v3577, %v3673
    %v3680 = vadd.f32 %v3578, %v3675
    %3681 = vrot.lane.b32.xlu0 %v2983, 117
    %v3682 = vpop.permute.xlu0 %3681
    %3683 = vrot.lane.b32.xlu0 %v2985, 117
    %v3684 = vpop.permute.xlu0 %3683
    %3685 = vrot.lane.b32.xlu0 %v2984, 117
    %v3686 = vpop.permute.xlu0 %3685
    %3687 = vrot.lane.b32.xlu0 %v2986, 117
    %v3688 = vpop.permute.xlu0 %3687
    %v3689 = vsel %vm747, %v3682, %v3686
    %v3690 = vsel %vm747, %v3684, %v3688
    %v3691 = vsel %vm747, %v3686, %v3682
    %v3692 = vsel %vm747, %v3688, %v3684
    %s3693 = scalar_lea.vmem %s3, 544
    %v3694 = vld [vmem:[%s3693] sm:$0xff]
    %v3695 = vld [vmem:[%s3693 + $0x8] sm:$0xff]
    %v3697 = vsel %vm70, %v3694, 0
    %v3700 = vsel %vm70, %v3695, 0
    %3702 = vmatprep.subr.mxu0 %v3691
    %3703 = vmatpush1.msra.mxu0 %v3689
    %3704 = vmatprep.subr.mxu0 %v3692
    %3705 = vmatpush1.msra.mxu0 %v3690
    %3706 = vmatprep.subr.mxu0 0.0
    %3707 = vmatpush1.msra.mxu0 0.0
    %3708 = vmatprep.subr.mxu0 0.0
    %3709 = vmatpush1.msra.mxu0 0.0
    %3710 = vmatprep.subr.mxu0 0.0
    %3711 = vmatpush1.msra.mxu0 0.0
    %3712 = vmatprep.subr.mxu0 0.0
    %3713 = vmatpush1.msra.mxu0 0.0
    %3714 = vmatprep.subr.mxu0 0.0
    %3715 = vmatpush1.msra.mxu0 0.0
    %3716 = vmatprep.subr.mxu0 0.0
    %3717 = vmatpush1.msra.mxu0 0.0
    %3718 = vmatprep.subr.mxu0 0.0
    %3719 = vmatpush1.msra.mxu0 0.0
    %3720 = vmatprep.subr.mxu0 0.0
    %3721 = vmatpush1.msra.mxu0 0.0
    %3722 = vmatprep.subr.mxu0 0.0
    %3723 = vmatpush1.msra.mxu0 0.0
    %3724 = vmatprep.subr.mxu0 0.0
    %3725 = vmatpush1.msra.mxu0 0.0
    %3726 = vmatprep.subr.mxu0 0.0
    %3727 = vmatpush1.msra.mxu0 0.0
    %3728 = vmatprep.subr.mxu0 0.0
    %3729 = vmatpush1.msra.mxu0 0.0
    %3730 = vmatprep.subr.mxu0 0.0
    %3731 = vmatpush1.msra.mxu0 0.0
    %3732 = vmatprep.subr.mxu0 0.0
    %3733 = vmatpush1.msra.mxu0 0.0
    %3734 = vmatprep.subr.mxu0 0.0
    %3735 = vmatpush1.msra.mxu0 0.0
    %3736 = vmatprep.subr.mxu0 0.0
    %3737 = vmatpush1.msra.mxu0 0.0
    %3738 = vmatprep.subr.mxu0 0.0
    %3739 = vmatpush1.msra.mxu0 0.0
    %3740 = vmatprep.subr.mxu0 0.0
    %3741 = vmatpush1.msra.mxu0 0.0
    %3742 = vmatprep.subr.mxu0 0.0
    %3743 = vmatpush1.msra.mxu0 0.0
    %3744 = vmatprep.subr.mxu0 0.0
    %3745 = vmatpush1.msra.mxu0 0.0
    %3746 = vmatprep.subr.mxu0 0.0
    %3747 = vmatpush1.msra.mxu0 0.0
    %3748 = vmatprep.subr.mxu0 0.0
    %3749 = vmatpush1.msra.mxu0 0.0
    %3750 = vmatprep.subr.mxu0 0.0
    %3751 = vmatpush1.msra.mxu0 0.0
    %3752 = vmatprep.subr.mxu0 0.0
    %3753 = vmatpush1.msra.mxu0 0.0
    %3754 = vmatprep.subr.mxu0 0.0
    %3755 = vmatpush1.msra.mxu0 0.0
    %3756 = vmatprep.subr.mxu0 0.0
    %3757 = vmatpush1.msra.mxu0 0.0
    %3758 = vmatprep.subr.mxu0 0.0
    %3759 = vmatpush1.msra.mxu0 0.0
    %3760 = vmatprep.subr.mxu0 0.0
    %3761 = vmatpush1.msra.mxu0 0.0
    %3762 = vmatprep.subr.mxu0 0.0
    %3763 = vmatpush1.msra.mxu0 0.0
    %3764 = vmatprep.subr.mxu0 0.0
    %3765 = vmatpush1.msra.mxu0 0.0
    %3766 = vmatprep.mubr.f32.mxu0 0.0
    %3767 = vmatmul.mubr.f32.gmra.mrb[0].mxu0 %v3697
    %v3768 = vpop.f32.mrb[0].mxu0
    %v3769 = vadd.f32 0.0, %v3768
    %v3770 = vpop.f32.mrb[0].mxu0
    %v3771 = vadd.f32 0.0, %v3770
    %3772 = vmatprep.mubr.f32.mxu0 0.0
    %3773 = vmatmul.mubr.f32.gmra.mrb[0].mxu0 %v3700
    %v3774 = vpop.f32.mrb[0].mxu0
    %v3775 = vadd.f32 0.0, %v3774
    %v3776 = vpop.f32.mrb[0].mxu0
    %v3777 = vadd.f32 0.0, %v3776
    %3778 = vdwg.mxu0
    %v3779 = vadd.f32 %v3677, %v3769
    %v3780 = vadd.f32 %v3678, %v3771
    %v3781 = vadd.f32 %v3679, %v3775
    %v3782 = vadd.f32 %v3680, %v3777
    %3783 = vrot.lane.b32.xlu0 %v2983, 116
    %v3784 = vpop.permute.xlu0 %3783
    %3785 = vrot.lane.b32.xlu0 %v2985, 116
    %v3786 = vpop.permute.xlu0 %3785
    %3787 = vrot.lane.b32.xlu0 %v2984, 116
    %v3788 = vpop.permute.xlu0 %3787
    %3789 = vrot.lane.b32.xlu0 %v2986, 116
    %v3790 = vpop.permute.xlu0 %3789
    %v3791 = vsel %vm850, %v3784, %v3788
    %v3792 = vsel %vm850, %v3786, %v3790
    %v3793 = vsel %vm850, %v3788, %v3784
    %v3794 = vsel %vm850, %v3790, %v3786
    %s3795 = scalar_lea.vmem %s3, 560
    %v3796 = vld [vmem:[%s3795] sm:$0xff]
    %v3797 = vld [vmem:[%s3795 + $0x8] sm:$0xff]
    %v3799 = vsel %vm70, %v3796, 0
    %v3802 = vsel %vm70, %v3797, 0
    %3804 = vmatprep.subr.mxu0 %v3793
    %3805 = vmatpush1.msra.mxu0 %v3791
    %3806 = vmatprep.subr.mxu0 %v3794
    %3807 = vmatpush1.msra.mxu0 %v3792
    %3808 = vmatprep.subr.mxu0 0.0
    %3809 = vmatpush1.msra.mxu0 0.0
    %3810 = vmatprep.subr.mxu0 0.0
    %3811 = vmatpush1.msra.mxu0 0.0
    %3812 = vmatprep.subr.mxu0 0.0
    %3813 = vmatpush1.msra.mxu0 0.0
    %3814 = vmatprep.subr.mxu0 0.0
    %3815 = vmatpush1.msra.mxu0 0.0
    %3816 = vmatprep.subr.mxu0 0.0
    %3817 = vmatpush1.msra.mxu0 0.0
    %3818 = vmatprep.subr.mxu0 0.0
    %3819 = vmatpush1.msra.mxu0 0.0
    %3820 = vmatprep.subr.mxu0 0.0
    %3821 = vmatpush1.msra.mxu0 0.0
    %3822 = vmatprep.subr.mxu0 0.0
    %3823 = vmatpush1.msra.mxu0 0.0
    %3824 = vmatprep.subr.mxu0 0.0
    %3825 = vmatpush1.msra.mxu0 0.0
    %3826 = vmatprep.subr.mxu0 0.0
    %3827 = vmatpush1.msra.mxu0 0.0
    %3828 = vmatprep.subr.mxu0 0.0
    %3829 = vmatpush1.msra.mxu0 0.0
    %3830 = vmatprep.subr.mxu0 0.0
    %3831 = vmatpush1.msra.mxu0 0.0
    %3832 = vmatprep.subr.mxu0 0.0
    %3833 = vmatpush1.msra.mxu0 0.0
    %3834 = vmatprep.subr.mxu0 0.0
    %3835 = vmatpush1.msra.mxu0 0.0
    %3836 = vmatprep.subr.mxu0 0.0
    %3837 = vmatpush1.msra.mxu0 0.0
    %3838 = vmatprep.subr.mxu0 0.0
    %3839 = vmatpush1.msra.mxu0 0.0
    %3840 = vmatprep.subr.mxu0 0.0
    %3841 = vmatpush1.msra.mxu0 0.0
    %3842 = vmatprep.subr.mxu0 0.0
    %3843 = vmatpush1.msra.mxu0 0.0
    %3844 = vmatprep.subr.mxu0 0.0
    %3845 = vmatpush1.msra.mxu0 0.0
    %3846 = vmatprep.subr.mxu0 0.0
    %3847 = vmatpush1.msra.mxu0 0.0
    %3848 = vmatprep.subr.mxu0 0.0
    %3849 = vmatpush1.msra.mxu0 0.0
    %3850 = vmatprep.subr.mxu0 0.0
    %3851 = vmatpush1.msra.mxu0 0.0
    %3852 = vmatprep.subr.mxu0 0.0
    %3853 = vmatpush1.msra.mxu0 0.0
    %3854 = vmatprep.subr.mxu0 0.0
    %3855 = vmatpush1.msra.mxu0 0.0
    %3856 = vmatprep.subr.mxu0 0.0
    %3857 = vmatpush1.msra.mxu0 0.0
    %3858 = vmatprep.subr.mxu0 0.0
    %3859 = vmatpush1.msra.mxu0 0.0
    %3860 = vmatprep.subr.mxu0 0.0
    %3861 = vmatpush1.msra.mxu0 0.0
    %3862 = vmatprep.subr.mxu0 0.0
    %3863 = vmatpush1.msra.mxu0 0.0
    %3864 = vmatprep.subr.mxu0 0.0
    %3865 = vmatpush1.msra.mxu0 0.0
    %3866 = vmatprep.subr.mxu0 0.0
    %3867 = vmatpush1.msra.mxu0 0.0
    %3868 = vmatprep.mubr.f32.mxu0 0.0
    %3869 = vmatmul.mubr.f32.gmra.mrb[0].mxu0 %v3799
    %v3870 = vpop.f32.mrb[0].mxu0
    %v3871 = vadd.f32 0.0, %v3870
    %v3872 = vpop.f32.mrb[0].mxu0
    %v3873 = vadd.f32 0.0, %v3872
    %3874 = vmatprep.mubr.f32.mxu0 0.0
    %3875 = vmatmul.mubr.f32.gmra.mrb[0].mxu0 %v3802
    %v3876 = vpop.f32.mrb[0].mxu0
    %v3877 = vadd.f32 0.0, %v3876
    %v3878 = vpop.f32.mrb[0].mxu0
    %v3879 = vadd.f32 0.0, %v3878
    %3880 = vdwg.mxu0
    %v3881 = vadd.f32 %v3779, %v3871
    %v3882 = vadd.f32 %v3780, %v3873
    %v3883 = vadd.f32 %v3781, %v3877
    %v3884 = vadd.f32 %v3782, %v3879
    %v3885 = vmul.f32 %v3881, %v948
    %v3886 = vmul.f32 %v3882, %v948
    %v3887 = vmul.f32 %v3883, %v948
    %v3888 = vmul.f32 %v3884, %v948
    %v3889 = vadd.f32 %v3885, %v3886
    %3890 = vadd.xlane.f32.xlu0 %v3889
    %v3891 = vpop.xlane.xlu0 %3890
    %v3892 = vadd.f32 %v3887, %v3888
    %3893 = vadd.xlane.f32.xlu0 %v3892
    %v3894 = vpop.xlane.xlu0 %3893
    %v3895 = vmul.f32 %v3885, %v3885
    %v3896 = vmul.f32 %v3886, %v3886
    %v3897 = vmul.f32 %v3887, %v3887
    %v3898 = vmul.f32 %v3888, %v3888
    %v3899 = vadd.f32 %v3895, %v3896
    %3900 = vadd.xlane.f32.xlu0 %v3899
    %v3901 = vpop.xlane.xlu0 %3900
    %v3902 = vadd.f32 %v3897, %v3898
    %3903 = vadd.xlane.f32.xlu0 %v3902
    %v3904 = vpop.xlane.xlu0 %3903
    %v3905 = vmul.f32 %v3891, 0.0061728396
    %v3906 = vmul.f32 %v3894, 0.0061728396
    %v3907 = vmul.f32 %v3901, 0.0061728396
    %v3908 = vmul.f32 %v3904, 0.0061728396
    %v3909 = vmul.f32 %v3905, %v3905
    %v3910 = vmul.f32 %v3906, %v3906
    %v3911 = vsub.f32 %v3907, %v3909
    %v3912 = vsub.f32 %v3908, %v3910
    %s3913 = scalar_lea.vmem %s4, 48
    %v3914 = vld [vmem:[%s3913] sm:$0xff]
    %v3915 = vld [vmem:[%s3913 + $0x8] sm:$0xff]
    %v3916 = vadd.f32 %v3911, 1e-05
    %v3917 = vadd.f32 %v3912, 1e-05
    %v3918 = vrsqrt.pop %v3916
    %v3919 = vrsqrt.pop %v3917
    %v3920 = vmul.f32 %v3914, %v3918
    %v3921 = vmul.f32 %v3915, %v3919
    %s3922 = scalar_lea.vmem %s5, 48
    %v3923 = vld [vmem:[%s3922] sm:$0xff]
    %v3924 = vld [vmem:[%s3922 + $0x8] sm:$0xff]
    %v3925 = vmul.f32 %v3905, %v3920
    %v3926 = vmul.f32 %v3906, %v3921
    %v3927 = vsub.f32 %v3923, %v3925
    %v3928 = vsub.f32 %v3924, %v3926
    %3930 = vset.pattern.permute.xlu0 0
    %3931 = vperm.xlu0 %3930, %v3920
    %v3932 = vpop.permute.xlu0 %3931
    %3935 = vset.pattern.permute.xlu0 0
    %3936 = vperm.xlu0 %3935, %v3921
    %v3937 = vpop.permute.xlu0 %3936
    %v3939 = vmul.f32 %v3881, %v3932
    %v3940 = vmul.f32 %v3882, %v3932
    %v3941 = vmul.f32 %v3883, %v3937
    %v3942 = vmul.f32 %v3884, %v3937
    %3944 = vset.pattern.permute.xlu0 0
    %3945 = vperm.xlu0 %3944, %v3927
    %v3946 = vpop.permute.xlu0 %3945
    %3949 = vset.pattern.permute.xlu0 0
    %3950 = vperm.xlu0 %3949, %v3928
    %v3951 = vpop.permute.xlu0 %3950
    %v3953 = vadd.f32 %v3939, %v3946
    %v3954 = vadd.f32 %v3940, %v3946
    %v3955 = vadd.f32 %v3941, %v3951
    %v3956 = vadd.f32 %v3942, %v3951
    %v3957 = vmax.f32 %v3953, 0.0
    %v3958 = vmax.f32 %v3954, 0.0
    %v3959 = vmax.f32 %v3955, 0.0
    %v3960 = vmax.f32 %v3956, 0.0
    %v3961 = vmul.f32 %v3957, %v948
    %v3962 = vmul.f32 %v3958, %v948
    %v3963 = vmul.f32 %v3959, %v948
    %v3964 = vmul.f32 %v3960, %v948
    %3965 = vrot.lane.b32.xlu0 %v3961, 12
    %v3966 = vpop.permute.xlu0 %3965
    %3967 = vrot.lane.b32.xlu0 %v3963, 12
    %v3968 = vpop.permute.xlu0 %3967
    %3969 = vrot.lane.b32.xlu0 %v3962, 12
    %v3970 = vpop.permute.xlu0 %3969
    %3971 = vrot.lane.b32.xlu0 %v3964, 12
    %v3972 = vpop.permute.xlu0 %3971
    %v3973 = vsel %vm47, %v3966, %v3970
    %v3974 = vsel %vm47, %v3968, %v3972
    %v3975 = vsel %vm47, %v3970, %v3966
    %v3976 = vsel %vm47, %v3972, %v3968
    %s3977 = scalar_lea.vmem %s3, 576
    %v3978 = vld [vmem:[%s3977] sm:$0xff]
    %v3979 = vld [vmem:[%s3977 + $0x8] sm:$0xff]
    %3980 = vrot.lane.b32.xlu0 %v3961, 11
    %v3981 = vpop.permute.xlu0 %3980
    %3982 = vrot.lane.b32.xlu0 %v3963, 11
    %v3983 = vpop.permute.xlu0 %3982
    %3984 = vrot.lane.b32.xlu0 %v3962, 11
    %v3985 = vpop.permute.xlu0 %3984
    %3986 = vrot.lane.b32.xlu0 %v3964, 11
    %v3987 = vpop.permute.xlu0 %3986
    %v3988 = vsel %vm62, %v3981, %v3985
    %v3989 = vsel %vm62, %v3983, %v3987
    %v3990 = vsel %vm62, %v3985, %v3981
    %v3991 = vsel %vm62, %v3987, %v3983
    %s3992 = scalar_lea.vmem %s3, 592
    %v3993 = vld [vmem:[%s3992] sm:$0xff]
    %v3994 = vld [vmem:[%s3992 + $0x8] sm:$0xff]
    %v3996 = vsel %vm70, %v3993, 0
    %v3999 = vsel %vm70, %v3994, 0
    %4001 = vmatprep.subr.mxu0 %v3988
    %4002 = vmatpush1.msra.mxu0 %v3990
    %4003 = vmatprep.subr.mxu0 %v3989
    %4004 = vmatpush1.msra.mxu0 %v3991
    %4005 = vmatprep.subr.mxu0 0.0
    %4006 = vmatpush1.msra.mxu0 0.0
    %4007 = vmatprep.subr.mxu0 0.0
    %4008 = vmatpush1.msra.mxu0 0.0
    %4009 = vmatprep.subr.mxu0 0.0
    %4010 = vmatpush1.msra.mxu0 0.0
    %4011 = vmatprep.subr.mxu0 0.0
    %4012 = vmatpush1.msra.mxu0 0.0
    %4013 = vmatprep.subr.mxu0 0.0
    %4014 = vmatpush1.msra.mxu0 0.0
    %4015 = vmatprep.subr.mxu0 0.0
    %4016 = vmatpush1.msra.mxu0 0.0
    %4017 = vmatprep.subr.mxu0 0.0
    %4018 = vmatpush1.msra.mxu0 0.0
    %4019 = vmatprep.subr.mxu0 0.0
    %4020 = vmatpush1.msra.mxu0 0.0
    %4021 = vmatprep.subr.mxu0 0.0
    %4022 = vmatpush1.msra.mxu0 0.0
    %4023 = vmatprep.subr.mxu0 0.0
    %4024 = vmatpush1.msra.mxu0 0.0
    %4025 = vmatprep.subr.mxu0 0.0
    %4026 = vmatpush1.msra.mxu0 0.0
    %4027 = vmatprep.subr.mxu0 0.0
    %4028 = vmatpush1.msra.mxu0 0.0
    %4029 = vmatprep.subr.mxu0 0.0
    %4030 = vmatpush1.msra.mxu0 0.0
    %4031 = vmatprep.subr.mxu0 0.0
    %4032 = vmatpush1.msra.mxu0 0.0
    %4033 = vmatprep.subr.mxu0 0.0
    %4034 = vmatpush1.msra.mxu0 0.0
    %4035 = vmatprep.subr.mxu0 0.0
    %4036 = vmatpush1.msra.mxu0 0.0
    %4037 = vmatprep.subr.mxu0 0.0
    %4038 = vmatpush1.msra.mxu0 0.0
    %4039 = vmatprep.subr.mxu0 0.0
    %4040 = vmatpush1.msra.mxu0 0.0
    %4041 = vmatprep.subr.mxu0 0.0
    %4042 = vmatpush1.msra.mxu0 0.0
    %4043 = vmatprep.subr.mxu0 0.0
    %4044 = vmatpush1.msra.mxu0 0.0
    %4045 = vmatprep.subr.mxu0 0.0
    %4046 = vmatpush1.msra.mxu0 0.0
    %4047 = vmatprep.subr.mxu0 0.0
    %4048 = vmatpush1.msra.mxu0 0.0
    %4049 = vmatprep.subr.mxu0 0.0
    %4050 = vmatpush1.msra.mxu0 0.0
    %4051 = vmatprep.subr.mxu0 0.0
    %4052 = vmatpush1.msra.mxu0 0.0
    %4053 = vmatprep.subr.mxu0 0.0
    %4054 = vmatpush1.msra.mxu0 0.0
    %4055 = vmatprep.subr.mxu0 0.0
    %4056 = vmatpush1.msra.mxu0 0.0
    %4057 = vmatprep.subr.mxu0 0.0
    %4058 = vmatpush1.msra.mxu0 0.0
    %4059 = vmatprep.subr.mxu0 0.0
    %4060 = vmatpush1.msra.mxu0 0.0
    %4061 = vmatprep.subr.mxu0 0.0
    %4062 = vmatpush1.msra.mxu0 0.0
    %4063 = vmatprep.subr.mxu0 0.0
    %4064 = vmatpush1.msra.mxu0 0.0
    %4065 = vmatprep.mubr.f32.mxu0 0.0
    %4066 = vmatmul.mubr.f32.gmra.mrb[0].mxu0 %v3996
    %v4067 = vpop.f32.mrb[0].mxu0
    %v4068 = vadd.f32 0.0, %v4067
    %v4069 = vpop.f32.mrb[0].mxu0
    %v4070 = vadd.f32 0.0, %v4069
    %4071 = vmatprep.mubr.f32.mxu0 0.0
    %4072 = vmatmul.mubr.f32.gmra.mrb[0].mxu0 %v3999
    %v4073 = vpop.f32.mrb[0].mxu0
    %v4074 = vadd.f32 0.0, %v4073
    %v4075 = vpop.f32.mrb[0].mxu0
    %v4076 = vadd.f32 0.0, %v4075
    %4077 = vdwg.mxu0
    %v4079 = vsel %vm70, %v3978, 0
    %v4082 = vsel %vm70, %v3979, 0
    %4084 = vmatprep.subr.mxu0 %v3973
    %4085 = vmatpush1.msra.mxu0 %v3975
    %4086 = vmatprep.subr.mxu0 %v3974
    %4087 = vmatpush1.msra.mxu0 %v3976
    %4088 = vmatprep.subr.mxu0 0.0
    %4089 = vmatpush1.msra.mxu0 0.0
    %4090 = vmatprep.subr.mxu0 0.0
    %4091 = vmatpush1.msra.mxu0 0.0
    %4092 = vmatprep.subr.mxu0 0.0
    %4093 = vmatpush1.msra.mxu0 0.0
    %4094 = vmatprep.subr.mxu0 0.0
    %4095 = vmatpush1.msra.mxu0 0.0
    %4096 = vmatprep.subr.mxu0 0.0
    %4097 = vmatpush1.msra.mxu0 0.0
    %4098 = vmatprep.subr.mxu0 0.0
    %4099 = vmatpush1.msra.mxu0 0.0
    %4100 = vmatprep.subr.mxu0 0.0
    %4101 = vmatpush1.msra.mxu0 0.0
    %4102 = vmatprep.subr.mxu0 0.0
    %4103 = vmatpush1.msra.mxu0 0.0
    %4104 = vmatprep.subr.mxu0 0.0
    %4105 = vmatpush1.msra.mxu0 0.0
    %4106 = vmatprep.subr.mxu0 0.0
    %4107 = vmatpush1.msra.mxu0 0.0
    %4108 = vmatprep.subr.mxu0 0.0
    %4109 = vmatpush1.msra.mxu0 0.0
    %4110 = vmatprep.subr.mxu0 0.0
    %4111 = vmatpush1.msra.mxu0 0.0
    %4112 = vmatprep.subr.mxu0 0.0
    %4113 = vmatpush1.msra.mxu0 0.0
    %4114 = vmatprep.subr.mxu0 0.0
    %4115 = vmatpush1.msra.mxu0 0.0
    %4116 = vmatprep.subr.mxu0 0.0
    %4117 = vmatpush1.msra.mxu0 0.0
    %4118 = vmatprep.subr.mxu0 0.0
    %4119 = vmatpush1.msra.mxu0 0.0
    %4120 = vmatprep.subr.mxu0 0.0
    %4121 = vmatpush1.msra.mxu0 0.0
    %4122 = vmatprep.subr.mxu0 0.0
    %4123 = vmatpush1.msra.mxu0 0.0
    %4124 = vmatprep.subr.mxu0 0.0
    %4125 = vmatpush1.msra.mxu0 0.0
    %4126 = vmatprep.subr.mxu0 0.0
    %4127 = vmatpush1.msra.mxu0 0.0
    %4128 = vmatprep.subr.mxu0 0.0
    %4129 = vmatpush1.msra.mxu0 0.0
    %4130 = vmatprep.subr.mxu0 0.0
    %4131 = vmatpush1.msra.mxu0 0.0
    %4132 = vmatprep.subr.mxu0 0.0
    %4133 = vmatpush1.msra.mxu0 0.0
    %4134 = vmatprep.subr.mxu0 0.0
    %4135 = vmatpush1.msra.mxu0 0.0
    %4136 = vmatprep.subr.mxu0 0.0
    %4137 = vmatpush1.msra.mxu0 0.0
    %4138 = vmatprep.subr.mxu0 0.0
    %4139 = vmatpush1.msra.mxu0 0.0
    %4140 = vmatprep.subr.mxu0 0.0
    %4141 = vmatpush1.msra.mxu0 0.0
    %4142 = vmatprep.subr.mxu0 0.0
    %4143 = vmatpush1.msra.mxu0 0.0
    %4144 = vmatprep.subr.mxu0 0.0
    %4145 = vmatpush1.msra.mxu0 0.0
    %4146 = vmatprep.subr.mxu0 0.0
    %4147 = vmatpush1.msra.mxu0 0.0
    %4148 = vmatprep.mubr.f32.mxu0 0.0
    %4149 = vmatmul.mubr.f32.gmra.mrb[0].mxu0 %v4079
    %v4150 = vpop.f32.mrb[0].mxu0
    %v4151 = vadd.f32 %v4068, %v4150
    %v4152 = vpop.f32.mrb[0].mxu0
    %v4153 = vadd.f32 %v4070, %v4152
    %4154 = vmatprep.mubr.f32.mxu0 0.0
    %4155 = vmatmul.mubr.f32.gmra.mrb[0].mxu0 %v4082
    %v4156 = vpop.f32.mrb[0].mxu0
    %v4157 = vadd.f32 %v4074, %v4156
    %v4158 = vpop.f32.mrb[0].mxu0
    %v4159 = vadd.f32 %v4076, %v4158
    %4160 = vdwg.mxu0
    %4161 = vrot.lane.b32.xlu0 %v3961, 10
    %v4162 = vpop.permute.xlu0 %4161
    %4163 = vrot.lane.b32.xlu0 %v3963, 10
    %v4164 = vpop.permute.xlu0 %4163
    %4165 = vrot.lane.b32.xlu0 %v3962, 10
    %v4166 = vpop.permute.xlu0 %4165
    %4167 = vrot.lane.b32.xlu0 %v3964, 10
    %v4168 = vpop.permute.xlu0 %4167
    %v4169 = vsel %vm245, %v4162, %v4166
    %v4170 = vsel %vm245, %v4164, %v4168
    %v4171 = vsel %vm245, %v4166, %v4162
    %v4172 = vsel %vm245, %v4168, %v4164
    %s4173 = scalar_lea.vmem %s3, 608
    %v4174 = vld [vmem:[%s4173] sm:$0xff]
    %v4175 = vld [vmem:[%s4173 + $0x8] sm:$0xff]
    %v4177 = vsel %vm70, %v4174, 0
    %v4180 = vsel %vm70, %v4175, 0
    %4182 = vmatprep.subr.mxu0 %v4169
    %4183 = vmatpush1.msra.mxu0 %v4171
    %4184 = vmatprep.subr.mxu0 %v4170
    %4185 = vmatpush1.msra.mxu0 %v4172
    %4186 = vmatprep.subr.mxu0 0.0
    %4187 = vmatpush1.msra.mxu0 0.0
    %4188 = vmatprep.subr.mxu0 0.0
    %4189 = vmatpush1.msra.mxu0 0.0
    %4190 = vmatprep.subr.mxu0 0.0
    %4191 = vmatpush1.msra.mxu0 0.0
    %4192 = vmatprep.subr.mxu0 0.0
    %4193 = vmatpush1.msra.mxu0 0.0
    %4194 = vmatprep.subr.mxu0 0.0
    %4195 = vmatpush1.msra.mxu0 0.0
    %4196 = vmatprep.subr.mxu0 0.0
    %4197 = vmatpush1.msra.mxu0 0.0
    %4198 = vmatprep.subr.mxu0 0.0
    %4199 = vmatpush1.msra.mxu0 0.0
    %4200 = vmatprep.subr.mxu0 0.0
    %4201 = vmatpush1.msra.mxu0 0.0
    %4202 = vmatprep.subr.mxu0 0.0
    %4203 = vmatpush1.msra.mxu0 0.0
    %4204 = vmatprep.subr.mxu0 0.0
    %4205 = vmatpush1.msra.mxu0 0.0
    %4206 = vmatprep.subr.mxu0 0.0
    %4207 = vmatpush1.msra.mxu0 0.0
    %4208 = vmatprep.subr.mxu0 0.0
    %4209 = vmatpush1.msra.mxu0 0.0
    %4210 = vmatprep.subr.mxu0 0.0
    %4211 = vmatpush1.msra.mxu0 0.0
    %4212 = vmatprep.subr.mxu0 0.0
    %4213 = vmatpush1.msra.mxu0 0.0
    %4214 = vmatprep.subr.mxu0 0.0
    %4215 = vmatpush1.msra.mxu0 0.0
    %4216 = vmatprep.subr.mxu0 0.0
    %4217 = vmatpush1.msra.mxu0 0.0
    %4218 = vmatprep.subr.mxu0 0.0
    %4219 = vmatpush1.msra.mxu0 0.0
    %4220 = vmatprep.subr.mxu0 0.0
    %4221 = vmatpush1.msra.mxu0 0.0
    %4222 = vmatprep.subr.mxu0 0.0
    %4223 = vmatpush1.msra.mxu0 0.0
    %4224 = vmatprep.subr.mxu0 0.0
    %4225 = vmatpush1.msra.mxu0 0.0
    %4226 = vmatprep.subr.mxu0 0.0
    %4227 = vmatpush1.msra.mxu0 0.0
    %4228 = vmatprep.subr.mxu0 0.0
    %4229 = vmatpush1.msra.mxu0 0.0
    %4230 = vmatprep.subr.mxu0 0.0
    %4231 = vmatpush1.msra.mxu0 0.0
    %4232 = vmatprep.subr.mxu0 0.0
    %4233 = vmatpush1.msra.mxu0 0.0
    %4234 = vmatprep.subr.mxu0 0.0
    %4235 = vmatpush1.msra.mxu0 0.0
    %4236 = vmatprep.subr.mxu0 0.0
    %4237 = vmatpush1.msra.mxu0 0.0
    %4238 = vmatprep.subr.mxu0 0.0
    %4239 = vmatpush1.msra.mxu0 0.0
    %4240 = vmatprep.subr.mxu0 0.0
    %4241 = vmatpush1.msra.mxu0 0.0
    %4242 = vmatprep.subr.mxu0 0.0
    %4243 = vmatpush1.msra.mxu0 0.0
    %4244 = vmatprep.subr.mxu0 0.0
    %4245 = vmatpush1.msra.mxu0 0.0
    %4246 = vmatprep.mubr.f32.mxu0 0.0
    %4247 = vmatmul.mubr.f32.gmra.mrb[0].mxu0 %v4177
    %v4248 = vpop.f32.mrb[0].mxu0
    %v4249 = vadd.f32 0.0, %v4248
    %v4250 = vpop.f32.mrb[0].mxu0
    %v4251 = vadd.f32 0.0, %v4250
    %4252 = vmatprep.mubr.f32.mxu0 0.0
    %4253 = vmatmul.mubr.f32.gmra.mrb[0].mxu0 %v4180
    %v4254 = vpop.f32.mrb[0].mxu0
    %v4255 = vadd.f32 0.0, %v4254
    %v4256 = vpop.f32.mrb[0].mxu0
    %v4257 = vadd.f32 0.0, %v4256
    %4258 = vdwg.mxu0
    %v4259 = vadd.f32 %v4151, %v4249
    %v4260 = vadd.f32 %v4153, %v4251
    %v4261 = vadd.f32 %v4157, %v4255
    %v4262 = vadd.f32 %v4159, %v4257
    %4263 = vrot.lane.b32.xlu0 %v3961, 1
    %v4264 = vpop.permute.xlu0 %4263
    %4265 = vrot.lane.b32.xlu0 %v3963, 1
    %v4266 = vpop.permute.xlu0 %4265
    %4267 = vrot.lane.b32.xlu0 %v3962, 1
    %v4268 = vpop.permute.xlu0 %4267
    %4269 = vrot.lane.b32.xlu0 %v3964, 1
    %v4270 = vpop.permute.xlu0 %4269
    %v4271 = vsel %vm348, %v4264, %v4268
    %v4272 = vsel %vm348, %v4266, %v4270
    %v4273 = vsel %vm348, %v4268, %v4264
    %v4274 = vsel %vm348, %v4270, %v4266
    %s4275 = scalar_lea.vmem %s3, 624
    %v4276 = vld [vmem:[%s4275] sm:$0xff]
    %v4277 = vld [vmem:[%s4275 + $0x8] sm:$0xff]
    %v4279 = vsel %vm70, %v4276, 0
    %v4282 = vsel %vm70, %v4277, 0
    %4284 = vmatprep.subr.mxu0 %v4271
    %4285 = vmatpush1.msra.mxu0 %v4273
    %4286 = vmatprep.subr.mxu0 %v4272
    %4287 = vmatpush1.msra.mxu0 %v4274
    %4288 = vmatprep.subr.mxu0 0.0
    %4289 = vmatpush1.msra.mxu0 0.0
    %4290 = vmatprep.subr.mxu0 0.0
    %4291 = vmatpush1.msra.mxu0 0.0
    %4292 = vmatprep.subr.mxu0 0.0
    %4293 = vmatpush1.msra.mxu0 0.0
    %4294 = vmatprep.subr.mxu0 0.0
    %4295 = vmatpush1.msra.mxu0 0.0
    %4296 = vmatprep.subr.mxu0 0.0
    %4297 = vmatpush1.msra.mxu0 0.0
    %4298 = vmatprep.subr.mxu0 0.0
    %4299 = vmatpush1.msra.mxu0 0.0
    %4300 = vmatprep.subr.mxu0 0.0
    %4301 = vmatpush1.msra.mxu0 0.0
    %4302 = vmatprep.subr.mxu0 0.0
    %4303 = vmatpush1.msra.mxu0 0.0
    %4304 = vmatprep.subr.mxu0 0.0
    %4305 = vmatpush1.msra.mxu0 0.0
    %4306 = vmatprep.subr.mxu0 0.0
    %4307 = vmatpush1.msra.mxu0 0.0
    %4308 = vmatprep.subr.mxu0 0.0
    %4309 = vmatpush1.msra.mxu0 0.0
    %4310 = vmatprep.subr.mxu0 0.0
    %4311 = vmatpush1.msra.mxu0 0.0
    %4312 = vmatprep.subr.mxu0 0.0
    %4313 = vmatpush1.msra.mxu0 0.0
    %4314 = vmatprep.subr.mxu0 0.0
    %4315 = vmatpush1.msra.mxu0 0.0
    %4316 = vmatprep.subr.mxu0 0.0
    %4317 = vmatpush1.msra.mxu0 0.0
    %4318 = vmatprep.subr.mxu0 0.0
    %4319 = vmatpush1.msra.mxu0 0.0
    %4320 = vmatprep.subr.mxu0 0.0
    %4321 = vmatpush1.msra.mxu0 0.0
    %4322 = vmatprep.subr.mxu0 0.0
    %4323 = vmatpush1.msra.mxu0 0.0
    %4324 = vmatprep.subr.mxu0 0.0
    %4325 = vmatpush1.msra.mxu0 0.0
    %4326 = vmatprep.subr.mxu0 0.0
    %4327 = vmatpush1.msra.mxu0 0.0
    %4328 = vmatprep.subr.mxu0 0.0
    %4329 = vmatpush1.msra.mxu0 0.0
    %4330 = vmatprep.subr.mxu0 0.0
    %4331 = vmatpush1.msra.mxu0 0.0
    %4332 = vmatprep.subr.mxu0 0.0
    %4333 = vmatpush1.msra.mxu0 0.0
    %4334 = vmatprep.subr.mxu0 0.0
    %4335 = vmatpush1.msra.mxu0 0.0
    %4336 = vmatprep.subr.mxu0 0.0
    %4337 = vmatpush1.msra.mxu0 0.0
    %4338 = vmatprep.subr.mxu0 0.0
    %4339 = vmatpush1.msra.mxu0 0.0
    %4340 = vmatprep.subr.mxu0 0.0
    %4341 = vmatpush1.msra.mxu0 0.0
    %4342 = vmatprep.subr.mxu0 0.0
    %4343 = vmatpush1.msra.mxu0 0.0
    %4344 = vmatprep.subr.mxu0 0.0
    %4345 = vmatpush1.msra.mxu0 0.0
    %4346 = vmatprep.subr.mxu0 0.0
    %4347 = vmatpush1.msra.mxu0 0.0
    %4348 = vmatprep.mubr.f32.mxu0 0.0
    %4349 = vmatmul.mubr.f32.gmra.mrb[0].mxu0 %v4279
    %v4350 = vpop.f32.mrb[0].mxu0
    %v4351 = vadd.f32 0.0, %v4350
    %v4352 = vpop.f32.mrb[0].mxu0
    %v4353 = vadd.f32 0.0, %v4352
    %4354 = vmatprep.mubr.f32.mxu0 0.0
    %4355 = vmatmul.mubr.f32.gmra.mrb[0].mxu0 %v4282
    %v4356 = vpop.f32.mrb[0].mxu0
    %v4357 = vadd.f32 0.0, %v4356
    %v4358 = vpop.f32.mrb[0].mxu0
    %v4359 = vadd.f32 0.0, %v4358
    %4360 = vdwg.mxu0
    %v4361 = vadd.f32 %v4259, %v4351
    %v4362 = vadd.f32 %v4260, %v4353
    %v4363 = vadd.f32 %v4261, %v4357
    %v4364 = vadd.f32 %v4262, %v4359
    %s4365 = scalar_lea.vmem %s3, 640
    %v4366 = vld [vmem:[%s4365] sm:$0xff]
    %v4367 = vld [vmem:[%s4365 + $0x8] sm:$0xff]
    %v4369 = vsel %vm70, %v4366, 0
    %v4372 = vsel %vm70, %v4367, 0
    %4374 = vmatprep.subr.mxu0 %v3962
    %4375 = vmatpush1.msra.mxu0 %v3961
    %4376 = vmatprep.subr.mxu0 %v3964
    %4377 = vmatpush1.msra.mxu0 %v3963
    %4378 = vmatprep.subr.mxu0 0.0
    %4379 = vmatpush1.msra.mxu0 0.0
    %4380 = vmatprep.subr.mxu0 0.0
    %4381 = vmatpush1.msra.mxu0 0.0
    %4382 = vmatprep.subr.mxu0 0.0
    %4383 = vmatpush1.msra.mxu0 0.0
    %4384 = vmatprep.subr.mxu0 0.0
    %4385 = vmatpush1.msra.mxu0 0.0
    %4386 = vmatprep.subr.mxu0 0.0
    %4387 = vmatpush1.msra.mxu0 0.0
    %4388 = vmatprep.subr.mxu0 0.0
    %4389 = vmatpush1.msra.mxu0 0.0
    %4390 = vmatprep.subr.mxu0 0.0
    %4391 = vmatpush1.msra.mxu0 0.0
    %4392 = vmatprep.subr.mxu0 0.0
    %4393 = vmatpush1.msra.mxu0 0.0
    %4394 = vmatprep.subr.mxu0 0.0
    %4395 = vmatpush1.msra.mxu0 0.0
    %4396 = vmatprep.subr.mxu0 0.0
    %4397 = vmatpush1.msra.mxu0 0.0
    %4398 = vmatprep.subr.mxu0 0.0
    %4399 = vmatpush1.msra.mxu0 0.0
    %4400 = vmatprep.subr.mxu0 0.0
    %4401 = vmatpush1.msra.mxu0 0.0
    %4402 = vmatprep.subr.mxu0 0.0
    %4403 = vmatpush1.msra.mxu0 0.0
    %4404 = vmatprep.subr.mxu0 0.0
    %4405 = vmatpush1.msra.mxu0 0.0
    %4406 = vmatprep.subr.mxu0 0.0
    %4407 = vmatpush1.msra.mxu0 0.0
    %4408 = vmatprep.subr.mxu0 0.0
    %4409 = vmatpush1.msra.mxu0 0.0
    %4410 = vmatprep.subr.mxu0 0.0
    %4411 = vmatpush1.msra.mxu0 0.0
    %4412 = vmatprep.subr.mxu0 0.0
    %4413 = vmatpush1.msra.mxu0 0.0
    %4414 = vmatprep.subr.mxu0 0.0
    %4415 = vmatpush1.msra.mxu0 0.0
    %4416 = vmatprep.subr.mxu0 0.0
    %4417 = vmatpush1.msra.mxu0 0.0
    %4418 = vmatprep.subr.mxu0 0.0
    %4419 = vmatpush1.msra.mxu0 0.0
    %4420 = vmatprep.subr.mxu0 0.0
    %4421 = vmatpush1.msra.mxu0 0.0
    %4422 = vmatprep.subr.mxu0 0.0
    %4423 = vmatpush1.msra.mxu0 0.0
    %4424 = vmatprep.subr.mxu0 0.0
    %4425 = vmatpush1.msra.mxu0 0.0
    %4426 = vmatprep.subr.mxu0 0.0
    %4427 = vmatpush1.msra.mxu0 0.0
    %4428 = vmatprep.subr.mxu0 0.0
    %4429 = vmatpush1.msra.mxu0 0.0
    %4430 = vmatprep.subr.mxu0 0.0
    %4431 = vmatpush1.msra.mxu0 0.0
    %4432 = vmatprep.subr.mxu0 0.0
    %4433 = vmatpush1.msra.mxu0 0.0
    %4434 = vmatprep.subr.mxu0 0.0
    %4435 = vmatpush1.msra.mxu0 0.0
    %4436 = vmatprep.subr.mxu0 0.0
    %4437 = vmatpush1.msra.mxu0 0.0
    %4438 = vmatprep.mubr.f32.mxu0 0.0
    %4439 = vmatmul.mubr.f32.gmra.mrb[0].mxu0 %v4369
    %v4440 = vpop.f32.mrb[0].mxu0
    %v4441 = vadd.f32 0.0, %v4440
    %v4442 = vpop.f32.mrb[0].mxu0
    %v4443 = vadd.f32 0.0, %v4442
    %4444 = vmatprep.mubr.f32.mxu0 0.0
    %4445 = vmatmul.mubr.f32.gmra.mrb[0].mxu0 %v4372
    %v4446 = vpop.f32.mrb[0].mxu0
    %v4447 = vadd.f32 0.0, %v4446
    %v4448 = vpop.f32.mrb[0].mxu0
    %v4449 = vadd.f32 0.0, %v4448
    %4450 = vdwg.mxu0
    %v4451 = vadd.f32 %v4361, %v4441
    %v4452 = vadd.f32 %v4362, %v4443
    %v4453 = vadd.f32 %v4363, %v4447
    %v4454 = vadd.f32 %v4364, %v4449
    %4455 = vrot.lane.b32.xlu0 %v3961, 127
    %v4456 = vpop.permute.xlu0 %4455
    %4457 = vrot.lane.b32.xlu0 %v3963, 127
    %v4458 = vpop.permute.xlu0 %4457
    %4459 = vrot.lane.b32.xlu0 %v3962, 127
    %v4460 = vpop.permute.xlu0 %4459
    %4461 = vrot.lane.b32.xlu0 %v3964, 127
    %v4462 = vpop.permute.xlu0 %4461
    %v4463 = vsel %vm541, %v4456, %v4460
    %v4464 = vsel %vm541, %v4458, %v4462
    %v4465 = vsel %vm541, %v4460, %v4456
    %v4466 = vsel %vm541, %v4462, %v4458
    %s4467 = scalar_lea.vmem %s3, 656
    %v4468 = vld [vmem:[%s4467] sm:$0xff]
    %v4469 = vld [vmem:[%s4467 + $0x8] sm:$0xff]
    %v4471 = vsel %vm70, %v4468, 0
    %v4474 = vsel %vm70, %v4469, 0
    %4476 = vmatprep.subr.mxu0 %v4465
    %4477 = vmatpush1.msra.mxu0 %v4463
    %4478 = vmatprep.subr.mxu0 %v4466
    %4479 = vmatpush1.msra.mxu0 %v4464
    %4480 = vmatprep.subr.mxu0 0.0
    %4481 = vmatpush1.msra.mxu0 0.0
    %4482 = vmatprep.subr.mxu0 0.0
    %4483 = vmatpush1.msra.mxu0 0.0
    %4484 = vmatprep.subr.mxu0 0.0
    %4485 = vmatpush1.msra.mxu0 0.0
    %4486 = vmatprep.subr.mxu0 0.0
    %4487 = vmatpush1.msra.mxu0 0.0
    %4488 = vmatprep.subr.mxu0 0.0
    %4489 = vmatpush1.msra.mxu0 0.0
    %4490 = vmatprep.subr.mxu0 0.0
    %4491 = vmatpush1.msra.mxu0 0.0
    %4492 = vmatprep.subr.mxu0 0.0
    %4493 = vmatpush1.msra.mxu0 0.0
    %4494 = vmatprep.subr.mxu0 0.0
    %4495 = vmatpush1.msra.mxu0 0.0
    %4496 = vmatprep.subr.mxu0 0.0
    %4497 = vmatpush1.msra.mxu0 0.0
    %4498 = vmatprep.subr.mxu0 0.0
    %4499 = vmatpush1.msra.mxu0 0.0
    %4500 = vmatprep.subr.mxu0 0.0
    %4501 = vmatpush1.msra.mxu0 0.0
    %4502 = vmatprep.subr.mxu0 0.0
    %4503 = vmatpush1.msra.mxu0 0.0
    %4504 = vmatprep.subr.mxu0 0.0
    %4505 = vmatpush1.msra.mxu0 0.0
    %4506 = vmatprep.subr.mxu0 0.0
    %4507 = vmatpush1.msra.mxu0 0.0
    %4508 = vmatprep.subr.mxu0 0.0
    %4509 = vmatpush1.msra.mxu0 0.0
    %4510 = vmatprep.subr.mxu0 0.0
    %4511 = vmatpush1.msra.mxu0 0.0
    %4512 = vmatprep.subr.mxu0 0.0
    %4513 = vmatpush1.msra.mxu0 0.0
    %4514 = vmatprep.subr.mxu0 0.0
    %4515 = vmatpush1.msra.mxu0 0.0
    %4516 = vmatprep.subr.mxu0 0.0
    %4517 = vmatpush1.msra.mxu0 0.0
    %4518 = vmatprep.subr.mxu0 0.0
    %4519 = vmatpush1.msra.mxu0 0.0
    %4520 = vmatprep.subr.mxu0 0.0
    %4521 = vmatpush1.msra.mxu0 0.0
    %4522 = vmatprep.subr.mxu0 0.0
    %4523 = vmatpush1.msra.mxu0 0.0
    %4524 = vmatprep.subr.mxu0 0.0
    %4525 = vmatpush1.msra.mxu0 0.0
    %4526 = vmatprep.subr.mxu0 0.0
    %4527 = vmatpush1.msra.mxu0 0.0
    %4528 = vmatprep.subr.mxu0 0.0
    %4529 = vmatpush1.msra.mxu0 0.0
    %4530 = vmatprep.subr.mxu0 0.0
    %4531 = vmatpush1.msra.mxu0 0.0
    %4532 = vmatprep.subr.mxu0 0.0
    %4533 = vmatpush1.msra.mxu0 0.0
    %4534 = vmatprep.subr.mxu0 0.0
    %4535 = vmatpush1.msra.mxu0 0.0
    %4536 = vmatprep.subr.mxu0 0.0
    %4537 = vmatpush1.msra.mxu0 0.0
    %4538 = vmatprep.subr.mxu0 0.0
    %4539 = vmatpush1.msra.mxu0 0.0
    %4540 = vmatprep.mubr.f32.mxu0 0.0
    %4541 = vmatmul.mubr.f32.gmra.mrb[0].mxu0 %v4471
    %v4542 = vpop.f32.mrb[0].mxu0
    %v4543 = vadd.f32 0.0, %v4542
    %v4544 = vpop.f32.mrb[0].mxu0
    %v4545 = vadd.f32 0.0, %v4544
    %4546 = vmatprep.mubr.f32.mxu0 0.0
    %4547 = vmatmul.mubr.f32.gmra.mrb[0].mxu0 %v4474
    %v4548 = vpop.f32.mrb[0].mxu0
    %v4549 = vadd.f32 0.0, %v4548
    %v4550 = vpop.f32.mrb[0].mxu0
    %v4551 = vadd.f32 0.0, %v4550
    %4552 = vdwg.mxu0
    %v4553 = vadd.f32 %v4451, %v4543
    %v4554 = vadd.f32 %v4452, %v4545
    %v4555 = vadd.f32 %v4453, %v4549
    %v4556 = vadd.f32 %v4454, %v4551
    %4557 = vrot.lane.b32.xlu0 %v3961, 118
    %v4558 = vpop.permute.xlu0 %4557
    %4559 = vrot.lane.b32.xlu0 %v3963, 118
    %v4560 = vpop.permute.xlu0 %4559
    %4561 = vrot.lane.b32.xlu0 %v3962, 118
    %v4562 = vpop.permute.xlu0 %4561
    %4563 = vrot.lane.b32.xlu0 %v3964, 118
    %v4564 = vpop.permute.xlu0 %4563
    %v4565 = vsel %vm644, %v4558, %v4562
    %v4566 = vsel %vm644, %v4560, %v4564
    %v4567 = vsel %vm644, %v4562, %v4558
    %v4568 = vsel %vm644, %v4564, %v4560
    %s4569 = scalar_lea.vmem %s3, 672
    %v4570 = vld [vmem:[%s4569] sm:$0xff]
    %v4571 = vld [vmem:[%s4569 + $0x8] sm:$0xff]
    %v4573 = vsel %vm70, %v4570, 0
    %v4576 = vsel %vm70, %v4571, 0
    %4578 = vmatprep.subr.mxu0 %v4567
    %4579 = vmatpush1.msra.mxu0 %v4565
    %4580 = vmatprep.subr.mxu0 %v4568
    %4581 = vmatpush1.msra.mxu0 %v4566
    %4582 = vmatprep.subr.mxu0 0.0
    %4583 = vmatpush1.msra.mxu0 0.0
    %4584 = vmatprep.subr.mxu0 0.0
    %4585 = vmatpush1.msra.mxu0 0.0
    %4586 = vmatprep.subr.mxu0 0.0
    %4587 = vmatpush1.msra.mxu0 0.0
    %4588 = vmatprep.subr.mxu0 0.0
    %4589 = vmatpush1.msra.mxu0 0.0
    %4590 = vmatprep.subr.mxu0 0.0
    %4591 = vmatpush1.msra.mxu0 0.0
    %4592 = vmatprep.subr.mxu0 0.0
    %4593 = vmatpush1.msra.mxu0 0.0
    %4594 = vmatprep.subr.mxu0 0.0
    %4595 = vmatpush1.msra.mxu0 0.0
    %4596 = vmatprep.subr.mxu0 0.0
    %4597 = vmatpush1.msra.mxu0 0.0
    %4598 = vmatprep.subr.mxu0 0.0
    %4599 = vmatpush1.msra.mxu0 0.0
    %4600 = vmatprep.subr.mxu0 0.0
    %4601 = vmatpush1.msra.mxu0 0.0
    %4602 = vmatprep.subr.mxu0 0.0
    %4603 = vmatpush1.msra.mxu0 0.0
    %4604 = vmatprep.subr.mxu0 0.0
    %4605 = vmatpush1.msra.mxu0 0.0
    %4606 = vmatprep.subr.mxu0 0.0
    %4607 = vmatpush1.msra.mxu0 0.0
    %4608 = vmatprep.subr.mxu0 0.0
    %4609 = vmatpush1.msra.mxu0 0.0
    %4610 = vmatprep.subr.mxu0 0.0
    %4611 = vmatpush1.msra.mxu0 0.0
    %4612 = vmatprep.subr.mxu0 0.0
    %4613 = vmatpush1.msra.mxu0 0.0
    %4614 = vmatprep.subr.mxu0 0.0
    %4615 = vmatpush1.msra.mxu0 0.0
    %4616 = vmatprep.subr.mxu0 0.0
    %4617 = vmatpush1.msra.mxu0 0.0
    %4618 = vmatprep.subr.mxu0 0.0
    %4619 = vmatpush1.msra.mxu0 0.0
    %4620 = vmatprep.subr.mxu0 0.0
    %4621 = vmatpush1.msra.mxu0 0.0
    %4622 = vmatprep.subr.mxu0 0.0
    %4623 = vmatpush1.msra.mxu0 0.0
    %4624 = vmatprep.subr.mxu0 0.0
    %4625 = vmatpush1.msra.mxu0 0.0
    %4626 = vmatprep.subr.mxu0 0.0
    %4627 = vmatpush1.msra.mxu0 0.0
    %4628 = vmatprep.subr.mxu0 0.0
    %4629 = vmatpush1.msra.mxu0 0.0
    %4630 = vmatprep.subr.mxu0 0.0
    %4631 = vmatpush1.msra.mxu0 0.0
    %4632 = vmatprep.subr.mxu0 0.0
    %4633 = vmatpush1.msra.mxu0 0.0
    %4634 = vmatprep.subr.mxu0 0.0
    %4635 = vmatpush1.msra.mxu0 0.0
    %4636 = vmatprep.subr.mxu0 0.0
    %4637 = vmatpush1.msra.mxu0 0.0
    %4638 = vmatprep.subr.mxu0 0.0
    %4639 = vmatpush1.msra.mxu0 0.0
    %4640 = vmatprep.subr.mxu0 0.0
    %4641 = vmatpush1.msra.mxu0 0.0
    %4642 = vmatprep.mubr.f32.mxu0 0.0
    %4643 = vmatmul.mubr.f32.gmra.mrb[0].mxu0 %v4573
    %v4644 = vpop.f32.mrb[0].mxu0
    %v4645 = vadd.f32 0.0, %v4644
    %v4646 = vpop.f32.mrb[0].mxu0
    %v4647 = vadd.f32 0.0, %v4646
    %4648 = vmatprep.mubr.f32.mxu0 0.0
    %4649 = vmatmul.mubr.f32.gmra.mrb[0].mxu0 %v4576
    %v4650 = vpop.f32.mrb[0].mxu0
    %v4651 = vadd.f32 0.0, %v4650
    %v4652 = vpop.f32.mrb[0].mxu0
    %v4653 = vadd.f32 0.0, %v4652
    %4654 = vdwg.mxu0
    %v4655 = vadd.f32 %v4553, %v4645
    %v4656 = vadd.f32 %v4554, %v4647
    %v4657 = vadd.f32 %v4555, %v4651
    %v4658 = vadd.f32 %v4556, %v4653
    %4659 = vrot.lane.b32.xlu0 %v3961, 117
    %v4660 = vpop.permute.xlu0 %4659
    %4661 = vrot.lane.b32.xlu0 %v3963, 117
    %v4662 = vpop.permute.xlu0 %4661
    %4663 = vrot.lane.b32.xlu0 %v3962, 117
    %v4664 = vpop.permute.xlu0 %4663
    %4665 = vrot.lane.b32.xlu0 %v3964, 117
    %v4666 = vpop.permute.xlu0 %4665
    %v4667 = vsel %vm747, %v4660, %v4664
    %v4668 = vsel %vm747, %v4662, %v4666
    %v4669 = vsel %vm747, %v4664, %v4660
    %v4670 = vsel %vm747, %v4666, %v4662
    %s4671 = scalar_lea.vmem %s3, 688
    %v4672 = vld [vmem:[%s4671] sm:$0xff]
    %v4673 = vld [vmem:[%s4671 + $0x8] sm:$0xff]
    %v4675 = vsel %vm70, %v4672, 0
    %v4678 = vsel %vm70, %v4673, 0
    %4680 = vmatprep.subr.mxu0 %v4669
    %4681 = vmatpush1.msra.mxu0 %v4667
    %4682 = vmatprep.subr.mxu0 %v4670
    %4683 = vmatpush1.msra.mxu0 %v4668
    %4684 = vmatprep.subr.mxu0 0.0
    %4685 = vmatpush1.msra.mxu0 0.0
    %4686 = vmatprep.subr.mxu0 0.0
    %4687 = vmatpush1.msra.mxu0 0.0
    %4688 = vmatprep.subr.mxu0 0.0
    %4689 = vmatpush1.msra.mxu0 0.0
    %4690 = vmatprep.subr.mxu0 0.0
    %4691 = vmatpush1.msra.mxu0 0.0
    %4692 = vmatprep.subr.mxu0 0.0
    %4693 = vmatpush1.msra.mxu0 0.0
    %4694 = vmatprep.subr.mxu0 0.0
    %4695 = vmatpush1.msra.mxu0 0.0
    %4696 = vmatprep.subr.mxu0 0.0
    %4697 = vmatpush1.msra.mxu0 0.0
    %4698 = vmatprep.subr.mxu0 0.0
    %4699 = vmatpush1.msra.mxu0 0.0
    %4700 = vmatprep.subr.mxu0 0.0
    %4701 = vmatpush1.msra.mxu0 0.0
    %4702 = vmatprep.subr.mxu0 0.0
    %4703 = vmatpush1.msra.mxu0 0.0
    %4704 = vmatprep.subr.mxu0 0.0
    %4705 = vmatpush1.msra.mxu0 0.0
    %4706 = vmatprep.subr.mxu0 0.0
    %4707 = vmatpush1.msra.mxu0 0.0
    %4708 = vmatprep.subr.mxu0 0.0
    %4709 = vmatpush1.msra.mxu0 0.0
    %4710 = vmatprep.subr.mxu0 0.0
    %4711 = vmatpush1.msra.mxu0 0.0
    %4712 = vmatprep.subr.mxu0 0.0
    %4713 = vmatpush1.msra.mxu0 0.0
    %4714 = vmatprep.subr.mxu0 0.0
    %4715 = vmatpush1.msra.mxu0 0.0
    %4716 = vmatprep.subr.mxu0 0.0
    %4717 = vmatpush1.msra.mxu0 0.0
    %4718 = vmatprep.subr.mxu0 0.0
    %4719 = vmatpush1.msra.mxu0 0.0
    %4720 = vmatprep.subr.mxu0 0.0
    %4721 = vmatpush1.msra.mxu0 0.0
    %4722 = vmatprep.subr.mxu0 0.0
    %4723 = vmatpush1.msra.mxu0 0.0
    %4724 = vmatprep.subr.mxu0 0.0
    %4725 = vmatpush1.msra.mxu0 0.0
    %4726 = vmatprep.subr.mxu0 0.0
    %4727 = vmatpush1.msra.mxu0 0.0
    %4728 = vmatprep.subr.mxu0 0.0
    %4729 = vmatpush1.msra.mxu0 0.0
    %4730 = vmatprep.subr.mxu0 0.0
    %4731 = vmatpush1.msra.mxu0 0.0
    %4732 = vmatprep.subr.mxu0 0.0
    %4733 = vmatpush1.msra.mxu0 0.0
    %4734 = vmatprep.subr.mxu0 0.0
    %4735 = vmatpush1.msra.mxu0 0.0
    %4736 = vmatprep.subr.mxu0 0.0
    %4737 = vmatpush1.msra.mxu0 0.0
    %4738 = vmatprep.subr.mxu0 0.0
    %4739 = vmatpush1.msra.mxu0 0.0
    %4740 = vmatprep.subr.mxu0 0.0
    %4741 = vmatpush1.msra.mxu0 0.0
    %4742 = vmatprep.subr.mxu0 0.0
    %4743 = vmatpush1.msra.mxu0 0.0
    %4744 = vmatprep.mubr.f32.mxu0 0.0
    %4745 = vmatmul.mubr.f32.gmra.mrb[0].mxu0 %v4675
    %v4746 = vpop.f32.mrb[0].mxu0
    %v4747 = vadd.f32 0.0, %v4746
    %v4748 = vpop.f32.mrb[0].mxu0
    %v4749 = vadd.f32 0.0, %v4748
    %4750 = vmatprep.mubr.f32.mxu0 0.0
    %4751 = vmatmul.mubr.f32.gmra.mrb[0].mxu0 %v4678
    %v4752 = vpop.f32.mrb[0].mxu0
    %v4753 = vadd.f32 0.0, %v4752
    %v4754 = vpop.f32.mrb[0].mxu0
    %v4755 = vadd.f32 0.0, %v4754
    %4756 = vdwg.mxu0
    %v4757 = vadd.f32 %v4655, %v4747
    %v4758 = vadd.f32 %v4656, %v4749
    %v4759 = vadd.f32 %v4657, %v4753
    %v4760 = vadd.f32 %v4658, %v4755
    %4761 = vrot.lane.b32.xlu0 %v3961, 116
    %v4762 = vpop.permute.xlu0 %4761
    %4763 = vrot.lane.b32.xlu0 %v3963, 116
    %v4764 = vpop.permute.xlu0 %4763
    %4765 = vrot.lane.b32.xlu0 %v3962, 116
    %v4766 = vpop.permute.xlu0 %4765
    %4767 = vrot.lane.b32.xlu0 %v3964, 116
    %v4768 = vpop.permute.xlu0 %4767
    %v4769 = vsel %vm850, %v4762, %v4766
    %v4770 = vsel %vm850, %v4764, %v4768
    %v4771 = vsel %vm850, %v4766, %v4762
    %v4772 = vsel %vm850, %v4768, %v4764
    %s4773 = scalar_lea.vmem %s3, 704
    %v4774 = vld [vmem:[%s4773] sm:$0xff]
    %v4775 = vld [vmem:[%s4773 + $0x8] sm:$0xff]
    %v4777 = vsel %vm70, %v4774, 0
    %v4780 = vsel %vm70, %v4775, 0
    %4782 = vmatprep.subr.mxu0 %v4771
    %4783 = vmatpush1.msra.mxu0 %v4769
    %4784 = vmatprep.subr.mxu0 %v4772
    %4785 = vmatpush1.msra.mxu0 %v4770
    %4786 = vmatprep.subr.mxu0 0.0
    %4787 = vmatpush1.msra.mxu0 0.0
    %4788 = vmatprep.subr.mxu0 0.0
    %4789 = vmatpush1.msra.mxu0 0.0
    %4790 = vmatprep.subr.mxu0 0.0
    %4791 = vmatpush1.msra.mxu0 0.0
    %4792 = vmatprep.subr.mxu0 0.0
    %4793 = vmatpush1.msra.mxu0 0.0
    %4794 = vmatprep.subr.mxu0 0.0
    %4795 = vmatpush1.msra.mxu0 0.0
    %4796 = vmatprep.subr.mxu0 0.0
    %4797 = vmatpush1.msra.mxu0 0.0
    %4798 = vmatprep.subr.mxu0 0.0
    %4799 = vmatpush1.msra.mxu0 0.0
    %4800 = vmatprep.subr.mxu0 0.0
    %4801 = vmatpush1.msra.mxu0 0.0
    %4802 = vmatprep.subr.mxu0 0.0
    %4803 = vmatpush1.msra.mxu0 0.0
    %4804 = vmatprep.subr.mxu0 0.0
    %4805 = vmatpush1.msra.mxu0 0.0
    %4806 = vmatprep.subr.mxu0 0.0
    %4807 = vmatpush1.msra.mxu0 0.0
    %4808 = vmatprep.subr.mxu0 0.0
    %4809 = vmatpush1.msra.mxu0 0.0
    %4810 = vmatprep.subr.mxu0 0.0
    %4811 = vmatpush1.msra.mxu0 0.0
    %4812 = vmatprep.subr.mxu0 0.0
    %4813 = vmatpush1.msra.mxu0 0.0
    %4814 = vmatprep.subr.mxu0 0.0
    %4815 = vmatpush1.msra.mxu0 0.0
    %4816 = vmatprep.subr.mxu0 0.0
    %4817 = vmatpush1.msra.mxu0 0.0
    %4818 = vmatprep.subr.mxu0 0.0
    %4819 = vmatpush1.msra.mxu0 0.0
    %4820 = vmatprep.subr.mxu0 0.0
    %4821 = vmatpush1.msra.mxu0 0.0
    %4822 = vmatprep.subr.mxu0 0.0
    %4823 = vmatpush1.msra.mxu0 0.0
    %4824 = vmatprep.subr.mxu0 0.0
    %4825 = vmatpush1.msra.mxu0 0.0
    %4826 = vmatprep.subr.mxu0 0.0
    %4827 = vmatpush1.msra.mxu0 0.0
    %4828 = vmatprep.subr.mxu0 0.0
    %4829 = vmatpush1.msra.mxu0 0.0
    %4830 = vmatprep.subr.mxu0 0.0
    %4831 = vmatpush1.msra.mxu0 0.0
    %4832 = vmatprep.subr.mxu0 0.0
    %4833 = vmatpush1.msra.mxu0 0.0
    %4834 = vmatprep.subr.mxu0 0.0
    %4835 = vmatpush1.msra.mxu0 0.0
    %4836 = vmatprep.subr.mxu0 0.0
    %4837 = vmatpush1.msra.mxu0 0.0
    %4838 = vmatprep.subr.mxu0 0.0
    %4839 = vmatpush1.msra.mxu0 0.0
    %4840 = vmatprep.subr.mxu0 0.0
    %4841 = vmatpush1.msra.mxu0 0.0
    %4842 = vmatprep.subr.mxu0 0.0
    %4843 = vmatpush1.msra.mxu0 0.0
    %4844 = vmatprep.subr.mxu0 0.0
    %4845 = vmatpush1.msra.mxu0 0.0
    %4846 = vmatprep.mubr.f32.mxu0 0.0
    %4847 = vmatmul.mubr.f32.gmra.mrb[0].mxu0 %v4777
    %v4848 = vpop.f32.mrb[0].mxu0
    %v4849 = vadd.f32 0.0, %v4848
    %v4850 = vpop.f32.mrb[0].mxu0
    %v4851 = vadd.f32 0.0, %v4850
    %4852 = vmatprep.mubr.f32.mxu0 0.0
    %4853 = vmatmul.mubr.f32.gmra.mrb[0].mxu0 %v4780
    %v4854 = vpop.f32.mrb[0].mxu0
    %v4855 = vadd.f32 0.0, %v4854
    %v4856 = vpop.f32.mrb[0].mxu0
    %v4857 = vadd.f32 0.0, %v4856
    %4858 = vdwg.mxu0
    %v4859 = vadd.f32 %v4757, %v4849
    %v4860 = vadd.f32 %v4758, %v4851
    %v4861 = vadd.f32 %v4759, %v4855
    %v4862 = vadd.f32 %v4760, %v4857
    %v4863 = vmul.f32 %v4859, %v948
    %v4864 = vmul.f32 %v4860, %v948
    %v4865 = vmul.f32 %v4861, %v948
    %v4866 = vmul.f32 %v4862, %v948
    %v4867 = vadd.f32 %v4863, %v4864
    %4868 = vadd.xlane.f32.xlu0 %v4867
    %v4869 = vpop.xlane.xlu0 %4868
    %v4870 = vadd.f32 %v4865, %v4866
    %4871 = vadd.xlane.f32.xlu0 %v4870
    %v4872 = vpop.xlane.xlu0 %4871
    %v4873 = vmul.f32 %v4863, %v4863
    %v4874 = vmul.f32 %v4864, %v4864
    %v4875 = vmul.f32 %v4865, %v4865
    %v4876 = vmul.f32 %v4866, %v4866
    %v4877 = vadd.f32 %v4873, %v4874
    %4878 = vadd.xlane.f32.xlu0 %v4877
    %v4879 = vpop.xlane.xlu0 %4878
    %v4880 = vadd.f32 %v4875, %v4876
    %4881 = vadd.xlane.f32.xlu0 %v4880
    %v4882 = vpop.xlane.xlu0 %4881
    %v4883 = vmul.f32 %v4869, 0.0061728396
    %v4884 = vmul.f32 %v4872, 0.0061728396
    %v4885 = vmul.f32 %v4879, 0.0061728396
    %v4886 = vmul.f32 %v4882, 0.0061728396
    %v4887 = vmul.f32 %v4883, %v4883
    %v4888 = vmul.f32 %v4884, %v4884
    %v4889 = vsub.f32 %v4885, %v4887
    %v4890 = vsub.f32 %v4886, %v4888
    %s4891 = scalar_lea.vmem %s4, 64
    %v4892 = vld [vmem:[%s4891] sm:$0xff]
    %v4893 = vld [vmem:[%s4891 + $0x8] sm:$0xff]
    %v4894 = vadd.f32 %v4889, 1e-05
    %v4895 = vadd.f32 %v4890, 1e-05
    %v4896 = vrsqrt.pop %v4894
    %v4897 = vrsqrt.pop %v4895
    %v4898 = vmul.f32 %v4892, %v4896
    %v4899 = vmul.f32 %v4893, %v4897
    %s4900 = scalar_lea.vmem %s5, 64
    %v4901 = vld [vmem:[%s4900] sm:$0xff]
    %v4902 = vld [vmem:[%s4900 + $0x8] sm:$0xff]
    %v4903 = vmul.f32 %v4883, %v4898
    %v4904 = vmul.f32 %v4884, %v4899
    %v4905 = vsub.f32 %v4901, %v4903
    %v4906 = vsub.f32 %v4902, %v4904
    %4908 = vset.pattern.permute.xlu0 0
    %4909 = vperm.xlu0 %4908, %v4898
    %v4910 = vpop.permute.xlu0 %4909
    %4913 = vset.pattern.permute.xlu0 0
    %4914 = vperm.xlu0 %4913, %v4899
    %v4915 = vpop.permute.xlu0 %4914
    %v4917 = vmul.f32 %v4859, %v4910
    %v4918 = vmul.f32 %v4860, %v4910
    %v4919 = vmul.f32 %v4861, %v4915
    %v4920 = vmul.f32 %v4862, %v4915
    %4922 = vset.pattern.permute.xlu0 0
    %4923 = vperm.xlu0 %4922, %v4905
    %v4924 = vpop.permute.xlu0 %4923
    %4927 = vset.pattern.permute.xlu0 0
    %4928 = vperm.xlu0 %4927, %v4906
    %v4929 = vpop.permute.xlu0 %4928
    %v4931 = vadd.f32 %v4917, %v4924
    %v4932 = vadd.f32 %v4918, %v4924
    %v4933 = vadd.f32 %v4919, %v4929
    %v4934 = vadd.f32 %v4920, %v4929
    %v4935 = vadd.f32 %v4931, %v2983
    %v4936 = vadd.f32 %v4932, %v2984
    %v4937 = vadd.f32 %v4933, %v2985
    %v4938 = vadd.f32 %v4934, %v2986
    %v4939 = vmax.f32 %v4935, 0.0
    %v4940 = vmax.f32 %v4936, 0.0
    %v4941 = vmax.f32 %v4937, 0.0
    %v4942 = vmax.f32 %v4938, 0.0
    %v4943 = vmul.f32 %v4939, %v948
    %v4944 = vmul.f32 %v4940, %v948
    %v4945 = vmul.f32 %v4941, %v948
    %v4946 = vmul.f32 %v4942, %v948
    %4947 = vrot.lane.b32.xlu0 %v4943, 12
    %v4948 = vpop.permute.xlu0 %4947
    %4949 = vrot.lane.b32.xlu0 %v4945, 12
    %v4950 = vpop.permute.xlu0 %4949
    %4951 = vrot.lane.b32.xlu0 %v4944, 12
    %v4952 = vpop.permute.xlu0 %4951
    %4953 = vrot.lane.b32.xlu0 %v4946, 12
    %v4954 = vpop.permute.xlu0 %4953
    %v4955 = vsel %vm47, %v4948, %v4952
    %v4956 = vsel %vm47, %v4950, %v4954
    %v4957 = vsel %vm47, %v4952, %v4948
    %v4958 = vsel %vm47, %v4954, %v4950
    %s4959 = scalar_lea.vmem %s3, 720
    %v4960 = vld [vmem:[%s4959] sm:$0xff]
    %v4961 = vld [vmem:[%s4959 + $0x8] sm:$0xff]
    %4962 = vrot.lane.b32.xlu0 %v4943, 11
    %v4963 = vpop.permute.xlu0 %4962
    %4964 = vrot.lane.b32.xlu0 %v4945, 11
    %v4965 = vpop.permute.xlu0 %4964
    %4966 = vrot.lane.b32.xlu0 %v4944, 11
    %v4967 = vpop.permute.xlu0 %4966
    %4968 = vrot.lane.b32.xlu0 %v4946, 11
    %v4969 = vpop.permute.xlu0 %4968
    %v4970 = vsel %vm62, %v4963, %v4967
    %v4971 = vsel %vm62, %v4965, %v4969
    %v4972 = vsel %vm62, %v4967, %v4963
    %v4973 = vsel %vm62, %v4969, %v4965
    %s4974 = scalar_lea.vmem %s3, 736
    %v4975 = vld [vmem:[%s4974] sm:$0xff]
    %v4976 = vld [vmem:[%s4974 + $0x8] sm:$0xff]
    %v4978 = vsel %vm70, %v4975, 0
    %v4981 = vsel %vm70, %v4976, 0
    %4983 = vmatprep.subr.mxu0 %v4970
    %4984 = vmatpush1.msra.mxu0 %v4972
    %4985 = vmatprep.subr.mxu0 %v4971
    %4986 = vmatpush1.msra.mxu0 %v4973
    %4987 = vmatprep.subr.mxu0 0.0
    %4988 = vmatpush1.msra.mxu0 0.0
    %4989 = vmatprep.subr.mxu0 0.0
    %4990 = vmatpush1.msra.mxu0 0.0
    %4991 = vmatprep.subr.mxu0 0.0
    %4992 = vmatpush1.msra.mxu0 0.0
    %4993 = vmatprep.subr.mxu0 0.0
    %4994 = vmatpush1.msra.mxu0 0.0
    %4995 = vmatprep.subr.mxu0 0.0
    %4996 = vmatpush1.msra.mxu0 0.0
    %4997 = vmatprep.subr.mxu0 0.0
    %4998 = vmatpush1.msra.mxu0 0.0
    %4999 = vmatprep.subr.mxu0 0.0
    %5000 = vmatpush1.msra.mxu0 0.0
    %5001 = vmatprep.subr.mxu0 0.0
    %5002 = vmatpush1.msra.mxu0 0.0
    %5003 = vmatprep.subr.mxu0 0.0
    %5004 = vmatpush1.msra.mxu0 0.0
    %5005 = vmatprep.subr.mxu0 0.0
    %5006 = vmatpush1.msra.mxu0 0.0
    %5007 = vmatprep.subr.mxu0 0.0
    %5008 = vmatpush1.msra.mxu0 0.0
    %5009 = vmatprep.subr.mxu0 0.0
    %5010 = vmatpush1.msra.mxu0 0.0
    %5011 = vmatprep.subr.mxu0 0.0
    %5012 = vmatpush1.msra.mxu0 0.0
    %5013 = vmatprep.subr.mxu0 0.0
    %5014 = vmatpush1.msra.mxu0 0.0
    %5015 = vmatprep.subr.mxu0 0.0
    %5016 = vmatpush1.msra.mxu0 0.0
    %5017 = vmatprep.subr.mxu0 0.0
    %5018 = vmatpush1.msra.mxu0 0.0
    %5019 = vmatprep.subr.mxu0 0.0
    %5020 = vmatpush1.msra.mxu0 0.0
    %5021 = vmatprep.subr.mxu0 0.0
    %5022 = vmatpush1.msra.mxu0 0.0
    %5023 = vmatprep.subr.mxu0 0.0
    %5024 = vmatpush1.msra.mxu0 0.0
    %5025 = vmatprep.subr.mxu0 0.0
    %5026 = vmatpush1.msra.mxu0 0.0
    %5027 = vmatprep.subr.mxu0 0.0
    %5028 = vmatpush1.msra.mxu0 0.0
    %5029 = vmatprep.subr.mxu0 0.0
    %5030 = vmatpush1.msra.mxu0 0.0
    %5031 = vmatprep.subr.mxu0 0.0
    %5032 = vmatpush1.msra.mxu0 0.0
    %5033 = vmatprep.subr.mxu0 0.0
    %5034 = vmatpush1.msra.mxu0 0.0
    %5035 = vmatprep.subr.mxu0 0.0
    %5036 = vmatpush1.msra.mxu0 0.0
    %5037 = vmatprep.subr.mxu0 0.0
    %5038 = vmatpush1.msra.mxu0 0.0
    %5039 = vmatprep.subr.mxu0 0.0
    %5040 = vmatpush1.msra.mxu0 0.0
    %5041 = vmatprep.subr.mxu0 0.0
    %5042 = vmatpush1.msra.mxu0 0.0
    %5043 = vmatprep.subr.mxu0 0.0
    %5044 = vmatpush1.msra.mxu0 0.0
    %5045 = vmatprep.subr.mxu0 0.0
    %5046 = vmatpush1.msra.mxu0 0.0
    %5047 = vmatprep.mubr.f32.mxu0 0.0
    %5048 = vmatmul.mubr.f32.gmra.mrb[0].mxu0 %v4978
    %v5049 = vpop.f32.mrb[0].mxu0
    %v5050 = vadd.f32 0.0, %v5049
    %v5051 = vpop.f32.mrb[0].mxu0
    %v5052 = vadd.f32 0.0, %v5051
    %5053 = vmatprep.mubr.f32.mxu0 0.0
    %5054 = vmatmul.mubr.f32.gmra.mrb[0].mxu0 %v4981
    %v5055 = vpop.f32.mrb[0].mxu0
    %v5056 = vadd.f32 0.0, %v5055
    %v5057 = vpop.f32.mrb[0].mxu0
    %v5058 = vadd.f32 0.0, %v5057
    %5059 = vdwg.mxu0
    %v5061 = vsel %vm70, %v4960, 0
    %v5064 = vsel %vm70, %v4961, 0
    %5066 = vmatprep.subr.mxu0 %v4955
    %5067 = vmatpush1.msra.mxu0 %v4957
    %5068 = vmatprep.subr.mxu0 %v4956
    %5069 = vmatpush1.msra.mxu0 %v4958
    %5070 = vmatprep.subr.mxu0 0.0
    %5071 = vmatpush1.msra.mxu0 0.0
    %5072 = vmatprep.subr.mxu0 0.0
    %5073 = vmatpush1.msra.mxu0 0.0
    %5074 = vmatprep.subr.mxu0 0.0
    %5075 = vmatpush1.msra.mxu0 0.0
    %5076 = vmatprep.subr.mxu0 0.0
    %5077 = vmatpush1.msra.mxu0 0.0
    %5078 = vmatprep.subr.mxu0 0.0
    %5079 = vmatpush1.msra.mxu0 0.0
    %5080 = vmatprep.subr.mxu0 0.0
    %5081 = vmatpush1.msra.mxu0 0.0
    %5082 = vmatprep.subr.mxu0 0.0
    %5083 = vmatpush1.msra.mxu0 0.0
    %5084 = vmatprep.subr.mxu0 0.0
    %5085 = vmatpush1.msra.mxu0 0.0
    %5086 = vmatprep.subr.mxu0 0.0
    %5087 = vmatpush1.msra.mxu0 0.0
    %5088 = vmatprep.subr.mxu0 0.0
    %5089 = vmatpush1.msra.mxu0 0.0
    %5090 = vmatprep.subr.mxu0 0.0
    %5091 = vmatpush1.msra.mxu0 0.0
    %5092 = vmatprep.subr.mxu0 0.0
    %5093 = vmatpush1.msra.mxu0 0.0
    %5094 = vmatprep.subr.mxu0 0.0
    %5095 = vmatpush1.msra.mxu0 0.0
    %5096 = vmatprep.subr.mxu0 0.0
    %5097 = vmatpush1.msra.mxu0 0.0
    %5098 = vmatprep.subr.mxu0 0.0
    %5099 = vmatpush1.msra.mxu0 0.0
    %5100 = vmatprep.subr.mxu0 0.0
    %5101 = vmatpush1.msra.mxu0 0.0
    %5102 = vmatprep.subr.mxu0 0.0
    %5103 = vmatpush1.msra.mxu0 0.0
    %5104 = vmatprep.subr.mxu0 0.0
    %5105 = vmatpush1.msra.mxu0 0.0
    %5106 = vmatprep.subr.mxu0 0.0
    %5107 = vmatpush1.msra.mxu0 0.0
    %5108 = vmatprep.subr.mxu0 0.0
    %5109 = vmatpush1.msra.mxu0 0.0
    %5110 = vmatprep.subr.mxu0 0.0
    %5111 = vmatpush1.msra.mxu0 0.0
    %5112 = vmatprep.subr.mxu0 0.0
    %5113 = vmatpush1.msra.mxu0 0.0
    %5114 = vmatprep.subr.mxu0 0.0
    %5115 = vmatpush1.msra.mxu0 0.0
    %5116 = vmatprep.subr.mxu0 0.0
    %5117 = vmatpush1.msra.mxu0 0.0
    %5118 = vmatprep.subr.mxu0 0.0
    %5119 = vmatpush1.msra.mxu0 0.0
    %5120 = vmatprep.subr.mxu0 0.0
    %5121 = vmatpush1.msra.mxu0 0.0
    %5122 = vmatprep.subr.mxu0 0.0
    %5123 = vmatpush1.msra.mxu0 0.0
    %5124 = vmatprep.subr.mxu0 0.0
    %5125 = vmatpush1.msra.mxu0 0.0
    %5126 = vmatprep.subr.mxu0 0.0
    %5127 = vmatpush1.msra.mxu0 0.0
    %5128 = vmatprep.subr.mxu0 0.0
    %5129 = vmatpush1.msra.mxu0 0.0
    %5130 = vmatprep.mubr.f32.mxu0 0.0
    %5131 = vmatmul.mubr.f32.gmra.mrb[0].mxu0 %v5061
    %v5132 = vpop.f32.mrb[0].mxu0
    %v5133 = vadd.f32 %v5050, %v5132
    %v5134 = vpop.f32.mrb[0].mxu0
    %v5135 = vadd.f32 %v5052, %v5134
    %5136 = vmatprep.mubr.f32.mxu0 0.0
    %5137 = vmatmul.mubr.f32.gmra.mrb[0].mxu0 %v5064
    %v5138 = vpop.f32.mrb[0].mxu0
    %v5139 = vadd.f32 %v5056, %v5138
    %v5140 = vpop.f32.mrb[0].mxu0
    %v5141 = vadd.f32 %v5058, %v5140
    %5142 = vdwg.mxu0
    %5143 = vrot.lane.b32.xlu0 %v4943, 10
    %v5144 = vpop.permute.xlu0 %5143
    %5145 = vrot.lane.b32.xlu0 %v4945, 10
    %v5146 = vpop.permute.xlu0 %5145
    %5147 = vrot.lane.b32.xlu0 %v4944, 10
    %v5148 = vpop.permute.xlu0 %5147
    %5149 = vrot.lane.b32.xlu0 %v4946, 10
    %v5150 = vpop.permute.xlu0 %5149
    %v5151 = vsel %vm245, %v5144, %v5148
    %v5152 = vsel %vm245, %v5146, %v5150
    %v5153 = vsel %vm245, %v5148, %v5144
    %v5154 = vsel %vm245, %v5150, %v5146
    %s5155 = scalar_lea.vmem %s3, 752
    %v5156 = vld [vmem:[%s5155] sm:$0xff]
    %v5157 = vld [vmem:[%s5155 + $0x8] sm:$0xff]
    %v5159 = vsel %vm70, %v5156, 0
    %v5162 = vsel %vm70, %v5157, 0
    %5164 = vmatprep.subr.mxu0 %v5151
    %5165 = vmatpush1.msra.mxu0 %v5153
    %5166 = vmatprep.subr.mxu0 %v5152
    %5167 = vmatpush1.msra.mxu0 %v5154
    %5168 = vmatprep.subr.mxu0 0.0
    %5169 = vmatpush1.msra.mxu0 0.0
    %5170 = vmatprep.subr.mxu0 0.0
    %5171 = vmatpush1.msra.mxu0 0.0
    %5172 = vmatprep.subr.mxu0 0.0
    %5173 = vmatpush1.msra.mxu0 0.0
    %5174 = vmatprep.subr.mxu0 0.0
    %5175 = vmatpush1.msra.mxu0 0.0
    %5176 = vmatprep.subr.mxu0 0.0
    %5177 = vmatpush1.msra.mxu0 0.0
    %5178 = vmatprep.subr.mxu0 0.0
    %5179 = vmatpush1.msra.mxu0 0.0
    %5180 = vmatprep.subr.mxu0 0.0
    %5181 = vmatpush1.msra.mxu0 0.0
    %5182 = vmatprep.subr.mxu0 0.0
    %5183 = vmatpush1.msra.mxu0 0.0
    %5184 = vmatprep.subr.mxu0 0.0
    %5185 = vmatpush1.msra.mxu0 0.0
    %5186 = vmatprep.subr.mxu0 0.0
    %5187 = vmatpush1.msra.mxu0 0.0
    %5188 = vmatprep.subr.mxu0 0.0
    %5189 = vmatpush1.msra.mxu0 0.0
    %5190 = vmatprep.subr.mxu0 0.0
    %5191 = vmatpush1.msra.mxu0 0.0
    %5192 = vmatprep.subr.mxu0 0.0
    %5193 = vmatpush1.msra.mxu0 0.0
    %5194 = vmatprep.subr.mxu0 0.0
    %5195 = vmatpush1.msra.mxu0 0.0
    %5196 = vmatprep.subr.mxu0 0.0
    %5197 = vmatpush1.msra.mxu0 0.0
    %5198 = vmatprep.subr.mxu0 0.0
    %5199 = vmatpush1.msra.mxu0 0.0
    %5200 = vmatprep.subr.mxu0 0.0
    %5201 = vmatpush1.msra.mxu0 0.0
    %5202 = vmatprep.subr.mxu0 0.0
    %5203 = vmatpush1.msra.mxu0 0.0
    %5204 = vmatprep.subr.mxu0 0.0
    %5205 = vmatpush1.msra.mxu0 0.0
    %5206 = vmatprep.subr.mxu0 0.0
    %5207 = vmatpush1.msra.mxu0 0.0
    %5208 = vmatprep.subr.mxu0 0.0
    %5209 = vmatpush1.msra.mxu0 0.0
    %5210 = vmatprep.subr.mxu0 0.0
    %5211 = vmatpush1.msra.mxu0 0.0
    %5212 = vmatprep.subr.mxu0 0.0
    %5213 = vmatpush1.msra.mxu0 0.0
    %5214 = vmatprep.subr.mxu0 0.0
    %5215 = vmatpush1.msra.mxu0 0.0
    %5216 = vmatprep.subr.mxu0 0.0
    %5217 = vmatpush1.msra.mxu0 0.0
    %5218 = vmatprep.subr.mxu0 0.0
    %5219 = vmatpush1.msra.mxu0 0.0
    %5220 = vmatprep.subr.mxu0 0.0
    %5221 = vmatpush1.msra.mxu0 0.0
    %5222 = vmatprep.subr.mxu0 0.0
    %5223 = vmatpush1.msra.mxu0 0.0
    %5224 = vmatprep.subr.mxu0 0.0
    %5225 = vmatpush1.msra.mxu0 0.0
    %5226 = vmatprep.subr.mxu0 0.0
    %5227 = vmatpush1.msra.mxu0 0.0
    %5228 = vmatprep.mubr.f32.mxu0 0.0
    %5229 = vmatmul.mubr.f32.gmra.mrb[0].mxu0 %v5159
    %v5230 = vpop.f32.mrb[0].mxu0
    %v5231 = vadd.f32 0.0, %v5230
    %v5232 = vpop.f32.mrb[0].mxu0
    %v5233 = vadd.f32 0.0, %v5232
    %5234 = vmatprep.mubr.f32.mxu0 0.0
    %5235 = vmatmul.mubr.f32.gmra.mrb[0].mxu0 %v5162
    %v5236 = vpop.f32.mrb[0].mxu0
    %v5237 = vadd.f32 0.0, %v5236
    %v5238 = vpop.f32.mrb[0].mxu0
    %v5239 = vadd.f32 0.0, %v5238
    %5240 = vdwg.mxu0
    %v5241 = vadd.f32 %v5133, %v5231
    %v5242 = vadd.f32 %v5135, %v5233
    %v5243 = vadd.f32 %v5139, %v5237
    %v5244 = vadd.f32 %v5141, %v5239
    %5245 = vrot.lane.b32.xlu0 %v4943, 1
    %v5246 = vpop.permute.xlu0 %5245
    %5247 = vrot.lane.b32.xlu0 %v4945, 1
    %v5248 = vpop.permute.xlu0 %5247
    %5249 = vrot.lane.b32.xlu0 %v4944, 1
    %v5250 = vpop.permute.xlu0 %5249
    %5251 = vrot.lane.b32.xlu0 %v4946, 1
    %v5252 = vpop.permute.xlu0 %5251
    %v5253 = vsel %vm348, %v5246, %v5250
    %v5254 = vsel %vm348, %v5248, %v5252
    %v5255 = vsel %vm348, %v5250, %v5246
    %v5256 = vsel %vm348, %v5252, %v5248
    %s5257 = scalar_lea.vmem %s3, 768
    %v5258 = vld [vmem:[%s5257] sm:$0xff]
    %v5259 = vld [vmem:[%s5257 + $0x8] sm:$0xff]
    %v5261 = vsel %vm70, %v5258, 0
    %v5264 = vsel %vm70, %v5259, 0
    %5266 = vmatprep.subr.mxu0 %v5253
    %5267 = vmatpush1.msra.mxu0 %v5255
    %5268 = vmatprep.subr.mxu0 %v5254
    %5269 = vmatpush1.msra.mxu0 %v5256
    %5270 = vmatprep.subr.mxu0 0.0
    %5271 = vmatpush1.msra.mxu0 0.0
    %5272 = vmatprep.subr.mxu0 0.0
    %5273 = vmatpush1.msra.mxu0 0.0
    %5274 = vmatprep.subr.mxu0 0.0
    %5275 = vmatpush1.msra.mxu0 0.0
    %5276 = vmatprep.subr.mxu0 0.0
    %5277 = vmatpush1.msra.mxu0 0.0
    %5278 = vmatprep.subr.mxu0 0.0
    %5279 = vmatpush1.msra.mxu0 0.0
    %5280 = vmatprep.subr.mxu0 0.0
    %5281 = vmatpush1.msra.mxu0 0.0
    %5282 = vmatprep.subr.mxu0 0.0
    %5283 = vmatpush1.msra.mxu0 0.0
    %5284 = vmatprep.subr.mxu0 0.0
    %5285 = vmatpush1.msra.mxu0 0.0
    %5286 = vmatprep.subr.mxu0 0.0
    %5287 = vmatpush1.msra.mxu0 0.0
    %5288 = vmatprep.subr.mxu0 0.0
    %5289 = vmatpush1.msra.mxu0 0.0
    %5290 = vmatprep.subr.mxu0 0.0
    %5291 = vmatpush1.msra.mxu0 0.0
    %5292 = vmatprep.subr.mxu0 0.0
    %5293 = vmatpush1.msra.mxu0 0.0
    %5294 = vmatprep.subr.mxu0 0.0
    %5295 = vmatpush1.msra.mxu0 0.0
    %5296 = vmatprep.subr.mxu0 0.0
    %5297 = vmatpush1.msra.mxu0 0.0
    %5298 = vmatprep.subr.mxu0 0.0
    %5299 = vmatpush1.msra.mxu0 0.0
    %5300 = vmatprep.subr.mxu0 0.0
    %5301 = vmatpush1.msra.mxu0 0.0
    %5302 = vmatprep.subr.mxu0 0.0
    %5303 = vmatpush1.msra.mxu0 0.0
    %5304 = vmatprep.subr.mxu0 0.0
    %5305 = vmatpush1.msra.mxu0 0.0
    %5306 = vmatprep.subr.mxu0 0.0
    %5307 = vmatpush1.msra.mxu0 0.0
    %5308 = vmatprep.subr.mxu0 0.0
    %5309 = vmatpush1.msra.mxu0 0.0
    %5310 = vmatprep.subr.mxu0 0.0
    %5311 = vmatpush1.msra.mxu0 0.0
    %5312 = vmatprep.subr.mxu0 0.0
    %5313 = vmatpush1.msra.mxu0 0.0
    %5314 = vmatprep.subr.mxu0 0.0
    %5315 = vmatpush1.msra.mxu0 0.0
    %5316 = vmatprep.subr.mxu0 0.0
    %5317 = vmatpush1.msra.mxu0 0.0
    %5318 = vmatprep.subr.mxu0 0.0
    %5319 = vmatpush1.msra.mxu0 0.0
    %5320 = vmatprep.subr.mxu0 0.0
    %5321 = vmatpush1.msra.mxu0 0.0
    %5322 = vmatprep.subr.mxu0 0.0
    %5323 = vmatpush1.msra.mxu0 0.0
    %5324 = vmatprep.subr.mxu0 0.0
    %5325 = vmatpush1.msra.mxu0 0.0
    %5326 = vmatprep.subr.mxu0 0.0
    %5327 = vmatpush1.msra.mxu0 0.0
    %5328 = vmatprep.subr.mxu0 0.0
    %5329 = vmatpush1.msra.mxu0 0.0
    %5330 = vmatprep.mubr.f32.mxu0 0.0
    %5331 = vmatmul.mubr.f32.gmra.mrb[0].mxu0 %v5261
    %v5332 = vpop.f32.mrb[0].mxu0
    %v5333 = vadd.f32 0.0, %v5332
    %v5334 = vpop.f32.mrb[0].mxu0
    %v5335 = vadd.f32 0.0, %v5334
    %5336 = vmatprep.mubr.f32.mxu0 0.0
    %5337 = vmatmul.mubr.f32.gmra.mrb[0].mxu0 %v5264
    %v5338 = vpop.f32.mrb[0].mxu0
    %v5339 = vadd.f32 0.0, %v5338
    %v5340 = vpop.f32.mrb[0].mxu0
    %v5341 = vadd.f32 0.0, %v5340
    %5342 = vdwg.mxu0
    %v5343 = vadd.f32 %v5241, %v5333
    %v5344 = vadd.f32 %v5242, %v5335
    %v5345 = vadd.f32 %v5243, %v5339
    %v5346 = vadd.f32 %v5244, %v5341
    %s5347 = scalar_lea.vmem %s3, 784
    %v5348 = vld [vmem:[%s5347] sm:$0xff]
    %v5349 = vld [vmem:[%s5347 + $0x8] sm:$0xff]
    %v5351 = vsel %vm70, %v5348, 0
    %v5354 = vsel %vm70, %v5349, 0
    %5356 = vmatprep.subr.mxu0 %v4944
    %5357 = vmatpush1.msra.mxu0 %v4943
    %5358 = vmatprep.subr.mxu0 %v4946
    %5359 = vmatpush1.msra.mxu0 %v4945
    %5360 = vmatprep.subr.mxu0 0.0
    %5361 = vmatpush1.msra.mxu0 0.0
    %5362 = vmatprep.subr.mxu0 0.0
    %5363 = vmatpush1.msra.mxu0 0.0
    %5364 = vmatprep.subr.mxu0 0.0
    %5365 = vmatpush1.msra.mxu0 0.0
    %5366 = vmatprep.subr.mxu0 0.0
    %5367 = vmatpush1.msra.mxu0 0.0
    %5368 = vmatprep.subr.mxu0 0.0
    %5369 = vmatpush1.msra.mxu0 0.0
    %5370 = vmatprep.subr.mxu0 0.0
    %5371 = vmatpush1.msra.mxu0 0.0
    %5372 = vmatprep.subr.mxu0 0.0
    %5373 = vmatpush1.msra.mxu0 0.0
    %5374 = vmatprep.subr.mxu0 0.0
    %5375 = vmatpush1.msra.mxu0 0.0
    %5376 = vmatprep.subr.mxu0 0.0
    %5377 = vmatpush1.msra.mxu0 0.0
    %5378 = vmatprep.subr.mxu0 0.0
    %5379 = vmatpush1.msra.mxu0 0.0
    %5380 = vmatprep.subr.mxu0 0.0
    %5381 = vmatpush1.msra.mxu0 0.0
    %5382 = vmatprep.subr.mxu0 0.0
    %5383 = vmatpush1.msra.mxu0 0.0
    %5384 = vmatprep.subr.mxu0 0.0
    %5385 = vmatpush1.msra.mxu0 0.0
    %5386 = vmatprep.subr.mxu0 0.0
    %5387 = vmatpush1.msra.mxu0 0.0
    %5388 = vmatprep.subr.mxu0 0.0
    %5389 = vmatpush1.msra.mxu0 0.0
    %5390 = vmatprep.subr.mxu0 0.0
    %5391 = vmatpush1.msra.mxu0 0.0
    %5392 = vmatprep.subr.mxu0 0.0
    %5393 = vmatpush1.msra.mxu0 0.0
    %5394 = vmatprep.subr.mxu0 0.0
    %5395 = vmatpush1.msra.mxu0 0.0
    %5396 = vmatprep.subr.mxu0 0.0
    %5397 = vmatpush1.msra.mxu0 0.0
    %5398 = vmatprep.subr.mxu0 0.0
    %5399 = vmatpush1.msra.mxu0 0.0
    %5400 = vmatprep.subr.mxu0 0.0
    %5401 = vmatpush1.msra.mxu0 0.0
    %5402 = vmatprep.subr.mxu0 0.0
    %5403 = vmatpush1.msra.mxu0 0.0
    %5404 = vmatprep.subr.mxu0 0.0
    %5405 = vmatpush1.msra.mxu0 0.0
    %5406 = vmatprep.subr.mxu0 0.0
    %5407 = vmatpush1.msra.mxu0 0.0
    %5408 = vmatprep.subr.mxu0 0.0
    %5409 = vmatpush1.msra.mxu0 0.0
    %5410 = vmatprep.subr.mxu0 0.0
    %5411 = vmatpush1.msra.mxu0 0.0
    %5412 = vmatprep.subr.mxu0 0.0
    %5413 = vmatpush1.msra.mxu0 0.0
    %5414 = vmatprep.subr.mxu0 0.0
    %5415 = vmatpush1.msra.mxu0 0.0
    %5416 = vmatprep.subr.mxu0 0.0
    %5417 = vmatpush1.msra.mxu0 0.0
    %5418 = vmatprep.subr.mxu0 0.0
    %5419 = vmatpush1.msra.mxu0 0.0
    %5420 = vmatprep.mubr.f32.mxu0 0.0
    %5421 = vmatmul.mubr.f32.gmra.mrb[0].mxu0 %v5351
    %v5422 = vpop.f32.mrb[0].mxu0
    %v5423 = vadd.f32 0.0, %v5422
    %v5424 = vpop.f32.mrb[0].mxu0
    %v5425 = vadd.f32 0.0, %v5424
    %5426 = vmatprep.mubr.f32.mxu0 0.0
    %5427 = vmatmul.mubr.f32.gmra.mrb[0].mxu0 %v5354
    %v5428 = vpop.f32.mrb[0].mxu0
    %v5429 = vadd.f32 0.0, %v5428
    %v5430 = vpop.f32.mrb[0].mxu0
    %v5431 = vadd.f32 0.0, %v5430
    %5432 = vdwg.mxu0
    %v5433 = vadd.f32 %v5343, %v5423
    %v5434 = vadd.f32 %v5344, %v5425
    %v5435 = vadd.f32 %v5345, %v5429
    %v5436 = vadd.f32 %v5346, %v5431
    %5437 = vrot.lane.b32.xlu0 %v4943, 127
    %v5438 = vpop.permute.xlu0 %5437
    %5439 = vrot.lane.b32.xlu0 %v4945, 127
    %v5440 = vpop.permute.xlu0 %5439
    %5441 = vrot.lane.b32.xlu0 %v4944, 127
    %v5442 = vpop.permute.xlu0 %5441
    %5443 = vrot.lane.b32.xlu0 %v4946, 127
    %v5444 = vpop.permute.xlu0 %5443
    %v5445 = vsel %vm541, %v5438, %v5442
    %v5446 = vsel %vm541, %v5440, %v5444
    %v5447 = vsel %vm541, %v5442, %v5438
    %v5448 = vsel %vm541, %v5444, %v5440
    %s5449 = scalar_lea.vmem %s3, 800
    %v5450 = vld [vmem:[%s5449] sm:$0xff]
    %v5451 = vld [vmem:[%s5449 + $0x8] sm:$0xff]
    %v5453 = vsel %vm70, %v5450, 0
    %v5456 = vsel %vm70, %v5451, 0
    %5458 = vmatprep.subr.mxu0 %v5447
    %5459 = vmatpush1.msra.mxu0 %v5445
    %5460 = vmatprep.subr.mxu0 %v5448
    %5461 = vmatpush1.msra.mxu0 %v5446
    %5462 = vmatprep.subr.mxu0 0.0
    %5463 = vmatpush1.msra.mxu0 0.0
    %5464 = vmatprep.subr.mxu0 0.0
    %5465 = vmatpush1.msra.mxu0 0.0
    %5466 = vmatprep.subr.mxu0 0.0
    %5467 = vmatpush1.msra.mxu0 0.0
    %5468 = vmatprep.subr.mxu0 0.0
    %5469 = vmatpush1.msra.mxu0 0.0
    %5470 = vmatprep.subr.mxu0 0.0
    %5471 = vmatpush1.msra.mxu0 0.0
    %5472 = vmatprep.subr.mxu0 0.0
    %5473 = vmatpush1.msra.mxu0 0.0
    %5474 = vmatprep.subr.mxu0 0.0
    %5475 = vmatpush1.msra.mxu0 0.0
    %5476 = vmatprep.subr.mxu0 0.0
    %5477 = vmatpush1.msra.mxu0 0.0
    %5478 = vmatprep.subr.mxu0 0.0
    %5479 = vmatpush1.msra.mxu0 0.0
    %5480 = vmatprep.subr.mxu0 0.0
    %5481 = vmatpush1.msra.mxu0 0.0
    %5482 = vmatprep.subr.mxu0 0.0
    %5483 = vmatpush1.msra.mxu0 0.0
    %5484 = vmatprep.subr.mxu0 0.0
    %5485 = vmatpush1.msra.mxu0 0.0
    %5486 = vmatprep.subr.mxu0 0.0
    %5487 = vmatpush1.msra.mxu0 0.0
    %5488 = vmatprep.subr.mxu0 0.0
    %5489 = vmatpush1.msra.mxu0 0.0
    %5490 = vmatprep.subr.mxu0 0.0
    %5491 = vmatpush1.msra.mxu0 0.0
    %5492 = vmatprep.subr.mxu0 0.0
    %5493 = vmatpush1.msra.mxu0 0.0
    %5494 = vmatprep.subr.mxu0 0.0
    %5495 = vmatpush1.msra.mxu0 0.0
    %5496 = vmatprep.subr.mxu0 0.0
    %5497 = vmatpush1.msra.mxu0 0.0
    %5498 = vmatprep.subr.mxu0 0.0
    %5499 = vmatpush1.msra.mxu0 0.0
    %5500 = vmatprep.subr.mxu0 0.0
    %5501 = vmatpush1.msra.mxu0 0.0
    %5502 = vmatprep.subr.mxu0 0.0
    %5503 = vmatpush1.msra.mxu0 0.0
    %5504 = vmatprep.subr.mxu0 0.0
    %5505 = vmatpush1.msra.mxu0 0.0
    %5506 = vmatprep.subr.mxu0 0.0
    %5507 = vmatpush1.msra.mxu0 0.0
    %5508 = vmatprep.subr.mxu0 0.0
    %5509 = vmatpush1.msra.mxu0 0.0
    %5510 = vmatprep.subr.mxu0 0.0
    %5511 = vmatpush1.msra.mxu0 0.0
    %5512 = vmatprep.subr.mxu0 0.0
    %5513 = vmatpush1.msra.mxu0 0.0
    %5514 = vmatprep.subr.mxu0 0.0
    %5515 = vmatpush1.msra.mxu0 0.0
    %5516 = vmatprep.subr.mxu0 0.0
    %5517 = vmatpush1.msra.mxu0 0.0
    %5518 = vmatprep.subr.mxu0 0.0
    %5519 = vmatpush1.msra.mxu0 0.0
    %5520 = vmatprep.subr.mxu0 0.0
    %5521 = vmatpush1.msra.mxu0 0.0
    %5522 = vmatprep.mubr.f32.mxu0 0.0
    %5523 = vmatmul.mubr.f32.gmra.mrb[0].mxu0 %v5453
    %v5524 = vpop.f32.mrb[0].mxu0
    %v5525 = vadd.f32 0.0, %v5524
    %v5526 = vpop.f32.mrb[0].mxu0
    %v5527 = vadd.f32 0.0, %v5526
    %5528 = vmatprep.mubr.f32.mxu0 0.0
    %5529 = vmatmul.mubr.f32.gmra.mrb[0].mxu0 %v5456
    %v5530 = vpop.f32.mrb[0].mxu0
    %v5531 = vadd.f32 0.0, %v5530
    %v5532 = vpop.f32.mrb[0].mxu0
    %v5533 = vadd.f32 0.0, %v5532
    %5534 = vdwg.mxu0
    %v5535 = vadd.f32 %v5433, %v5525
    %v5536 = vadd.f32 %v5434, %v5527
    %v5537 = vadd.f32 %v5435, %v5531
    %v5538 = vadd.f32 %v5436, %v5533
    %5539 = vrot.lane.b32.xlu0 %v4943, 118
    %v5540 = vpop.permute.xlu0 %5539
    %5541 = vrot.lane.b32.xlu0 %v4945, 118
    %v5542 = vpop.permute.xlu0 %5541
    %5543 = vrot.lane.b32.xlu0 %v4944, 118
    %v5544 = vpop.permute.xlu0 %5543
    %5545 = vrot.lane.b32.xlu0 %v4946, 118
    %v5546 = vpop.permute.xlu0 %5545
    %v5547 = vsel %vm644, %v5540, %v5544
    %v5548 = vsel %vm644, %v5542, %v5546
    %v5549 = vsel %vm644, %v5544, %v5540
    %v5550 = vsel %vm644, %v5546, %v5542
    %s5551 = scalar_lea.vmem %s3, 816
    %v5552 = vld [vmem:[%s5551] sm:$0xff]
    %v5553 = vld [vmem:[%s5551 + $0x8] sm:$0xff]
    %v5555 = vsel %vm70, %v5552, 0
    %v5558 = vsel %vm70, %v5553, 0
    %5560 = vmatprep.subr.mxu0 %v5549
    %5561 = vmatpush1.msra.mxu0 %v5547
    %5562 = vmatprep.subr.mxu0 %v5550
    %5563 = vmatpush1.msra.mxu0 %v5548
    %5564 = vmatprep.subr.mxu0 0.0
    %5565 = vmatpush1.msra.mxu0 0.0
    %5566 = vmatprep.subr.mxu0 0.0
    %5567 = vmatpush1.msra.mxu0 0.0
    %5568 = vmatprep.subr.mxu0 0.0
    %5569 = vmatpush1.msra.mxu0 0.0
    %5570 = vmatprep.subr.mxu0 0.0
    %5571 = vmatpush1.msra.mxu0 0.0
    %5572 = vmatprep.subr.mxu0 0.0
    %5573 = vmatpush1.msra.mxu0 0.0
    %5574 = vmatprep.subr.mxu0 0.0
    %5575 = vmatpush1.msra.mxu0 0.0
    %5576 = vmatprep.subr.mxu0 0.0
    %5577 = vmatpush1.msra.mxu0 0.0
    %5578 = vmatprep.subr.mxu0 0.0
    %5579 = vmatpush1.msra.mxu0 0.0
    %5580 = vmatprep.subr.mxu0 0.0
    %5581 = vmatpush1.msra.mxu0 0.0
    %5582 = vmatprep.subr.mxu0 0.0
    %5583 = vmatpush1.msra.mxu0 0.0
    %5584 = vmatprep.subr.mxu0 0.0
    %5585 = vmatpush1.msra.mxu0 0.0
    %5586 = vmatprep.subr.mxu0 0.0
    %5587 = vmatpush1.msra.mxu0 0.0
    %5588 = vmatprep.subr.mxu0 0.0
    %5589 = vmatpush1.msra.mxu0 0.0
    %5590 = vmatprep.subr.mxu0 0.0
    %5591 = vmatpush1.msra.mxu0 0.0
    %5592 = vmatprep.subr.mxu0 0.0
    %5593 = vmatpush1.msra.mxu0 0.0
    %5594 = vmatprep.subr.mxu0 0.0
    %5595 = vmatpush1.msra.mxu0 0.0
    %5596 = vmatprep.subr.mxu0 0.0
    %5597 = vmatpush1.msra.mxu0 0.0
    %5598 = vmatprep.subr.mxu0 0.0
    %5599 = vmatpush1.msra.mxu0 0.0
    %5600 = vmatprep.subr.mxu0 0.0
    %5601 = vmatpush1.msra.mxu0 0.0
    %5602 = vmatprep.subr.mxu0 0.0
    %5603 = vmatpush1.msra.mxu0 0.0
    %5604 = vmatprep.subr.mxu0 0.0
    %5605 = vmatpush1.msra.mxu0 0.0
    %5606 = vmatprep.subr.mxu0 0.0
    %5607 = vmatpush1.msra.mxu0 0.0
    %5608 = vmatprep.subr.mxu0 0.0
    %5609 = vmatpush1.msra.mxu0 0.0
    %5610 = vmatprep.subr.mxu0 0.0
    %5611 = vmatpush1.msra.mxu0 0.0
    %5612 = vmatprep.subr.mxu0 0.0
    %5613 = vmatpush1.msra.mxu0 0.0
    %5614 = vmatprep.subr.mxu0 0.0
    %5615 = vmatpush1.msra.mxu0 0.0
    %5616 = vmatprep.subr.mxu0 0.0
    %5617 = vmatpush1.msra.mxu0 0.0
    %5618 = vmatprep.subr.mxu0 0.0
    %5619 = vmatpush1.msra.mxu0 0.0
    %5620 = vmatprep.subr.mxu0 0.0
    %5621 = vmatpush1.msra.mxu0 0.0
    %5622 = vmatprep.subr.mxu0 0.0
    %5623 = vmatpush1.msra.mxu0 0.0
    %5624 = vmatprep.mubr.f32.mxu0 0.0
    %5625 = vmatmul.mubr.f32.gmra.mrb[0].mxu0 %v5555
    %v5626 = vpop.f32.mrb[0].mxu0
    %v5627 = vadd.f32 0.0, %v5626
    %v5628 = vpop.f32.mrb[0].mxu0
    %v5629 = vadd.f32 0.0, %v5628
    %5630 = vmatprep.mubr.f32.mxu0 0.0
    %5631 = vmatmul.mubr.f32.gmra.mrb[0].mxu0 %v5558
    %v5632 = vpop.f32.mrb[0].mxu0
    %v5633 = vadd.f32 0.0, %v5632
    %v5634 = vpop.f32.mrb[0].mxu0
    %v5635 = vadd.f32 0.0, %v5634
    %5636 = vdwg.mxu0
    %v5637 = vadd.f32 %v5535, %v5627
    %v5638 = vadd.f32 %v5536, %v5629
    %v5639 = vadd.f32 %v5537, %v5633
    %v5640 = vadd.f32 %v5538, %v5635
    %5641 = vrot.lane.b32.xlu0 %v4943, 117
    %v5642 = vpop.permute.xlu0 %5641
    %5643 = vrot.lane.b32.xlu0 %v4945, 117
    %v5644 = vpop.permute.xlu0 %5643
    %5645 = vrot.lane.b32.xlu0 %v4944, 117
    %v5646 = vpop.permute.xlu0 %5645
    %5647 = vrot.lane.b32.xlu0 %v4946, 117
    %v5648 = vpop.permute.xlu0 %5647
    %v5649 = vsel %vm747, %v5642, %v5646
    %v5650 = vsel %vm747, %v5644, %v5648
    %v5651 = vsel %vm747, %v5646, %v5642
    %v5652 = vsel %vm747, %v5648, %v5644
    %s5653 = scalar_lea.vmem %s3, 832
    %v5654 = vld [vmem:[%s5653] sm:$0xff]
    %v5655 = vld [vmem:[%s5653 + $0x8] sm:$0xff]
    %v5657 = vsel %vm70, %v5654, 0
    %v5660 = vsel %vm70, %v5655, 0
    %5662 = vmatprep.subr.mxu0 %v5651
    %5663 = vmatpush1.msra.mxu0 %v5649
    %5664 = vmatprep.subr.mxu0 %v5652
    %5665 = vmatpush1.msra.mxu0 %v5650
    %5666 = vmatprep.subr.mxu0 0.0
    %5667 = vmatpush1.msra.mxu0 0.0
    %5668 = vmatprep.subr.mxu0 0.0
    %5669 = vmatpush1.msra.mxu0 0.0
    %5670 = vmatprep.subr.mxu0 0.0
    %5671 = vmatpush1.msra.mxu0 0.0
    %5672 = vmatprep.subr.mxu0 0.0
    %5673 = vmatpush1.msra.mxu0 0.0
    %5674 = vmatprep.subr.mxu0 0.0
    %5675 = vmatpush1.msra.mxu0 0.0
    %5676 = vmatprep.subr.mxu0 0.0
    %5677 = vmatpush1.msra.mxu0 0.0
    %5678 = vmatprep.subr.mxu0 0.0
    %5679 = vmatpush1.msra.mxu0 0.0
    %5680 = vmatprep.subr.mxu0 0.0
    %5681 = vmatpush1.msra.mxu0 0.0
    %5682 = vmatprep.subr.mxu0 0.0
    %5683 = vmatpush1.msra.mxu0 0.0
    %5684 = vmatprep.subr.mxu0 0.0
    %5685 = vmatpush1.msra.mxu0 0.0
    %5686 = vmatprep.subr.mxu0 0.0
    %5687 = vmatpush1.msra.mxu0 0.0
    %5688 = vmatprep.subr.mxu0 0.0
    %5689 = vmatpush1.msra.mxu0 0.0
    %5690 = vmatprep.subr.mxu0 0.0
    %5691 = vmatpush1.msra.mxu0 0.0
    %5692 = vmatprep.subr.mxu0 0.0
    %5693 = vmatpush1.msra.mxu0 0.0
    %5694 = vmatprep.subr.mxu0 0.0
    %5695 = vmatpush1.msra.mxu0 0.0
    %5696 = vmatprep.subr.mxu0 0.0
    %5697 = vmatpush1.msra.mxu0 0.0
    %5698 = vmatprep.subr.mxu0 0.0
    %5699 = vmatpush1.msra.mxu0 0.0
    %5700 = vmatprep.subr.mxu0 0.0
    %5701 = vmatpush1.msra.mxu0 0.0
    %5702 = vmatprep.subr.mxu0 0.0
    %5703 = vmatpush1.msra.mxu0 0.0
    %5704 = vmatprep.subr.mxu0 0.0
    %5705 = vmatpush1.msra.mxu0 0.0
    %5706 = vmatprep.subr.mxu0 0.0
    %5707 = vmatpush1.msra.mxu0 0.0
    %5708 = vmatprep.subr.mxu0 0.0
    %5709 = vmatpush1.msra.mxu0 0.0
    %5710 = vmatprep.subr.mxu0 0.0
    %5711 = vmatpush1.msra.mxu0 0.0
    %5712 = vmatprep.subr.mxu0 0.0
    %5713 = vmatpush1.msra.mxu0 0.0
    %5714 = vmatprep.subr.mxu0 0.0
    %5715 = vmatpush1.msra.mxu0 0.0
    %5716 = vmatprep.subr.mxu0 0.0
    %5717 = vmatpush1.msra.mxu0 0.0
    %5718 = vmatprep.subr.mxu0 0.0
    %5719 = vmatpush1.msra.mxu0 0.0
    %5720 = vmatprep.subr.mxu0 0.0
    %5721 = vmatpush1.msra.mxu0 0.0
    %5722 = vmatprep.subr.mxu0 0.0
    %5723 = vmatpush1.msra.mxu0 0.0
    %5724 = vmatprep.subr.mxu0 0.0
    %5725 = vmatpush1.msra.mxu0 0.0
    %5726 = vmatprep.mubr.f32.mxu0 0.0
    %5727 = vmatmul.mubr.f32.gmra.mrb[0].mxu0 %v5657
    %v5728 = vpop.f32.mrb[0].mxu0
    %v5729 = vadd.f32 0.0, %v5728
    %v5730 = vpop.f32.mrb[0].mxu0
    %v5731 = vadd.f32 0.0, %v5730
    %5732 = vmatprep.mubr.f32.mxu0 0.0
    %5733 = vmatmul.mubr.f32.gmra.mrb[0].mxu0 %v5660
    %v5734 = vpop.f32.mrb[0].mxu0
    %v5735 = vadd.f32 0.0, %v5734
    %v5736 = vpop.f32.mrb[0].mxu0
    %v5737 = vadd.f32 0.0, %v5736
    %5738 = vdwg.mxu0
    %v5739 = vadd.f32 %v5637, %v5729
    %v5740 = vadd.f32 %v5638, %v5731
    %v5741 = vadd.f32 %v5639, %v5735
    %v5742 = vadd.f32 %v5640, %v5737
    %5743 = vrot.lane.b32.xlu0 %v4943, 116
    %v5744 = vpop.permute.xlu0 %5743
    %5745 = vrot.lane.b32.xlu0 %v4945, 116
    %v5746 = vpop.permute.xlu0 %5745
    %5747 = vrot.lane.b32.xlu0 %v4944, 116
    %v5748 = vpop.permute.xlu0 %5747
    %5749 = vrot.lane.b32.xlu0 %v4946, 116
    %v5750 = vpop.permute.xlu0 %5749
    %v5751 = vsel %vm850, %v5744, %v5748
    %v5752 = vsel %vm850, %v5746, %v5750
    %v5753 = vsel %vm850, %v5748, %v5744
    %v5754 = vsel %vm850, %v5750, %v5746
    %s5755 = scalar_lea.vmem %s3, 848
    %v5756 = vld [vmem:[%s5755] sm:$0xff]
    %v5757 = vld [vmem:[%s5755 + $0x8] sm:$0xff]
    %v5759 = vsel %vm70, %v5756, 0
    %v5762 = vsel %vm70, %v5757, 0
    %5764 = vmatprep.subr.mxu0 %v5753
    %5765 = vmatpush1.msra.mxu0 %v5751
    %5766 = vmatprep.subr.mxu0 %v5754
    %5767 = vmatpush1.msra.mxu0 %v5752
    %5768 = vmatprep.subr.mxu0 0.0
    %5769 = vmatpush1.msra.mxu0 0.0
    %5770 = vmatprep.subr.mxu0 0.0
    %5771 = vmatpush1.msra.mxu0 0.0
    %5772 = vmatprep.subr.mxu0 0.0
    %5773 = vmatpush1.msra.mxu0 0.0
    %5774 = vmatprep.subr.mxu0 0.0
    %5775 = vmatpush1.msra.mxu0 0.0
    %5776 = vmatprep.subr.mxu0 0.0
    %5777 = vmatpush1.msra.mxu0 0.0
    %5778 = vmatprep.subr.mxu0 0.0
    %5779 = vmatpush1.msra.mxu0 0.0
    %5780 = vmatprep.subr.mxu0 0.0
    %5781 = vmatpush1.msra.mxu0 0.0
    %5782 = vmatprep.subr.mxu0 0.0
    %5783 = vmatpush1.msra.mxu0 0.0
    %5784 = vmatprep.subr.mxu0 0.0
    %5785 = vmatpush1.msra.mxu0 0.0
    %5786 = vmatprep.subr.mxu0 0.0
    %5787 = vmatpush1.msra.mxu0 0.0
    %5788 = vmatprep.subr.mxu0 0.0
    %5789 = vmatpush1.msra.mxu0 0.0
    %5790 = vmatprep.subr.mxu0 0.0
    %5791 = vmatpush1.msra.mxu0 0.0
    %5792 = vmatprep.subr.mxu0 0.0
    %5793 = vmatpush1.msra.mxu0 0.0
    %5794 = vmatprep.subr.mxu0 0.0
    %5795 = vmatpush1.msra.mxu0 0.0
    %5796 = vmatprep.subr.mxu0 0.0
    %5797 = vmatpush1.msra.mxu0 0.0
    %5798 = vmatprep.subr.mxu0 0.0
    %5799 = vmatpush1.msra.mxu0 0.0
    %5800 = vmatprep.subr.mxu0 0.0
    %5801 = vmatpush1.msra.mxu0 0.0
    %5802 = vmatprep.subr.mxu0 0.0
    %5803 = vmatpush1.msra.mxu0 0.0
    %5804 = vmatprep.subr.mxu0 0.0
    %5805 = vmatpush1.msra.mxu0 0.0
    %5806 = vmatprep.subr.mxu0 0.0
    %5807 = vmatpush1.msra.mxu0 0.0
    %5808 = vmatprep.subr.mxu0 0.0
    %5809 = vmatpush1.msra.mxu0 0.0
    %5810 = vmatprep.subr.mxu0 0.0
    %5811 = vmatpush1.msra.mxu0 0.0
    %5812 = vmatprep.subr.mxu0 0.0
    %5813 = vmatpush1.msra.mxu0 0.0
    %5814 = vmatprep.subr.mxu0 0.0
    %5815 = vmatpush1.msra.mxu0 0.0
    %5816 = vmatprep.subr.mxu0 0.0
    %5817 = vmatpush1.msra.mxu0 0.0
    %5818 = vmatprep.subr.mxu0 0.0
    %5819 = vmatpush1.msra.mxu0 0.0
    %5820 = vmatprep.subr.mxu0 0.0
    %5821 = vmatpush1.msra.mxu0 0.0
    %5822 = vmatprep.subr.mxu0 0.0
    %5823 = vmatpush1.msra.mxu0 0.0
    %5824 = vmatprep.subr.mxu0 0.0
    %5825 = vmatpush1.msra.mxu0 0.0
    %5826 = vmatprep.subr.mxu0 0.0
    %5827 = vmatpush1.msra.mxu0 0.0
    %5828 = vmatprep.mubr.f32.mxu0 0.0
    %5829 = vmatmul.mubr.f32.gmra.mrb[0].mxu0 %v5759
    %v5830 = vpop.f32.mrb[0].mxu0
    %v5831 = vadd.f32 0.0, %v5830
    %v5832 = vpop.f32.mrb[0].mxu0
    %v5833 = vadd.f32 0.0, %v5832
    %5834 = vmatprep.mubr.f32.mxu0 0.0
    %5835 = vmatmul.mubr.f32.gmra.mrb[0].mxu0 %v5762
    %v5836 = vpop.f32.mrb[0].mxu0
    %v5837 = vadd.f32 0.0, %v5836
    %v5838 = vpop.f32.mrb[0].mxu0
    %v5839 = vadd.f32 0.0, %v5838
    %5840 = vdwg.mxu0
    %v5841 = vadd.f32 %v5739, %v5831
    %v5842 = vadd.f32 %v5740, %v5833
    %v5843 = vadd.f32 %v5741, %v5837
    %v5844 = vadd.f32 %v5742, %v5839
    %v5845 = vmul.f32 %v5841, %v948
    %v5846 = vmul.f32 %v5842, %v948
    %v5847 = vmul.f32 %v5843, %v948
    %v5848 = vmul.f32 %v5844, %v948
    %v5849 = vadd.f32 %v5845, %v5846
    %5850 = vadd.xlane.f32.xlu0 %v5849
    %v5851 = vpop.xlane.xlu0 %5850
    %v5852 = vadd.f32 %v5847, %v5848
    %5853 = vadd.xlane.f32.xlu0 %v5852
    %v5854 = vpop.xlane.xlu0 %5853
    %v5855 = vmul.f32 %v5845, %v5845
    %v5856 = vmul.f32 %v5846, %v5846
    %v5857 = vmul.f32 %v5847, %v5847
    %v5858 = vmul.f32 %v5848, %v5848
    %v5859 = vadd.f32 %v5855, %v5856
    %5860 = vadd.xlane.f32.xlu0 %v5859
    %v5861 = vpop.xlane.xlu0 %5860
    %v5862 = vadd.f32 %v5857, %v5858
    %5863 = vadd.xlane.f32.xlu0 %v5862
    %v5864 = vpop.xlane.xlu0 %5863
    %v5865 = vmul.f32 %v5851, 0.0061728396
    %v5866 = vmul.f32 %v5854, 0.0061728396
    %v5867 = vmul.f32 %v5861, 0.0061728396
    %v5868 = vmul.f32 %v5864, 0.0061728396
    %v5869 = vmul.f32 %v5865, %v5865
    %v5870 = vmul.f32 %v5866, %v5866
    %v5871 = vsub.f32 %v5867, %v5869
    %v5872 = vsub.f32 %v5868, %v5870
    %s5873 = scalar_lea.vmem %s4, 80
    %v5874 = vld [vmem:[%s5873] sm:$0xff]
    %v5875 = vld [vmem:[%s5873 + $0x8] sm:$0xff]
    %v5876 = vadd.f32 %v5871, 1e-05
    %v5877 = vadd.f32 %v5872, 1e-05
    %v5878 = vrsqrt.pop %v5876
    %v5879 = vrsqrt.pop %v5877
    %v5880 = vmul.f32 %v5874, %v5878
    %v5881 = vmul.f32 %v5875, %v5879
    %s5882 = scalar_lea.vmem %s5, 80
    %v5883 = vld [vmem:[%s5882] sm:$0xff]
    %v5884 = vld [vmem:[%s5882 + $0x8] sm:$0xff]
    %v5885 = vmul.f32 %v5865, %v5880
    %v5886 = vmul.f32 %v5866, %v5881
    %v5887 = vsub.f32 %v5883, %v5885
    %v5888 = vsub.f32 %v5884, %v5886
    %5890 = vset.pattern.permute.xlu0 0
    %5891 = vperm.xlu0 %5890, %v5880
    %v5892 = vpop.permute.xlu0 %5891
    %5895 = vset.pattern.permute.xlu0 0
    %5896 = vperm.xlu0 %5895, %v5881
    %v5897 = vpop.permute.xlu0 %5896
    %v5899 = vmul.f32 %v5841, %v5892
    %v5900 = vmul.f32 %v5842, %v5892
    %v5901 = vmul.f32 %v5843, %v5897
    %v5902 = vmul.f32 %v5844, %v5897
    %5904 = vset.pattern.permute.xlu0 0
    %5905 = vperm.xlu0 %5904, %v5887
    %v5906 = vpop.permute.xlu0 %5905
    %5909 = vset.pattern.permute.xlu0 0
    %5910 = vperm.xlu0 %5909, %v5888
    %v5911 = vpop.permute.xlu0 %5910
    %v5913 = vadd.f32 %v5899, %v5906
    %v5914 = vadd.f32 %v5900, %v5906
    %v5915 = vadd.f32 %v5901, %v5911
    %v5916 = vadd.f32 %v5902, %v5911
    %v5917 = vmax.f32 %v5913, 0.0
    %v5918 = vmax.f32 %v5914, 0.0
    %v5919 = vmax.f32 %v5915, 0.0
    %v5920 = vmax.f32 %v5916, 0.0
    %v5921 = vmul.f32 %v5917, %v948
    %v5922 = vmul.f32 %v5918, %v948
    %v5923 = vmul.f32 %v5919, %v948
    %v5924 = vmul.f32 %v5920, %v948
    %5925 = vrot.lane.b32.xlu0 %v5921, 12
    %v5926 = vpop.permute.xlu0 %5925
    %5927 = vrot.lane.b32.xlu0 %v5923, 12
    %v5928 = vpop.permute.xlu0 %5927
    %5929 = vrot.lane.b32.xlu0 %v5922, 12
    %v5930 = vpop.permute.xlu0 %5929
    %5931 = vrot.lane.b32.xlu0 %v5924, 12
    %v5932 = vpop.permute.xlu0 %5931
    %v5933 = vsel %vm47, %v5926, %v5930
    %v5934 = vsel %vm47, %v5928, %v5932
    %v5935 = vsel %vm47, %v5930, %v5926
    %v5936 = vsel %vm47, %v5932, %v5928
    %s5937 = scalar_lea.vmem %s3, 864
    %v5938 = vld [vmem:[%s5937] sm:$0xff]
    %v5939 = vld [vmem:[%s5937 + $0x8] sm:$0xff]
    %5940 = vrot.lane.b32.xlu0 %v5921, 11
    %v5941 = vpop.permute.xlu0 %5940
    %5942 = vrot.lane.b32.xlu0 %v5923, 11
    %v5943 = vpop.permute.xlu0 %5942
    %5944 = vrot.lane.b32.xlu0 %v5922, 11
    %v5945 = vpop.permute.xlu0 %5944
    %5946 = vrot.lane.b32.xlu0 %v5924, 11
    %v5947 = vpop.permute.xlu0 %5946
    %v5948 = vsel %vm62, %v5941, %v5945
    %v5949 = vsel %vm62, %v5943, %v5947
    %v5950 = vsel %vm62, %v5945, %v5941
    %v5951 = vsel %vm62, %v5947, %v5943
    %s5952 = scalar_lea.vmem %s3, 880
    %v5953 = vld [vmem:[%s5952] sm:$0xff]
    %v5954 = vld [vmem:[%s5952 + $0x8] sm:$0xff]
    %v5956 = vsel %vm70, %v5953, 0
    %v5959 = vsel %vm70, %v5954, 0
    %5961 = vmatprep.subr.mxu0 %v5948
    %5962 = vmatpush1.msra.mxu0 %v5950
    %5963 = vmatprep.subr.mxu0 %v5949
    %5964 = vmatpush1.msra.mxu0 %v5951
    %5965 = vmatprep.subr.mxu0 0.0
    %5966 = vmatpush1.msra.mxu0 0.0
    %5967 = vmatprep.subr.mxu0 0.0
    %5968 = vmatpush1.msra.mxu0 0.0
    %5969 = vmatprep.subr.mxu0 0.0
    %5970 = vmatpush1.msra.mxu0 0.0
    %5971 = vmatprep.subr.mxu0 0.0
    %5972 = vmatpush1.msra.mxu0 0.0
    %5973 = vmatprep.subr.mxu0 0.0
    %5974 = vmatpush1.msra.mxu0 0.0
    %5975 = vmatprep.subr.mxu0 0.0
    %5976 = vmatpush1.msra.mxu0 0.0
    %5977 = vmatprep.subr.mxu0 0.0
    %5978 = vmatpush1.msra.mxu0 0.0
    %5979 = vmatprep.subr.mxu0 0.0
    %5980 = vmatpush1.msra.mxu0 0.0
    %5981 = vmatprep.subr.mxu0 0.0
    %5982 = vmatpush1.msra.mxu0 0.0
    %5983 = vmatprep.subr.mxu0 0.0
    %5984 = vmatpush1.msra.mxu0 0.0
    %5985 = vmatprep.subr.mxu0 0.0
    %5986 = vmatpush1.msra.mxu0 0.0
    %5987 = vmatprep.subr.mxu0 0.0
    %5988 = vmatpush1.msra.mxu0 0.0
    %5989 = vmatprep.subr.mxu0 0.0
    %5990 = vmatpush1.msra.mxu0 0.0
    %5991 = vmatprep.subr.mxu0 0.0
    %5992 = vmatpush1.msra.mxu0 0.0
    %5993 = vmatprep.subr.mxu0 0.0
    %5994 = vmatpush1.msra.mxu0 0.0
    %5995 = vmatprep.subr.mxu0 0.0
    %5996 = vmatpush1.msra.mxu0 0.0
    %5997 = vmatprep.subr.mxu0 0.0
    %5998 = vmatpush1.msra.mxu0 0.0
    %5999 = vmatprep.subr.mxu0 0.0
    %6000 = vmatpush1.msra.mxu0 0.0
    %6001 = vmatprep.subr.mxu0 0.0
    %6002 = vmatpush1.msra.mxu0 0.0
    %6003 = vmatprep.subr.mxu0 0.0
    %6004 = vmatpush1.msra.mxu0 0.0
    %6005 = vmatprep.subr.mxu0 0.0
    %6006 = vmatpush1.msra.mxu0 0.0
    %6007 = vmatprep.subr.mxu0 0.0
    %6008 = vmatpush1.msra.mxu0 0.0
    %6009 = vmatprep.subr.mxu0 0.0
    %6010 = vmatpush1.msra.mxu0 0.0
    %6011 = vmatprep.subr.mxu0 0.0
    %6012 = vmatpush1.msra.mxu0 0.0
    %6013 = vmatprep.subr.mxu0 0.0
    %6014 = vmatpush1.msra.mxu0 0.0
    %6015 = vmatprep.subr.mxu0 0.0
    %6016 = vmatpush1.msra.mxu0 0.0
    %6017 = vmatprep.subr.mxu0 0.0
    %6018 = vmatpush1.msra.mxu0 0.0
    %6019 = vmatprep.subr.mxu0 0.0
    %6020 = vmatpush1.msra.mxu0 0.0
    %6021 = vmatprep.subr.mxu0 0.0
    %6022 = vmatpush1.msra.mxu0 0.0
    %6023 = vmatprep.subr.mxu0 0.0
    %6024 = vmatpush1.msra.mxu0 0.0
    %6025 = vmatprep.mubr.f32.mxu0 0.0
    %6026 = vmatmul.mubr.f32.gmra.mrb[0].mxu0 %v5956
    %v6027 = vpop.f32.mrb[0].mxu0
    %v6028 = vadd.f32 0.0, %v6027
    %v6029 = vpop.f32.mrb[0].mxu0
    %v6030 = vadd.f32 0.0, %v6029
    %6031 = vmatprep.mubr.f32.mxu0 0.0
    %6032 = vmatmul.mubr.f32.gmra.mrb[0].mxu0 %v5959
    %v6033 = vpop.f32.mrb[0].mxu0
    %v6034 = vadd.f32 0.0, %v6033
    %v6035 = vpop.f32.mrb[0].mxu0
    %v6036 = vadd.f32 0.0, %v6035
    %6037 = vdwg.mxu0
    %v6039 = vsel %vm70, %v5938, 0
    %v6042 = vsel %vm70, %v5939, 0
    %6044 = vmatprep.subr.mxu0 %v5933
    %6045 = vmatpush1.msra.mxu0 %v5935
    %6046 = vmatprep.subr.mxu0 %v5934
    %6047 = vmatpush1.msra.mxu0 %v5936
    %6048 = vmatprep.subr.mxu0 0.0
    %6049 = vmatpush1.msra.mxu0 0.0
    %6050 = vmatprep.subr.mxu0 0.0
    %6051 = vmatpush1.msra.mxu0 0.0
    %6052 = vmatprep.subr.mxu0 0.0
    %6053 = vmatpush1.msra.mxu0 0.0
    %6054 = vmatprep.subr.mxu0 0.0
    %6055 = vmatpush1.msra.mxu0 0.0
    %6056 = vmatprep.subr.mxu0 0.0
    %6057 = vmatpush1.msra.mxu0 0.0
    %6058 = vmatprep.subr.mxu0 0.0
    %6059 = vmatpush1.msra.mxu0 0.0
    %6060 = vmatprep.subr.mxu0 0.0
    %6061 = vmatpush1.msra.mxu0 0.0
    %6062 = vmatprep.subr.mxu0 0.0
    %6063 = vmatpush1.msra.mxu0 0.0
    %6064 = vmatprep.subr.mxu0 0.0
    %6065 = vmatpush1.msra.mxu0 0.0
    %6066 = vmatprep.subr.mxu0 0.0
    %6067 = vmatpush1.msra.mxu0 0.0
    %6068 = vmatprep.subr.mxu0 0.0
    %6069 = vmatpush1.msra.mxu0 0.0
    %6070 = vmatprep.subr.mxu0 0.0
    %6071 = vmatpush1.msra.mxu0 0.0
    %6072 = vmatprep.subr.mxu0 0.0
    %6073 = vmatpush1.msra.mxu0 0.0
    %6074 = vmatprep.subr.mxu0 0.0
    %6075 = vmatpush1.msra.mxu0 0.0
    %6076 = vmatprep.subr.mxu0 0.0
    %6077 = vmatpush1.msra.mxu0 0.0
    %6078 = vmatprep.subr.mxu0 0.0
    %6079 = vmatpush1.msra.mxu0 0.0
    %6080 = vmatprep.subr.mxu0 0.0
    %6081 = vmatpush1.msra.mxu0 0.0
    %6082 = vmatprep.subr.mxu0 0.0
    %6083 = vmatpush1.msra.mxu0 0.0
    %6084 = vmatprep.subr.mxu0 0.0
    %6085 = vmatpush1.msra.mxu0 0.0
    %6086 = vmatprep.subr.mxu0 0.0
    %6087 = vmatpush1.msra.mxu0 0.0
    %6088 = vmatprep.subr.mxu0 0.0
    %6089 = vmatpush1.msra.mxu0 0.0
    %6090 = vmatprep.subr.mxu0 0.0
    %6091 = vmatpush1.msra.mxu0 0.0
    %6092 = vmatprep.subr.mxu0 0.0
    %6093 = vmatpush1.msra.mxu0 0.0
    %6094 = vmatprep.subr.mxu0 0.0
    %6095 = vmatpush1.msra.mxu0 0.0
    %6096 = vmatprep.subr.mxu0 0.0
    %6097 = vmatpush1.msra.mxu0 0.0
    %6098 = vmatprep.subr.mxu0 0.0
    %6099 = vmatpush1.msra.mxu0 0.0
    %6100 = vmatprep.subr.mxu0 0.0
    %6101 = vmatpush1.msra.mxu0 0.0
    %6102 = vmatprep.subr.mxu0 0.0
    %6103 = vmatpush1.msra.mxu0 0.0
    %6104 = vmatprep.subr.mxu0 0.0
    %6105 = vmatpush1.msra.mxu0 0.0
    %6106 = vmatprep.subr.mxu0 0.0
    %6107 = vmatpush1.msra.mxu0 0.0
    %6108 = vmatprep.mubr.f32.mxu0 0.0
    %6109 = vmatmul.mubr.f32.gmra.mrb[0].mxu0 %v6039
    %v6110 = vpop.f32.mrb[0].mxu0
    %v6111 = vadd.f32 %v6028, %v6110
    %v6112 = vpop.f32.mrb[0].mxu0
    %v6113 = vadd.f32 %v6030, %v6112
    %6114 = vmatprep.mubr.f32.mxu0 0.0
    %6115 = vmatmul.mubr.f32.gmra.mrb[0].mxu0 %v6042
    %v6116 = vpop.f32.mrb[0].mxu0
    %v6117 = vadd.f32 %v6034, %v6116
    %v6118 = vpop.f32.mrb[0].mxu0
    %v6119 = vadd.f32 %v6036, %v6118
    %6120 = vdwg.mxu0
    %6121 = vrot.lane.b32.xlu0 %v5921, 10
    %v6122 = vpop.permute.xlu0 %6121
    %6123 = vrot.lane.b32.xlu0 %v5923, 10
    %v6124 = vpop.permute.xlu0 %6123
    %6125 = vrot.lane.b32.xlu0 %v5922, 10
    %v6126 = vpop.permute.xlu0 %6125
    %6127 = vrot.lane.b32.xlu0 %v5924, 10
    %v6128 = vpop.permute.xlu0 %6127
    %v6129 = vsel %vm245, %v6122, %v6126
    %v6130 = vsel %vm245, %v6124, %v6128
    %v6131 = vsel %vm245, %v6126, %v6122
    %v6132 = vsel %vm245, %v6128, %v6124
    %s6133 = scalar_lea.vmem %s3, 896
    %v6134 = vld [vmem:[%s6133] sm:$0xff]
    %v6135 = vld [vmem:[%s6133 + $0x8] sm:$0xff]
    %v6137 = vsel %vm70, %v6134, 0
    %v6140 = vsel %vm70, %v6135, 0
    %6142 = vmatprep.subr.mxu0 %v6129
    %6143 = vmatpush1.msra.mxu0 %v6131
    %6144 = vmatprep.subr.mxu0 %v6130
    %6145 = vmatpush1.msra.mxu0 %v6132
    %6146 = vmatprep.subr.mxu0 0.0
    %6147 = vmatpush1.msra.mxu0 0.0
    %6148 = vmatprep.subr.mxu0 0.0
    %6149 = vmatpush1.msra.mxu0 0.0
    %6150 = vmatprep.subr.mxu0 0.0
    %6151 = vmatpush1.msra.mxu0 0.0
    %6152 = vmatprep.subr.mxu0 0.0
    %6153 = vmatpush1.msra.mxu0 0.0
    %6154 = vmatprep.subr.mxu0 0.0
    %6155 = vmatpush1.msra.mxu0 0.0
    %6156 = vmatprep.subr.mxu0 0.0
    %6157 = vmatpush1.msra.mxu0 0.0
    %6158 = vmatprep.subr.mxu0 0.0
    %6159 = vmatpush1.msra.mxu0 0.0
    %6160 = vmatprep.subr.mxu0 0.0
    %6161 = vmatpush1.msra.mxu0 0.0
    %6162 = vmatprep.subr.mxu0 0.0
    %6163 = vmatpush1.msra.mxu0 0.0
    %6164 = vmatprep.subr.mxu0 0.0
    %6165 = vmatpush1.msra.mxu0 0.0
    %6166 = vmatprep.subr.mxu0 0.0
    %6167 = vmatpush1.msra.mxu0 0.0
    %6168 = vmatprep.subr.mxu0 0.0
    %6169 = vmatpush1.msra.mxu0 0.0
    %6170 = vmatprep.subr.mxu0 0.0
    %6171 = vmatpush1.msra.mxu0 0.0
    %6172 = vmatprep.subr.mxu0 0.0
    %6173 = vmatpush1.msra.mxu0 0.0
    %6174 = vmatprep.subr.mxu0 0.0
    %6175 = vmatpush1.msra.mxu0 0.0
    %6176 = vmatprep.subr.mxu0 0.0
    %6177 = vmatpush1.msra.mxu0 0.0
    %6178 = vmatprep.subr.mxu0 0.0
    %6179 = vmatpush1.msra.mxu0 0.0
    %6180 = vmatprep.subr.mxu0 0.0
    %6181 = vmatpush1.msra.mxu0 0.0
    %6182 = vmatprep.subr.mxu0 0.0
    %6183 = vmatpush1.msra.mxu0 0.0
    %6184 = vmatprep.subr.mxu0 0.0
    %6185 = vmatpush1.msra.mxu0 0.0
    %6186 = vmatprep.subr.mxu0 0.0
    %6187 = vmatpush1.msra.mxu0 0.0
    %6188 = vmatprep.subr.mxu0 0.0
    %6189 = vmatpush1.msra.mxu0 0.0
    %6190 = vmatprep.subr.mxu0 0.0
    %6191 = vmatpush1.msra.mxu0 0.0
    %6192 = vmatprep.subr.mxu0 0.0
    %6193 = vmatpush1.msra.mxu0 0.0
    %6194 = vmatprep.subr.mxu0 0.0
    %6195 = vmatpush1.msra.mxu0 0.0
    %6196 = vmatprep.subr.mxu0 0.0
    %6197 = vmatpush1.msra.mxu0 0.0
    %6198 = vmatprep.subr.mxu0 0.0
    %6199 = vmatpush1.msra.mxu0 0.0
    %6200 = vmatprep.subr.mxu0 0.0
    %6201 = vmatpush1.msra.mxu0 0.0
    %6202 = vmatprep.subr.mxu0 0.0
    %6203 = vmatpush1.msra.mxu0 0.0
    %6204 = vmatprep.subr.mxu0 0.0
    %6205 = vmatpush1.msra.mxu0 0.0
    %6206 = vmatprep.mubr.f32.mxu0 0.0
    %6207 = vmatmul.mubr.f32.gmra.mrb[0].mxu0 %v6137
    %v6208 = vpop.f32.mrb[0].mxu0
    %v6209 = vadd.f32 0.0, %v6208
    %v6210 = vpop.f32.mrb[0].mxu0
    %v6211 = vadd.f32 0.0, %v6210
    %6212 = vmatprep.mubr.f32.mxu0 0.0
    %6213 = vmatmul.mubr.f32.gmra.mrb[0].mxu0 %v6140
    %v6214 = vpop.f32.mrb[0].mxu0
    %v6215 = vadd.f32 0.0, %v6214
    %v6216 = vpop.f32.mrb[0].mxu0
    %v6217 = vadd.f32 0.0, %v6216
    %6218 = vdwg.mxu0
    %v6219 = vadd.f32 %v6111, %v6209
    %v6220 = vadd.f32 %v6113, %v6211
    %v6221 = vadd.f32 %v6117, %v6215
    %v6222 = vadd.f32 %v6119, %v6217
    %6223 = vrot.lane.b32.xlu0 %v5921, 1
    %v6224 = vpop.permute.xlu0 %6223
    %6225 = vrot.lane.b32.xlu0 %v5923, 1
    %v6226 = vpop.permute.xlu0 %6225
    %6227 = vrot.lane.b32.xlu0 %v5922, 1
    %v6228 = vpop.permute.xlu0 %6227
    %6229 = vrot.lane.b32.xlu0 %v5924, 1
    %v6230 = vpop.permute.xlu0 %6229
    %v6231 = vsel %vm348, %v6224, %v6228
    %v6232 = vsel %vm348, %v6226, %v6230
    %v6233 = vsel %vm348, %v6228, %v6224
    %v6234 = vsel %vm348, %v6230, %v6226
    %s6235 = scalar_lea.vmem %s3, 912
    %v6236 = vld [vmem:[%s6235] sm:$0xff]
    %v6237 = vld [vmem:[%s6235 + $0x8] sm:$0xff]
    %v6239 = vsel %vm70, %v6236, 0
    %v6242 = vsel %vm70, %v6237, 0
    %6244 = vmatprep.subr.mxu0 %v6231
    %6245 = vmatpush1.msra.mxu0 %v6233
    %6246 = vmatprep.subr.mxu0 %v6232
    %6247 = vmatpush1.msra.mxu0 %v6234
    %6248 = vmatprep.subr.mxu0 0.0
    %6249 = vmatpush1.msra.mxu0 0.0
    %6250 = vmatprep.subr.mxu0 0.0
    %6251 = vmatpush1.msra.mxu0 0.0
    %6252 = vmatprep.subr.mxu0 0.0
    %6253 = vmatpush1.msra.mxu0 0.0
    %6254 = vmatprep.subr.mxu0 0.0
    %6255 = vmatpush1.msra.mxu0 0.0
    %6256 = vmatprep.subr.mxu0 0.0
    %6257 = vmatpush1.msra.mxu0 0.0
    %6258 = vmatprep.subr.mxu0 0.0
    %6259 = vmatpush1.msra.mxu0 0.0
    %6260 = vmatprep.subr.mxu0 0.0
    %6261 = vmatpush1.msra.mxu0 0.0
    %6262 = vmatprep.subr.mxu0 0.0
    %6263 = vmatpush1.msra.mxu0 0.0
    %6264 = vmatprep.subr.mxu0 0.0
    %6265 = vmatpush1.msra.mxu0 0.0
    %6266 = vmatprep.subr.mxu0 0.0
    %6267 = vmatpush1.msra.mxu0 0.0
    %6268 = vmatprep.subr.mxu0 0.0
    %6269 = vmatpush1.msra.mxu0 0.0
    %6270 = vmatprep.subr.mxu0 0.0
    %6271 = vmatpush1.msra.mxu0 0.0
    %6272 = vmatprep.subr.mxu0 0.0
    %6273 = vmatpush1.msra.mxu0 0.0
    %6274 = vmatprep.subr.mxu0 0.0
    %6275 = vmatpush1.msra.mxu0 0.0
    %6276 = vmatprep.subr.mxu0 0.0
    %6277 = vmatpush1.msra.mxu0 0.0
    %6278 = vmatprep.subr.mxu0 0.0
    %6279 = vmatpush1.msra.mxu0 0.0
    %6280 = vmatprep.subr.mxu0 0.0
    %6281 = vmatpush1.msra.mxu0 0.0
    %6282 = vmatprep.subr.mxu0 0.0
    %6283 = vmatpush1.msra.mxu0 0.0
    %6284 = vmatprep.subr.mxu0 0.0
    %6285 = vmatpush1.msra.mxu0 0.0
    %6286 = vmatprep.subr.mxu0 0.0
    %6287 = vmatpush1.msra.mxu0 0.0
    %6288 = vmatprep.subr.mxu0 0.0
    %6289 = vmatpush1.msra.mxu0 0.0
    %6290 = vmatprep.subr.mxu0 0.0
    %6291 = vmatpush1.msra.mxu0 0.0
    %6292 = vmatprep.subr.mxu0 0.0
    %6293 = vmatpush1.msra.mxu0 0.0
    %6294 = vmatprep.subr.mxu0 0.0
    %6295 = vmatpush1.msra.mxu0 0.0
    %6296 = vmatprep.subr.mxu0 0.0
    %6297 = vmatpush1.msra.mxu0 0.0
    %6298 = vmatprep.subr.mxu0 0.0
    %6299 = vmatpush1.msra.mxu0 0.0
    %6300 = vmatprep.subr.mxu0 0.0
    %6301 = vmatpush1.msra.mxu0 0.0
    %6302 = vmatprep.subr.mxu0 0.0
    %6303 = vmatpush1.msra.mxu0 0.0
    %6304 = vmatprep.subr.mxu0 0.0
    %6305 = vmatpush1.msra.mxu0 0.0
    %6306 = vmatprep.subr.mxu0 0.0
    %6307 = vmatpush1.msra.mxu0 0.0
    %6308 = vmatprep.mubr.f32.mxu0 0.0
    %6309 = vmatmul.mubr.f32.gmra.mrb[0].mxu0 %v6239
    %v6310 = vpop.f32.mrb[0].mxu0
    %v6311 = vadd.f32 0.0, %v6310
    %v6312 = vpop.f32.mrb[0].mxu0
    %v6313 = vadd.f32 0.0, %v6312
    %6314 = vmatprep.mubr.f32.mxu0 0.0
    %6315 = vmatmul.mubr.f32.gmra.mrb[0].mxu0 %v6242
    %v6316 = vpop.f32.mrb[0].mxu0
    %v6317 = vadd.f32 0.0, %v6316
    %v6318 = vpop.f32.mrb[0].mxu0
    %v6319 = vadd.f32 0.0, %v6318
    %6320 = vdwg.mxu0
    %v6321 = vadd.f32 %v6219, %v6311
    %v6322 = vadd.f32 %v6220, %v6313
    %v6323 = vadd.f32 %v6221, %v6317
    %v6324 = vadd.f32 %v6222, %v6319
    %s6325 = scalar_lea.vmem %s3, 928
    %v6326 = vld [vmem:[%s6325] sm:$0xff]
    %v6327 = vld [vmem:[%s6325 + $0x8] sm:$0xff]
    %v6329 = vsel %vm70, %v6326, 0
    %v6332 = vsel %vm70, %v6327, 0
    %6334 = vmatprep.subr.mxu0 %v5922
    %6335 = vmatpush1.msra.mxu0 %v5921
    %6336 = vmatprep.subr.mxu0 %v5924
    %6337 = vmatpush1.msra.mxu0 %v5923
    %6338 = vmatprep.subr.mxu0 0.0
    %6339 = vmatpush1.msra.mxu0 0.0
    %6340 = vmatprep.subr.mxu0 0.0
    %6341 = vmatpush1.msra.mxu0 0.0
    %6342 = vmatprep.subr.mxu0 0.0
    %6343 = vmatpush1.msra.mxu0 0.0
    %6344 = vmatprep.subr.mxu0 0.0
    %6345 = vmatpush1.msra.mxu0 0.0
    %6346 = vmatprep.subr.mxu0 0.0
    %6347 = vmatpush1.msra.mxu0 0.0
    %6348 = vmatprep.subr.mxu0 0.0
    %6349 = vmatpush1.msra.mxu0 0.0
    %6350 = vmatprep.subr.mxu0 0.0
    %6351 = vmatpush1.msra.mxu0 0.0
    %6352 = vmatprep.subr.mxu0 0.0
    %6353 = vmatpush1.msra.mxu0 0.0
    %6354 = vmatprep.subr.mxu0 0.0
    %6355 = vmatpush1.msra.mxu0 0.0
    %6356 = vmatprep.subr.mxu0 0.0
    %6357 = vmatpush1.msra.mxu0 0.0
    %6358 = vmatprep.subr.mxu0 0.0
    %6359 = vmatpush1.msra.mxu0 0.0
    %6360 = vmatprep.subr.mxu0 0.0
    %6361 = vmatpush1.msra.mxu0 0.0
    %6362 = vmatprep.subr.mxu0 0.0
    %6363 = vmatpush1.msra.mxu0 0.0
    %6364 = vmatprep.subr.mxu0 0.0
    %6365 = vmatpush1.msra.mxu0 0.0
    %6366 = vmatprep.subr.mxu0 0.0
    %6367 = vmatpush1.msra.mxu0 0.0
    %6368 = vmatprep.subr.mxu0 0.0
    %6369 = vmatpush1.msra.mxu0 0.0
    %6370 = vmatprep.subr.mxu0 0.0
    %6371 = vmatpush1.msra.mxu0 0.0
    %6372 = vmatprep.subr.mxu0 0.0
    %6373 = vmatpush1.msra.mxu0 0.0
    %6374 = vmatprep.subr.mxu0 0.0
    %6375 = vmatpush1.msra.mxu0 0.0
    %6376 = vmatprep.subr.mxu0 0.0
    %6377 = vmatpush1.msra.mxu0 0.0
    %6378 = vmatprep.subr.mxu0 0.0
    %6379 = vmatpush1.msra.mxu0 0.0
    %6380 = vmatprep.subr.mxu0 0.0
    %6381 = vmatpush1.msra.mxu0 0.0
    %6382 = vmatprep.subr.mxu0 0.0
    %6383 = vmatpush1.msra.mxu0 0.0
    %6384 = vmatprep.subr.mxu0 0.0
    %6385 = vmatpush1.msra.mxu0 0.0
    %6386 = vmatprep.subr.mxu0 0.0
    %6387 = vmatpush1.msra.mxu0 0.0
    %6388 = vmatprep.subr.mxu0 0.0
    %6389 = vmatpush1.msra.mxu0 0.0
    %6390 = vmatprep.subr.mxu0 0.0
    %6391 = vmatpush1.msra.mxu0 0.0
    %6392 = vmatprep.subr.mxu0 0.0
    %6393 = vmatpush1.msra.mxu0 0.0
    %6394 = vmatprep.subr.mxu0 0.0
    %6395 = vmatpush1.msra.mxu0 0.0
    %6396 = vmatprep.subr.mxu0 0.0
    %6397 = vmatpush1.msra.mxu0 0.0
    %6398 = vmatprep.mubr.f32.mxu0 0.0
    %6399 = vmatmul.mubr.f32.gmra.mrb[0].mxu0 %v6329
    %v6400 = vpop.f32.mrb[0].mxu0
    %v6401 = vadd.f32 0.0, %v6400
    %v6402 = vpop.f32.mrb[0].mxu0
    %v6403 = vadd.f32 0.0, %v6402
    %6404 = vmatprep.mubr.f32.mxu0 0.0
    %6405 = vmatmul.mubr.f32.gmra.mrb[0].mxu0 %v6332
    %v6406 = vpop.f32.mrb[0].mxu0
    %v6407 = vadd.f32 0.0, %v6406
    %v6408 = vpop.f32.mrb[0].mxu0
    %v6409 = vadd.f32 0.0, %v6408
    %6410 = vdwg.mxu0
    %v6411 = vadd.f32 %v6321, %v6401
    %v6412 = vadd.f32 %v6322, %v6403
    %v6413 = vadd.f32 %v6323, %v6407
    %v6414 = vadd.f32 %v6324, %v6409
    %6415 = vrot.lane.b32.xlu0 %v5921, 127
    %v6416 = vpop.permute.xlu0 %6415
    %6417 = vrot.lane.b32.xlu0 %v5923, 127
    %v6418 = vpop.permute.xlu0 %6417
    %6419 = vrot.lane.b32.xlu0 %v5922, 127
    %v6420 = vpop.permute.xlu0 %6419
    %6421 = vrot.lane.b32.xlu0 %v5924, 127
    %v6422 = vpop.permute.xlu0 %6421
    %v6423 = vsel %vm541, %v6416, %v6420
    %v6424 = vsel %vm541, %v6418, %v6422
    %v6425 = vsel %vm541, %v6420, %v6416
    %v6426 = vsel %vm541, %v6422, %v6418
    %s6427 = scalar_lea.vmem %s3, 944
    %v6428 = vld [vmem:[%s6427] sm:$0xff]
    %v6429 = vld [vmem:[%s6427 + $0x8] sm:$0xff]
    %v6431 = vsel %vm70, %v6428, 0
    %v6434 = vsel %vm70, %v6429, 0
    %6436 = vmatprep.subr.mxu0 %v6425
    %6437 = vmatpush1.msra.mxu0 %v6423
    %6438 = vmatprep.subr.mxu0 %v6426
    %6439 = vmatpush1.msra.mxu0 %v6424
    %6440 = vmatprep.subr.mxu0 0.0
    %6441 = vmatpush1.msra.mxu0 0.0
    %6442 = vmatprep.subr.mxu0 0.0
    %6443 = vmatpush1.msra.mxu0 0.0
    %6444 = vmatprep.subr.mxu0 0.0
    %6445 = vmatpush1.msra.mxu0 0.0
    %6446 = vmatprep.subr.mxu0 0.0
    %6447 = vmatpush1.msra.mxu0 0.0
    %6448 = vmatprep.subr.mxu0 0.0
    %6449 = vmatpush1.msra.mxu0 0.0
    %6450 = vmatprep.subr.mxu0 0.0
    %6451 = vmatpush1.msra.mxu0 0.0
    %6452 = vmatprep.subr.mxu0 0.0
    %6453 = vmatpush1.msra.mxu0 0.0
    %6454 = vmatprep.subr.mxu0 0.0
    %6455 = vmatpush1.msra.mxu0 0.0
    %6456 = vmatprep.subr.mxu0 0.0
    %6457 = vmatpush1.msra.mxu0 0.0
    %6458 = vmatprep.subr.mxu0 0.0
    %6459 = vmatpush1.msra.mxu0 0.0
    %6460 = vmatprep.subr.mxu0 0.0
    %6461 = vmatpush1.msra.mxu0 0.0
    %6462 = vmatprep.subr.mxu0 0.0
    %6463 = vmatpush1.msra.mxu0 0.0
    %6464 = vmatprep.subr.mxu0 0.0
    %6465 = vmatpush1.msra.mxu0 0.0
    %6466 = vmatprep.subr.mxu0 0.0
    %6467 = vmatpush1.msra.mxu0 0.0
    %6468 = vmatprep.subr.mxu0 0.0
    %6469 = vmatpush1.msra.mxu0 0.0
    %6470 = vmatprep.subr.mxu0 0.0
    %6471 = vmatpush1.msra.mxu0 0.0
    %6472 = vmatprep.subr.mxu0 0.0
    %6473 = vmatpush1.msra.mxu0 0.0
    %6474 = vmatprep.subr.mxu0 0.0
    %6475 = vmatpush1.msra.mxu0 0.0
    %6476 = vmatprep.subr.mxu0 0.0
    %6477 = vmatpush1.msra.mxu0 0.0
    %6478 = vmatprep.subr.mxu0 0.0
    %6479 = vmatpush1.msra.mxu0 0.0
    %6480 = vmatprep.subr.mxu0 0.0
    %6481 = vmatpush1.msra.mxu0 0.0
    %6482 = vmatprep.subr.mxu0 0.0
    %6483 = vmatpush1.msra.mxu0 0.0
    %6484 = vmatprep.subr.mxu0 0.0
    %6485 = vmatpush1.msra.mxu0 0.0
    %6486 = vmatprep.subr.mxu0 0.0
    %6487 = vmatpush1.msra.mxu0 0.0
    %6488 = vmatprep.subr.mxu0 0.0
    %6489 = vmatpush1.msra.mxu0 0.0
    %6490 = vmatprep.subr.mxu0 0.0
    %6491 = vmatpush1.msra.mxu0 0.0
    %6492 = vmatprep.subr.mxu0 0.0
    %6493 = vmatpush1.msra.mxu0 0.0
    %6494 = vmatprep.subr.mxu0 0.0
    %6495 = vmatpush1.msra.mxu0 0.0
    %6496 = vmatprep.subr.mxu0 0.0
    %6497 = vmatpush1.msra.mxu0 0.0
    %6498 = vmatprep.subr.mxu0 0.0
    %6499 = vmatpush1.msra.mxu0 0.0
    %6500 = vmatprep.mubr.f32.mxu0 0.0
    %6501 = vmatmul.mubr.f32.gmra.mrb[0].mxu0 %v6431
    %v6502 = vpop.f32.mrb[0].mxu0
    %v6503 = vadd.f32 0.0, %v6502
    %v6504 = vpop.f32.mrb[0].mxu0
    %v6505 = vadd.f32 0.0, %v6504
    %6506 = vmatprep.mubr.f32.mxu0 0.0
    %6507 = vmatmul.mubr.f32.gmra.mrb[0].mxu0 %v6434
    %v6508 = vpop.f32.mrb[0].mxu0
    %v6509 = vadd.f32 0.0, %v6508
    %v6510 = vpop.f32.mrb[0].mxu0
    %v6511 = vadd.f32 0.0, %v6510
    %6512 = vdwg.mxu0
    %v6513 = vadd.f32 %v6411, %v6503
    %v6514 = vadd.f32 %v6412, %v6505
    %v6515 = vadd.f32 %v6413, %v6509
    %v6516 = vadd.f32 %v6414, %v6511
    %6517 = vrot.lane.b32.xlu0 %v5921, 118
    %v6518 = vpop.permute.xlu0 %6517
    %6519 = vrot.lane.b32.xlu0 %v5923, 118
    %v6520 = vpop.permute.xlu0 %6519
    %6521 = vrot.lane.b32.xlu0 %v5922, 118
    %v6522 = vpop.permute.xlu0 %6521
    %6523 = vrot.lane.b32.xlu0 %v5924, 118
    %v6524 = vpop.permute.xlu0 %6523
    %v6525 = vsel %vm644, %v6518, %v6522
    %v6526 = vsel %vm644, %v6520, %v6524
    %v6527 = vsel %vm644, %v6522, %v6518
    %v6528 = vsel %vm644, %v6524, %v6520
    %s6529 = scalar_lea.vmem %s3, 960
    %v6530 = vld [vmem:[%s6529] sm:$0xff]
    %v6531 = vld [vmem:[%s6529 + $0x8] sm:$0xff]
    %v6533 = vsel %vm70, %v6530, 0
    %v6536 = vsel %vm70, %v6531, 0
    %6538 = vmatprep.subr.mxu0 %v6527
    %6539 = vmatpush1.msra.mxu0 %v6525
    %6540 = vmatprep.subr.mxu0 %v6528
    %6541 = vmatpush1.msra.mxu0 %v6526
    %6542 = vmatprep.subr.mxu0 0.0
    %6543 = vmatpush1.msra.mxu0 0.0
    %6544 = vmatprep.subr.mxu0 0.0
    %6545 = vmatpush1.msra.mxu0 0.0
    %6546 = vmatprep.subr.mxu0 0.0
    %6547 = vmatpush1.msra.mxu0 0.0
    %6548 = vmatprep.subr.mxu0 0.0
    %6549 = vmatpush1.msra.mxu0 0.0
    %6550 = vmatprep.subr.mxu0 0.0
    %6551 = vmatpush1.msra.mxu0 0.0
    %6552 = vmatprep.subr.mxu0 0.0
    %6553 = vmatpush1.msra.mxu0 0.0
    %6554 = vmatprep.subr.mxu0 0.0
    %6555 = vmatpush1.msra.mxu0 0.0
    %6556 = vmatprep.subr.mxu0 0.0
    %6557 = vmatpush1.msra.mxu0 0.0
    %6558 = vmatprep.subr.mxu0 0.0
    %6559 = vmatpush1.msra.mxu0 0.0
    %6560 = vmatprep.subr.mxu0 0.0
    %6561 = vmatpush1.msra.mxu0 0.0
    %6562 = vmatprep.subr.mxu0 0.0
    %6563 = vmatpush1.msra.mxu0 0.0
    %6564 = vmatprep.subr.mxu0 0.0
    %6565 = vmatpush1.msra.mxu0 0.0
    %6566 = vmatprep.subr.mxu0 0.0
    %6567 = vmatpush1.msra.mxu0 0.0
    %6568 = vmatprep.subr.mxu0 0.0
    %6569 = vmatpush1.msra.mxu0 0.0
    %6570 = vmatprep.subr.mxu0 0.0
    %6571 = vmatpush1.msra.mxu0 0.0
    %6572 = vmatprep.subr.mxu0 0.0
    %6573 = vmatpush1.msra.mxu0 0.0
    %6574 = vmatprep.subr.mxu0 0.0
    %6575 = vmatpush1.msra.mxu0 0.0
    %6576 = vmatprep.subr.mxu0 0.0
    %6577 = vmatpush1.msra.mxu0 0.0
    %6578 = vmatprep.subr.mxu0 0.0
    %6579 = vmatpush1.msra.mxu0 0.0
    %6580 = vmatprep.subr.mxu0 0.0
    %6581 = vmatpush1.msra.mxu0 0.0
    %6582 = vmatprep.subr.mxu0 0.0
    %6583 = vmatpush1.msra.mxu0 0.0
    %6584 = vmatprep.subr.mxu0 0.0
    %6585 = vmatpush1.msra.mxu0 0.0
    %6586 = vmatprep.subr.mxu0 0.0
    %6587 = vmatpush1.msra.mxu0 0.0
    %6588 = vmatprep.subr.mxu0 0.0
    %6589 = vmatpush1.msra.mxu0 0.0
    %6590 = vmatprep.subr.mxu0 0.0
    %6591 = vmatpush1.msra.mxu0 0.0
    %6592 = vmatprep.subr.mxu0 0.0
    %6593 = vmatpush1.msra.mxu0 0.0
    %6594 = vmatprep.subr.mxu0 0.0
    %6595 = vmatpush1.msra.mxu0 0.0
    %6596 = vmatprep.subr.mxu0 0.0
    %6597 = vmatpush1.msra.mxu0 0.0
    %6598 = vmatprep.subr.mxu0 0.0
    %6599 = vmatpush1.msra.mxu0 0.0
    %6600 = vmatprep.subr.mxu0 0.0
    %6601 = vmatpush1.msra.mxu0 0.0
    %6602 = vmatprep.mubr.f32.mxu0 0.0
    %6603 = vmatmul.mubr.f32.gmra.mrb[0].mxu0 %v6533
    %v6604 = vpop.f32.mrb[0].mxu0
    %v6605 = vadd.f32 0.0, %v6604
    %v6606 = vpop.f32.mrb[0].mxu0
    %v6607 = vadd.f32 0.0, %v6606
    %6608 = vmatprep.mubr.f32.mxu0 0.0
    %6609 = vmatmul.mubr.f32.gmra.mrb[0].mxu0 %v6536
    %v6610 = vpop.f32.mrb[0].mxu0
    %v6611 = vadd.f32 0.0, %v6610
    %v6612 = vpop.f32.mrb[0].mxu0
    %v6613 = vadd.f32 0.0, %v6612
    %6614 = vdwg.mxu0
    %v6615 = vadd.f32 %v6513, %v6605
    %v6616 = vadd.f32 %v6514, %v6607
    %v6617 = vadd.f32 %v6515, %v6611
    %v6618 = vadd.f32 %v6516, %v6613
    %6619 = vrot.lane.b32.xlu0 %v5921, 117
    %v6620 = vpop.permute.xlu0 %6619
    %6621 = vrot.lane.b32.xlu0 %v5923, 117
    %v6622 = vpop.permute.xlu0 %6621
    %6623 = vrot.lane.b32.xlu0 %v5922, 117
    %v6624 = vpop.permute.xlu0 %6623
    %6625 = vrot.lane.b32.xlu0 %v5924, 117
    %v6626 = vpop.permute.xlu0 %6625
    %v6627 = vsel %vm747, %v6620, %v6624
    %v6628 = vsel %vm747, %v6622, %v6626
    %v6629 = vsel %vm747, %v6624, %v6620
    %v6630 = vsel %vm747, %v6626, %v6622
    %s6631 = scalar_lea.vmem %s3, 976
    %v6632 = vld [vmem:[%s6631] sm:$0xff]
    %v6633 = vld [vmem:[%s6631 + $0x8] sm:$0xff]
    %v6635 = vsel %vm70, %v6632, 0
    %v6638 = vsel %vm70, %v6633, 0
    %6640 = vmatprep.subr.mxu0 %v6629
    %6641 = vmatpush1.msra.mxu0 %v6627
    %6642 = vmatprep.subr.mxu0 %v6630
    %6643 = vmatpush1.msra.mxu0 %v6628
    %6644 = vmatprep.subr.mxu0 0.0
    %6645 = vmatpush1.msra.mxu0 0.0
    %6646 = vmatprep.subr.mxu0 0.0
    %6647 = vmatpush1.msra.mxu0 0.0
    %6648 = vmatprep.subr.mxu0 0.0
    %6649 = vmatpush1.msra.mxu0 0.0
    %6650 = vmatprep.subr.mxu0 0.0
    %6651 = vmatpush1.msra.mxu0 0.0
    %6652 = vmatprep.subr.mxu0 0.0
    %6653 = vmatpush1.msra.mxu0 0.0
    %6654 = vmatprep.subr.mxu0 0.0
    %6655 = vmatpush1.msra.mxu0 0.0
    %6656 = vmatprep.subr.mxu0 0.0
    %6657 = vmatpush1.msra.mxu0 0.0
    %6658 = vmatprep.subr.mxu0 0.0
    %6659 = vmatpush1.msra.mxu0 0.0
    %6660 = vmatprep.subr.mxu0 0.0
    %6661 = vmatpush1.msra.mxu0 0.0
    %6662 = vmatprep.subr.mxu0 0.0
    %6663 = vmatpush1.msra.mxu0 0.0
    %6664 = vmatprep.subr.mxu0 0.0
    %6665 = vmatpush1.msra.mxu0 0.0
    %6666 = vmatprep.subr.mxu0 0.0
    %6667 = vmatpush1.msra.mxu0 0.0
    %6668 = vmatprep.subr.mxu0 0.0
    %6669 = vmatpush1.msra.mxu0 0.0
    %6670 = vmatprep.subr.mxu0 0.0
    %6671 = vmatpush1.msra.mxu0 0.0
    %6672 = vmatprep.subr.mxu0 0.0
    %6673 = vmatpush1.msra.mxu0 0.0
    %6674 = vmatprep.subr.mxu0 0.0
    %6675 = vmatpush1.msra.mxu0 0.0
    %6676 = vmatprep.subr.mxu0 0.0
    %6677 = vmatpush1.msra.mxu0 0.0
    %6678 = vmatprep.subr.mxu0 0.0
    %6679 = vmatpush1.msra.mxu0 0.0
    %6680 = vmatprep.subr.mxu0 0.0
    %6681 = vmatpush1.msra.mxu0 0.0
    %6682 = vmatprep.subr.mxu0 0.0
    %6683 = vmatpush1.msra.mxu0 0.0
    %6684 = vmatprep.subr.mxu0 0.0
    %6685 = vmatpush1.msra.mxu0 0.0
    %6686 = vmatprep.subr.mxu0 0.0
    %6687 = vmatpush1.msra.mxu0 0.0
    %6688 = vmatprep.subr.mxu0 0.0
    %6689 = vmatpush1.msra.mxu0 0.0
    %6690 = vmatprep.subr.mxu0 0.0
    %6691 = vmatpush1.msra.mxu0 0.0
    %6692 = vmatprep.subr.mxu0 0.0
    %6693 = vmatpush1.msra.mxu0 0.0
    %6694 = vmatprep.subr.mxu0 0.0
    %6695 = vmatpush1.msra.mxu0 0.0
    %6696 = vmatprep.subr.mxu0 0.0
    %6697 = vmatpush1.msra.mxu0 0.0
    %6698 = vmatprep.subr.mxu0 0.0
    %6699 = vmatpush1.msra.mxu0 0.0
    %6700 = vmatprep.subr.mxu0 0.0
    %6701 = vmatpush1.msra.mxu0 0.0
    %6702 = vmatprep.subr.mxu0 0.0
    %6703 = vmatpush1.msra.mxu0 0.0
    %6704 = vmatprep.mubr.f32.mxu0 0.0
    %6705 = vmatmul.mubr.f32.gmra.mrb[0].mxu0 %v6635
    %v6706 = vpop.f32.mrb[0].mxu0
    %v6707 = vadd.f32 0.0, %v6706
    %v6708 = vpop.f32.mrb[0].mxu0
    %v6709 = vadd.f32 0.0, %v6708
    %6710 = vmatprep.mubr.f32.mxu0 0.0
    %6711 = vmatmul.mubr.f32.gmra.mrb[0].mxu0 %v6638
    %v6712 = vpop.f32.mrb[0].mxu0
    %v6713 = vadd.f32 0.0, %v6712
    %v6714 = vpop.f32.mrb[0].mxu0
    %v6715 = vadd.f32 0.0, %v6714
    %6716 = vdwg.mxu0
    %v6717 = vadd.f32 %v6615, %v6707
    %v6718 = vadd.f32 %v6616, %v6709
    %v6719 = vadd.f32 %v6617, %v6713
    %v6720 = vadd.f32 %v6618, %v6715
    %6721 = vrot.lane.b32.xlu0 %v5921, 116
    %v6722 = vpop.permute.xlu0 %6721
    %6723 = vrot.lane.b32.xlu0 %v5923, 116
    %v6724 = vpop.permute.xlu0 %6723
    %6725 = vrot.lane.b32.xlu0 %v5922, 116
    %v6726 = vpop.permute.xlu0 %6725
    %6727 = vrot.lane.b32.xlu0 %v5924, 116
    %v6728 = vpop.permute.xlu0 %6727
    %v6729 = vsel %vm850, %v6722, %v6726
    %v6730 = vsel %vm850, %v6724, %v6728
    %v6731 = vsel %vm850, %v6726, %v6722
    %v6732 = vsel %vm850, %v6728, %v6724
    %s6733 = scalar_lea.vmem %s3, 992
    %v6734 = vld [vmem:[%s6733] sm:$0xff]
    %v6735 = vld [vmem:[%s6733 + $0x8] sm:$0xff]
    %v6737 = vsel %vm70, %v6734, 0
    %v6740 = vsel %vm70, %v6735, 0
    %6742 = vmatprep.subr.mxu0 %v6731
    %6743 = vmatpush1.msra.mxu0 %v6729
    %6744 = vmatprep.subr.mxu0 %v6732
    %6745 = vmatpush1.msra.mxu0 %v6730
    %6746 = vmatprep.subr.mxu0 0.0
    %6747 = vmatpush1.msra.mxu0 0.0
    %6748 = vmatprep.subr.mxu0 0.0
    %6749 = vmatpush1.msra.mxu0 0.0
    %6750 = vmatprep.subr.mxu0 0.0
    %6751 = vmatpush1.msra.mxu0 0.0
    %6752 = vmatprep.subr.mxu0 0.0
    %6753 = vmatpush1.msra.mxu0 0.0
    %6754 = vmatprep.subr.mxu0 0.0
    %6755 = vmatpush1.msra.mxu0 0.0
    %6756 = vmatprep.subr.mxu0 0.0
    %6757 = vmatpush1.msra.mxu0 0.0
    %6758 = vmatprep.subr.mxu0 0.0
    %6759 = vmatpush1.msra.mxu0 0.0
    %6760 = vmatprep.subr.mxu0 0.0
    %6761 = vmatpush1.msra.mxu0 0.0
    %6762 = vmatprep.subr.mxu0 0.0
    %6763 = vmatpush1.msra.mxu0 0.0
    %6764 = vmatprep.subr.mxu0 0.0
    %6765 = vmatpush1.msra.mxu0 0.0
    %6766 = vmatprep.subr.mxu0 0.0
    %6767 = vmatpush1.msra.mxu0 0.0
    %6768 = vmatprep.subr.mxu0 0.0
    %6769 = vmatpush1.msra.mxu0 0.0
    %6770 = vmatprep.subr.mxu0 0.0
    %6771 = vmatpush1.msra.mxu0 0.0
    %6772 = vmatprep.subr.mxu0 0.0
    %6773 = vmatpush1.msra.mxu0 0.0
    %6774 = vmatprep.subr.mxu0 0.0
    %6775 = vmatpush1.msra.mxu0 0.0
    %6776 = vmatprep.subr.mxu0 0.0
    %6777 = vmatpush1.msra.mxu0 0.0
    %6778 = vmatprep.subr.mxu0 0.0
    %6779 = vmatpush1.msra.mxu0 0.0
    %6780 = vmatprep.subr.mxu0 0.0
    %6781 = vmatpush1.msra.mxu0 0.0
    %6782 = vmatprep.subr.mxu0 0.0
    %6783 = vmatpush1.msra.mxu0 0.0
    %6784 = vmatprep.subr.mxu0 0.0
    %6785 = vmatpush1.msra.mxu0 0.0
    %6786 = vmatprep.subr.mxu0 0.0
    %6787 = vmatpush1.msra.mxu0 0.0
    %6788 = vmatprep.subr.mxu0 0.0
    %6789 = vmatpush1.msra.mxu0 0.0
    %6790 = vmatprep.subr.mxu0 0.0
    %6791 = vmatpush1.msra.mxu0 0.0
    %6792 = vmatprep.subr.mxu0 0.0
    %6793 = vmatpush1.msra.mxu0 0.0
    %6794 = vmatprep.subr.mxu0 0.0
    %6795 = vmatpush1.msra.mxu0 0.0
    %6796 = vmatprep.subr.mxu0 0.0
    %6797 = vmatpush1.msra.mxu0 0.0
    %6798 = vmatprep.subr.mxu0 0.0
    %6799 = vmatpush1.msra.mxu0 0.0
    %6800 = vmatprep.subr.mxu0 0.0
    %6801 = vmatpush1.msra.mxu0 0.0
    %6802 = vmatprep.subr.mxu0 0.0
    %6803 = vmatpush1.msra.mxu0 0.0
    %6804 = vmatprep.subr.mxu0 0.0
    %6805 = vmatpush1.msra.mxu0 0.0
    %6806 = vmatprep.mubr.f32.mxu0 0.0
    %6807 = vmatmul.mubr.f32.gmra.mrb[0].mxu0 %v6737
    %v6808 = vpop.f32.mrb[0].mxu0
    %v6809 = vadd.f32 0.0, %v6808
    %v6810 = vpop.f32.mrb[0].mxu0
    %v6811 = vadd.f32 0.0, %v6810
    %6812 = vmatprep.mubr.f32.mxu0 0.0
    %6813 = vmatmul.mubr.f32.gmra.mrb[0].mxu0 %v6740
    %v6814 = vpop.f32.mrb[0].mxu0
    %v6815 = vadd.f32 0.0, %v6814
    %v6816 = vpop.f32.mrb[0].mxu0
    %v6817 = vadd.f32 0.0, %v6816
    %6818 = vdwg.mxu0
    %v6819 = vadd.f32 %v6717, %v6809
    %v6820 = vadd.f32 %v6718, %v6811
    %v6821 = vadd.f32 %v6719, %v6815
    %v6822 = vadd.f32 %v6720, %v6817
    %v6823 = vmul.f32 %v6819, %v948
    %v6824 = vmul.f32 %v6820, %v948
    %v6825 = vmul.f32 %v6821, %v948
    %v6826 = vmul.f32 %v6822, %v948
    %v6827 = vadd.f32 %v6823, %v6824
    %6828 = vadd.xlane.f32.xlu0 %v6827
    %v6829 = vpop.xlane.xlu0 %6828
    %v6830 = vadd.f32 %v6825, %v6826
    %6831 = vadd.xlane.f32.xlu0 %v6830
    %v6832 = vpop.xlane.xlu0 %6831
    %v6833 = vmul.f32 %v6823, %v6823
    %v6834 = vmul.f32 %v6824, %v6824
    %v6835 = vmul.f32 %v6825, %v6825
    %v6836 = vmul.f32 %v6826, %v6826
    %v6837 = vadd.f32 %v6833, %v6834
    %6838 = vadd.xlane.f32.xlu0 %v6837
    %v6839 = vpop.xlane.xlu0 %6838
    %v6840 = vadd.f32 %v6835, %v6836
    %6841 = vadd.xlane.f32.xlu0 %v6840
    %v6842 = vpop.xlane.xlu0 %6841
    %v6843 = vmul.f32 %v6829, 0.0061728396
    %v6844 = vmul.f32 %v6832, 0.0061728396
    %v6845 = vmul.f32 %v6839, 0.0061728396
    %v6846 = vmul.f32 %v6842, 0.0061728396
    %v6847 = vmul.f32 %v6843, %v6843
    %v6848 = vmul.f32 %v6844, %v6844
    %v6849 = vsub.f32 %v6845, %v6847
    %v6850 = vsub.f32 %v6846, %v6848
    %s6851 = scalar_lea.vmem %s4, 96
    %v6852 = vld [vmem:[%s6851] sm:$0xff]
    %v6853 = vld [vmem:[%s6851 + $0x8] sm:$0xff]
    %v6854 = vadd.f32 %v6849, 1e-05
    %v6855 = vadd.f32 %v6850, 1e-05
    %v6856 = vrsqrt.pop %v6854
    %v6857 = vrsqrt.pop %v6855
    %v6858 = vmul.f32 %v6852, %v6856
    %v6859 = vmul.f32 %v6853, %v6857
    %s6860 = scalar_lea.vmem %s5, 96
    %v6861 = vld [vmem:[%s6860] sm:$0xff]
    %v6862 = vld [vmem:[%s6860 + $0x8] sm:$0xff]
    %v6863 = vmul.f32 %v6843, %v6858
    %v6864 = vmul.f32 %v6844, %v6859
    %v6865 = vsub.f32 %v6861, %v6863
    %v6866 = vsub.f32 %v6862, %v6864
    %6868 = vset.pattern.permute.xlu0 0
    %6869 = vperm.xlu0 %6868, %v6858
    %v6870 = vpop.permute.xlu0 %6869
    %6873 = vset.pattern.permute.xlu0 0
    %6874 = vperm.xlu0 %6873, %v6859
    %v6875 = vpop.permute.xlu0 %6874
    %v6877 = vmul.f32 %v6819, %v6870
    %v6878 = vmul.f32 %v6820, %v6870
    %v6879 = vmul.f32 %v6821, %v6875
    %v6880 = vmul.f32 %v6822, %v6875
    %6882 = vset.pattern.permute.xlu0 0
    %6883 = vperm.xlu0 %6882, %v6865
    %v6884 = vpop.permute.xlu0 %6883
    %6887 = vset.pattern.permute.xlu0 0
    %6888 = vperm.xlu0 %6887, %v6866
    %v6889 = vpop.permute.xlu0 %6888
    %v6891 = vadd.f32 %v6877, %v6884
    %v6892 = vadd.f32 %v6878, %v6884
    %v6893 = vadd.f32 %v6879, %v6889
    %v6894 = vadd.f32 %v6880, %v6889
    %v6895 = vadd.f32 %v6891, %v4943
    %v6896 = vadd.f32 %v6892, %v4944
    %v6897 = vadd.f32 %v6893, %v4945
    %v6898 = vadd.f32 %v6894, %v4946
    %v6899 = vmax.f32 %v6895, 0.0
    %v6900 = vmax.f32 %v6896, 0.0
    %v6901 = vmax.f32 %v6897, 0.0
    %v6902 = vmax.f32 %v6898, 0.0
    %v6903 = vmul.f32 %v6899, %v948
    %v6904 = vmul.f32 %v6900, %v948
    %v6905 = vmul.f32 %v6901, %v948
    %v6906 = vmul.f32 %v6902, %v948
    %6907 = vst [vmem:[%s9] sm:$0xff] %v6903
    %6908 = vst [vmem:[%s9 + $0x8] sm:$0xff] %v6904
    %6909 = vst [vmem:[%s9 + $0x10] sm:$0xff] %v6905
    %6910 = vst [vmem:[%s9 + $0x18] sm:$0xff] %v6906
    %v6911 = vld [vmem:[%s1] sm:$0xff]
    %v6912 = vld [vmem:[%s1 + $0x8] sm:$0x3f]
    %v6913 = vmax.f32 %v6911, 0.0
    %v6914 = vmax.f32 %v6912, 0.0
    %v6915 = vld [vmem:[%s6] sm:$0xff]
    %v6916 = vld [vmem:[%s6 + $0x8] sm:$0xff]
    %v6917 = vld [vmem:[%s6 + $0x10] sm:$0xff]
    %v6918 = vld [vmem:[%s6 + $0x18] sm:$0xff]
    %v6919 = vld [vmem:[%s6 + $0x20] sm:$0xff]
    %v6920 = vld [vmem:[%s6 + $0x28] sm:$0xff]
    %v6921 = vld [vmem:[%s6 + $0x30] sm:$0xff]
    %v6922 = vld [vmem:[%s6 + $0x38] sm:$0xff]
    %v6923 = vld [vmem:[%s6 + $0x40] sm:$0xff]
    %v6924 = vld [vmem:[%s6 + $0x48] sm:$0xff]
    %v6925 = vld [vmem:[%s6 + $0x50] sm:$0xff]
    %v6926 = vld [vmem:[%s6 + $0x58] sm:$0xff]
    %v6927 = vld [vmem:[%s6 + $0x60] sm:$0xff]
    %v6928 = vld [vmem:[%s6 + $0x68] sm:$0xff]
    %v6929 = vld [vmem:[%s6 + $0x70] sm:$0xff]
    %v6930 = vld [vmem:[%s6 + $0x78] sm:$0xff]
    %v6931 = vld [vmem:[%s6 + $0x80] sm:$0xff]
    %v6932 = vld [vmem:[%s6 + $0x88] sm:$0xff]
    %v6933 = vld [vmem:[%s6 + $0x90] sm:$0xff]
    %v6934 = vld [vmem:[%s6 + $0x98] sm:$0xff]
    %v6935 = vld [vmem:[%s6 + $0xa0] sm:$0xff]
    %v6936 = vld [vmem:[%s6 + $0xa8] sm:$0xff]
    %v6937 = vld [vmem:[%s6 + $0xb0] sm:$0xff]
    %v6938 = vld [vmem:[%s6 + $0xb8] sm:$0xff]
    %v6939 = vld [vmem:[%s6 + $0xc0] sm:$0xff]
    %v6940 = vld [vmem:[%s6 + $0xc8] sm:$0xff]
    %v6941 = vld [vmem:[%s6 + $0xd0] sm:$0xff]
    %v6942 = vld [vmem:[%s6 + $0xd8] sm:$0xff]
    %v6943 = vld [vmem:[%s6 + $0xe0] sm:$0xff]
    %v6944 = vld [vmem:[%s6 + $0xe8] sm:$0xff]
    %v6945 = vld [vmem:[%s6 + $0xf0] sm:$0xff]
    %v6946 = vld [vmem:[%s6 + $0xf8] sm:$0xff]
    %v6947 = vld [vmem:[%s6 + $0x100] sm:$0xff]
    %v6948 = vld [vmem:[%s6 + $0x108] sm:$0xff]
    %v6949 = vld [vmem:[%s6 + $0x110] sm:$0xff]
    %v6950 = vld [vmem:[%s6 + $0x118] sm:$0xff]
    %v6951 = vld [vmem:[%s6 + $0x120] sm:$0xff]
    %v6952 = vld [vmem:[%s6 + $0x128] sm:$0xff]
    %v6953 = vld [vmem:[%s6 + $0x130] sm:$0xff]
    %v6954 = vld [vmem:[%s6 + $0x138] sm:$0xff]
    %v6955 = vld [vmem:[%s6 + $0x140] sm:$0xff]
    %v6956 = vld [vmem:[%s6 + $0x148] sm:$0xff]
    %v6957 = vld [vmem:[%s6 + $0x150] sm:$0xff]
    %v6958 = vld [vmem:[%s6 + $0x158] sm:$0xff]
    %v6959 = vld [vmem:[%s6 + $0x160] sm:$0xff]
    %v6960 = vld [vmem:[%s6 + $0x168] sm:$0xff]
    %v6961 = vld [vmem:[%s6 + $0x170] sm:$0xff]
    %v6962 = vld [vmem:[%s6 + $0x178] sm:$0xff]
    %v6963 = vld [vmem:[%s6 + $0x180] sm:$0xff]
    %v6964 = vld [vmem:[%s6 + $0x188] sm:$0xff]
    %v6965 = vld [vmem:[%s6 + $0x190] sm:$0xff]
    %v6966 = vld [vmem:[%s6 + $0x198] sm:$0xff]
    %v6967 = vld [vmem:[%s6 + $0x1a0] sm:$0xff]
    %v6968 = vld [vmem:[%s6 + $0x1a8] sm:$0xff]
    %v6969 = vld [vmem:[%s6 + $0x1b0] sm:$0xff]
    %v6970 = vld [vmem:[%s6 + $0x1b8] sm:$0xff]
    %v6971 = vld [vmem:[%s6 + $0x1c0] sm:$0xff]
    %v6972 = vld [vmem:[%s6 + $0x1c8] sm:$0xff]
    %v6973 = vld [vmem:[%s6 + $0x1d0] sm:$0xff]
    %v6974 = vld [vmem:[%s6 + $0x1d8] sm:$0xff]
    %v6975 = vld [vmem:[%s6 + $0x1e0] sm:$0xff]
    %v6976 = vld [vmem:[%s6 + $0x1e8] sm:$0xff]
    %v6977 = vld [vmem:[%s6 + $0x1f0] sm:$0xff]
    %v6978 = vld [vmem:[%s6 + $0x1f8] sm:$0xff]
    %v6979 = vld [vmem:[%s6 + $0x200] sm:$0xff]
    %v6980 = vld [vmem:[%s6 + $0x208] sm:$0xff]
    %v6981 = vld [vmem:[%s6 + $0x210] sm:$0xff]
    %v6982 = vld [vmem:[%s6 + $0x218] sm:$0xff]
    %v6983 = vld [vmem:[%s6 + $0x220] sm:$0xff]
    %v6984 = vld [vmem:[%s6 + $0x228] sm:$0xff]
    %v6985 = vld [vmem:[%s6 + $0x230] sm:$0xff]
    %v6986 = vld [vmem:[%s6 + $0x238] sm:$0xff]
    %v6987 = vld [vmem:[%s6 + $0x240] sm:$0xff]
    %v6988 = vld [vmem:[%s6 + $0x248] sm:$0xff]
    %v6989 = vld [vmem:[%s6 + $0x250] sm:$0xff]
    %v6990 = vld [vmem:[%s6 + $0x258] sm:$0xff]
    %v6991 = vld [vmem:[%s6 + $0x260] sm:$0xff]
    %v6992 = vld [vmem:[%s6 + $0x268] sm:$0xff]
    %v6993 = vld [vmem:[%s6 + $0x270] sm:$0xff]
    %v6994 = vld [vmem:[%s6 + $0x278] sm:$0xff]
    %v6995 = vld [vmem:[%s6 + $0x280] sm:$0xff]
    %v6996 = vld [vmem:[%s6 + $0x288] sm:$0xff]
    %v6997 = vld [vmem:[%s6 + $0x290] sm:$0xff]
    %v6998 = vld [vmem:[%s6 + $0x298] sm:$0xff]
    %v6999 = vld [vmem:[%s6 + $0x2a0] sm:$0xff]
    %v7000 = vld [vmem:[%s6 + $0x2a8] sm:$0xff]
    %v7001 = vld [vmem:[%s6 + $0x2b0] sm:$0xff]
    %v7002 = vld [vmem:[%s6 + $0x2b8] sm:$0xff]
    %v7003 = vld [vmem:[%s6 + $0x2c0] sm:$0xff]
    %v7004 = vld [vmem:[%s6 + $0x2c8] sm:$0xff]
    %v7005 = vld [vmem:[%s6 + $0x2d0] sm:$0xff]
    %v7006 = vld [vmem:[%s6 + $0x2d8] sm:$0xff]
    %v7007 = vld [vmem:[%s6 + $0x2e0] sm:$0xff]
    %v7008 = vld [vmem:[%s6 + $0x2e8] sm:$0xff]
    %v7009 = vld [vmem:[%s6 + $0x2f0] sm:$0xff]
    %v7010 = vld [vmem:[%s6 + $0x2f8] sm:$0xff]
    %v7011 = vld [vmem:[%s6 + $0x300] sm:$0xff]
    %v7012 = vld [vmem:[%s6 + $0x308] sm:$0xff]
    %v7013 = vld [vmem:[%s6 + $0x310] sm:$0xff]
    %v7014 = vld [vmem:[%s6 + $0x318] sm:$0xff]
    %v7015 = vld [vmem:[%s6 + $0x320] sm:$0xff]
    %v7016 = vld [vmem:[%s6 + $0x328] sm:$0xff]
    %v7017 = vld [vmem:[%s6 + $0x330] sm:$0xff]
    %v7018 = vld [vmem:[%s6 + $0x338] sm:$0xff]
    %v7019 = vld [vmem:[%s6 + $0x340] sm:$0xff]
    %v7020 = vld [vmem:[%s6 + $0x348] sm:$0xff]
    %v7021 = vld [vmem:[%s6 + $0x350] sm:$0xff]
    %v7022 = vld [vmem:[%s6 + $0x358] sm:$0xff]
    %v7023 = vld [vmem:[%s6 + $0x360] sm:$0xff]
    %v7024 = vld [vmem:[%s6 + $0x368] sm:$0xff]
    %v7025 = vld [vmem:[%s6 + $0x370] sm:$0xff]
    %v7026 = vld [vmem:[%s6 + $0x378] sm:$0xff]
    %v7027 = vld [vmem:[%s7] sm:$0x1]
    %v7029 = vlaneseq
    %v7030 = vshrl.u32 %v7029, 7
    %v7031 = vsub.s32 0, %v7030
    %v7032 = vrot.slane %v7027, %v7031
    %v7036 = vcombine.high %v6913, %v6913
    %v7038 = vunpack.c.l.s4 1983009808
    %v7039 = vunpack.c.0.s8 %v7038
    %v7040 = vlaneseq
    %v7041 = vshrl.u32 %v7040, 7
    %v7042 = vsub.s32 %v7039, %v7041
    %v7043 = vrot.slane %v6913, %v7042
    %v7045 = vunpack.c.l.s4 1983009808
    %v7046 = vunpack.c.0.s8 %v7045
    %v7047 = vlaneseq
    %v7048 = vshrl.u32 %v7047, 7
    %v7049 = vsub.s32 %v7046, %v7048
    %v7050 = vrot.slane %v7036, %v7049
    %v7051 = vcombine.high %v7043, %v7043
    %v7052 = vcombine.high %v7050, %v7050
    %v7053 = vcombine.high %v6914, %v6914
    %v7055 = vunpack.c.l.s4 1983009808
    %v7056 = vunpack.c.0.s8 %v7055
    %v7057 = vlaneseq
    %v7058 = vshrl.u32 %v7057, 7
    %v7059 = vsub.s32 %v7056, %v7058
    %v7060 = vrot.slane %v6914, %v7059
    %v7062 = vunpack.c.l.s4 1983009808
    %v7063 = vunpack.c.0.s8 %v7062
    %v7064 = vlaneseq
    %v7065 = vshrl.u32 %v7064, 7
    %v7066 = vsub.s32 %v7063, %v7065
    %v7067 = vrot.slane %v7053, %v7066
    %v7068 = vcombine.high %v7060, %v7060
    %7076 = vmatprep.subr.mxu0 0.0
    %7077 = vmatpush1.msra.mxu0 %v6915
    %7078 = vmatprep.subr.mxu0 0.0
    %7079 = vmatpush1.msra.mxu0 %v6916
    %7080 = vmatprep.subr.mxu0 0.0
    %7081 = vmatpush1.msra.mxu0 %v6917
    %7082 = vmatprep.subr.mxu0 0.0
    %7083 = vmatpush1.msra.mxu0 %v6918
    %7084 = vmatprep.subr.mxu0 0.0
    %7085 = vmatpush1.msra.mxu0 %v6919
    %7086 = vmatprep.subr.mxu0 0.0
    %7087 = vmatpush1.msra.mxu0 %v6920
    %7088 = vmatprep.subr.mxu0 0.0
    %7089 = vmatpush1.msra.mxu0 %v6921
    %7090 = vmatprep.subr.mxu0 0.0
    %7091 = vmatpush1.msra.mxu0 %v6922
    %7092 = vmatprep.subr.mxu0 0.0
    %7093 = vmatpush1.msra.mxu0 %v6923
    %7094 = vmatprep.subr.mxu0 0.0
    %7095 = vmatpush1.msra.mxu0 %v6924
    %7096 = vmatprep.subr.mxu0 0.0
    %7097 = vmatpush1.msra.mxu0 %v6925
    %7098 = vmatprep.subr.mxu0 0.0
    %7099 = vmatpush1.msra.mxu0 %v6926
    %7100 = vmatprep.subr.mxu0 0.0
    %7101 = vmatpush1.msra.mxu0 %v6927
    %7102 = vmatprep.subr.mxu0 0.0
    %7103 = vmatpush1.msra.mxu0 %v6928
    %7104 = vmatprep.subr.mxu0 0.0
    %7105 = vmatpush1.msra.mxu0 %v6929
    %7106 = vmatprep.subr.mxu0 0.0
    %7107 = vmatpush1.msra.mxu0 %v6930
    %7108 = vmatprep.subr.mxu0 0.0
    %7109 = vmatpush1.msra.mxu0 %v6931
    %7110 = vmatprep.subr.mxu0 0.0
    %7111 = vmatpush1.msra.mxu0 %v6932
    %7112 = vmatprep.subr.mxu0 0.0
    %7113 = vmatpush1.msra.mxu0 %v6933
    %7114 = vmatprep.subr.mxu0 0.0
    %7115 = vmatpush1.msra.mxu0 %v6934
    %7116 = vmatprep.subr.mxu0 0.0
    %7117 = vmatpush1.msra.mxu0 %v6935
    %7118 = vmatprep.subr.mxu0 0.0
    %7119 = vmatpush1.msra.mxu0 %v6936
    %7120 = vmatprep.subr.mxu0 0.0
    %7121 = vmatpush1.msra.mxu0 %v6937
    %7122 = vmatprep.subr.mxu0 0.0
    %7123 = vmatpush1.msra.mxu0 %v6938
    %7124 = vmatprep.subr.mxu0 0.0
    %7125 = vmatpush1.msra.mxu0 %v6939
    %7126 = vmatprep.subr.mxu0 0.0
    %7127 = vmatpush1.msra.mxu0 %v6940
    %7128 = vmatprep.subr.mxu0 0.0
    %7129 = vmatpush1.msra.mxu0 %v6941
    %7130 = vmatprep.subr.mxu0 0.0
    %7131 = vmatpush1.msra.mxu0 %v6942
    %7132 = vmatprep.subr.mxu0 0.0
    %7133 = vmatpush1.msra.mxu0 %v6943
    %7134 = vmatprep.subr.mxu0 0.0
    %7135 = vmatpush1.msra.mxu0 %v6944
    %7136 = vmatprep.subr.mxu0 0.0
    %7137 = vmatpush1.msra.mxu0 %v6945
    %7138 = vmatprep.subr.mxu0 0.0
    %7139 = vmatpush1.msra.mxu0 %v6946
    %7140 = vmatprep.mubr.f32.mxu0 %v7051
    %7141 = vmatmul.mubr.f32.gmra.mrb[0].mxu0 %v7043
    %v7142 = vpop.f32.mrb[0].mxu0
    %v7143 = vadd.f32 %v7032, %v7142
    %v7144 = vpop.f32.mrb[0].mxu0
    %7145 = vdwg.mxu0
    %7146 = vmatprep.subr.mxu0 0.0
    %7147 = vmatpush1.msra.mxu0 %v6947
    %7148 = vmatprep.subr.mxu0 0.0
    %7149 = vmatpush1.msra.mxu0 %v6948
    %7150 = vmatprep.subr.mxu0 0.0
    %7151 = vmatpush1.msra.mxu0 %v6949
    %7152 = vmatprep.subr.mxu0 0.0
    %7153 = vmatpush1.msra.mxu0 %v6950
    %7154 = vmatprep.subr.mxu0 0.0
    %7155 = vmatpush1.msra.mxu0 %v6951
    %7156 = vmatprep.subr.mxu0 0.0
    %7157 = vmatpush1.msra.mxu0 %v6952
    %7158 = vmatprep.subr.mxu0 0.0
    %7159 = vmatpush1.msra.mxu0 %v6953
    %7160 = vmatprep.subr.mxu0 0.0
    %7161 = vmatpush1.msra.mxu0 %v6954
    %7162 = vmatprep.subr.mxu0 0.0
    %7163 = vmatpush1.msra.mxu0 %v6955
    %7164 = vmatprep.subr.mxu0 0.0
    %7165 = vmatpush1.msra.mxu0 %v6956
    %7166 = vmatprep.subr.mxu0 0.0
    %7167 = vmatpush1.msra.mxu0 %v6957
    %7168 = vmatprep.subr.mxu0 0.0
    %7169 = vmatpush1.msra.mxu0 %v6958
    %7170 = vmatprep.subr.mxu0 0.0
    %7171 = vmatpush1.msra.mxu0 %v6959
    %7172 = vmatprep.subr.mxu0 0.0
    %7173 = vmatpush1.msra.mxu0 %v6960
    %7174 = vmatprep.subr.mxu0 0.0
    %7175 = vmatpush1.msra.mxu0 %v6961
    %7176 = vmatprep.subr.mxu0 0.0
    %7177 = vmatpush1.msra.mxu0 %v6962
    %7178 = vmatprep.subr.mxu0 0.0
    %7179 = vmatpush1.msra.mxu0 %v6963
    %7180 = vmatprep.subr.mxu0 0.0
    %7181 = vmatpush1.msra.mxu0 %v6964
    %7182 = vmatprep.subr.mxu0 0.0
    %7183 = vmatpush1.msra.mxu0 %v6965
    %7184 = vmatprep.subr.mxu0 0.0
    %7185 = vmatpush1.msra.mxu0 %v6966
    %7186 = vmatprep.subr.mxu0 0.0
    %7187 = vmatpush1.msra.mxu0 %v6967
    %7188 = vmatprep.subr.mxu0 0.0
    %7189 = vmatpush1.msra.mxu0 %v6968
    %7190 = vmatprep.subr.mxu0 0.0
    %7191 = vmatpush1.msra.mxu0 %v6969
    %7192 = vmatprep.subr.mxu0 0.0
    %7193 = vmatpush1.msra.mxu0 %v6970
    %7194 = vmatprep.subr.mxu0 0.0
    %7195 = vmatpush1.msra.mxu0 %v6971
    %7196 = vmatprep.subr.mxu0 0.0
    %7197 = vmatpush1.msra.mxu0 %v6972
    %7198 = vmatprep.subr.mxu0 0.0
    %7199 = vmatpush1.msra.mxu0 %v6973
    %7200 = vmatprep.subr.mxu0 0.0
    %7201 = vmatpush1.msra.mxu0 %v6974
    %7202 = vmatprep.subr.mxu0 0.0
    %7203 = vmatpush1.msra.mxu0 %v6975
    %7204 = vmatprep.subr.mxu0 0.0
    %7205 = vmatpush1.msra.mxu0 %v6976
    %7206 = vmatprep.subr.mxu0 0.0
    %7207 = vmatpush1.msra.mxu0 %v6977
    %7208 = vmatprep.subr.mxu0 0.0
    %7209 = vmatpush1.msra.mxu0 %v6978
    %7210 = vmatprep.mubr.f32.mxu0 %v7052
    %7211 = vmatmul.mubr.f32.gmra.mrb[0].mxu0 %v7050
    %v7212 = vpop.f32.mrb[0].mxu0
    %v7213 = vadd.f32 %v7143, %v7212
    %v7214 = vpop.f32.mrb[0].mxu0
    %7215 = vdwg.mxu0
    %7216 = vmatprep.subr.mxu0 0.0
    %7217 = vmatpush1.msra.mxu0 %v6979
    %7218 = vmatprep.subr.mxu0 0.0
    %7219 = vmatpush1.msra.mxu0 %v6980
    %7220 = vmatprep.subr.mxu0 0.0
    %7221 = vmatpush1.msra.mxu0 %v6981
    %7222 = vmatprep.subr.mxu0 0.0
    %7223 = vmatpush1.msra.mxu0 %v6982
    %7224 = vmatprep.subr.mxu0 0.0
    %7225 = vmatpush1.msra.mxu0 %v6983
    %7226 = vmatprep.subr.mxu0 0.0
    %7227 = vmatpush1.msra.mxu0 %v6984
    %7228 = vmatprep.subr.mxu0 0.0
    %7229 = vmatpush1.msra.mxu0 %v6985
    %7230 = vmatprep.subr.mxu0 0.0
    %7231 = vmatpush1.msra.mxu0 %v6986
    %7232 = vmatprep.subr.mxu0 0.0
    %7233 = vmatpush1.msra.mxu0 %v6987
    %7234 = vmatprep.subr.mxu0 0.0
    %7235 = vmatpush1.msra.mxu0 %v6988
    %7236 = vmatprep.subr.mxu0 0.0
    %7237 = vmatpush1.msra.mxu0 %v6989
    %7238 = vmatprep.subr.mxu0 0.0
    %7239 = vmatpush1.msra.mxu0 %v6990
    %7240 = vmatprep.subr.mxu0 0.0
    %7241 = vmatpush1.msra.mxu0 %v6991
    %7242 = vmatprep.subr.mxu0 0.0
    %7243 = vmatpush1.msra.mxu0 %v6992
    %7244 = vmatprep.subr.mxu0 0.0
    %7245 = vmatpush1.msra.mxu0 %v6993
    %7246 = vmatprep.subr.mxu0 0.0
    %7247 = vmatpush1.msra.mxu0 %v6994
    %7248 = vmatprep.subr.mxu0 0.0
    %7249 = vmatpush1.msra.mxu0 %v6995
    %7250 = vmatprep.subr.mxu0 0.0
    %7251 = vmatpush1.msra.mxu0 %v6996
    %7252 = vmatprep.subr.mxu0 0.0
    %7253 = vmatpush1.msra.mxu0 %v6997
    %7254 = vmatprep.subr.mxu0 0.0
    %7255 = vmatpush1.msra.mxu0 %v6998
    %7256 = vmatprep.subr.mxu0 0.0
    %7257 = vmatpush1.msra.mxu0 %v6999
    %7258 = vmatprep.subr.mxu0 0.0
    %7259 = vmatpush1.msra.mxu0 %v7000
    %7260 = vmatprep.subr.mxu0 0.0
    %7261 = vmatpush1.msra.mxu0 %v7001
    %7262 = vmatprep.subr.mxu0 0.0
    %7263 = vmatpush1.msra.mxu0 %v7002
    %7264 = vmatprep.subr.mxu0 0.0
    %7265 = vmatpush1.msra.mxu0 %v7003
    %7266 = vmatprep.subr.mxu0 0.0
    %7267 = vmatpush1.msra.mxu0 %v7004
    %7268 = vmatprep.subr.mxu0 0.0
    %7269 = vmatpush1.msra.mxu0 %v7005
    %7270 = vmatprep.subr.mxu0 0.0
    %7271 = vmatpush1.msra.mxu0 %v7006
    %7272 = vmatprep.subr.mxu0 0.0
    %7273 = vmatpush1.msra.mxu0 %v7007
    %7274 = vmatprep.subr.mxu0 0.0
    %7275 = vmatpush1.msra.mxu0 %v7008
    %7276 = vmatprep.subr.mxu0 0.0
    %7277 = vmatpush1.msra.mxu0 %v7009
    %7278 = vmatprep.subr.mxu0 0.0
    %7279 = vmatpush1.msra.mxu0 %v7010
    %7280 = vmatprep.mubr.f32.mxu0 %v7068
    %7281 = vmatmul.mubr.f32.gmra.mrb[0].mxu0 %v7060
    %v7282 = vpop.f32.mrb[0].mxu0
    %v7283 = vadd.f32 %v7213, %v7282
    %v7284 = vpop.f32.mrb[0].mxu0
    %7285 = vdwg.mxu0
    %7286 = vmatprep.subr.mxu0 0.0
    %7287 = vmatpush1.msra.mxu0 %v7011
    %7288 = vmatprep.subr.mxu0 0.0
    %7289 = vmatpush1.msra.mxu0 %v7012
    %7290 = vmatprep.subr.mxu0 0.0
    %7291 = vmatpush1.msra.mxu0 %v7013
    %7292 = vmatprep.subr.mxu0 0.0
    %7293 = vmatpush1.msra.mxu0 %v7014
    %7294 = vmatprep.subr.mxu0 0.0
    %7295 = vmatpush1.msra.mxu0 %v7015
    %7296 = vmatprep.subr.mxu0 0.0
    %7297 = vmatpush1.msra.mxu0 %v7016
    %7298 = vmatprep.subr.mxu0 0.0
    %7299 = vmatpush1.msra.mxu0 %v7017
    %7300 = vmatprep.subr.mxu0 0.0
    %7301 = vmatpush1.msra.mxu0 %v7018
    %7302 = vmatprep.subr.mxu0 0.0
    %7303 = vmatpush1.msra.mxu0 %v7019
    %7304 = vmatprep.subr.mxu0 0.0
    %7305 = vmatpush1.msra.mxu0 %v7020
    %7306 = vmatprep.subr.mxu0 0.0
    %7307 = vmatpush1.msra.mxu0 %v7021
    %7308 = vmatprep.subr.mxu0 0.0
    %7309 = vmatpush1.msra.mxu0 %v7022
    %7310 = vmatprep.subr.mxu0 0.0
    %7311 = vmatpush1.msra.mxu0 %v7023
    %7312 = vmatprep.subr.mxu0 0.0
    %7313 = vmatpush1.msra.mxu0 %v7024
    %7314 = vmatprep.subr.mxu0 0.0
    %7315 = vmatpush1.msra.mxu0 %v7025
    %7316 = vmatprep.subr.mxu0 0.0
    %7317 = vmatpush1.msra.mxu0 %v7026
    %7318 = vmatprep.subr.mxu0 0.0
    %7319 = vmatpush1.msra.mxu0 0.0
    %7320 = vmatprep.subr.mxu0 0.0
    %7321 = vmatpush1.msra.mxu0 0.0
    %7322 = vmatprep.subr.mxu0 0.0
    %7323 = vmatpush1.msra.mxu0 0.0
    %7324 = vmatprep.subr.mxu0 0.0
    %7325 = vmatpush1.msra.mxu0 0.0
    %7326 = vmatprep.subr.mxu0 0.0
    %7327 = vmatpush1.msra.mxu0 0.0
    %7328 = vmatprep.subr.mxu0 0.0
    %7329 = vmatpush1.msra.mxu0 0.0
    %7330 = vmatprep.subr.mxu0 0.0
    %7331 = vmatpush1.msra.mxu0 0.0
    %7332 = vmatprep.subr.mxu0 0.0
    %7333 = vmatpush1.msra.mxu0 0.0
    %7334 = vmatprep.subr.mxu0 0.0
    %7335 = vmatpush1.msra.mxu0 0.0
    %7336 = vmatprep.subr.mxu0 0.0
    %7337 = vmatpush1.msra.mxu0 0.0
    %7338 = vmatprep.subr.mxu0 0.0
    %7339 = vmatpush1.msra.mxu0 0.0
    %7340 = vmatprep.subr.mxu0 0.0
    %7341 = vmatpush1.msra.mxu0 0.0
    %7342 = vmatprep.subr.mxu0 0.0
    %7343 = vmatpush1.msra.mxu0 0.0
    %7344 = vmatprep.subr.mxu0 0.0
    %7345 = vmatpush1.msra.mxu0 0.0
    %7346 = vmatprep.subr.mxu0 0.0
    %7347 = vmatpush1.msra.mxu0 0.0
    %7348 = vmatprep.subr.mxu0 0.0
    %7349 = vmatpush1.msra.mxu0 0.0
    %7350 = vmatprep.mubr.f32.mxu0 0.0
    %7351 = vmatmul.mubr.f32.gmra.mrb[0].mxu0 %v7067
    %v7352 = vpop.f32.mrb[0].mxu0
    %v7353 = vadd.f32 %v7283, %v7352
    %v7354 = vpop.f32.mrb[0].mxu0
    %7355 = vdwg.mxu0
    %vm7356 = vcmask 1041408
    %v7357 = vsel %vm7356, %v7353, -inf
    %7358 = vmax.xlane.f32.xlu0 %v7357
    %v7359 = vpop.xlane.xlu0 %7358
    %v7360 = vsub.f32 %v7353, %v7359
    %v7361 = vmul.f32 %v7360, 1.442695
    %v7362 = vpow.pop %v7361
    %v7363 = vsel %vm7356, %v7362, 0.0
    %7364 = vadd.xlane.f32.xlu0 %v7363
    %v7365 = vpop.xlane.xlu0 %7364
    %v7366 = vrcp.pop %v7365
    %v7367 = vmul.f32 %v7362, %v7366
    %7368 = vst [vmem:[#allocation2] sm:$0x3] %v7367
    // Predicated region
    $region34: #{policy_network_forward.1} parent=1 // pred_check
      _
    $region35: #{policy_network_forward.1} parent=1 // pred_check_branch
      %7370 = sbr.rel (0) target = $region37
    $region36: #{policy_network_forward.1} parent=1 // pred_region
      %s7372 = ssub.s32 32, 32
      %7373 = vsyncadd [#allocation3], %s7372
      %s7375 = sshll.u32 [#allocation2], 4
      %s7376 = int_to_ptr.vmem [resolvable:$true] %s7375
      %7378 = dma.vmem_to_hbm [thread:$0]  %s7376, 32, %s8, [#allocation3]
    $region37: #{policy_network_forward.1} parent=1 // pred_fallthru
      _
    // Predicated region
    $region38: #{policy_network_forward.1} parent=1 // pred_check
      _
    $region39: #{policy_network_forward.1} parent=1 // pred_check_branch
      %7380 = sbr.rel (0) target = $region41
    $region40: #{policy_network_forward.1} parent=1 // pred_region
      _
    $region41: #{policy_network_forward.1} parent=1 // pred_fallthru
      _
    // Predicated region
    $region42: #{policy_network_forward.1} parent=1 // pred_check
      _
    $region43: #{policy_network_forward.1} parent=1 // pred_check_branch
      %7382 = sbr.rel (0) target = $region45
    $region44: #{policy_network_forward.1} parent=1 // pred_region
      %7383 = dma.done [#allocation3], 32
    $region45: #{policy_network_forward.1} parent=1 // pred_fallthru
      _
    // Predicated region
    $region46: #{policy_network_forward.1} parent=1 // pred_check
      _
    $region47: #{policy_network_forward.1} parent=1 // pred_check_branch
      %7385 = sbr.rel (0) target = $region49
    $region48: #{policy_network_forward.1} parent=1 // pred_region
      _
    $region49: #{policy_network_forward.1} parent=1 // pred_fallthru
      _
    %7386 = vsyncpa [#allocation3], 1

</llo_original>
